<compile_context>
chip_gen: v5e
topology: v5e:2x2
jax: 0.10.0
libtpu: 0.0.40
codegen_flags: <defaults>
</compile_context>

<pallas_src>
import functools

import jax
import jax.numpy as jnp
from jax.experimental import pallas as pl
from jax.experimental.pallas import tpu as pltpu

EPS = 1e-6                      # torch.nn.LayerNorm eps
_MXU_DTYPE = jnp.bfloat16       # matmul operand dtype (f32 accumulation)
_SLAB_DTYPE = jnp.bfloat16      # inter-stage activation slabs in HBM
_CPARAMS = pltpu.CompilerParams(dimension_semantics=("parallel",))


def _round8(c):
    return ((c + 7) // 8) * 8


# ------------------------------ BlockSpec helpers ----------------------------

def _const_spec(shape):
    """Full-array block whose index_map is constant across the grid."""
    n = len(shape)
    return pl.BlockSpec(tuple(shape), lambda b, _n=n: (0,) * _n)


def _batch_spec(tail):
    """Per-batch block: leading batch dim squeezed, rest full-extent."""
    n = len(tail)
    return pl.BlockSpec((None,) + tuple(tail), lambda b, _n=n: (b,) + (0,) * _n)


# ------------------------------ in-kernel helpers ----------------------------

def _ln_silu_cm(x, g, b, c_real):
    """Per-pixel LayerNorm over channel rows + SiLU on a (C_pad, N) slab.

    Padded channel rows are zero, so means/variances use row sums divided by the
    real channel count; gamma/beta are zero at padded rows so they stay zero.
    """
    inv_c = 1.0 / float(c_real)
    mean = jnp.sum(x, axis=0, keepdims=True) * inv_c
    var = jnp.maximum(jnp.sum(x * x, axis=0, keepdims=True) * inv_c - mean * mean, 0.0)
    y = (x - mean) * jax.lax.rsqrt(var + EPS)
    y = y * g + b                                             # g, b: (C_pad, 1)
    sig = pl.reciprocal(1.0 + jnp.exp(-y), approx=True)       # exp + rcp on the EUP
    return y * sig


def _conv3x3_cm(x, w, bias, Wp, n):
    """3x3 'same' conv, channel-major, single MXU dot.

    x    : (Cin_pad, n) f32, n = (H+2)*(W+2) row-major flattened padded image
           (zero border / zero padded channel rows).
    w    : (Cout_pad, 9*Cin_pad) bf16, tap blocks ordered k = ky*3 + kx.
    bias : (Cout_pad, 1) f32.
    Returns (Cout_pad, n) f32.  Only interior flat positions are valid; the
    caller masks the border if the result feeds another conv.
    """
    cinp = x.shape[0]
    ext = Wp + 1
    z = jnp.zeros((cinp, ext), jnp.float32)
    xw = jnp.concatenate([z, x, z], axis=1)                   # (Cin_pad, n + 2*ext)
    col = jnp.concatenate(
        [xw[:, ky * Wp + kx: ky * Wp + kx + n]
         for ky in range(3) for kx in range(3)],
        axis=0).astype(_MXU_DTYPE)                            # (9*Cin_pad, n)
    y = jnp.dot(w, col, preferred_element_type=jnp.float32)   # one MXU pass
    return y + bias


def _resnet_cm(x, m, Wp, n, cin_real, cout_real,
               g1, b1, w1, c1b, g2, b2, w2, c2b, nw=None, nb=None):
    """Fused ResnetBlock2D (LN->SiLU->conv1->LN->SiLU->conv2 + shortcut)."""
    a1 = _ln_silu_cm(x, g1, b1, cin_real) * m                 # zero the border
    h = _conv3x3_cm(a1, w1, c1b, Wp, n)                       # (Cout_pad, n)
    a2 = _ln_silu_cm(h, g2, b2, cout_real) * m
    y = _conv3x3_cm(a2, w2, c2b, Wp, n)
    if nw is None:
        sc = x                                                # identity (cin == cout)
    else:                                                     # 1x1 nin shortcut
        sc = jnp.dot(nw, x.astype(_MXU_DTYPE),
                     preferred_element_type=jnp.float32) + nb
    return y + sc


# ------------------------------ stage kernels --------------------------------

def _make_branch_kernel(Wp, n, ci, e, cip):
    """branch_conv: ResnetBlock2D(Ci -> Ci+E), split into up / flow slabs."""
    cout_real = ci + e

    def kernel(x_ref, m_ref, g1, b1, w1, c1b, g2, b2, w2, c2b, nw, nb,
               up_ref, flow_ref):
        x = x_ref[...].astype(jnp.float32)
        m = m_ref[...]
        y = _resnet_cm(x, m, Wp, n, ci, cout_real,
                       g1[...], b1[...], w1[...], c1b[...],
                       g2[...], b2[...], w2[...], c2b[...],
                       nw[...], nb[...]) * m
        # output channels are packed as [Ci real | pad to cip | E real | pad]
        up_ref[...] = y[:cip, :].astype(up_ref.dtype)
        flow_ref[...] = y[cip:, :].astype(flow_ref.dtype)
    return kernel


def _make_flow_kernel(Wp, n, e, has_w):
    """out_flow_conv (ResnetBlock E->E, Conv E->12) + w add + inverse-Haar mix."""
    def kernel(*refs):
        if has_w:
            (xf_ref, m_ref, wadd_ref, g1, b1, w1, c1b, g2, b2, w2, c2b,
             fo_w, fo_b, haar_t, coef_ref, haar_ref) = refs
        else:
            (xf_ref, m_ref, g1, b1, w1, c1b, g2, b2, w2, c2b,
             fo_w, fo_b, haar_t, coef_ref, haar_ref) = refs
        xf = xf_ref[...].astype(jnp.float32)
        m = m_ref[...]
        f = _resnet_cm(xf, m, Wp, n, e, e,
                       g1[...], b1[...], w1[...], c1b[...],
                       g2[...], b2[...], w2[...], c2b[...]) * m
        coeffs = _conv3x3_cm(f, fo_w[...], fo_b[...], Wp, n)  # (16, n) f32
        if has_w:
            # add w into the first rows (no concat-with-zeros over the full slab)
            coeffs = jnp.concatenate(
                [coeffs[:8, :] + wadd_ref[...].astype(jnp.float32),
                 coeffs[8:, :]], axis=0)
        coef_ref[...] = coeffs.astype(coef_ref.dtype)
        haar = jnp.dot(haar_t[...], coeffs.astype(_MXU_DTYPE),
                       preferred_element_type=jnp.float32)    # (16, n)
        haar_ref[...] = haar.astype(haar_ref.dtype)
    return kernel


def _make_out_kernel(Wp2, n2, ci, co, has_nin):
    """Upsample's 3x3 conv + out_res_block ResnetBlock2D(Ci -> Co), fused."""
    def kernel(*refs):
        if has_nin:
            (xu_ref, m_ref, uw, ub, g1, b1, w1, c1b, g2, b2, w2, c2b, nw, nb,
             out_ref) = refs
            nwv, nbv = nw[...], nb[...]
        else:
            (xu_ref, m_ref, uw, ub, g1, b1, w1, c1b, g2, b2, w2, c2b,
             out_ref) = refs
            nwv = nbv = None
        xu = xu_ref[...].astype(jnp.float32)
        m = m_ref[...]
        h = _conv3x3_cm(xu, uw[...], ub[...], Wp2, n2)        # Upsample conv
        y = _resnet_cm(h, m, Wp2, n2, ci, co,
                       g1[...], b1[...], w1[...], c1b[...],
                       g2[...], b2[...], w2[...], c2b[...], nwv, nbv)
        out_ref[...] = y.astype(out_ref.dtype)                # interior extracted later
    return kernel


# ------------------------------ weight packing --------------------------------
# A "layout" is a list of (src_start, length, dst_start) row segments plus a
# padded total; non-listed destination rows are zero.  Packing runs once,
# outside the jitted forward (review: pre-cast / pre-reshape weights).

def _col(v):
    return v.reshape(-1, 1).astype(jnp.float32)


def _pack_vec(v, layout, total):
    out = jnp.zeros((total,), jnp.float32)
    for s, l, d in layout:
        out = out.at[d:d + l].set(v[s:s + l].astype(jnp.float32))
    return out


def _pack_conv(w_hwio, in_layout, in_tot, out_layout, out_tot):
    """(3,3,Cin,Cout) HWIO -> (out_tot, 9*in_tot) bf16, tap blocks k = ky*3+kx."""
    wt = jnp.zeros((3, 3, in_tot, out_tot), jnp.float32)
    for si, li, di in in_layout:
        for so, lo, do in out_layout:
            wt = wt.at[:, :, di:di + li, do:do + lo].set(
                w_hwio[:, :, si:si + li, so:so + lo].astype(jnp.float32))
    return jnp.transpose(wt, (3, 0, 1, 2)).reshape(out_tot, 9 * in_tot).astype(_MXU_DTYPE)


def _pack_mat(m_io, in_layout, in_tot, out_layout, out_tot):
    """(Cin, Cout) -> (out_tot, in_tot) bf16 for weights-stationary 1x1 / mixes."""
    mt = jnp.zeros((in_tot, out_tot), jnp.float32)
    for si, li, di in in_layout:
        for so, lo, do in out_layout:
            mt = mt.at[di:di + li, do:do + lo].set(
                m_io[si:si + li, so:so + lo].astype(jnp.float32))
    return jnp.transpose(mt).astype(_MXU_DTYPE)


def _pack_resnet(p, in_layout, in_tot, out_layout, out_tot):
    args = [
        _col(_pack_vec(p["norm1_g"], in_layout, in_tot)),
        _col(_pack_vec(p["norm1_b"], in_layout, in_tot)),
        _pack_conv(p["conv1_w"], in_layout, in_tot, out_layout, out_tot),
        _col(_pack_vec(p["conv1_b"], out_layout, out_tot)),
        _col(_pack_vec(p["norm2_g"], out_layout, out_tot)),
        _col(_pack_vec(p["norm2_b"], out_layout, out_tot)),
        _pack_conv(p["conv2_w"], out_layout, out_tot, out_layout, out_tot),
        _col(_pack_vec(p["conv2_b"], out_layout, out_tot)),
    ]
    if "nin_w" in p:
        args += [_pack_mat(p["nin_w"], in_layout, in_tot, out_layout, out_tot),
                 _col(_pack_vec(p["nin_b"], out_layout, out_tot))]
    return tuple(args)


def pack_wf_up_block_params(params, in_channels, out_channels, energy_flow_size):
    Ci, Co, E = in_channels, out_channels, energy_flow_size
    cip, cop, ep = _round8(Ci), _round8(Co), _round8(E)
    simple = lambda c: [(0, c, 0)]
    # branch output channel groups: [0..Ci) -> rows [0..Ci), [Ci..Ci+E) -> rows [cip..cip+E)
    branch_out = [(0, Ci, 0), (Ci, E, cip)]
    return {
        "branch": _pack_resnet(params["branch_conv"], simple(Ci), cip,
                               branch_out, cip + ep),
        "flow_res": _pack_resnet(params["flow_res"], simple(E), ep, simple(E), ep),
        "flow_out": (
            _pack_conv(params["flow_out_w"], simple(E), ep, simple(12), 16),
            _col(_pack_vec(params["flow_out_b"], simple(12), 16)),
            _pack_mat(params["haar_m"], simple(12), 16, simple(12), 16),
        ),
        "up": (
            _pack_conv(params["up_w"], simple(Ci), cip, simple(Ci), cip),
            _col(_pack_vec(params["up_b"], simple(Ci), cip)),
        ),
        "out_res": _pack_resnet(params["out_res"], simple(Ci), cip, simple(Co), cop),
    }


# ------------------------------- inverse Haar --------------------------------

def make_inverse_haar2d_matrix():
    """(12,12) channel-mix matrix equivalent to InverseHaarWaveletTransform2D."""
    k = jnp.array(
        [[[1, 1], [1, 1]],      # aa (low_low)
         [[1, 1], [-1, -1]],    # ad (low_high)
         [[1, -1], [1, -1]],    # da (high_low)
         [[1, -1], [-1, 1]]],   # dd (high_high)
        jnp.float32) / 2.0
    kflat = k.reshape(4, 4)                       # (coeff group, 2x2 sub-position)
    eye3 = jnp.eye(3, dtype=jnp.float32)
    # M[g*3+c, s*3+c] = kflat[g, s]
    return jnp.einsum("gs,ce->gcse", kflat, eye3).reshape(12, 12)


# ------------------------------- WFUpBlock -----------------------------------

def wf_up_block_forward(packed, x_nchw, w=None, *,
                        in_channels, out_channels, energy_flow_size):
    """Mirrors WFUpBlock.forward for up_type='hw'. Returns (out, w, coeffs) in NCHW."""
    B, _, H, W = x_nchw.shape
    Ci, Co, E = in_channels, out_channels, energy_flow_size
    cip, cop, ep = _round8(Ci), _round8(Co), _round8(E)
    Hp, Wp = H + 2, W + 2
    n1 = Hp * Wp
    H2, W2 = 2 * H, 2 * W
    Hp2, Wp2 = H2 + 2, W2 + 2
    n2 = Hp2 * Wp2

    # ---- layout glue (XLA): NCHW -> channel-major padded flat slabs ----------
    x_flat = jnp.pad(x_nchw, ((0, 0), (0, cip - Ci), (1, 1), (1, 1))).reshape(B, cip, n1)
    mask1 = jnp.pad(jnp.ones((H, W), jnp.float32), 1).reshape(1, n1)
    mask2 = jnp.pad(jnp.ones((H2, W2), jnp.float32), 1).reshape(1, n2)

    # ---- stage A: branch_conv ResnetBlock2D(Ci -> Ci+E), split outputs -------
    pA = packed["branch"]
    xb_up, xb_flow = pl.pallas_call(
        _make_branch_kernel(Wp, n1, Ci, E, cip),
        out_shape=(jax.ShapeDtypeStruct((B, cip, n1), _SLAB_DTYPE),
                   jax.ShapeDtypeStruct((B, ep, n1), _SLAB_DTYPE)),
        grid=(B,),
        in_specs=[_batch_spec((cip, n1)), _const_spec((1, n1))]
                 + [_const_spec(tuple(a.shape)) for a in pA],
        out_specs=(_batch_spec((cip, n1)), _batch_spec((ep, n1))),
        compiler_params=_CPARAMS,
    )(x_flat, mask1, *pA)

    # ---- stage B: flow ResnetBlock(E->E) + Conv(E->12) + w add + Haar mix ----
    pF = packed["flow_res"]
    fo = packed["flow_out"]
    has_w = w is not None
    args_b = [xb_flow, mask1]
    specs_b = [_batch_spec((ep, n1)), _const_spec((1, n1))]
    if has_w:
        w_flat = jnp.pad(w, ((0, 0), (0, 8 - 3), (1, 1), (1, 1))).reshape(B, 8, n1)
        args_b.append(w_flat)
        specs_b.append(_batch_spec((8, n1)))
    args_b += list(pF) + list(fo)
    specs_b += [_const_spec(tuple(a.shape)) for a in pF]
    specs_b += [_const_spec(tuple(a.shape)) for a in fo]
    coeffs_cm, haar_cm = pl.pallas_call(
        _make_flow_kernel(Wp, n1, E, has_w),
        out_shape=(jax.ShapeDtypeStruct((B, 16, n1), jnp.float32),
                   jax.ShapeDtypeStruct((B, 16, n1), jnp.float32)),
        grid=(B,),
        in_specs=specs_b,
        out_specs=(_batch_spec((16, n1)), _batch_spec((16, n1))),
        compiler_params=_CPARAMS,
    )(*args_b)

    # ---- nearest-2x upsample of the up branch (pure data movement, XLA glue) -
    # TODO(synk): fold this into stage C via strided VMEM stores if the 4x slab
    #             HBM round trip matters at production resolution.
    xb3 = xb_up.reshape(B, cip, Hp, Wp)[:, :, 1:H + 1, 1:W + 1]
    u = jnp.repeat(jnp.repeat(xb3, 2, axis=2), 2, axis=3)
    xu_flat = jnp.pad(u, ((0, 0), (0, 0), (1, 1), (1, 1))).reshape(B, cip, n2)

    # ---- stage C: Upsample conv (Ci->Ci) + out_res ResnetBlock(Ci->Co) -------
    pU = packed["up"]
    pO = packed["out_res"]
    out_cm = pl.pallas_call(
        _make_out_kernel(Wp2, n2, Ci, Co, has_nin=(len(pO) == 10)),
        out_shape=jax.ShapeDtypeStruct((B, cop, n2), jnp.float32),
        grid=(B,),
        in_specs=[_batch_spec((cip, n2)), _const_spec((1, n2))]
                 + [_const_spec(tuple(a.shape)) for a in pU]
                 + [_const_spec(tuple(a.shape)) for a in pO],
        out_specs=_batch_spec((cop, n2)),
        compiler_params=_CPARAMS,
    )(xu_flat, mask2, *pU, *pO)

    # ---- extract interiors / Haar pixel shuffle (XLA glue) -------------------
    out = out_cm.reshape(B, cop, Hp2, Wp2)[:, :Co, 1:H2 + 1, 1:W2 + 1]
    coeffs = coeffs_cm.reshape(B, 16, Hp, Wp)[:, :12, 1:H + 1, 1:W + 1]
    haar = haar_cm.reshape(B, 16, Hp, Wp)[:, :12, 1:H + 1, 1:W + 1]
    w_out = haar.reshape(B, 2, 2, 3, H, W).transpose(0, 3, 4, 1, 5, 2)
    w_out = w_out.reshape(B, 3, H2, W2)
    return out, w_out, coeffs


# ------------------------------ parameter init -------------------------------

def _init_resnet_params(key, cin, cout):
    ks = jax.random.split(key, 5)
    p = {
        "norm1_g": jnp.ones((cin,), jnp.float32),
        "norm1_b": jnp.zeros((cin,), jnp.float32),
        "conv1_w": 0.1 * jax.random.normal(ks[0], (3, 3, cin, cout), jnp.float32),
        "conv1_b": 0.05 * jax.random.normal(ks[1], (cout,), jnp.float32),
        "norm2_g": jnp.ones((cout,), jnp.float32),
        "norm2_b": jnp.zeros((cout,), jnp.float32),
        "conv2_w": 0.1 * jax.random.normal(ks[2], (3, 3, cout, cout), jnp.float32),
        "conv2_b": 0.05 * jax.random.normal(ks[3], (cout,), jnp.float32),
    }
    if cin != cout:
        ka, kb = jax.random.split(ks[4])
        p["nin_w"] = 0.1 * jax.random.normal(ka, (cin, cout), jnp.float32)
        p["nin_b"] = 0.05 * jax.random.normal(kb, (cout,), jnp.float32)
    return p


def init_wf_up_block_params(key, in_channels, out_channels, energy_flow_size):
    k = jax.random.split(key, 6)
    return {
        "branch_conv": _init_resnet_params(k[0], in_channels,
                                           in_channels + energy_flow_size),
        "flow_res": _init_resnet_params(k[1], energy_flow_size, energy_flow_size),
        "flow_out_w": 0.1 * jax.random.normal(k[2], (3, 3, energy_flow_size, 12),
                                              jnp.float32),
        "flow_out_b": 0.05 * jax.random.normal(k[3], (12,), jnp.float32),
        "up_w": 0.1 * jax.random.normal(k[4], (3, 3, in_channels, in_channels),
                                        jnp.float32),
        "up_b": jnp.zeros((in_channels,), jnp.float32),
        "out_res": _init_resnet_params(k[5], in_channels, out_channels),
        "haar_m": make_inverse_haar2d_matrix(),
    }


# ----------------------------------- demo ------------------------------------

if __name__ == "__main__":
    B, Ci, Co, E, H, W = 2, 4, 4, 8, 16, 16
    key = jax.random.PRNGKey(0)
    kx, kw, kp = jax.random.split(key, 3)
    x = jax.random.normal(kx, (B, Ci, H, W), jnp.float32)          # NCHW like PyTorch
    w_in = 0.1 * jax.random.normal(kw, (B, 3, H, W), jnp.float32)  # residual coeffs
    params = init_wf_up_block_params(kp, Ci, Co, E)
    packed = pack_wf_up_block_params(params, Ci, Co, E)            # one-time packing

    fwd = jax.jit(functools.partial(
        wf_up_block_forward, packed,
        in_channels=Ci, out_channels=Co, energy_flow_size=E))
    out, w_out, coeffs = fwd(x, w_in)
    jax.block_until_ready((out, w_out, coeffs))

    assert out.shape == (B, Co, 2 * H, 2 * W)
    assert w_out.shape == (B, 3, 2 * H, 2 * W)
    assert coeffs.shape == (B, 12, H, W)
    assert all(bool(jnp.isfinite(t).all()) for t in (out, w_out, coeffs))
    print("KERNEL_OK")
</pallas_src>

<mosaic_0001>
module attributes {stable_mosaic.version = 11 : i64} {
  func.func @kernel(%arg0: i32, %arg1: memref<1x8x324xbf16, #tpu.memory_space<vmem>>, %arg2: memref<1x324xf32, #tpu.memory_space<vmem>>, %arg3: memref<1x8x324xf32, #tpu.memory_space<vmem>>, %arg4: memref<8x1xf32, #tpu.memory_space<vmem>>, %arg5: memref<8x1xf32, #tpu.memory_space<vmem>>, %arg6: memref<8x72xbf16, #tpu.memory_space<vmem>>, %arg7: memref<8x1xf32, #tpu.memory_space<vmem>>, %arg8: memref<8x1xf32, #tpu.memory_space<vmem>>, %arg9: memref<8x1xf32, #tpu.memory_space<vmem>>, %arg10: memref<8x72xbf16, #tpu.memory_space<vmem>>, %arg11: memref<8x1xf32, #tpu.memory_space<vmem>>, %arg12: memref<16x72xbf16, #tpu.memory_space<vmem>>, %arg13: memref<16x1xf32, #tpu.memory_space<vmem>>, %arg14: memref<16x16xbf16, #tpu.memory_space<vmem>>, %arg15: memref<1x16x324xf32, #tpu.memory_space<vmem>>, %arg16: memref<1x16x324xf32, #tpu.memory_space<vmem>>) attributes {dimension_semantics = [#tpu.dimension_semantics<parallel>], iteration_bounds = array<i64: 2>, scalar_prefetch = 0 : i64, scratch_operands = 0 : i64, tpu.core_type = #tpu.core_type<tc>, window_params = [{transform_indices = @transform_0, window_bounds = array<i64: 1, 8, 324>}, {pipeline_mode = #tpu.pipeline_mode<synchronous>, transform_indices = @transform_1, window_bounds = array<i64: 1, 324>}, {transform_indices = @transform_2, window_bounds = array<i64: 1, 8, 324>}, {pipeline_mode = #tpu.pipeline_mode<synchronous>, transform_indices = @transform_3, window_bounds = array<i64: 8, 1>}, {pipeline_mode = #tpu.pipeline_mode<synchronous>, transform_indices = @transform_4, window_bounds = array<i64: 8, 1>}, {pipeline_mode = #tpu.pipeline_mode<synchronous>, transform_indices = @transform_5, window_bounds = array<i64: 8, 72>}, {pipeline_mode = #tpu.pipeline_mode<synchronous>, transform_indices = @transform_6, window_bounds = array<i64: 8, 1>}, {pipeline_mode = #tpu.pipeline_mode<synchronous>, transform_indices = @transform_7, window_bounds = array<i64: 8, 1>}, {pipeline_mode = #tpu.pipeline_mode<synchronous>, transform_indices = @transform_8, window_bounds = array<i64: 8, 1>}, {pipeline_mode = #tpu.pipeline_mode<synchronous>, transform_indices = @transform_9, window_bounds = array<i64: 8, 72>}, {pipeline_mode = #tpu.pipeline_mode<synchronous>, transform_indices = @transform_10, window_bounds = array<i64: 8, 1>}, {pipeline_mode = #tpu.pipeline_mode<synchronous>, transform_indices = @transform_11, window_bounds = array<i64: 16, 72>}, {pipeline_mode = #tpu.pipeline_mode<synchronous>, transform_indices = @transform_12, window_bounds = array<i64: 16, 1>}, {pipeline_mode = #tpu.pipeline_mode<synchronous>, transform_indices = @transform_13, window_bounds = array<i64: 16, 16>}, {transform_indices = @transform_14, window_bounds = array<i64: 1, 16, 324>}, {transform_indices = @transform_15, window_bounds = array<i64: 1, 16, 324>}]} {
    %c0 = arith.constant 0 : index
    %c0_0 = arith.constant 0 : index
    %c0_1 = arith.constant 0 : index
    %0 = vector.load %arg1[%c0, %c0_0, %c0_1] : memref<1x8x324xbf16, #tpu.memory_space<vmem>>, vector<1x8x324xbf16>
    %1 = vector.shape_cast %0 : vector<1x8x324xbf16> to vector<8x324xbf16>
    %2 = arith.extf %1 : vector<8x324xbf16> to vector<8x324xf32>
    %c0_2 = arith.constant 0 : index
    %c0_3 = arith.constant 0 : index
    %3 = vector.load %arg2[%c0_2, %c0_3] : memref<1x324xf32, #tpu.memory_space<vmem>>, vector<1x324xf32>
    %c0_4 = arith.constant 0 : index
    %c0_5 = arith.constant 0 : index
    %4 = vector.load %arg4[%c0_4, %c0_5] : memref<8x1xf32, #tpu.memory_space<vmem>>, vector<8x1xf32>
    %c0_6 = arith.constant 0 : index
    %c0_7 = arith.constant 0 : index
    %5 = vector.load %arg5[%c0_6, %c0_7] : memref<8x1xf32, #tpu.memory_space<vmem>>, vector<8x1xf32>
    %c0_8 = arith.constant 0 : index
    %c0_9 = arith.constant 0 : index
    %6 = vector.load %arg6[%c0_8, %c0_9] : memref<8x72xbf16, #tpu.memory_space<vmem>>, vector<8x72xbf16>
    %c0_10 = arith.constant 0 : index
    %c0_11 = arith.constant 0 : index
    %7 = vector.load %arg7[%c0_10, %c0_11] : memref<8x1xf32, #tpu.memory_space<vmem>>, vector<8x1xf32>
    %c0_12 = arith.constant 0 : index
    %c0_13 = arith.constant 0 : index
    %8 = vector.load %arg8[%c0_12, %c0_13] : memref<8x1xf32, #tpu.memory_space<vmem>>, vector<8x1xf32>
    %c0_14 = arith.constant 0 : index
    %c0_15 = arith.constant 0 : index
    %9 = vector.load %arg9[%c0_14, %c0_15] : memref<8x1xf32, #tpu.memory_space<vmem>>, vector<8x1xf32>
    %c0_16 = arith.constant 0 : index
    %c0_17 = arith.constant 0 : index
    %10 = vector.load %arg10[%c0_16, %c0_17] : memref<8x72xbf16, #tpu.memory_space<vmem>>, vector<8x72xbf16>
    %c0_18 = arith.constant 0 : index
    %c0_19 = arith.constant 0 : index
    %11 = vector.load %arg11[%c0_18, %c0_19] : memref<8x1xf32, #tpu.memory_space<vmem>>, vector<8x1xf32>
    %cst = arith.constant dense<0.000000e+00> : vector<324xf32>
    %12 = vector.multi_reduction <add>, %2, %cst [0] : vector<8x324xf32> to vector<324xf32>
    %13 = vector.shape_cast %12 : vector<324xf32> to vector<1x324xf32>
    %cst_20 = arith.constant 1.250000e-01 : f32
    %14 = vector.broadcast %cst_20 : f32 to vector<1x324xf32>
    %15 = arith.mulf %13, %14 : vector<1x324xf32>
    %16 = arith.mulf %2, %2 : vector<8x324xf32>
    %cst_21 = arith.constant dense<0.000000e+00> : vector<324xf32>
    %17 = vector.multi_reduction <add>, %16, %cst_21 [0] : vector<8x324xf32> to vector<324xf32>
    %18 = vector.shape_cast %17 : vector<324xf32> to vector<1x324xf32>
    %cst_22 = arith.constant 1.250000e-01 : f32
    %19 = vector.broadcast %cst_22 : f32 to vector<1x324xf32>
    %20 = arith.mulf %18, %19 : vector<1x324xf32>
    %21 = arith.mulf %15, %15 : vector<1x324xf32>
    %22 = arith.subf %20, %21 : vector<1x324xf32>
    %cst_23 = arith.constant 0.000000e+00 : f32
    %23 = vector.broadcast %cst_23 : f32 to vector<1x324xf32>
    %24 = arith.maximumf %22, %23 : vector<1x324xf32>
    %25 = vector.broadcast %15 : vector<1x324xf32> to vector<8x324xf32>
    %26 = arith.subf %2, %25 : vector<8x324xf32>
    %cst_24 = arith.constant 9.99999997E-7 : f32
    %27 = vector.broadcast %cst_24 : f32 to vector<1x324xf32>
    %28 = arith.addf %24, %27 : vector<1x324xf32>
    %29 = math.rsqrt %28 : vector<1x324xf32>
    %30 = vector.broadcast %29 : vector<1x324xf32> to vector<8x324xf32>
    %31 = arith.mulf %26, %30 : vector<8x324xf32>
    %32 = vector.broadcast %4 : vector<8x1xf32> to vector<8x324xf32>
    %33 = arith.mulf %31, %32 : vector<8x324xf32>
    %34 = vector.broadcast %5 : vector<8x1xf32> to vector<8x324xf32>
    %35 = arith.addf %33, %34 : vector<8x324xf32>
    %cst_25 = arith.constant 0.000000e+00 : f32
    %36 = vector.broadcast %cst_25 : f32 to vector<8x324xf32>
    %37 = arith.subf %36, %35 : vector<8x324xf32>
    %38 = math.exp %37 : vector<8x324xf32>
    %cst_26 = arith.constant 1.000000e+00 : f32
    %39 = vector.broadcast %cst_26 : f32 to vector<8x324xf32>
    %40 = arith.addf %39, %38 : vector<8x324xf32>
    %41 = tpu.reciprocal %40 {approx = true} : vector<8x324xf32> -> vector<8x324xf32>
    %42 = arith.mulf %35, %41 : vector<8x324xf32>
    %43 = vector.broadcast %3 : vector<1x324xf32> to vector<8x324xf32>
    %44 = arith.mulf %42, %43 : vector<8x324xf32>
    %cst_27 = arith.constant 0.000000e+00 : f32
    %45 = vector.broadcast %cst_27 : f32 to vector<8x19xf32>
    %46 = tpu.concatenate %45, %44, %45 in 1 : vector<8x19xf32>, vector<8x324xf32>, vector<8x19xf32> -> vector<8x362xf32>
    %47 = vector.extract_strided_slice %46 {offsets = [0, 0], sizes = [8, 324], strides = [1, 1]} : vector<8x362xf32> to vector<8x324xf32>
    %48 = vector.extract_strided_slice %46 {offsets = [0, 1], sizes = [8, 324], strides = [1, 1]} : vector<8x362xf32> to vector<8x324xf32>
    %49 = vector.extract_strided_slice %46 {offsets = [0, 2], sizes = [8, 324], strides = [1, 1]} : vector<8x362xf32> to vector<8x324xf32>
    %50 = vector.extract_strided_slice %46 {offsets = [0, 18], sizes = [8, 324], strides = [1, 1]} : vector<8x362xf32> to vector<8x324xf32>
    %51 = vector.extract_strided_slice %46 {offsets = [0, 19], sizes = [8, 324], strides = [1, 1]} : vector<8x362xf32> to vector<8x324xf32>
    %52 = vector.extract_strided_slice %46 {offsets = [0, 20], sizes = [8, 324], strides = [1, 1]} : vector<8x362xf32> to vector<8x324xf32>
    %53 = vector.extract_strided_slice %46 {offsets = [0, 36], sizes = [8, 324], strides = [1, 1]} : vector<8x362xf32> to vector<8x324xf32>
    %54 = vector.extract_strided_slice %46 {offsets = [0, 37], sizes = [8, 324], strides = [1, 1]} : vector<8x362xf32> to vector<8x324xf32>
    %55 = vector.extract_strided_slice %46 {offsets = [0, 38], sizes = [8, 324], strides = [1, 1]} : vector<8x362xf32> to vector<8x324xf32>
    %56 = tpu.concatenate %47, %48, %49, %50, %51, %52, %53, %54, %55 in 0 : vector<8x324xf32>, vector<8x324xf32>, vector<8x324xf32>, vector<8x324xf32>, vector<8x324xf32>, vector<8x324xf32>, vector<8x324xf32>, vector<8x324xf32>, vector<8x324xf32> -> vector<72x324xf32>
    %57 = arith.truncf %56 : vector<72x324xf32> to vector<72x324xbf16>
    %cst_28 = arith.constant dense<0.000000e+00> : vector<8x324xf32>
    %58 = tpu.matmul %6, %57, %cst_28 {dimension_numbers = #tpu.dot_dimension_numbers<[1], [0], [0], [1], [0, 0, 1, 1], [], []>} : vector<8x72xbf16>, vector<72x324xbf16>, vector<8x324xf32> -> vector<8x324xf32>
    %59 = vector.broadcast %7 : vector<8x1xf32> to vector<8x324xf32>
    %60 = arith.addf %58, %59 : vector<8x324xf32>
    %cst_29 = arith.constant dense<0.000000e+00> : vector<324xf32>
    %61 = vector.multi_reduction <add>, %60, %cst_29 [0] : vector<8x324xf32> to vector<324xf32>
    %62 = vector.shape_cast %61 : vector<324xf32> to vector<1x324xf32>
    %cst_30 = arith.constant 1.250000e-01 : f32
    %63 = vector.broadcast %cst_30 : f32 to vector<1x324xf32>
    %64 = arith.mulf %62, %63 : vector<1x324xf32>
    %65 = arith.mulf %60, %60 : vector<8x324xf32>
    %cst_31 = arith.constant dense<0.000000e+00> : vector<324xf32>
    %66 = vector.multi_reduction <add>, %65, %cst_31 [0] : vector<8x324xf32> to vector<324xf32>
    %67 = vector.shape_cast %66 : vector<324xf32> to vector<1x324xf32>
    %cst_32 = arith.constant 1.250000e-01 : f32
    %68 = vector.broadcast %cst_32 : f32 to vector<1x324xf32>
    %69 = arith.mulf %67, %68 : vector<1x324xf32>
    %70 = arith.mulf %64, %64 : vector<1x324xf32>
    %71 = arith.subf %69, %70 : vector<1x324xf32>
    %cst_33 = arith.constant 0.000000e+00 : f32
    %72 = vector.broadcast %cst_33 : f32 to vector<1x324xf32>
    %73 = arith.maximumf %71, %72 : vector<1x324xf32>
    %74 = vector.broadcast %64 : vector<1x324xf32> to vector<8x324xf32>
    %75 = arith.subf %60, %74 : vector<8x324xf32>
    %cst_34 = arith.constant 9.99999997E-7 : f32
    %76 = vector.broadcast %cst_34 : f32 to vector<1x324xf32>
    %77 = arith.addf %73, %76 : vector<1x324xf32>
    %78 = math.rsqrt %77 : vector<1x324xf32>
    %79 = vector.broadcast %78 : vector<1x324xf32> to vector<8x324xf32>
    %80 = arith.mulf %75, %79 : vector<8x324xf32>
    %81 = vector.broadcast %8 : vector<8x1xf32> to vector<8x324xf32>
    %82 = arith.mulf %80, %81 : vector<8x324xf32>
    %83 = vector.broadcast %9 : vector<8x1xf32> to vector<8x324xf32>
    %84 = arith.addf %82, %83 : vector<8x324xf32>
    %cst_35 = arith.constant 0.000000e+00 : f32
    %85 = vector.broadcast %cst_35 : f32 to vector<8x324xf32>
    %86 = arith.subf %85, %84 : vector<8x324xf32>
    %87 = math.exp %86 : vector<8x324xf32>
    %cst_36 = arith.constant 1.000000e+00 : f32
    %88 = vector.broadcast %cst_36 : f32 to vector<8x324xf32>
    %89 = arith.addf %88, %87 : vector<8x324xf32>
    %90 = tpu.reciprocal %89 {approx = true} : vector<8x324xf32> -> vector<8x324xf32>
    %91 = arith.mulf %84, %90 : vector<8x324xf32>
    %92 = vector.broadcast %3 : vector<1x324xf32> to vector<8x324xf32>
    %93 = arith.mulf %91, %92 : vector<8x324xf32>
    %cst_37 = arith.constant 0.000000e+00 : f32
    %94 = vector.broadcast %cst_37 : f32 to vector<8x19xf32>
    %95 = tpu.concatenate %94, %93, %94 in 1 : vector<8x19xf32>, vector<8x324xf32>, vector<8x19xf32> -> vector<8x362xf32>
    %96 = vector.extract_strided_slice %95 {offsets = [0, 0], sizes = [8, 324], strides = [1, 1]} : vector<8x362xf32> to vector<8x324xf32>
    %97 = vector.extract_strided_slice %95 {offsets = [0, 1], sizes = [8, 324], strides = [1, 1]} : vector<8x362xf32> to vector<8x324xf32>
    %98 = vector.extract_strided_slice %95 {offsets = [0, 2], sizes = [8, 324], strides = [1, 1]} : vector<8x362xf32> to vector<8x324xf32>
    %99 = vector.extract_strided_slice %95 {offsets = [0, 18], sizes = [8, 324], strides = [1, 1]} : vector<8x362xf32> to vector<8x324xf32>
    %100 = vector.extract_strided_slice %95 {offsets = [0, 19], sizes = [8, 324], strides = [1, 1]} : vector<8x362xf32> to vector<8x324xf32>
    %101 = vector.extract_strided_slice %95 {offsets = [0, 20], sizes = [8, 324], strides = [1, 1]} : vector<8x362xf32> to vector<8x324xf32>
    %102 = vector.extract_strided_slice %95 {offsets = [0, 36], sizes = [8, 324], strides = [1, 1]} : vector<8x362xf32> to vector<8x324xf32>
    %103 = vector.extract_strided_slice %95 {offsets = [0, 37], sizes = [8, 324], strides = [1, 1]} : vector<8x362xf32> to vector<8x324xf32>
    %104 = vector.extract_strided_slice %95 {offsets = [0, 38], sizes = [8, 324], strides = [1, 1]} : vector<8x362xf32> to vector<8x324xf32>
    %105 = tpu.concatenate %96, %97, %98, %99, %100, %101, %102, %103, %104 in 0 : vector<8x324xf32>, vector<8x324xf32>, vector<8x324xf32>, vector<8x324xf32>, vector<8x324xf32>, vector<8x324xf32>, vector<8x324xf32>, vector<8x324xf32>, vector<8x324xf32> -> vector<72x324xf32>
    %106 = arith.truncf %105 : vector<72x324xf32> to vector<72x324xbf16>
    %cst_38 = arith.constant dense<0.000000e+00> : vector<8x324xf32>
    %107 = tpu.matmul %10, %106, %cst_38 {dimension_numbers = #tpu.dot_dimension_numbers<[1], [0], [0], [1], [0, 0, 1, 1], [], []>} : vector<8x72xbf16>, vector<72x324xbf16>, vector<8x324xf32> -> vector<8x324xf32>
    %108 = vector.broadcast %11 : vector<8x1xf32> to vector<8x324xf32>
    %109 = arith.addf %107, %108 : vector<8x324xf32>
    %110 = arith.addf %109, %2 : vector<8x324xf32>
    %111 = vector.broadcast %3 : vector<1x324xf32> to vector<8x324xf32>
    %112 = arith.mulf %110, %111 : vector<8x324xf32>
    %c0_39 = arith.constant 0 : index
    %c0_40 = arith.constant 0 : index
    %113 = vector.load %arg12[%c0_39, %c0_40] : memref<16x72xbf16, #tpu.memory_space<vmem>>, vector<16x72xbf16>
    %c0_41 = arith.constant 0 : index
    %c0_42 = arith.constant 0 : index
    %114 = vector.load %arg13[%c0_41, %c0_42] : memref<16x1xf32, #tpu.memory_space<vmem>>, vector<16x1xf32>
    %cst_43 = arith.constant 0.000000e+00 : f32
    %115 = vector.broadcast %cst_43 : f32 to vector<8x19xf32>
    %116 = tpu.concatenate %115, %112, %115 in 1 : vector<8x19xf32>, vector<8x324xf32>, vector<8x19xf32> -> vector<8x362xf32>
    %117 = vector.extract_strided_slice %116 {offsets = [0, 0], sizes = [8, 324], strides = [1, 1]} : vector<8x362xf32> to vector<8x324xf32>
    %118 = vector.extract_strided_slice %116 {offsets = [0, 1], sizes = [8, 324], strides = [1, 1]} : vector<8x362xf32> to vector<8x324xf32>
    %119 = vector.extract_strided_slice %116 {offsets = [0, 2], sizes = [8, 324], strides = [1, 1]} : vector<8x362xf32> to vector<8x324xf32>
    %120 = vector.extract_strided_slice %116 {offsets = [0, 18], sizes = [8, 324], strides = [1, 1]} : vector<8x362xf32> to vector<8x324xf32>
    %121 = vector.extract_strided_slice %116 {offsets = [0, 19], sizes = [8, 324], strides = [1, 1]} : vector<8x362xf32> to vector<8x324xf32>
    %122 = vector.extract_strided_slice %116 {offsets = [0, 20], sizes = [8, 324], strides = [1, 1]} : vector<8x362xf32> to vector<8x324xf32>
    %123 = vector.extract_strided_slice %116 {offsets = [0, 36], sizes = [8, 324], strides = [1, 1]} : vector<8x362xf32> to vector<8x324xf32>
    %124 = vector.extract_strided_slice %116 {offsets = [0, 37], sizes = [8, 324], strides = [1, 1]} : vector<8x362xf32> to vector<8x324xf32>
    %125 = vector.extract_strided_slice %116 {offsets = [0, 38], sizes = [8, 324], strides = [1, 1]} : vector<8x362xf32> to vector<8x324xf32>
    %126 = tpu.concatenate %117, %118, %119, %120, %121, %122, %123, %124, %125 in 0 : vector<8x324xf32>, vector<8x324xf32>, vector<8x324xf32>, vector<8x324xf32>, vector<8x324xf32>, vector<8x324xf32>, vector<8x324xf32>, vector<8x324xf32>, vector<8x324xf32> -> vector<72x324xf32>
    %127 = arith.truncf %126 : vector<72x324xf32> to vector<72x324xbf16>
    %cst_44 = arith.constant dense<0.000000e+00> : vector<16x324xf32>
    %128 = tpu.matmul %113, %127, %cst_44 {dimension_numbers = #tpu.dot_dimension_numbers<[1], [0], [0], [1], [0, 0, 1, 1], [], []>} : vector<16x72xbf16>, vector<72x324xbf16>, vector<16x324xf32> -> vector<16x324xf32>
    %129 = vector.broadcast %114 : vector<16x1xf32> to vector<16x324xf32>
    %130 = arith.addf %128, %129 : vector<16x324xf32>
    %131 = vector.extract_strided_slice %130 {offsets = [0, 0], sizes = [8, 324], strides = [1, 1]} : vector<16x324xf32> to vector<8x324xf32>
    %c0_45 = arith.constant 0 : index
    %c0_46 = arith.constant 0 : index
    %c0_47 = arith.constant 0 : index
    %132 = vector.load %arg3[%c0_45, %c0_46, %c0_47] : memref<1x8x324xf32, #tpu.memory_space<vmem>>, vector<1x8x324xf32>
    %133 = vector.shape_cast %132 : vector<1x8x324xf32> to vector<8x324xf32>
    %134 = arith.addf %131, %133 : vector<8x324xf32>
    %135 = vector.extract_strided_slice %130 {offsets = [8, 0], sizes = [8, 324], strides = [1, 1]} : vector<16x324xf32> to vector<8x324xf32>
    %136 = tpu.concatenate %134, %135 in 0 : vector<8x324xf32>, vector<8x324xf32> -> vector<16x324xf32>
    %c0_48 = arith.constant 0 : index
    %c0_49 = arith.constant 0 : index
    %c0_50 = arith.constant 0 : index
    %137 = vector.load %arg15[%c0_48, %c0_49, %c0_50] : memref<1x16x324xf32, #tpu.memory_space<vmem>>, vector<1x16x324xf32>
    %138 = vector.shape_cast %137 : vector<1x16x324xf32> to vector<16x324xf32>
    %139 = vector.shape_cast %136 : vector<16x324xf32> to vector<1x16x324xf32>
    tpu.vector_store %arg15[%c0_48, %c0_49, %c0_50], %139 {strides = array<i32>} : memref<1x16x324xf32, #tpu.memory_space<vmem>>, vector<1x16x324xf32>,
    %c0_51 = arith.constant 0 : index
    %c0_52 = arith.constant 0 : index
    %140 = vector.load %arg14[%c0_51, %c0_52] : memref<16x16xbf16, #tpu.memory_space<vmem>>, vector<16x16xbf16>
    %141 = arith.truncf %136 : vector<16x324xf32> to vector<16x324xbf16>
    %cst_53 = arith.constant dense<0.000000e+00> : vector<16x324xf32>
    %142 = tpu.matmul %140, %141, %cst_53 {dimension_numbers = #tpu.dot_dimension_numbers<[1], [0], [0], [1], [0, 0, 1, 1], [], []>} : vector<16x16xbf16>, vector<16x324xbf16>, vector<16x324xf32> -> vector<16x324xf32>
    %c0_54 = arith.constant 0 : index
    %c0_55 = arith.constant 0 : index
    %c0_56 = arith.constant 0 : index
    %143 = vector.load %arg16[%c0_54, %c0_55, %c0_56] : memref<1x16x324xf32, #tpu.memory_space<vmem>>, vector<1x16x324xf32>
    %144 = vector.shape_cast %143 : vector<1x16x324xf32> to vector<16x324xf32>
    %145 = vector.shape_cast %142 : vector<16x324xf32> to vector<1x16x324xf32>
    tpu.vector_store %arg16[%c0_54, %c0_55, %c0_56], %145 {strides = array<i32>} : memref<1x16x324xf32, #tpu.memory_space<vmem>>, vector<1x16x324xf32>,
    return
  }
  func.func @transform_0(%arg0: i32) -> (i32, i32, i32) {
    %c0_i32 = arith.constant 0 : i32
    %c0_i32_0 = arith.constant 0 : i32
    %c0_i32_1 = arith.constant 0 : i32
    return %arg0, %c0_i32, %c0_i32_0 : i32, i32, i32
  }
  func.func @transform_1(%arg0: i32) -> (i32, i32) {
    %c0_i32 = arith.constant 0 : i32
    %c0_i32_0 = arith.constant 0 : i32
    %c0_i32_1 = arith.constant 0 : i32
    return %c0_i32, %c0_i32_0 : i32, i32
  }
  func.func @transform_2(%arg0: i32) -> (i32, i32, i32) {
    %c0_i32 = arith.constant 0 : i32
    %c0_i32_0 = arith.constant 0 : i32
    %c0_i32_1 = arith.constant 0 : i32
    return %arg0, %c0_i32, %c0_i32_0 : i32, i32, i32
  }
  func.func @transform_3(%arg0: i32) -> (i32, i32) {
    %c0_i32 = arith.constant 0 : i32
    %c0_i32_0 = arith.constant 0 : i32
    %c0_i32_1 = arith.constant 0 : i32
    return %c0_i32, %c0_i32_0 : i32, i32
  }
  func.func @transform_4(%arg0: i32) -> (i32, i32) {
    %c0_i32 = arith.constant 0 : i32
    %c0_i32_0 = arith.constant 0 : i32
    %c0_i32_1 = arith.constant 0 : i32
    return %c0_i32, %c0_i32_0 : i32, i32
  }
  func.func @transform_5(%arg0: i32) -> (i32, i32) {
    %c0_i32 = arith.constant 0 : i32
    %c0_i32_0 = arith.constant 0 : i32
    %c0_i32_1 = arith.constant 0 : i32
    return %c0_i32, %c0_i32_0 : i32, i32
  }
  func.func @transform_6(%arg0: i32) -> (i32, i32) {
    %c0_i32 = arith.constant 0 : i32
    %c0_i32_0 = arith.constant 0 : i32
    %c0_i32_1 = arith.constant 0 : i32
    return %c0_i32, %c0_i32_0 : i32, i32
  }
  func.func @transform_7(%arg0: i32) -> (i32, i32) {
    %c0_i32 = arith.constant 0 : i32
    %c0_i32_0 = arith.constant 0 : i32
    %c0_i32_1 = arith.constant 0 : i32
    return %c0_i32, %c0_i32_0 : i32, i32
  }
  func.func @transform_8(%arg0: i32) -> (i32, i32) {
    %c0_i32 = arith.constant 0 : i32
    %c0_i32_0 = arith.constant 0 : i32
    %c0_i32_1 = arith.constant 0 : i32
    return %c0_i32, %c0_i32_0 : i32, i32
  }
  func.func @transform_9(%arg0: i32) -> (i32, i32) {
    %c0_i32 = arith.constant 0 : i32
    %c0_i32_0 = arith.constant 0 : i32
    %c0_i32_1 = arith.constant 0 : i32
    return %c0_i32, %c0_i32_0 : i32, i32
  }
  func.func @transform_10(%arg0: i32) -> (i32, i32) {
    %c0_i32 = arith.constant 0 : i32
    %c0_i32_0 = arith.constant 0 : i32
    %c0_i32_1 = arith.constant 0 : i32
    return %c0_i32, %c0_i32_0 : i32, i32
  }
  func.func @transform_11(%arg0: i32) -> (i32, i32) {
    %c0_i32 = arith.constant 0 : i32
    %c0_i32_0 = arith.constant 0 : i32
    %c0_i32_1 = arith.constant 0 : i32
    return %c0_i32, %c0_i32_0 : i32, i32
  }
  func.func @transform_12(%arg0: i32) -> (i32, i32) {
    %c0_i32 = arith.constant 0 : i32
    %c0_i32_0 = arith.constant 0 : i32
    %c0_i32_1 = arith.constant 0 : i32
    return %c0_i32, %c0_i32_0 : i32, i32
  }
  func.func @transform_13(%arg0: i32) -> (i32, i32) {
    %c0_i32 = arith.constant 0 : i32
    %c0_i32_0 = arith.constant 0 : i32
    %c0_i32_1 = arith.constant 0 : i32
    return %c0_i32, %c0_i32_0 : i32, i32
  }
  func.func @transform_14(%arg0: i32) -> (i32, i32, i32) {
    %c0_i32 = arith.constant 0 : i32
    %c0_i32_0 = arith.constant 0 : i32
    %c0_i32_1 = arith.constant 0 : i32
    return %arg0, %c0_i32, %c0_i32_0 : i32, i32, i32
  }
  func.func @transform_15(%arg0: i32) -> (i32, i32, i32) {
    %c0_i32 = arith.constant 0 : i32
    %c0_i32_0 = arith.constant 0 : i32
    %c0_i32_1 = arith.constant 0 : i32
    return %arg0, %c0_i32, %c0_i32_0 : i32, i32, i32
  }
}

module attributes {stable_mosaic.version = 11 : i64} {
  func.func @kernel(%arg0: i32, %arg1: memref<1x8x324xf32, #tpu.memory_space<vmem>>, %arg2: memref<1x324xf32, #tpu.memory_space<vmem>>, %arg3: memref<8x1xf32, #tpu.memory_space<vmem>>, %arg4: memref<8x1xf32, #tpu.memory_space<vmem>>, %arg5: memref<16x72xbf16, #tpu.memory_space<vmem>>, %arg6: memref<16x1xf32, #tpu.memory_space<vmem>>, %arg7: memref<16x1xf32, #tpu.memory_space<vmem>>, %arg8: memref<16x1xf32, #tpu.memory_space<vmem>>, %arg9: memref<16x144xbf16, #tpu.memory_space<vmem>>, %arg10: memref<16x1xf32, #tpu.memory_space<vmem>>, %arg11: memref<16x8xbf16, #tpu.memory_space<vmem>>, %arg12: memref<16x1xf32, #tpu.memory_space<vmem>>, %arg13: memref<1x8x324xbf16, #tpu.memory_space<vmem>>, %arg14: memref<1x8x324xbf16, #tpu.memory_space<vmem>>) attributes {dimension_semantics = [#tpu.dimension_semantics<parallel>], iteration_bounds = array<i64: 2>, scalar_prefetch = 0 : i64, scratch_operands = 0 : i64, tpu.core_type = #tpu.core_type<tc>, window_params = [{transform_indices = @transform_0, window_bounds = array<i64: 1, 8, 324>}, {pipeline_mode = #tpu.pipeline_mode<synchronous>, transform_indices = @transform_1, window_bounds = array<i64: 1, 324>}, {pipeline_mode = #tpu.pipeline_mode<synchronous>, transform_indices = @transform_2, window_bounds = array<i64: 8, 1>}, {pipeline_mode = #tpu.pipeline_mode<synchronous>, transform_indices = @transform_3, window_bounds = array<i64: 8, 1>}, {pipeline_mode = #tpu.pipeline_mode<synchronous>, transform_indices = @transform_4, window_bounds = array<i64: 16, 72>}, {pipeline_mode = #tpu.pipeline_mode<synchronous>, transform_indices = @transform_5, window_bounds = array<i64: 16, 1>}, {pipeline_mode = #tpu.pipeline_mode<synchronous>, transform_indices = @transform_6, window_bounds = array<i64: 16, 1>}, {pipeline_mode = #tpu.pipeline_mode<synchronous>, transform_indices = @transform_7, window_bounds = array<i64: 16, 1>}, {pipeline_mode = #tpu.pipeline_mode<synchronous>, transform_indices = @transform_8, window_bounds = array<i64: 16, 144>}, {pipeline_mode = #tpu.pipeline_mode<synchronous>, transform_indices = @transform_9, window_bounds = array<i64: 16, 1>}, {pipeline_mode = #tpu.pipeline_mode<synchronous>, transform_indices = @transform_10, window_bounds = array<i64: 16, 8>}, {pipeline_mode = #tpu.pipeline_mode<synchronous>, transform_indices = @transform_11, window_bounds = array<i64: 16, 1>}, {transform_indices = @transform_12, window_bounds = array<i64: 1, 8, 324>}, {transform_indices = @transform_13, window_bounds = array<i64: 1, 8, 324>}]} {
    %c0 = arith.constant 0 : index
    %c0_0 = arith.constant 0 : index
    %c0_1 = arith.constant 0 : index
    %0 = vector.load %arg1[%c0, %c0_0, %c0_1] : memref<1x8x324xf32, #tpu.memory_space<vmem>>, vector<1x8x324xf32>
    %1 = vector.shape_cast %0 : vector<1x8x324xf32> to vector<8x324xf32>
    %c0_2 = arith.constant 0 : index
    %c0_3 = arith.constant 0 : index
    %2 = vector.load %arg2[%c0_2, %c0_3] : memref<1x324xf32, #tpu.memory_space<vmem>>, vector<1x324xf32>
    %c0_4 = arith.constant 0 : index
    %c0_5 = arith.constant 0 : index
    %3 = vector.load %arg3[%c0_4, %c0_5] : memref<8x1xf32, #tpu.memory_space<vmem>>, vector<8x1xf32>
    %c0_6 = arith.constant 0 : index
    %c0_7 = arith.constant 0 : index
    %4 = vector.load %arg4[%c0_6, %c0_7] : memref<8x1xf32, #tpu.memory_space<vmem>>, vector<8x1xf32>
    %c0_8 = arith.constant 0 : index
    %c0_9 = arith.constant 0 : index
    %5 = vector.load %arg5[%c0_8, %c0_9] : memref<16x72xbf16, #tpu.memory_space<vmem>>, vector<16x72xbf16>
    %c0_10 = arith.constant 0 : index
    %c0_11 = arith.constant 0 : index
    %6 = vector.load %arg6[%c0_10, %c0_11] : memref<16x1xf32, #tpu.memory_space<vmem>>, vector<16x1xf32>
    %c0_12 = arith.constant 0 : index
    %c0_13 = arith.constant 0 : index
    %7 = vector.load %arg7[%c0_12, %c0_13] : memref<16x1xf32, #tpu.memory_space<vmem>>, vector<16x1xf32>
    %c0_14 = arith.constant 0 : index
    %c0_15 = arith.constant 0 : index
    %8 = vector.load %arg8[%c0_14, %c0_15] : memref<16x1xf32, #tpu.memory_space<vmem>>, vector<16x1xf32>
    %c0_16 = arith.constant 0 : index
    %c0_17 = arith.constant 0 : index
    %9 = vector.load %arg9[%c0_16, %c0_17] : memref<16x144xbf16, #tpu.memory_space<vmem>>, vector<16x144xbf16>
    %c0_18 = arith.constant 0 : index
    %c0_19 = arith.constant 0 : index
    %10 = vector.load %arg10[%c0_18, %c0_19] : memref<16x1xf32, #tpu.memory_space<vmem>>, vector<16x1xf32>
    %c0_20 = arith.constant 0 : index
    %c0_21 = arith.constant 0 : index
    %11 = vector.load %arg11[%c0_20, %c0_21] : memref<16x8xbf16, #tpu.memory_space<vmem>>, vector<16x8xbf16>
    %c0_22 = arith.constant 0 : index
    %c0_23 = arith.constant 0 : index
    %12 = vector.load %arg12[%c0_22, %c0_23] : memref<16x1xf32, #tpu.memory_space<vmem>>, vector<16x1xf32>
    %cst = arith.constant dense<0.000000e+00> : vector<324xf32>
    %13 = vector.multi_reduction <add>, %1, %cst [0] : vector<8x324xf32> to vector<324xf32>
    %14 = vector.shape_cast %13 : vector<324xf32> to vector<1x324xf32>
    %cst_24 = arith.constant 2.500000e-01 : f32
    %15 = vector.broadcast %cst_24 : f32 to vector<1x324xf32>
    %16 = arith.mulf %14, %15 : vector<1x324xf32>
    %17 = arith.mulf %1, %1 : vector<8x324xf32>
    %cst_25 = arith.constant dense<0.000000e+00> : vector<324xf32>
    %18 = vector.multi_reduction <add>, %17, %cst_25 [0] : vector<8x324xf32> to vector<324xf32>
    %19 = vector.shape_cast %18 : vector<324xf32> to vector<1x324xf32>
    %cst_26 = arith.constant 2.500000e-01 : f32
    %20 = vector.broadcast %cst_26 : f32 to vector<1x324xf32>
    %21 = arith.mulf %19, %20 : vector<1x324xf32>
    %22 = arith.mulf %16, %16 : vector<1x324xf32>
    %23 = arith.subf %21, %22 : vector<1x324xf32>
    %cst_27 = arith.constant 0.000000e+00 : f32
    %24 = vector.broadcast %cst_27 : f32 to vector<1x324xf32>
    %25 = arith.maximumf %23, %24 : vector<1x324xf32>
    %26 = vector.broadcast %16 : vector<1x324xf32> to vector<8x324xf32>
    %27 = arith.subf %1, %26 : vector<8x324xf32>
    %cst_28 = arith.constant 9.99999997E-7 : f32
    %28 = vector.broadcast %cst_28 : f32 to vector<1x324xf32>
    %29 = arith.addf %25, %28 : vector<1x324xf32>
    %30 = math.rsqrt %29 : vector<1x324xf32>
    %31 = vector.broadcast %30 : vector<1x324xf32> to vector<8x324xf32>
    %32 = arith.mulf %27, %31 : vector<8x324xf32>
    %33 = vector.broadcast %3 : vector<8x1xf32> to vector<8x324xf32>
    %34 = arith.mulf %32, %33 : vector<8x324xf32>
    %35 = vector.broadcast %4 : vector<8x1xf32> to vector<8x324xf32>
    %36 = arith.addf %34, %35 : vector<8x324xf32>
    %cst_29 = arith.constant 0.000000e+00 : f32
    %37 = vector.broadcast %cst_29 : f32 to vector<8x324xf32>
    %38 = arith.subf %37, %36 : vector<8x324xf32>
    %39 = math.exp %38 : vector<8x324xf32>
    %cst_30 = arith.constant 1.000000e+00 : f32
    %40 = vector.broadcast %cst_30 : f32 to vector<8x324xf32>
    %41 = arith.addf %40, %39 : vector<8x324xf32>
    %42 = tpu.reciprocal %41 {approx = true} : vector<8x324xf32> -> vector<8x324xf32>
    %43 = arith.mulf %36, %42 : vector<8x324xf32>
    %44 = vector.broadcast %2 : vector<1x324xf32> to vector<8x324xf32>
    %45 = arith.mulf %43, %44 : vector<8x324xf32>
    %cst_31 = arith.constant 0.000000e+00 : f32
    %46 = vector.broadcast %cst_31 : f32 to vector<8x19xf32>
    %47 = tpu.concatenate %46, %45, %46 in 1 : vector<8x19xf32>, vector<8x324xf32>, vector<8x19xf32> -> vector<8x362xf32>
    %48 = vector.extract_strided_slice %47 {offsets = [0, 0], sizes = [8, 324], strides = [1, 1]} : vector<8x362xf32> to vector<8x324xf32>
    %49 = vector.extract_strided_slice %47 {offsets = [0, 1], sizes = [8, 324], strides = [1, 1]} : vector<8x362xf32> to vector<8x324xf32>
    %50 = vector.extract_strided_slice %47 {offsets = [0, 2], sizes = [8, 324], strides = [1, 1]} : vector<8x362xf32> to vector<8x324xf32>
    %51 = vector.extract_strided_slice %47 {offsets = [0, 18], sizes = [8, 324], strides = [1, 1]} : vector<8x362xf32> to vector<8x324xf32>
    %52 = vector.extract_strided_slice %47 {offsets = [0, 19], sizes = [8, 324], strides = [1, 1]} : vector<8x362xf32> to vector<8x324xf32>
    %53 = vector.extract_strided_slice %47 {offsets = [0, 20], sizes = [8, 324], strides = [1, 1]} : vector<8x362xf32> to vector<8x324xf32>
    %54 = vector.extract_strided_slice %47 {offsets = [0, 36], sizes = [8, 324], strides = [1, 1]} : vector<8x362xf32> to vector<8x324xf32>
    %55 = vector.extract_strided_slice %47 {offsets = [0, 37], sizes = [8, 324], strides = [1, 1]} : vector<8x362xf32> to vector<8x324xf32>
    %56 = vector.extract_strided_slice %47 {offsets = [0, 38], sizes = [8, 324], strides = [1, 1]} : vector<8x362xf32> to vector<8x324xf32>
    %57 = tpu.concatenate %48, %49, %50, %51, %52, %53, %54, %55, %56 in 0 : vector<8x324xf32>, vector<8x324xf32>, vector<8x324xf32>, vector<8x324xf32>, vector<8x324xf32>, vector<8x324xf32>, vector<8x324xf32>, vector<8x324xf32>, vector<8x324xf32> -> vector<72x324xf32>
    %58 = arith.truncf %57 : vector<72x324xf32> to vector<72x324xbf16>
    %cst_32 = arith.constant dense<0.000000e+00> : vector<16x324xf32>
    %59 = tpu.matmul %5, %58, %cst_32 {dimension_numbers = #tpu.dot_dimension_numbers<[1], [0], [0], [1], [0, 0, 1, 1], [], []>} : vector<16x72xbf16>, vector<72x324xbf16>, vector<16x324xf32> -> vector<16x324xf32>
    %60 = vector.broadcast %6 : vector<16x1xf32> to vector<16x324xf32>
    %61 = arith.addf %59, %60 : vector<16x324xf32>
    %cst_33 = arith.constant dense<0.000000e+00> : vector<324xf32>
    %62 = vector.multi_reduction <add>, %61, %cst_33 [0] : vector<16x324xf32> to vector<324xf32>
    %63 = vector.shape_cast %62 : vector<324xf32> to vector<1x324xf32>
    %cst_34 = arith.constant 0.0833333358 : f32
    %64 = vector.broadcast %cst_34 : f32 to vector<1x324xf32>
    %65 = arith.mulf %63, %64 : vector<1x324xf32>
    %66 = arith.mulf %61, %61 : vector<16x324xf32>
    %cst_35 = arith.constant dense<0.000000e+00> : vector<324xf32>
    %67 = vector.multi_reduction <add>, %66, %cst_35 [0] : vector<16x324xf32> to vector<324xf32>
    %68 = vector.shape_cast %67 : vector<324xf32> to vector<1x324xf32>
    %cst_36 = arith.constant 0.0833333358 : f32
    %69 = vector.broadcast %cst_36 : f32 to vector<1x324xf32>
    %70 = arith.mulf %68, %69 : vector<1x324xf32>
    %71 = arith.mulf %65, %65 : vector<1x324xf32>
    %72 = arith.subf %70, %71 : vector<1x324xf32>
    %cst_37 = arith.constant 0.000000e+00 : f32
    %73 = vector.broadcast %cst_37 : f32 to vector<1x324xf32>
    %74 = arith.maximumf %72, %73 : vector<1x324xf32>
    %75 = vector.broadcast %65 : vector<1x324xf32> to vector<16x324xf32>
    %76 = arith.subf %61, %75 : vector<16x324xf32>
    %cst_38 = arith.constant 9.99999997E-7 : f32
    %77 = vector.broadcast %cst_38 : f32 to vector<1x324xf32>
    %78 = arith.addf %74, %77 : vector<1x324xf32>
    %79 = math.rsqrt %78 : vector<1x324xf32>
    %80 = vector.broadcast %79 : vector<1x324xf32> to vector<16x324xf32>
    %81 = arith.mulf %76, %80 : vector<16x324xf32>
    %82 = vector.broadcast %7 : vector<16x1xf32> to vector<16x324xf32>
    %83 = arith.mulf %81, %82 : vector<16x324xf32>
    %84 = vector.broadcast %8 : vector<16x1xf32> to vector<16x324xf32>
    %85 = arith.addf %83, %84 : vector<16x324xf32>
    %cst_39 = arith.constant 0.000000e+00 : f32
    %86 = vector.broadcast %cst_39 : f32 to vector<16x324xf32>
    %87 = arith.subf %86, %85 : vector<16x324xf32>
    %88 = math.exp %87 : vector<16x324xf32>
    %cst_40 = arith.constant 1.000000e+00 : f32
    %89 = vector.broadcast %cst_40 : f32 to vector<16x324xf32>
    %90 = arith.addf %89, %88 : vector<16x324xf32>
    %91 = tpu.reciprocal %90 {approx = true} : vector<16x324xf32> -> vector<16x324xf32>
    %92 = arith.mulf %85, %91 : vector<16x324xf32>
    %93 = vector.broadcast %2 : vector<1x324xf32> to vector<16x324xf32>
    %94 = arith.mulf %92, %93 : vector<16x324xf32>
    %cst_41 = arith.constant 0.000000e+00 : f32
    %95 = vector.broadcast %cst_41 : f32 to vector<16x19xf32>
    %96 = tpu.concatenate %95, %94, %95 in 1 : vector<16x19xf32>, vector<16x324xf32>, vector<16x19xf32> -> vector<16x362xf32>
    %97 = vector.extract_strided_slice %96 {offsets = [0, 0], sizes = [16, 324], strides = [1, 1]} : vector<16x362xf32> to vector<16x324xf32>
    %98 = vector.extract_strided_slice %96 {offsets = [0, 1], sizes = [16, 324], strides = [1, 1]} : vector<16x362xf32> to vector<16x324xf32>
    %99 = vector.extract_strided_slice %96 {offsets = [0, 2], sizes = [16, 324], strides = [1, 1]} : vector<16x362xf32> to vector<16x324xf32>
    %100 = vector.extract_strided_slice %96 {offsets = [0, 18], sizes = [16, 324], strides = [1, 1]} : vector<16x362xf32> to vector<16x324xf32>
    %101 = vector.extract_strided_slice %96 {offsets = [0, 19], sizes = [16, 324], strides = [1, 1]} : vector<16x362xf32> to vector<16x324xf32>
    %102 = vector.extract_strided_slice %96 {offsets = [0, 20], sizes = [16, 324], strides = [1, 1]} : vector<16x362xf32> to vector<16x324xf32>
    %103 = vector.extract_strided_slice %96 {offsets = [0, 36], sizes = [16, 324], strides = [1, 1]} : vector<16x362xf32> to vector<16x324xf32>
    %104 = vector.extract_strided_slice %96 {offsets = [0, 37], sizes = [16, 324], strides = [1, 1]} : vector<16x362xf32> to vector<16x324xf32>
    %105 = vector.extract_strided_slice %96 {offsets = [0, 38], sizes = [16, 324], strides = [1, 1]} : vector<16x362xf32> to vector<16x324xf32>
    %106 = tpu.concatenate %97, %98, %99, %100, %101, %102, %103, %104, %105 in 0 : vector<16x324xf32>, vector<16x324xf32>, vector<16x324xf32>, vector<16x324xf32>, vector<16x324xf32>, vector<16x324xf32>, vector<16x324xf32>, vector<16x324xf32>, vector<16x324xf32> -> vector<144x324xf32>
    %107 = arith.truncf %106 : vector<144x324xf32> to vector<144x324xbf16>
    %cst_42 = arith.constant dense<0.000000e+00> : vector<16x324xf32>
    %108 = tpu.matmul %9, %107, %cst_42 {dimension_numbers = #tpu.dot_dimension_numbers<[1], [0], [0], [1], [0, 0, 1, 1], [], []>} : vector<16x144xbf16>, vector<144x324xbf16>, vector<16x324xf32> -> vector<16x324xf32>
    %109 = vector.broadcast %10 : vector<16x1xf32> to vector<16x324xf32>
    %110 = arith.addf %108, %109 : vector<16x324xf32>
    %111 = arith.truncf %1 : vector<8x324xf32> to vector<8x324xbf16>
    %cst_43 = arith.constant dense<0.000000e+00> : vector<16x324xf32>
    %112 = tpu.matmul %11, %111, %cst_43 {dimension_numbers = #tpu.dot_dimension_numbers<[1], [0], [0], [1], [0, 0, 1, 1], [], []>} : vector<16x8xbf16>, vector<8x324xbf16>, vector<16x324xf32> -> vector<16x324xf32>
    %113 = vector.broadcast %12 : vector<16x1xf32> to vector<16x324xf32>
    %114 = arith.addf %112, %113 : vector<16x324xf32>
    %115 = arith.addf %110, %114 : vector<16x324xf32>
    %116 = vector.broadcast %2 : vector<1x324xf32> to vector<16x324xf32>
    %117 = arith.mulf %115, %116 : vector<16x324xf32>
    %118 = vector.extract_strided_slice %117 {offsets = [0, 0], sizes = [8, 324], strides = [1, 1]} : vector<16x324xf32> to vector<8x324xf32>
    %119 = arith.truncf %118 : vector<8x324xf32> to vector<8x324xbf16>
    %c0_44 = arith.constant 0 : index
    %c0_45 = arith.constant 0 : index
    %c0_46 = arith.constant 0 : index
    %120 = vector.load %arg13[%c0_44, %c0_45, %c0_46] : memref<1x8x324xbf16, #tpu.memory_space<vmem>>, vector<1x8x324xbf16>
    %121 = vector.shape_cast %120 : vector<1x8x324xbf16> to vector<8x324xbf16>
    %122 = vector.shape_cast %119 : vector<8x324xbf16> to vector<1x8x324xbf16>
    tpu.vector_store %arg13[%c0_44, %c0_45, %c0_46], %122 {strides = array<i32>} : memref<1x8x324xbf16, #tpu.memory_space<vmem>>, vector<1x8x324xbf16>,
    %123 = vector.extract_strided_slice %117 {offsets = [8, 0], sizes = [8, 324], strides = [1, 1]} : vector<16x324xf32> to vector<8x324xf32>
    %124 = arith.truncf %123 : vector<8x324xf32> to vector<8x324xbf16>
    %c0_47 = arith.constant 0 : index
    %c0_48 = arith.constant 0 : index
    %c0_49 = arith.constant 0 : index
    %125 = vector.load %arg14[%c0_47, %c0_48, %c0_49] : memref<1x8x324xbf16, #tpu.memory_space<vmem>>, vector<1x8x324xbf16>
    %126 = vector.shape_cast %125 : vector<1x8x324xbf16> to vector<8x324xbf16>
    %127 = vector.shape_cast %124 : vector<8x324xbf16> to vector<1x8x324xbf16>
    tpu.vector_store %arg14[%c0_47, %c0_48, %c0_49], %127 {strides = array<i32>} : memref<1x8x324xbf16, #tpu.memory_space<vmem>>, vector<1x8x324xbf16>,
    return
  }
  func.func @transform_0(%arg0: i32) -> (i32, i32, i32) {
    %c0_i32 = arith.constant 0 : i32
    %c0_i32_0 = arith.constant 0 : i32
    %c0_i32_1 = arith.constant 0 : i32
    return %arg0, %c0_i32, %c0_i32_0 : i32, i32, i32
  }
  func.func @transform_1(%arg0: i32) -> (i32, i32) {
    %c0_i32 = arith.constant 0 : i32
    %c0_i32_0 = arith.constant 0 : i32
    %c0_i32_1 = arith.constant 0 : i32
    return %c0_i32, %c0_i32_0 : i32, i32
  }
  func.func @transform_2(%arg0: i32) -> (i32, i32) {
    %c0_i32 = arith.constant 0 : i32
    %c0_i32_0 = arith.constant 0 : i32
    %c0_i32_1 = arith.constant 0 : i32
    return %c0_i32, %c0_i32_0 : i32, i32
  }
  func.func @transform_3(%arg0: i32) -> (i32, i32) {
    %c0_i32 = arith.constant 0 : i32
    %c0_i32_0 = arith.constant 0 : i32
    %c0_i32_1 = arith.constant 0 : i32
    return %c0_i32, %c0_i32_0 : i32, i32
  }
  func.func @transform_4(%arg0: i32) -> (i32, i32) {
    %c0_i32 = arith.constant 0 : i32
    %c0_i32_0 = arith.constant 0 : i32
    %c0_i32_1 = arith.constant 0 : i32
    return %c0_i32, %c0_i32_0 : i32, i32
  }
  func.func @transform_5(%arg0: i32) -> (i32, i32) {
    %c0_i32 = arith.constant 0 : i32
    %c0_i32_0 = arith.constant 0 : i32
    %c0_i32_1 = arith.constant 0 : i32
    return %c0_i32, %c0_i32_0 : i32, i32
  }
  func.func @transform_6(%arg0: i32) -> (i32, i32) {
    %c0_i32 = arith.constant 0 : i32
    %c0_i32_0 = arith.constant 0 : i32
    %c0_i32_1 = arith.constant 0 : i32
    return %c0_i32, %c0_i32_0 : i32, i32
  }
  func.func @transform_7(%arg0: i32) -> (i32, i32) {
    %c0_i32 = arith.constant 0 : i32
    %c0_i32_0 = arith.constant 0 : i32
    %c0_i32_1 = arith.constant 0 : i32
    return %c0_i32, %c0_i32_0 : i32, i32
  }
  func.func @transform_8(%arg0: i32) -> (i32, i32) {
    %c0_i32 = arith.constant 0 : i32
    %c0_i32_0 = arith.constant 0 : i32
    %c0_i32_1 = arith.constant 0 : i32
    return %c0_i32, %c0_i32_0 : i32, i32
  }
  func.func @transform_9(%arg0: i32) -> (i32, i32) {
    %c0_i32 = arith.constant 0 : i32
    %c0_i32_0 = arith.constant 0 : i32
    %c0_i32_1 = arith.constant 0 : i32
    return %c0_i32, %c0_i32_0 : i32, i32
  }
  func.func @transform_10(%arg0: i32) -> (i32, i32) {
    %c0_i32 = arith.constant 0 : i32
    %c0_i32_0 = arith.constant 0 : i32
    %c0_i32_1 = arith.constant 0 : i32
    return %c0_i32, %c0_i32_0 : i32, i32
  }
  func.func @transform_11(%arg0: i32) -> (i32, i32) {
    %c0_i32 = arith.constant 0 : i32
    %c0_i32_0 = arith.constant 0 : i32
    %c0_i32_1 = arith.constant 0 : i32
    return %c0_i32, %c0_i32_0 : i32, i32
  }
  func.func @transform_12(%arg0: i32) -> (i32, i32, i32) {
    %c0_i32 = arith.constant 0 : i32
    %c0_i32_0 = arith.constant 0 : i32
    %c0_i32_1 = arith.constant 0 : i32
    return %arg0, %c0_i32, %c0_i32_0 : i32, i32, i32
  }
  func.func @transform_13(%arg0: i32) -> (i32, i32, i32) {
    %c0_i32 = arith.constant 0 : i32
    %c0_i32_0 = arith.constant 0 : i32
    %c0_i32_1 = arith.constant 0 : i32
    return %arg0, %c0_i32, %c0_i32_0 : i32, i32, i32
  }
}

module attributes {stable_mosaic.version = 11 : i64} {
  func.func @kernel(%arg0: i32, %arg1: memref<1x8x1156xbf16, #tpu.memory_space<vmem>>, %arg2: memref<1x1156xf32, #tpu.memory_space<vmem>>, %arg3: memref<8x72xbf16, #tpu.memory_space<vmem>>, %arg4: memref<8x1xf32, #tpu.memory_space<vmem>>, %arg5: memref<8x1xf32, #tpu.memory_space<vmem>>, %arg6: memref<8x1xf32, #tpu.memory_space<vmem>>, %arg7: memref<8x72xbf16, #tpu.memory_space<vmem>>, %arg8: memref<8x1xf32, #tpu.memory_space<vmem>>, %arg9: memref<8x1xf32, #tpu.memory_space<vmem>>, %arg10: memref<8x1xf32, #tpu.memory_space<vmem>>, %arg11: memref<8x72xbf16, #tpu.memory_space<vmem>>, %arg12: memref<8x1xf32, #tpu.memory_space<vmem>>, %arg13: memref<1x8x1156xf32, #tpu.memory_space<vmem>>) attributes {dimension_semantics = [#tpu.dimension_semantics<parallel>], iteration_bounds = array<i64: 2>, scalar_prefetch = 0 : i64, scratch_operands = 0 : i64, tpu.core_type = #tpu.core_type<tc>, window_params = [{transform_indices = @transform_0, window_bounds = array<i64: 1, 8, 1156>}, {pipeline_mode = #tpu.pipeline_mode<synchronous>, transform_indices = @transform_1, window_bounds = array<i64: 1, 1156>}, {pipeline_mode = #tpu.pipeline_mode<synchronous>, transform_indices = @transform_2, window_bounds = array<i64: 8, 72>}, {pipeline_mode = #tpu.pipeline_mode<synchronous>, transform_indices = @transform_3, window_bounds = array<i64: 8, 1>}, {pipeline_mode = #tpu.pipeline_mode<synchronous>, transform_indices = @transform_4, window_bounds = array<i64: 8, 1>}, {pipeline_mode = #tpu.pipeline_mode<synchronous>, transform_indices = @transform_5, window_bounds = array<i64: 8, 1>}, {pipeline_mode = #tpu.pipeline_mode<synchronous>, transform_indices = @transform_6, window_bounds = array<i64: 8, 72>}, {pipeline_mode = #tpu.pipeline_mode<synchronous>, transform_indices = @transform_7, window_bounds = array<i64: 8, 1>}, {pipeline_mode = #tpu.pipeline_mode<synchronous>, transform_indices = @transform_8, window_bounds = array<i64: 8, 1>}, {pipeline_mode = #tpu.pipeline_mode<synchronous>, transform_indices = @transform_9, window_bounds = array<i64: 8, 1>}, {pipeline_mode = #tpu.pipeline_mode<synchronous>, transform_indices = @transform_10, window_bounds = array<i64: 8, 72>}, {pipeline_mode = #tpu.pipeline_mode<synchronous>, transform_indices = @transform_11, window_bounds = array<i64: 8, 1>}, {transform_indices = @transform_12, window_bounds = array<i64: 1, 8, 1156>}]} {
    %c0 = arith.constant 0 : index
    %c0_0 = arith.constant 0 : index
    %c0_1 = arith.constant 0 : index
    %0 = vector.load %arg1[%c0, %c0_0, %c0_1] : memref<1x8x1156xbf16, #tpu.memory_space<vmem>>, vector<1x8x1156xbf16>
    %1 = vector.shape_cast %0 : vector<1x8x1156xbf16> to vector<8x1156xbf16>
    %2 = arith.extf %1 : vector<8x1156xbf16> to vector<8x1156xf32>
    %c0_2 = arith.constant 0 : index
    %c0_3 = arith.constant 0 : index
    %3 = vector.load %arg2[%c0_2, %c0_3] : memref<1x1156xf32, #tpu.memory_space<vmem>>, vector<1x1156xf32>
    %c0_4 = arith.constant 0 : index
    %c0_5 = arith.constant 0 : index
    %4 = vector.load %arg3[%c0_4, %c0_5] : memref<8x72xbf16, #tpu.memory_space<vmem>>, vector<8x72xbf16>
    %c0_6 = arith.constant 0 : index
    %c0_7 = arith.constant 0 : index
    %5 = vector.load %arg4[%c0_6, %c0_7] : memref<8x1xf32, #tpu.memory_space<vmem>>, vector<8x1xf32>
    %cst = arith.constant 0.000000e+00 : f32
    %6 = vector.broadcast %cst : f32 to vector<8x35xf32>
    %7 = tpu.concatenate %6, %2, %6 in 1 : vector<8x35xf32>, vector<8x1156xf32>, vector<8x35xf32> -> vector<8x1226xf32>
    %8 = vector.extract_strided_slice %7 {offsets = [0, 0], sizes = [8, 1156], strides = [1, 1]} : vector<8x1226xf32> to vector<8x1156xf32>
    %9 = vector.extract_strided_slice %7 {offsets = [0, 1], sizes = [8, 1156], strides = [1, 1]} : vector<8x1226xf32> to vector<8x1156xf32>
    %10 = vector.extract_strided_slice %7 {offsets = [0, 2], sizes = [8, 1156], strides = [1, 1]} : vector<8x1226xf32> to vector<8x1156xf32>
    %11 = vector.extract_strided_slice %7 {offsets = [0, 34], sizes = [8, 1156], strides = [1, 1]} : vector<8x1226xf32> to vector<8x1156xf32>
    %12 = vector.extract_strided_slice %7 {offsets = [0, 35], sizes = [8, 1156], strides = [1, 1]} : vector<8x1226xf32> to vector<8x1156xf32>
    %13 = vector.extract_strided_slice %7 {offsets = [0, 36], sizes = [8, 1156], strides = [1, 1]} : vector<8x1226xf32> to vector<8x1156xf32>
    %14 = vector.extract_strided_slice %7 {offsets = [0, 68], sizes = [8, 1156], strides = [1, 1]} : vector<8x1226xf32> to vector<8x1156xf32>
    %15 = vector.extract_strided_slice %7 {offsets = [0, 69], sizes = [8, 1156], strides = [1, 1]} : vector<8x1226xf32> to vector<8x1156xf32>
    %16 = vector.extract_strided_slice %7 {offsets = [0, 70], sizes = [8, 1156], strides = [1, 1]} : vector<8x1226xf32> to vector<8x1156xf32>
    %17 = tpu.concatenate %8, %9, %10, %11, %12, %13, %14, %15, %16 in 0 : vector<8x1156xf32>, vector<8x1156xf32>, vector<8x1156xf32>, vector<8x1156xf32>, vector<8x1156xf32>, vector<8x1156xf32>, vector<8x1156xf32>, vector<8x1156xf32>, vector<8x1156xf32> -> vector<72x1156xf32>
    %18 = arith.truncf %17 : vector<72x1156xf32> to vector<72x1156xbf16>
    %cst_8 = arith.constant dense<0.000000e+00> : vector<8x1156xf32>
    %19 = tpu.matmul %4, %18, %cst_8 {dimension_numbers = #tpu.dot_dimension_numbers<[1], [0], [0], [1], [0, 0, 1, 1], [], []>} : vector<8x72xbf16>, vector<72x1156xbf16>, vector<8x1156xf32> -> vector<8x1156xf32>
    %20 = vector.broadcast %5 : vector<8x1xf32> to vector<8x1156xf32>
    %21 = arith.addf %19, %20 : vector<8x1156xf32>
    %c0_9 = arith.constant 0 : index
    %c0_10 = arith.constant 0 : index
    %22 = vector.load %arg5[%c0_9, %c0_10] : memref<8x1xf32, #tpu.memory_space<vmem>>, vector<8x1xf32>
    %c0_11 = arith.constant 0 : index
    %c0_12 = arith.constant 0 : index
    %23 = vector.load %arg6[%c0_11, %c0_12] : memref<8x1xf32, #tpu.memory_space<vmem>>, vector<8x1xf32>
    %c0_13 = arith.constant 0 : index
    %c0_14 = arith.constant 0 : index
    %24 = vector.load %arg7[%c0_13, %c0_14] : memref<8x72xbf16, #tpu.memory_space<vmem>>, vector<8x72xbf16>
    %c0_15 = arith.constant 0 : index
    %c0_16 = arith.constant 0 : index
    %25 = vector.load %arg8[%c0_15, %c0_16] : memref<8x1xf32, #tpu.memory_space<vmem>>, vector<8x1xf32>
    %c0_17 = arith.constant 0 : index
    %c0_18 = arith.constant 0 : index
    %26 = vector.load %arg9[%c0_17, %c0_18] : memref<8x1xf32, #tpu.memory_space<vmem>>, vector<8x1xf32>
    %c0_19 = arith.constant 0 : index
    %c0_20 = arith.constant 0 : index
    %27 = vector.load %arg10[%c0_19, %c0_20] : memref<8x1xf32, #tpu.memory_space<vmem>>, vector<8x1xf32>
    %c0_21 = arith.constant 0 : index
    %c0_22 = arith.constant 0 : index
    %28 = vector.load %arg11[%c0_21, %c0_22] : memref<8x72xbf16, #tpu.memory_space<vmem>>, vector<8x72xbf16>
    %c0_23 = arith.constant 0 : index
    %c0_24 = arith.constant 0 : index
    %29 = vector.load %arg12[%c0_23, %c0_24] : memref<8x1xf32, #tpu.memory_space<vmem>>, vector<8x1xf32>
    %cst_25 = arith.constant dense<0.000000e+00> : vector<1156xf32>
    %30 = vector.multi_reduction <add>, %21, %cst_25 [0] : vector<8x1156xf32> to vector<1156xf32>
    %31 = vector.shape_cast %30 : vector<1156xf32> to vector<1x1156xf32>
    %cst_26 = arith.constant 2.500000e-01 : f32
    %32 = vector.broadcast %cst_26 : f32 to vector<1x1156xf32>
    %33 = arith.mulf %31, %32 : vector<1x1156xf32>
    %34 = arith.mulf %21, %21 : vector<8x1156xf32>
    %cst_27 = arith.constant dense<0.000000e+00> : vector<1156xf32>
    %35 = vector.multi_reduction <add>, %34, %cst_27 [0] : vector<8x1156xf32> to vector<1156xf32>
    %36 = vector.shape_cast %35 : vector<1156xf32> to vector<1x1156xf32>
    %cst_28 = arith.constant 2.500000e-01 : f32
    %37 = vector.broadcast %cst_28 : f32 to vector<1x1156xf32>
    %38 = arith.mulf %36, %37 : vector<1x1156xf32>
    %39 = arith.mulf %33, %33 : vector<1x1156xf32>
    %40 = arith.subf %38, %39 : vector<1x1156xf32>
    %cst_29 = arith.constant 0.000000e+00 : f32
    %41 = vector.broadcast %cst_29 : f32 to vector<1x1156xf32>
    %42 = arith.maximumf %40, %41 : vector<1x1156xf32>
    %43 = vector.broadcast %33 : vector<1x1156xf32> to vector<8x1156xf32>
    %44 = arith.subf %21, %43 : vector<8x1156xf32>
    %cst_30 = arith.constant 9.99999997E-7 : f32
    %45 = vector.broadcast %cst_30 : f32 to vector<1x1156xf32>
    %46 = arith.addf %42, %45 : vector<1x1156xf32>
    %47 = math.rsqrt %46 : vector<1x1156xf32>
    %48 = vector.broadcast %47 : vector<1x1156xf32> to vector<8x1156xf32>
    %49 = arith.mulf %44, %48 : vector<8x1156xf32>
    %50 = vector.broadcast %22 : vector<8x1xf32> to vector<8x1156xf32>
    %51 = arith.mulf %49, %50 : vector<8x1156xf32>
    %52 = vector.broadcast %23 : vector<8x1xf32> to vector<8x1156xf32>
    %53 = arith.addf %51, %52 : vector<8x1156xf32>
    %cst_31 = arith.constant 0.000000e+00 : f32
    %54 = vector.broadcast %cst_31 : f32 to vector<8x1156xf32>
    %55 = arith.subf %54, %53 : vector<8x1156xf32>
    %56 = math.exp %55 : vector<8x1156xf32>
    %cst_32 = arith.constant 1.000000e+00 : f32
    %57 = vector.broadcast %cst_32 : f32 to vector<8x1156xf32>
    %58 = arith.addf %57, %56 : vector<8x1156xf32>
    %59 = tpu.reciprocal %58 {approx = true} : vector<8x1156xf32> -> vector<8x1156xf32>
    %60 = arith.mulf %53, %59 : vector<8x1156xf32>
    %61 = vector.broadcast %3 : vector<1x1156xf32> to vector<8x1156xf32>
    %62 = arith.mulf %60, %61 : vector<8x1156xf32>
    %cst_33 = arith.constant 0.000000e+00 : f32
    %63 = vector.broadcast %cst_33 : f32 to vector<8x35xf32>
    %64 = tpu.concatenate %63, %62, %63 in 1 : vector<8x35xf32>, vector<8x1156xf32>, vector<8x35xf32> -> vector<8x1226xf32>
    %65 = vector.extract_strided_slice %64 {offsets = [0, 0], sizes = [8, 1156], strides = [1, 1]} : vector<8x1226xf32> to vector<8x1156xf32>
    %66 = vector.extract_strided_slice %64 {offsets = [0, 1], sizes = [8, 1156], strides = [1, 1]} : vector<8x1226xf32> to vector<8x1156xf32>
    %67 = vector.extract_strided_slice %64 {offsets = [0, 2], sizes = [8, 1156], strides = [1, 1]} : vector<8x1226xf32> to vector<8x1156xf32>
    %68 = vector.extract_strided_slice %64 {offsets = [0, 34], sizes = [8, 1156], strides = [1, 1]} : vector<8x1226xf32> to vector<8x1156xf32>
    %69 = vector.extract_strided_slice %64 {offsets = [0, 35], sizes = [8, 1156], strides = [1, 1]} : vector<8x1226xf32> to vector<8x1156xf32>
    %70 = vector.extract_strided_slice %64 {offsets = [0, 36], sizes = [8, 1156], strides = [1, 1]} : vector<8x1226xf32> to vector<8x1156xf32>
    %71 = vector.extract_strided_slice %64 {offsets = [0, 68], sizes = [8, 1156], strides = [1, 1]} : vector<8x1226xf32> to vector<8x1156xf32>
    %72 = vector.extract_strided_slice %64 {offsets = [0, 69], sizes = [8, 1156], strides = [1, 1]} : vector<8x1226xf32> to vector<8x1156xf32>
    %73 = vector.extract_strided_slice %64 {offsets = [0, 70], sizes = [8, 1156], strides = [1, 1]} : vector<8x1226xf32> to vector<8x1156xf32>
    %74 = tpu.concatenate %65, %66, %67, %68, %69, %70, %71, %72, %73 in 0 : vector<8x1156xf32>, vector<8x1156xf32>, vector<8x1156xf32>, vector<8x1156xf32>, vector<8x1156xf32>, vector<8x1156xf32>, vector<8x1156xf32>, vector<8x1156xf32>, vector<8x1156xf32> -> vector<72x1156xf32>
    %75 = arith.truncf %74 : vector<72x1156xf32> to vector<72x1156xbf16>
    %cst_34 = arith.constant dense<0.000000e+00> : vector<8x1156xf32>
    %76 = tpu.matmul %24, %75, %cst_34 {dimension_numbers = #tpu.dot_dimension_numbers<[1], [0], [0], [1], [0, 0, 1, 1], [], []>} : vector<8x72xbf16>, vector<72x1156xbf16>, vector<8x1156xf32> -> vector<8x1156xf32>
    %77 = vector.broadcast %25 : vector<8x1xf32> to vector<8x1156xf32>
    %78 = arith.addf %76, %77 : vector<8x1156xf32>
    %cst_35 = arith.constant dense<0.000000e+00> : vector<1156xf32>
    %79 = vector.multi_reduction <add>, %78, %cst_35 [0] : vector<8x1156xf32> to vector<1156xf32>
    %80 = vector.shape_cast %79 : vector<1156xf32> to vector<1x1156xf32>
    %cst_36 = arith.constant 2.500000e-01 : f32
    %81 = vector.broadcast %cst_36 : f32 to vector<1x1156xf32>
    %82 = arith.mulf %80, %81 : vector<1x1156xf32>
    %83 = arith.mulf %78, %78 : vector<8x1156xf32>
    %cst_37 = arith.constant dense<0.000000e+00> : vector<1156xf32>
    %84 = vector.multi_reduction <add>, %83, %cst_37 [0] : vector<8x1156xf32> to vector<1156xf32>
    %85 = vector.shape_cast %84 : vector<1156xf32> to vector<1x1156xf32>
    %cst_38 = arith.constant 2.500000e-01 : f32
    %86 = vector.broadcast %cst_38 : f32 to vector<1x1156xf32>
    %87 = arith.mulf %85, %86 : vector<1x1156xf32>
    %88 = arith.mulf %82, %82 : vector<1x1156xf32>
    %89 = arith.subf %87, %88 : vector<1x1156xf32>
    %cst_39 = arith.constant 0.000000e+00 : f32
    %90 = vector.broadcast %cst_39 : f32 to vector<1x1156xf32>
    %91 = arith.maximumf %89, %90 : vector<1x1156xf32>
    %92 = vector.broadcast %82 : vector<1x1156xf32> to vector<8x1156xf32>
    %93 = arith.subf %78, %92 : vector<8x1156xf32>
    %cst_40 = arith.constant 9.99999997E-7 : f32
    %94 = vector.broadcast %cst_40 : f32 to vector<1x1156xf32>
    %95 = arith.addf %91, %94 : vector<1x1156xf32>
    %96 = math.rsqrt %95 : vector<1x1156xf32>
    %97 = vector.broadcast %96 : vector<1x1156xf32> to vector<8x1156xf32>
    %98 = arith.mulf %93, %97 : vector<8x1156xf32>
    %99 = vector.broadcast %26 : vector<8x1xf32> to vector<8x1156xf32>
    %100 = arith.mulf %98, %99 : vector<8x1156xf32>
    %101 = vector.broadcast %27 : vector<8x1xf32> to vector<8x1156xf32>
    %102 = arith.addf %100, %101 : vector<8x1156xf32>
    %cst_41 = arith.constant 0.000000e+00 : f32
    %103 = vector.broadcast %cst_41 : f32 to vector<8x1156xf32>
    %104 = arith.subf %103, %102 : vector<8x1156xf32>
    %105 = math.exp %104 : vector<8x1156xf32>
    %cst_42 = arith.constant 1.000000e+00 : f32
    %106 = vector.broadcast %cst_42 : f32 to vector<8x1156xf32>
    %107 = arith.addf %106, %105 : vector<8x1156xf32>
    %108 = tpu.reciprocal %107 {approx = true} : vector<8x1156xf32> -> vector<8x1156xf32>
    %109 = arith.mulf %102, %108 : vector<8x1156xf32>
    %110 = vector.broadcast %3 : vector<1x1156xf32> to vector<8x1156xf32>
    %111 = arith.mulf %109, %110 : vector<8x1156xf32>
    %cst_43 = arith.constant 0.000000e+00 : f32
    %112 = vector.broadcast %cst_43 : f32 to vector<8x35xf32>
    %113 = tpu.concatenate %112, %111, %112 in 1 : vector<8x35xf32>, vector<8x1156xf32>, vector<8x35xf32> -> vector<8x1226xf32>
    %114 = vector.extract_strided_slice %113 {offsets = [0, 0], sizes = [8, 1156], strides = [1, 1]} : vector<8x1226xf32> to vector<8x1156xf32>
    %115 = vector.extract_strided_slice %113 {offsets = [0, 1], sizes = [8, 1156], strides = [1, 1]} : vector<8x1226xf32> to vector<8x1156xf32>
    %116 = vector.extract_strided_slice %113 {offsets = [0, 2], sizes = [8, 1156], strides = [1, 1]} : vector<8x1226xf32> to vector<8x1156xf32>
    %117 = vector.extract_strided_slice %113 {offsets = [0, 34], sizes = [8, 1156], strides = [1, 1]} : vector<8x1226xf32> to vector<8x1156xf32>
    %118 = vector.extract_strided_slice %113 {offsets = [0, 35], sizes = [8, 1156], strides = [1, 1]} : vector<8x1226xf32> to vector<8x1156xf32>
    %119 = vector.extract_strided_slice %113 {offsets = [0, 36], sizes = [8, 1156], strides = [1, 1]} : vector<8x1226xf32> to vector<8x1156xf32>
    %120 = vector.extract_strided_slice %113 {offsets = [0, 68], sizes = [8, 1156], strides = [1, 1]} : vector<8x1226xf32> to vector<8x1156xf32>
    %121 = vector.extract_strided_slice %113 {offsets = [0, 69], sizes = [8, 1156], strides = [1, 1]} : vector<8x1226xf32> to vector<8x1156xf32>
    %122 = vector.extract_strided_slice %113 {offsets = [0, 70], sizes = [8, 1156], strides = [1, 1]} : vector<8x1226xf32> to vector<8x1156xf32>
    %123 = tpu.concatenate %114, %115, %116, %117, %118, %119, %120, %121, %122 in 0 : vector<8x1156xf32>, vector<8x1156xf32>, vector<8x1156xf32>, vector<8x1156xf32>, vector<8x1156xf32>, vector<8x1156xf32>, vector<8x1156xf32>, vector<8x1156xf32>, vector<8x1156xf32> -> vector<72x1156xf32>
    %124 = arith.truncf %123 : vector<72x1156xf32> to vector<72x1156xbf16>
    %cst_44 = arith.constant dense<0.000000e+00> : vector<8x1156xf32>
    %125 = tpu.matmul %28, %124, %cst_44 {dimension_numbers = #tpu.dot_dimension_numbers<[1], [0], [0], [1], [0, 0, 1, 1], [], []>} : vector<8x72xbf16>, vector<72x1156xbf16>, vector<8x1156xf32> -> vector<8x1156xf32>
    %126 = vector.broadcast %29 : vector<8x1xf32> to vector<8x1156xf32>
    %127 = arith.addf %125, %126 : vector<8x1156xf32>
    %128 = arith.addf %127, %21 : vector<8x1156xf32>
    %c0_45 = arith.constant 0 : index
    %c0_46 = arith.constant 0 : index
    %c0_47 = arith.constant 0 : index
    %129 = vector.load %arg13[%c0_45, %c0_46, %c0_47] : memref<1x8x1156xf32, #tpu.memory_space<vmem>>, vector<1x8x1156xf32>
    %130 = vector.shape_cast %129 : vector<1x8x1156xf32> to vector<8x1156xf32>
    %131 = vector.shape_cast %128 : vector<8x1156xf32> to vector<1x8x1156xf32>
    tpu.vector_store %arg13[%c0_45, %c0_46, %c0_47], %131 {strides = array<i32>} : memref<1x8x1156xf32, #tpu.memory_space<vmem>>, vector<1x8x1156xf32>,
    return
  }
  func.func @transform_0(%arg0: i32) -> (i32, i32, i32) {
    %c0_i32 = arith.constant 0 : i32
    %c0_i32_0 = arith.constant 0 : i32
    %c0_i32_1 = arith.constant 0 : i32
    return %arg0, %c0_i32, %c0_i32_0 : i32, i32, i32
  }
  func.func @transform_1(%arg0: i32) -> (i32, i32) {
    %c0_i32 = arith.constant 0 : i32
    %c0_i32_0 = arith.constant 0 : i32
    %c0_i32_1 = arith.constant 0 : i32
    return %c0_i32, %c0_i32_0 : i32, i32
  }
  func.func @transform_2(%arg0: i32) -> (i32, i32) {
    %c0_i32 = arith.constant 0 : i32
    %c0_i32_0 = arith.constant 0 : i32
    %c0_i32_1 = arith.constant 0 : i32
    return %c0_i32, %c0_i32_0 : i32, i32
  }
  func.func @transform_3(%arg0: i32) -> (i32, i32) {
    %c0_i32 = arith.constant 0 : i32
    %c0_i32_0 = arith.constant 0 : i32
    %c0_i32_1 = arith.constant 0 : i32
    return %c0_i32, %c0_i32_0 : i32, i32
  }
  func.func @transform_4(%arg0: i32) -> (i32, i32) {
    %c0_i32 = arith.constant 0 : i32
    %c0_i32_0 = arith.constant 0 : i32
    %c0_i32_1 = arith.constant 0 : i32
    return %c0_i32, %c0_i32_0 : i32, i32
  }
  func.func @transform_5(%arg0: i32) -> (i32, i32) {
    %c0_i32 = arith.constant 0 : i32
    %c0_i32_0 = arith.constant 0 : i32
    %c0_i32_1 = arith.constant 0 : i32
    return %c0_i32, %c0_i32_0 : i32, i32
  }
  func.func @transform_6(%arg0: i32) -> (i32, i32) {
    %c0_i32 = arith.constant 0 : i32
    %c0_i32_0 = arith.constant 0 : i32
    %c0_i32_1 = arith.constant 0 : i32
    return %c0_i32, %c0_i32_0 : i32, i32
  }
  func.func @transform_7(%arg0: i32) -> (i32, i32) {
    %c0_i32 = arith.constant 0 : i32
    %c0_i32_0 = arith.constant 0 : i32
    %c0_i32_1 = arith.constant 0 : i32
    return %c0_i32, %c0_i32_0 : i32, i32
  }
  func.func @transform_8(%arg0: i32) -> (i32, i32) {
    %c0_i32 = arith.constant 0 : i32
    %c0_i32_0 = arith.constant 0 : i32
    %c0_i32_1 = arith.constant 0 : i32
    return %c0_i32, %c0_i32_0 : i32, i32
  }
  func.func @transform_9(%arg0: i32) -> (i32, i32) {
    %c0_i32 = arith.constant 0 : i32
    %c0_i32_0 = arith.constant 0 : i32
    %c0_i32_1 = arith.constant 0 : i32
    return %c0_i32, %c0_i32_0 : i32, i32
  }
  func.func @transform_10(%arg0: i32) -> (i32, i32) {
    %c0_i32 = arith.constant 0 : i32
    %c0_i32_0 = arith.constant 0 : i32
    %c0_i32_1 = arith.constant 0 : i32
    return %c0_i32, %c0_i32_0 : i32, i32
  }
  func.func @transform_11(%arg0: i32) -> (i32, i32) {
    %c0_i32 = arith.constant 0 : i32
    %c0_i32_0 = arith.constant 0 : i32
    %c0_i32_1 = arith.constant 0 : i32
    return %c0_i32, %c0_i32_0 : i32, i32
  }
  func.func @transform_12(%arg0: i32) -> (i32, i32, i32) {
    %c0_i32 = arith.constant 0 : i32
    %c0_i32_0 = arith.constant 0 : i32
    %c0_i32_1 = arith.constant 0 : i32
    return %arg0, %c0_i32, %c0_i32_0 : i32, i32, i32
  }
}

</mosaic_0001>

<llo_original>
// kernel: wf_up_block_forward.3
$region0: #{wf_up_block_forward.3}
  #allocation0 [shape = 'u32[]', space=smem, size = 0x4, offset = 0x4, fixed_abs, tag = 'smem constant byte address 0x4 - core index']
  #allocation1 [shape = 'u32[72,128]{1,0:T(1,128)}', space=vmem, size = 0x9000, scoped, tag = 'internal scratch']
  %s0 = inlined_call_operand.vmem [shape: f32[2,8,324], index: 0, kind: input, shape index: {}]
  %s1 = inlined_call_operand.vmem [shape: f32[1,324], index: 1, kind: input, shape index: {}]
  %s2 = inlined_call_operand.hbm [shape: f32[8,1], index: 2, kind: input, shape index: {}]
  %s3 = inlined_call_operand.vmem [shape: f32[8,1], index: 3, kind: input, shape index: {}]
  %s4 = inlined_call_operand.hbm [shape: bf16[16,72], index: 4, kind: input, shape index: {}]
  %s5 = inlined_call_operand.hbm [shape: f32[16,1], index: 5, kind: input, shape index: {}]
  %s6 = inlined_call_operand.hbm [shape: f32[16,1], index: 6, kind: input, shape index: {}]
  %s7 = inlined_call_operand.vmem [shape: f32[16,1], index: 7, kind: input, shape index: {}]
  %s8 = inlined_call_operand.hbm [shape: bf16[16,144], index: 8, kind: input, shape index: {}]
  %s9 = inlined_call_operand.hbm [shape: f32[16,1], index: 9, kind: input, shape index: {}]
  %s10 = inlined_call_operand.hbm [shape: bf16[16,8], index: 10, kind: input, shape index: {}]
  %s11 = inlined_call_operand.hbm [shape: f32[16,1], index: 11, kind: input, shape index: {}]
  %s12 = inlined_call_operand.vmem [shape: bf16[2,8,324], index: 12, kind: output, shape index: {0}]
  %s13 = inlined_call_operand.vmem [shape: bf16[2,8,324], index: 13, kind: output, shape index: {1}]
  %14 = xla_tuple %s12, %s13
  %s15 = sld [smem:[#allocation0]]
  $region121: #{wf_up_block_forward.3} parent=0
    _
  %s17 = ssub.s32 1, %s15
  %s18 = scalar_select 0, %s17, %s15
  $region1: #{wf_up_block_forward.3} parent=0
    #allocation2 [shape = 'u8[4096]{0}', space=vmem, size = 0x1000, scoped, tag = 'input window, operand 2, single buffered']
    #allocation3 [shape = 's32[2]{0}', space=sflag, size = 0x8, scoped, tag = 'scoped memory for wf_up_block_forward.3']
    #allocation4 [shape = 'u8[4096]{0}', space=vmem, size = 0x1000, scoped, tag = 'input window, operand 4, single buffered']
    #allocation5 [shape = 's32[1]{0}', space=sflag, size = 0x4, scoped, tag = 'scoped memory for wf_up_block_forward.3']
    #allocation6 [shape = 'u8[8192]{0}', space=vmem, size = 0x2000, scoped, tag = 'input window, operand 5, single buffered']
    #allocation7 [shape = 'u8[8192]{0}', space=vmem, size = 0x2000, scoped, tag = 'input window, operand 6, single buffered']
    #allocation8 [shape = 's32[1]{0}', space=sflag, size = 0x4, scoped, tag = 'scoped memory for wf_up_block_forward.3']
    #allocation9 [shape = 'u8[8192]{0}', space=vmem, size = 0x2000, scoped, tag = 'input window, operand 8, single buffered']
    #allocation10 [shape = 'u8[8192]{0}', space=vmem, size = 0x2000, scoped, tag = 'input window, operand 9, single buffered']
    #allocation11 [shape = 's32[1]{0}', space=sflag, size = 0x4, scoped, tag = 'scoped memory for wf_up_block_forward.3']
    #allocation12 [shape = 'u8[4096]{0}', space=vmem, size = 0x1000, scoped, tag = 'input window, operand 10, single buffered']
    #allocation13 [shape = 'u8[8192]{0}', space=vmem, size = 0x2000, scoped, tag = 'input window, operand 11, single buffered']
    #allocation14 [shape = 's32[1]{0}', space=sflag, size = 0x4, scoped, tag = 'scoped memory for wf_up_block_forward.3']
    %19 = vsyncpa [#allocation3], 0
    %20 = vsyncpa [#allocation5], 0
    %21 = vsyncpa [#allocation8], 0
    %22 = vsyncpa [#allocation11], 0
    %23 = vsyncpa [#allocation14], 0
    loop: start=0, step=1, limit=4
    $region2: #{wf_up_block_forward.3} parent=1 // loop_pre_header
      _
    $region3: #{wf_up_block_forward.3} parent=1 // loop_header
      %s25 = sphi 0, %s29
      %p26 = scmp.ge.s32.totalorder %s25, 4
      %s35 = sphi 0, %s37
      %s38 = sphi 0, %s35
      %s39 = sphi 0, %s38
      %s55 = sphi 0, %s39
      %s59 = sphi 0, %s59
      %s61 = sphi 0, %s59
      %s62 = sphi 0, %s61
      %s76 = sphi 0, %s62
      %s80 = sphi 0, %s80
      %s82 = sphi 0, %s80
      %s83 = sphi 0, %s82
      %s97 = sphi 0, %s83
      %s101 = sphi 0, %s101
      %s103 = sphi 0, %s101
      %s104 = sphi 0, %s103
      %s118 = sphi 0, %s104
      %s122 = sphi 0, %s122
      %s124 = sphi 0, %s122
      %s125 = sphi 0, %s124
      %s139 = sphi 0, %s125
      %s143 = sphi 0, %s143
      %s145 = sphi 0, %s143
      %s146 = sphi 0, %s145
      %s160 = sphi 0, %s146
      %s164 = sphi 0, %s164
      %s166 = sphi 0, %s164
      %s167 = sphi 0, %s166
      %s181 = sphi 0, %s167
      %s185 = sphi 0, %s185
      %s187 = sphi 0, %s185
      %s188 = sphi 0, %s187
      %s202 = sphi 0, %s188
      %s206 = sphi 0, %s206
      %s208 = sphi 0, %s206
      %s209 = sphi 0, %s208
      %s223 = sphi 0, %s209
      %s227 = sphi 0, %s227
      %s229 = sphi 0, %s227
      %s230 = sphi 0, %s229
      %s244 = sphi 0, %s230
      %s248 = sphi 0, %s248
      %s250 = sphi 0, %s248
      %s251 = sphi 0, %s250
      %s265 = sphi 0, %s251
      %s269 = sphi 0, %s269
      %s271 = sphi 0, %s269
      %s272 = sphi 0, %s271
      %s286 = sphi 0, %s272
      %s292 = sphi 0, %s294
      %s295 = sphi 0, %s292
      %s296 = sphi 0, %s295
      %s312 = sphi 0, %s296
      %s318 = sphi 0, %s320
      %s321 = sphi 0, %s318
      %s322 = sphi 0, %s321
      %s338 = sphi 0, %s322
    $region4: #{wf_up_block_forward.3} parent=1 // loop_header_branch
      %28 = sbr.rel (%p26) target = $region8
    $region5: #{wf_up_block_forward.3} parent=1 // loop_body
      %s30 = ssub.s32 %s25, 1
      %s31 = ssub.s32 %s25, 2
      %s32 = sadd.s32 %s25, 1
      %s33 = ssub.s32 %s25, %s32
      %p34 = scmp.eq.s32.totalorder %s33, 0
      %s36 = sadd.s32 %s35, 1
      %s37 = scalar_select %p34, %s35, %s36
      %p40 = pneg %p34
      %p41 = scmp.eq.s32.totalorder %s25, 1
      %p42 = por %p40, %p41
      %p43 = scmp.ne.s32.totalorder %s35, %s38
      %p44 = scmp.eq.s32.totalorder %s25, 0
      %p45 = por %p43, %p44
      %p46 = scmp.ne.s32.totalorder %s35, %s38
      %p47 = scmp.eq.s32.totalorder %s30, 1
      %p48 = por %p46, %p47
      %p49 = scmp.ne.s32.totalorder %s38, %s39
      %p50 = scmp.eq.s32.totalorder %s30, 0
      %p51 = por %p49, %p50
      %p52 = scmp.ne.s32.totalorder %s38, %s39
      %p53 = scmp.eq.s32.totalorder %s31, 1
      %p54 = por %p52, %p53
      %p56 = scmp.ne.s32.totalorder %s39, %s55
      %p57 = scmp.eq.s32.totalorder %s31, 0
      %p58 = por %p56, %p57
      %s60 = sadd.s32 %s59, 1
      %p63 = scmp.eq.s32.totalorder %s25, 1
      %p64 = scmp.ne.s32.totalorder %s59, %s61
      %p65 = scmp.eq.s32.totalorder %s25, 0
      %p66 = por %p64, %p65
      %p67 = scmp.ne.s32.totalorder %s59, %s61
      %p68 = scmp.eq.s32.totalorder %s30, 1
      %p69 = por %p67, %p68
      %p70 = scmp.ne.s32.totalorder %s61, %s62
      %p71 = scmp.eq.s32.totalorder %s30, 0
      %p72 = por %p70, %p71
      %p73 = scmp.ne.s32.totalorder %s61, %s62
      %p74 = scmp.eq.s32.totalorder %s31, 1
      %p75 = por %p73, %p74
      %p77 = scmp.ne.s32.totalorder %s62, %s76
      %p78 = scmp.eq.s32.totalorder %s31, 0
      %p79 = por %p77, %p78
      %s81 = sadd.s32 %s80, 1
      %p84 = scmp.eq.s32.totalorder %s25, 1
      %p85 = scmp.ne.s32.totalorder %s80, %s82
      %p86 = scmp.eq.s32.totalorder %s25, 0
      %p87 = por %p85, %p86
      %p88 = scmp.ne.s32.totalorder %s80, %s82
      %p89 = scmp.eq.s32.totalorder %s30, 1
      %p90 = por %p88, %p89
      %p91 = scmp.ne.s32.totalorder %s82, %s83
      %p92 = scmp.eq.s32.totalorder %s30, 0
      %p93 = por %p91, %p92
      %p94 = scmp.ne.s32.totalorder %s82, %s83
      %p95 = scmp.eq.s32.totalorder %s31, 1
      %p96 = por %p94, %p95
      %p98 = scmp.ne.s32.totalorder %s83, %s97
      %p99 = scmp.eq.s32.totalorder %s31, 0
      %p100 = por %p98, %p99
      %s102 = sadd.s32 %s101, 1
      %p105 = scmp.eq.s32.totalorder %s25, 1
      %p106 = scmp.ne.s32.totalorder %s101, %s103
      %p107 = scmp.eq.s32.totalorder %s25, 0
      %p108 = por %p106, %p107
      %p109 = scmp.ne.s32.totalorder %s101, %s103
      %p110 = scmp.eq.s32.totalorder %s30, 1
      %p111 = por %p109, %p110
      %p112 = scmp.ne.s32.totalorder %s103, %s104
      %p113 = scmp.eq.s32.totalorder %s30, 0
      %p114 = por %p112, %p113
      %p115 = scmp.ne.s32.totalorder %s103, %s104
      %p116 = scmp.eq.s32.totalorder %s31, 1
      %p117 = por %p115, %p116
      %p119 = scmp.ne.s32.totalorder %s104, %s118
      %p120 = scmp.eq.s32.totalorder %s31, 0
      %p121 = por %p119, %p120
      %s123 = sadd.s32 %s122, 1
      %p126 = scmp.eq.s32.totalorder %s25, 1
      %p127 = scmp.ne.s32.totalorder %s122, %s124
      %p128 = scmp.eq.s32.totalorder %s25, 0
      %p129 = por %p127, %p128
      %p130 = scmp.ne.s32.totalorder %s122, %s124
      %p131 = scmp.eq.s32.totalorder %s30, 1
      %p132 = por %p130, %p131
      %p133 = scmp.ne.s32.totalorder %s124, %s125
      %p134 = scmp.eq.s32.totalorder %s30, 0
      %p135 = por %p133, %p134
      %p136 = scmp.ne.s32.totalorder %s124, %s125
      %p137 = scmp.eq.s32.totalorder %s31, 1
      %p138 = por %p136, %p137
      %p140 = scmp.ne.s32.totalorder %s125, %s139
      %p141 = scmp.eq.s32.totalorder %s31, 0
      %p142 = por %p140, %p141
      %s144 = sadd.s32 %s143, 1
      %p147 = scmp.eq.s32.totalorder %s25, 1
      %p148 = scmp.ne.s32.totalorder %s143, %s145
      %p149 = scmp.eq.s32.totalorder %s25, 0
      %p150 = por %p148, %p149
      %p151 = scmp.ne.s32.totalorder %s143, %s145
      %p152 = scmp.eq.s32.totalorder %s30, 1
      %p153 = por %p151, %p152
      %p154 = scmp.ne.s32.totalorder %s145, %s146
      %p155 = scmp.eq.s32.totalorder %s30, 0
      %p156 = por %p154, %p155
      %p157 = scmp.ne.s32.totalorder %s145, %s146
      %p158 = scmp.eq.s32.totalorder %s31, 1
      %p159 = por %p157, %p158
      %p161 = scmp.ne.s32.totalorder %s146, %s160
      %p162 = scmp.eq.s32.totalorder %s31, 0
      %p163 = por %p161, %p162
      %s165 = sadd.s32 %s164, 1
      %p168 = scmp.eq.s32.totalorder %s25, 1
      %p169 = scmp.ne.s32.totalorder %s164, %s166
      %p170 = scmp.eq.s32.totalorder %s25, 0
      %p171 = por %p169, %p170
      %p172 = scmp.ne.s32.totalorder %s164, %s166
      %p173 = scmp.eq.s32.totalorder %s30, 1
      %p174 = por %p172, %p173
      %p175 = scmp.ne.s32.totalorder %s166, %s167
      %p176 = scmp.eq.s32.totalorder %s30, 0
      %p177 = por %p175, %p176
      %p178 = scmp.ne.s32.totalorder %s166, %s167
      %p179 = scmp.eq.s32.totalorder %s31, 1
      %p180 = por %p178, %p179
      %p182 = scmp.ne.s32.totalorder %s167, %s181
      %p183 = scmp.eq.s32.totalorder %s31, 0
      %p184 = por %p182, %p183
      %s186 = sadd.s32 %s185, 1
      %p189 = scmp.eq.s32.totalorder %s25, 1
      %p190 = scmp.ne.s32.totalorder %s185, %s187
      %p191 = scmp.eq.s32.totalorder %s25, 0
      %p192 = por %p190, %p191
      %p193 = scmp.ne.s32.totalorder %s185, %s187
      %p194 = scmp.eq.s32.totalorder %s30, 1
      %p195 = por %p193, %p194
      %p196 = scmp.ne.s32.totalorder %s187, %s188
      %p197 = scmp.eq.s32.totalorder %s30, 0
      %p198 = por %p196, %p197
      %p199 = scmp.ne.s32.totalorder %s187, %s188
      %p200 = scmp.eq.s32.totalorder %s31, 1
      %p201 = por %p199, %p200
      %p203 = scmp.ne.s32.totalorder %s188, %s202
      %p204 = scmp.eq.s32.totalorder %s31, 0
      %p205 = por %p203, %p204
      %s207 = sadd.s32 %s206, 1
      %p210 = scmp.eq.s32.totalorder %s25, 1
      %p211 = scmp.ne.s32.totalorder %s206, %s208
      %p212 = scmp.eq.s32.totalorder %s25, 0
      %p213 = por %p211, %p212
      %p214 = scmp.ne.s32.totalorder %s206, %s208
      %p215 = scmp.eq.s32.totalorder %s30, 1
      %p216 = por %p214, %p215
      %p217 = scmp.ne.s32.totalorder %s208, %s209
      %p218 = scmp.eq.s32.totalorder %s30, 0
      %p219 = por %p217, %p218
      %p220 = scmp.ne.s32.totalorder %s208, %s209
      %p221 = scmp.eq.s32.totalorder %s31, 1
      %p222 = por %p220, %p221
      %p224 = scmp.ne.s32.totalorder %s209, %s223
      %p225 = scmp.eq.s32.totalorder %s31, 0
      %p226 = por %p224, %p225
      %s228 = sadd.s32 %s227, 1
      %p231 = scmp.eq.s32.totalorder %s25, 1
      %p232 = scmp.ne.s32.totalorder %s227, %s229
      %p233 = scmp.eq.s32.totalorder %s25, 0
      %p234 = por %p232, %p233
      %p235 = scmp.ne.s32.totalorder %s227, %s229
      %p236 = scmp.eq.s32.totalorder %s30, 1
      %p237 = por %p235, %p236
      %p238 = scmp.ne.s32.totalorder %s229, %s230
      %p239 = scmp.eq.s32.totalorder %s30, 0
      %p240 = por %p238, %p239
      %p241 = scmp.ne.s32.totalorder %s229, %s230
      %p242 = scmp.eq.s32.totalorder %s31, 1
      %p243 = por %p241, %p242
      %p245 = scmp.ne.s32.totalorder %s230, %s244
      %p246 = scmp.eq.s32.totalorder %s31, 0
      %p247 = por %p245, %p246
      %s249 = sadd.s32 %s248, 1
      %p252 = scmp.eq.s32.totalorder %s25, 1
      %p253 = scmp.ne.s32.totalorder %s248, %s250
      %p254 = scmp.eq.s32.totalorder %s25, 0
      %p255 = por %p253, %p254
      %p256 = scmp.ne.s32.totalorder %s248, %s250
      %p257 = scmp.eq.s32.totalorder %s30, 1
      %p258 = por %p256, %p257
      %p259 = scmp.ne.s32.totalorder %s250, %s251
      %p260 = scmp.eq.s32.totalorder %s30, 0
      %p261 = por %p259, %p260
      %p262 = scmp.ne.s32.totalorder %s250, %s251
      %p263 = scmp.eq.s32.totalorder %s31, 1
      %p264 = por %p262, %p263
      %p266 = scmp.ne.s32.totalorder %s251, %s265
      %p267 = scmp.eq.s32.totalorder %s31, 0
      %p268 = por %p266, %p267
      %s270 = sadd.s32 %s269, 1
      %p273 = scmp.eq.s32.totalorder %s25, 1
      %p274 = scmp.ne.s32.totalorder %s269, %s271
      %p275 = scmp.eq.s32.totalorder %s25, 0
      %p276 = por %p274, %p275
      %p277 = scmp.ne.s32.totalorder %s269, %s271
      %p278 = scmp.eq.s32.totalorder %s30, 1
      %p279 = por %p277, %p278
      %p280 = scmp.ne.s32.totalorder %s271, %s272
      %p281 = scmp.eq.s32.totalorder %s30, 0
      %p282 = por %p280, %p281
      %p283 = scmp.ne.s32.totalorder %s271, %s272
      %p284 = scmp.eq.s32.totalorder %s31, 1
      %p285 = por %p283, %p284
      %p287 = scmp.ne.s32.totalorder %s272, %s286
      %p288 = scmp.eq.s32.totalorder %s31, 0
      %p289 = por %p287, %p288
      %s290 = ssub.s32 %s25, %s32
      %p291 = scmp.eq.s32.totalorder %s290, 0
      %s293 = sadd.s32 %s292, 1
      %s294 = scalar_select %p291, %s292, %s293
      %p297 = pneg %p291
      %p298 = scmp.eq.s32.totalorder %s25, 1
      %p299 = por %p297, %p298
      %p300 = scmp.ne.s32.totalorder %s292, %s295
      %p301 = scmp.eq.s32.totalorder %s25, 0
      %p302 = por %p300, %p301
      %p303 = scmp.ne.s32.totalorder %s292, %s295
      %p304 = scmp.eq.s32.totalorder %s30, 1
      %p305 = por %p303, %p304
      %p306 = scmp.ne.s32.totalorder %s295, %s296
      %p307 = scmp.eq.s32.totalorder %s30, 0
      %p308 = por %p306, %p307
      %p309 = scmp.ne.s32.totalorder %s295, %s296
      %p310 = scmp.eq.s32.totalorder %s31, 1
      %p311 = por %p309, %p310
      %p313 = scmp.ne.s32.totalorder %s296, %s312
      %p314 = scmp.eq.s32.totalorder %s31, 0
      %p315 = por %p313, %p314
      %s316 = ssub.s32 %s25, %s32
      %p317 = scmp.eq.s32.totalorder %s316, 0
      %s319 = sadd.s32 %s318, 1
      %s320 = scalar_select %p317, %s318, %s319
      %p323 = pneg %p317
      %p324 = scmp.eq.s32.totalorder %s25, 1
      %p325 = por %p323, %p324
      %p326 = scmp.ne.s32.totalorder %s318, %s321
      %p327 = scmp.eq.s32.totalorder %s25, 0
      %p328 = por %p326, %p327
      %p329 = scmp.ne.s32.totalorder %s318, %s321
      %p330 = scmp.eq.s32.totalorder %s30, 1
      %p331 = por %p329, %p330
      %p332 = scmp.ne.s32.totalorder %s321, %s322
      %p333 = scmp.eq.s32.totalorder %s30, 0
      %p334 = por %p332, %p333
      %p335 = scmp.ne.s32.totalorder %s321, %s322
      %p336 = scmp.eq.s32.totalorder %s31, 1
      %p337 = por %p335, %p336
      %p339 = scmp.ne.s32.totalorder %s322, %s338
      %p340 = scmp.eq.s32.totalorder %s31, 0
      %p341 = por %p339, %p340
      %p342 = scmp.le.s32.totalorder 1, %s25
      %p343 = scmp.lt.s32.totalorder %s25, 3
      %p344 = pnand %p342, %p343
      %p345 = pneg %p344
      // Predicated region
      $region9: #{wf_up_block_forward.3} parent=5 // pred_check
        _
      $region10: #{wf_up_block_forward.3} parent=5 // pred_check_branch
        %347 = sbr.rel (%p344) target = $region12
      $region11: #{wf_up_block_forward.3} parent=5 // pred_region
        %s348 = ssub.s32 %s25, 1
        // Predicated region
        $region13: #{wf_up_block_forward.3} parent=11 // pred_check
          %p349 = pneg %p72
        $region14: #{wf_up_block_forward.3} parent=11 // pred_check_branch
          %351 = sbr.rel (%p349) target = $region16
        $region15: #{wf_up_block_forward.3} parent=11 // pred_region
          _
        $region16: #{wf_up_block_forward.3} parent=11 // pred_fallthru
          _
        // Predicated region
        $region17: #{wf_up_block_forward.3} parent=11 // pred_check
          %p352 = pneg %p93
        $region18: #{wf_up_block_forward.3} parent=11 // pred_check_branch
          %354 = sbr.rel (%p352) target = $region20
        $region19: #{wf_up_block_forward.3} parent=11 // pred_region
          %356 = vsyncadd [#allocation3], 0
          %s358 = sshll.u32 %s2, 4
          %s359 = int_to_ptr.hbm [resolvable:$true] %s358
          %s360 = sshll.u32 [#allocation2], 4
          %s361 = int_to_ptr.vmem [resolvable:$true] %s360
          %363 = dma.hbm_to_vmem [thread:$0]  %s359, 128, %s361, [#allocation3]
        $region20: #{wf_up_block_forward.3} parent=11 // pred_fallthru
          _
        // Predicated region
        $region21: #{wf_up_block_forward.3} parent=11 // pred_check
          %p364 = pneg %p114
        $region22: #{wf_up_block_forward.3} parent=11 // pred_check_branch
          %366 = sbr.rel (%p364) target = $region24
        $region23: #{wf_up_block_forward.3} parent=11 // pred_region
          _
        $region24: #{wf_up_block_forward.3} parent=11 // pred_fallthru
          _
        // Predicated region
        $region25: #{wf_up_block_forward.3} parent=11 // pred_check
          %p367 = pneg %p135
        $region26: #{wf_up_block_forward.3} parent=11 // pred_check_branch
          %369 = sbr.rel (%p367) target = $region28
        $region27: #{wf_up_block_forward.3} parent=11 // pred_region
          %371 = vsyncadd [#allocation5], 0
          %s372 = sshll.u32 %s4, 4
          %s373 = int_to_ptr.hbm [resolvable:$true] %s372
          %s374 = sshll.u32 [#allocation4], 4
          %s375 = int_to_ptr.vmem [resolvable:$true] %s374
          %380 = dma.hbm_to_vmem [thread:$0]  %s373, 128, %s375, [#allocation5], 64, 64, 4
        $region28: #{wf_up_block_forward.3} parent=11 // pred_fallthru
          _
        // Predicated region
        $region29: #{wf_up_block_forward.3} parent=11 // pred_check
          %p381 = pneg %p156
        $region30: #{wf_up_block_forward.3} parent=11 // pred_check_branch
          %383 = sbr.rel (%p381) target = $region32
        $region31: #{wf_up_block_forward.3} parent=11 // pred_region
          %385 = vsyncadd [#allocation5], 0
          %s386 = sshll.u32 %s5, 4
          %s387 = int_to_ptr.hbm [resolvable:$true] %s386
          %s388 = sshll.u32 [#allocation6], 4
          %s389 = int_to_ptr.vmem [resolvable:$true] %s388
          %394 = dma.hbm_to_vmem [thread:$0]  %s387, 256, %s389, [#allocation5], 128, 128, 8
        $region32: #{wf_up_block_forward.3} parent=11 // pred_fallthru
          _
        // Predicated region
        $region33: #{wf_up_block_forward.3} parent=11 // pred_check
          %p395 = pneg %p177
        $region34: #{wf_up_block_forward.3} parent=11 // pred_check_branch
          %397 = sbr.rel (%p395) target = $region36
        $region35: #{wf_up_block_forward.3} parent=11 // pred_region
          %399 = vsyncadd [#allocation8], 0
          %s400 = sshll.u32 %s6, 4
          %s401 = int_to_ptr.hbm [resolvable:$true] %s400
          %s402 = sshll.u32 [#allocation7], 4
          %s403 = int_to_ptr.vmem [resolvable:$true] %s402
          %408 = dma.hbm_to_vmem [thread:$0]  %s401, 256, %s403, [#allocation8], 128, 128, 8
        $region36: #{wf_up_block_forward.3} parent=11 // pred_fallthru
          _
        // Predicated region
        $region37: #{wf_up_block_forward.3} parent=11 // pred_check
          %p409 = pneg %p198
        $region38: #{wf_up_block_forward.3} parent=11 // pred_check_branch
          %411 = sbr.rel (%p409) target = $region40
        $region39: #{wf_up_block_forward.3} parent=11 // pred_region
          _
        $region40: #{wf_up_block_forward.3} parent=11 // pred_fallthru
          _
        // Predicated region
        $region41: #{wf_up_block_forward.3} parent=11 // pred_check
          %p412 = pneg %p219
        $region42: #{wf_up_block_forward.3} parent=11 // pred_check_branch
          %414 = sbr.rel (%p412) target = $region44
        $region43: #{wf_up_block_forward.3} parent=11 // pred_region
          %416 = vsyncadd [#allocation8], 0
          %s417 = sshll.u32 %s8, 4
          %s418 = int_to_ptr.hbm [resolvable:$true] %s417
          %s419 = sshll.u32 [#allocation9], 4
          %s420 = int_to_ptr.vmem [resolvable:$true] %s419
          %425 = dma.hbm_to_vmem [thread:$0]  %s418, 256, %s420, [#allocation8], 128, 128, 8
        $region44: #{wf_up_block_forward.3} parent=11 // pred_fallthru
          _
        // Predicated region
        $region45: #{wf_up_block_forward.3} parent=11 // pred_check
          %p426 = pneg %p240
        $region46: #{wf_up_block_forward.3} parent=11 // pred_check_branch
          %428 = sbr.rel (%p426) target = $region48
        $region47: #{wf_up_block_forward.3} parent=11 // pred_region
          %430 = vsyncadd [#allocation11], 0
          %s431 = sshll.u32 %s9, 4
          %s432 = int_to_ptr.hbm [resolvable:$true] %s431
          %s433 = sshll.u32 [#allocation10], 4
          %s434 = int_to_ptr.vmem [resolvable:$true] %s433
          %439 = dma.hbm_to_vmem [thread:$0]  %s432, 256, %s434, [#allocation11], 128, 128, 8
        $region48: #{wf_up_block_forward.3} parent=11 // pred_fallthru
          _
        // Predicated region
        $region49: #{wf_up_block_forward.3} parent=11 // pred_check
          %p440 = pneg %p261
        $region50: #{wf_up_block_forward.3} parent=11 // pred_check_branch
          %442 = sbr.rel (%p440) target = $region52
        $region51: #{wf_up_block_forward.3} parent=11 // pred_region
          %444 = vsyncadd [#allocation11], 0
          %s445 = sshll.u32 %s10, 4
          %s446 = int_to_ptr.hbm [resolvable:$true] %s445
          %s447 = sshll.u32 [#allocation12], 4
          %s448 = int_to_ptr.vmem [resolvable:$true] %s447
          %453 = dma.hbm_to_vmem [thread:$0]  %s446, 128, %s448, [#allocation11], 64, 64, 4
        $region52: #{wf_up_block_forward.3} parent=11 // pred_fallthru
          _
        // Predicated region
        $region53: #{wf_up_block_forward.3} parent=11 // pred_check
          %p454 = pneg %p282
        $region54: #{wf_up_block_forward.3} parent=11 // pred_check_branch
          %456 = sbr.rel (%p454) target = $region56
        $region55: #{wf_up_block_forward.3} parent=11 // pred_region
          %458 = vsyncadd [#allocation14], 0
          %s459 = sshll.u32 %s11, 4
          %s460 = int_to_ptr.hbm [resolvable:$true] %s459
          %s461 = sshll.u32 [#allocation13], 4
          %s462 = int_to_ptr.vmem [resolvable:$true] %s461
          %467 = dma.hbm_to_vmem [thread:$0]  %s460, 256, %s462, [#allocation14], 128, 128, 8
        $region56: #{wf_up_block_forward.3} parent=11 // pred_fallthru
          _
      $region12: #{wf_up_block_forward.3} parent=5 // pred_fallthru
        _
      %p468 = scmp.lt.s32.totalorder %s25, 2
      // Predicated region
      $region57: #{wf_up_block_forward.3} parent=5 // pred_check
        %p469 = pneg %p468
      $region58: #{wf_up_block_forward.3} parent=5 // pred_check_branch
        %471 = sbr.rel (%p469) target = $region60
      $region59: #{wf_up_block_forward.3} parent=5 // pred_region
        // Predicated region
        $region61: #{wf_up_block_forward.3} parent=59 // pred_check
          %p472 = pneg %p45
        $region62: #{wf_up_block_forward.3} parent=59 // pred_check_branch
          %474 = sbr.rel (%p472) target = $region64
        $region63: #{wf_up_block_forward.3} parent=59 // pred_region
          %p475 = scmp.lt.s32.totalorder %s25, 1
          %s476 = scalar_select %p475, %s25, 1
          %s477 = smul.addr %s476, 3
          %s478 = smul.addr %s477, 8
          %s479 = scalar_lea.vmem %s0, %s478
        $region64: #{wf_up_block_forward.3} parent=59 // pred_fallthru
          _
      $region60: #{wf_up_block_forward.3} parent=5 // pred_fallthru
        _
      %p480 = scmp.le.s32.totalorder 1, %s25
      %p481 = scmp.lt.s32.totalorder %s25, 3
      %p482 = pnand %p480, %p481
      %p483 = pneg %p482
      // Predicated region
      $region65: #{wf_up_block_forward.3} parent=5 // pred_check
        _
      $region66: #{wf_up_block_forward.3} parent=5 // pred_check_branch
        %485 = sbr.rel (%p482) target = $region68
      $region67: #{wf_up_block_forward.3} parent=5 // pred_region
        %s486 = ssub.s32 %s25, 1
        // Predicated region
        $region69: #{wf_up_block_forward.3} parent=67 // pred_check
          %p487 = pneg %p93
        $region70: #{wf_up_block_forward.3} parent=67 // pred_check_branch
          %489 = sbr.rel (%p487) target = $region72
        $region71: #{wf_up_block_forward.3} parent=67 // pred_region
          %491 = dma.done [#allocation3], 128
        $region72: #{wf_up_block_forward.3} parent=67 // pred_fallthru
          _
        // Predicated region
        $region73: #{wf_up_block_forward.3} parent=67 // pred_check
          %p492 = pneg %p135
        $region74: #{wf_up_block_forward.3} parent=67 // pred_check_branch
          %494 = sbr.rel (%p492) target = $region76
        $region75: #{wf_up_block_forward.3} parent=67 // pred_region
          %496 = dma.done [#allocation5], 128
        $region76: #{wf_up_block_forward.3} parent=67 // pred_fallthru
          _
        // Predicated region
        $region77: #{wf_up_block_forward.3} parent=67 // pred_check
          %p497 = pneg %p156
        $region78: #{wf_up_block_forward.3} parent=67 // pred_check_branch
          %499 = sbr.rel (%p497) target = $region80
        $region79: #{wf_up_block_forward.3} parent=67 // pred_region
          %501 = dma.done [#allocation5], 256
        $region80: #{wf_up_block_forward.3} parent=67 // pred_fallthru
          _
        // Predicated region
        $region81: #{wf_up_block_forward.3} parent=67 // pred_check
          %p502 = pneg %p177
        $region82: #{wf_up_block_forward.3} parent=67 // pred_check_branch
          %504 = sbr.rel (%p502) target = $region84
        $region83: #{wf_up_block_forward.3} parent=67 // pred_region
          %506 = dma.done [#allocation8], 256
        $region84: #{wf_up_block_forward.3} parent=67 // pred_fallthru
          _
        // Predicated region
        $region85: #{wf_up_block_forward.3} parent=67 // pred_check
          %p507 = pneg %p219
        $region86: #{wf_up_block_forward.3} parent=67 // pred_check_branch
          %509 = sbr.rel (%p507) target = $region88
        $region87: #{wf_up_block_forward.3} parent=67 // pred_region
          %511 = dma.done [#allocation8], 256
        $region88: #{wf_up_block_forward.3} parent=67 // pred_fallthru
          _
        // Predicated region
        $region89: #{wf_up_block_forward.3} parent=67 // pred_check
          %p512 = pneg %p240
        $region90: #{wf_up_block_forward.3} parent=67 // pred_check_branch
          %514 = sbr.rel (%p512) target = $region92
        $region91: #{wf_up_block_forward.3} parent=67 // pred_region
          %516 = dma.done [#allocation11], 256
        $region92: #{wf_up_block_forward.3} parent=67 // pred_fallthru
          _
        // Predicated region
        $region93: #{wf_up_block_forward.3} parent=67 // pred_check
          %p517 = pneg %p261
        $region94: #{wf_up_block_forward.3} parent=67 // pred_check_branch
          %519 = sbr.rel (%p517) target = $region96
        $region95: #{wf_up_block_forward.3} parent=67 // pred_region
          %521 = dma.done [#allocation11], 128
        $region96: #{wf_up_block_forward.3} parent=67 // pred_fallthru
          _
        // Predicated region
        $region97: #{wf_up_block_forward.3} parent=67 // pred_check
          %p522 = pneg %p282
        $region98: #{wf_up_block_forward.3} parent=67 // pred_check_branch
          %524 = sbr.rel (%p522) target = $region100
        $region99: #{wf_up_block_forward.3} parent=67 // pred_region
          %526 = dma.done [#allocation14], 256
        $region100: #{wf_up_block_forward.3} parent=67 // pred_fallthru
          _
        %p527 = scmp.lt.s32.totalorder %s30, 1
        %s528 = scalar_select %p527, %s30, 1
        %s529 = smul.addr %s528, 3
        %s530 = smul.addr %s529, 8
        %s531 = scalar_lea.vmem %s0, %s530
        %p532 = pneg %p51
        %p533 = pneg %p48
        %p534 = pneg %p72
        %p535 = pneg %p69
        %p536 = pneg %p93
        %p537 = pneg %p90
        %p538 = pneg %p114
        %p539 = pneg %p111
        %p540 = pneg %p135
        %p541 = pneg %p132
        %p542 = pneg %p156
        %p543 = pneg %p153
        %p544 = pneg %p177
        %p545 = pneg %p174
        %p546 = pneg %p198
        %p547 = pneg %p195
        %p548 = pneg %p219
        %p549 = pneg %p216
        %p550 = pneg %p240
        %p551 = pneg %p237
        %p552 = pneg %p261
        %p553 = pneg %p258
        %p554 = pneg %p282
        %p555 = pneg %p279
        %p556 = pneg %p308
        %p557 = pneg %p305
        %p558 = scmp.lt.s32.totalorder %s30, 1
        %s559 = scalar_select %p558, %s30, 1
        %s560 = smul.addr %s559, 3
        %s561 = smul.addr %s560, 4
        %s562 = scalar_lea.vmem %s12, %s561
        %p563 = pneg %p334
        %p564 = pneg %p331
        %p565 = scmp.lt.s32.totalorder %s30, 1
        %s566 = scalar_select %p565, %s30, 1
        %s567 = smul.addr %s566, 3
        %s568 = smul.addr %s567, 4
        %s569 = scalar_lea.vmem %s13, %s568
        %p570 = scmp.lt.s32.totalorder %s30, 1
        %s571 = scalar_select %p570, %s30, 1
        %s572 = smul.addr %s571, 3
        %s573 = smul.addr %s572, 8
        %s574 = scalar_lea.vmem %s0, %s573
        %p575 = scmp.lt.s32.totalorder %s30, 1
        %s576 = scalar_select %p575, %s30, 1
        %s577 = smul.addr %s576, 3
        %s578 = smul.addr %s577, 4
        %s579 = scalar_lea.vmem %s12, %s578
        %p580 = scmp.lt.s32.totalorder %s30, 1
        %s581 = scalar_select %p580, %s30, 1
        %s582 = smul.addr %s581, 3
        %s583 = smul.addr %s582, 4
        %s584 = scalar_lea.vmem %s13, %s583
        %v586 = vld [vmem:[%s574] sm:$0xff]
        %v587 = vld [vmem:[%s574 + $0x8] sm:$0xff]
        %v588 = vld [vmem:[%s574 + $0x10] sm:$0xff]
        %v589 = vld [vmem:[%s1] sm:$0x7]
        %v590 = vld [vmem:[#allocation2] sm:$0xff]
        %v591 = vld [vmem:[%s3] sm:$0xff]
        %v592 = vld [vmem:[#allocation4] sm:$0xf]
        %v593 = vld [vmem:[#allocation4 + $0x4] sm:$0xf]
        %v594 = vld [vmem:[#allocation6] sm:$0xff]
        %v595 = vld [vmem:[#allocation6 + $0x8] sm:$0xff]
        %v596 = vld [vmem:[#allocation7] sm:$0xff]
        %v597 = vld [vmem:[#allocation7 + $0x8] sm:$0xff]
        %v598 = vld [vmem:[%s7] sm:$0xff]
        %v599 = vld [vmem:[%s7 + $0x8] sm:$0xff]
        %v600 = vld [vmem:[#allocation9] sm:$0xff]
        %v601 = vld [vmem:[#allocation9 + $0x8] sm:$0xff]
        %v602 = vld [vmem:[#allocation10] sm:$0xff]
        %v603 = vld [vmem:[#allocation10 + $0x8] sm:$0xff]
        %v604 = vld [vmem:[#allocation12] sm:$0xf]
        %v605 = vld [vmem:[#allocation12 + $0x4] sm:$0xf]
        %v606 = vld [vmem:[#allocation13] sm:$0xff]
        %v607 = vld [vmem:[#allocation13 + $0x8] sm:$0xff]
        %v608 = vrot.slane %v586, 4
        %v609 = vadd.f32 %v586, %v608
        %v610 = vrot.slane %v609, 2
        %v611 = vadd.f32 %v609, %v610
        %v612 = vrot.slane %v611, 1
        %v613 = vadd.f32 %v611, %v612
        %v614 = vrot.slane %v587, 4
        %v615 = vadd.f32 %v587, %v614
        %v616 = vrot.slane %v615, 2
        %v617 = vadd.f32 %v615, %v616
        %v618 = vrot.slane %v617, 1
        %v619 = vadd.f32 %v617, %v618
        %vm620 = vcmask 556032
        %v621 = vsel %vm620, %v588, 0.0
        %v622 = vrot.slane %v621, 4
        %v623 = vadd.f32 %v621, %v622
        %v624 = vrot.slane %v623, 2
        %v625 = vadd.f32 %v623, %v624
        %v626 = vrot.slane %v625, 1
        %v627 = vadd.f32 %v625, %v626
        %v628 = vmul.f32 %v613, 0.25
        %v629 = vmul.f32 %v619, 0.25
        %v630 = vmul.f32 %v627, 0.25
        %v631 = vmul.f32 %v586, %v586
        %v632 = vmul.f32 %v587, %v587
        %v633 = vmul.f32 %v588, %v588
        %v634 = vrot.slane %v631, 4
        %v635 = vadd.f32 %v631, %v634
        %v636 = vrot.slane %v635, 2
        %v637 = vadd.f32 %v635, %v636
        %v638 = vrot.slane %v637, 1
        %v639 = vadd.f32 %v637, %v638
        %v640 = vrot.slane %v632, 4
        %v641 = vadd.f32 %v632, %v640
        %v642 = vrot.slane %v641, 2
        %v643 = vadd.f32 %v641, %v642
        %v644 = vrot.slane %v643, 1
        %v645 = vadd.f32 %v643, %v644
        %v646 = vsel %vm620, %v633, 0.0
        %v647 = vrot.slane %v646, 4
        %v648 = vadd.f32 %v646, %v647
        %v649 = vrot.slane %v648, 2
        %v650 = vadd.f32 %v648, %v649
        %v651 = vrot.slane %v650, 1
        %v652 = vadd.f32 %v650, %v651
        %v653 = vmul.f32 %v639, 0.25
        %v654 = vmul.f32 %v645, 0.25
        %v655 = vmul.f32 %v652, 0.25
        %v656 = vmul.f32 %v628, %v628
        %v657 = vmul.f32 %v629, %v629
        %v658 = vmul.f32 %v630, %v630
        %v659 = vsub.f32 %v653, %v656
        %v660 = vsub.f32 %v654, %v657
        %v661 = vsub.f32 %v655, %v658
        %v662 = vmax.f32 %v659, 0.0
        %v663 = vmax.f32 %v660, 0.0
        %v664 = vmax.f32 %v661, 0.0
        %v665 = vsub.f32 %v586, %v628
        %v666 = vsub.f32 %v587, %v629
        %v667 = vsub.f32 %v588, %v630
        %v668 = vadd.f32 %v662, 1e-06
        %v669 = vadd.f32 %v663, 1e-06
        %v670 = vadd.f32 %v664, 1e-06
        %v671 = vrsqrt.pop %v668
        %v672 = vmul.f32 %v671, %v668
        %v673 = vmul.f32 %v672, %v671
        %v674 = vmul.f32 0.5, %v673
        %v675 = vsub.f32 1.5, %v674
        %v676 = vmul.f32 %v671, %v675
        %vm677 = vweird.f32 %v668
        %vm678 = vweird.f32 %v671
        %vm679 = vmor %vm677, %vm678
        %v680 = vsel %vm679, %v671, %v676
        %v681 = vrsqrt.pop %v669
        %v682 = vmul.f32 %v681, %v669
        %v683 = vmul.f32 %v682, %v681
        %v684 = vmul.f32 0.5, %v683
        %v685 = vsub.f32 1.5, %v684
        %v686 = vmul.f32 %v681, %v685
        %vm687 = vweird.f32 %v669
        %vm688 = vweird.f32 %v681
        %vm689 = vmor %vm687, %vm688
        %v690 = vsel %vm689, %v681, %v686
        %v691 = vrsqrt.pop %v670
        %v692 = vmul.f32 %v691, %v670
        %v693 = vmul.f32 %v692, %v691
        %v694 = vmul.f32 0.5, %v693
        %v695 = vsub.f32 1.5, %v694
        %v696 = vmul.f32 %v691, %v695
        %vm697 = vweird.f32 %v670
        %vm698 = vweird.f32 %v691
        %vm699 = vmor %vm697, %vm698
        %v700 = vsel %vm699, %v691, %v696
        %v701 = vmul.f32 %v665, %v680
        %v702 = vmul.f32 %v666, %v690
        %v703 = vmul.f32 %v667, %v700
        %705 = vset.pattern.permute.xlu0 0
        %706 = vperm.xlu0 %705, %v590
        %v707 = vpop.permute.xlu0 %706
        %v709 = vmul.f32 %v701, %v707
        %v710 = vmul.f32 %v702, %v707
        %v711 = vmul.f32 %v703, %v707
        %713 = vset.pattern.permute.xlu0 0
        %714 = vperm.xlu0 %713, %v591
        %v715 = vpop.permute.xlu0 %714
        %v717 = vadd.f32 %v709, %v715
        %v718 = vadd.f32 %v710, %v715
        %v719 = vadd.f32 %v711, %v715
        %v720 = vsub.f32 0.0, %v717
        %v721 = vsub.f32 0.0, %v718
        %v722 = vsub.f32 0.0, %v719
        %v723 = vmul.f32 %v720, 1.442695
        %v724 = vpow.pop %v723
        %v725 = vmul.f32 %v721, 1.442695
        %v726 = vpow.pop %v725
        %v727 = vmul.f32 %v722, 1.442695
        %v728 = vpow.pop %v727
        %v729 = vadd.f32 %v724, 1.0
        %v730 = vadd.f32 %v726, 1.0
        %v731 = vadd.f32 %v728, 1.0
        %v732 = vrcp.pop %v729
        %v733 = vrcp.pop %v730
        %v734 = vrcp.pop %v731
        %v735 = vmul.f32 %v717, %v732
        %v736 = vmul.f32 %v718, %v733
        %v737 = vmul.f32 %v719, %v734
        %v739 = vperm.slane %v589, 0
        %v740 = vperm.slane %v589, 1
        %v741 = vperm.slane %v589, 2
        %v745 = vmul.f32 %v735, %v739
        %v746 = vmul.f32 %v736, %v740
        %v747 = vmul.f32 %v737, %v741
        %751 = vrot.lane.b32.xlu0 %v745, 19
        %v752 = vpop.permute.xlu0 %751
        %753 = vrot.lane.b32.xlu0 %v746, 19
        %v754 = vpop.permute.xlu0 %753
        %755 = vrot.lane.b32.xlu0 %v747, 19
        %v756 = vpop.permute.xlu0 %755
        %vm757 = vcmask 154624
        %v758 = vsel %vm757, %v752, %v754
        %v759 = vsel %vm757, %v754, %v756
        %v763 = vsel %vm757, 0.0, %v752
        %vm764 = vcmask 711680
        %v765 = vsel %vm764, %v759, 0.0
        %768 = vrot.lane.b32.xlu0 %v763, 127
        %v769 = vpop.permute.xlu0 %768
        %770 = vrot.lane.b32.xlu0 %v758, 127
        %v771 = vpop.permute.xlu0 %770
        %772 = vrot.lane.b32.xlu0 %v765, 127
        %v773 = vpop.permute.xlu0 %772
        %vm774 = vcmask 1039360
        %v775 = vsel %vm774, %v769, %v771
        %v776 = vsel %vm774, %v771, %v773
        %780 = vrot.lane.b32.xlu0 %v763, 126
        %v781 = vpop.permute.xlu0 %780
        %782 = vrot.lane.b32.xlu0 %v758, 126
        %v783 = vpop.permute.xlu0 %782
        %784 = vrot.lane.b32.xlu0 %v765, 126
        %v785 = vpop.permute.xlu0 %784
        %vm786 = vcmask 1031168
        %v787 = vsel %vm786, %v781, %v783
        %v788 = vsel %vm786, %v783, %v785
        %792 = vrot.lane.b32.xlu0 %v763, 110
        %v793 = vpop.permute.xlu0 %792
        %794 = vrot.lane.b32.xlu0 %v758, 110
        %v795 = vpop.permute.xlu0 %794
        %796 = vrot.lane.b32.xlu0 %v765, 110
        %v797 = vpop.permute.xlu0 %796
        %vm798 = vcmask 900096
        %v799 = vsel %vm798, %v793, %v795
        %v800 = vsel %vm798, %v795, %v797
        %804 = vrot.lane.b32.xlu0 %v763, 109
        %v805 = vpop.permute.xlu0 %804
        %806 = vrot.lane.b32.xlu0 %v758, 109
        %v807 = vpop.permute.xlu0 %806
        %808 = vrot.lane.b32.xlu0 %v765, 109
        %v809 = vpop.permute.xlu0 %808
        %vm810 = vcmask 891904
        %v811 = vsel %vm810, %v805, %v807
        %v812 = vsel %vm810, %v807, %v809
        %816 = vrot.lane.b32.xlu0 %v763, 108
        %v817 = vpop.permute.xlu0 %816
        %818 = vrot.lane.b32.xlu0 %v758, 108
        %v819 = vpop.permute.xlu0 %818
        %820 = vrot.lane.b32.xlu0 %v765, 108
        %v821 = vpop.permute.xlu0 %820
        %vm822 = vcmask 883712
        %v823 = vsel %vm822, %v817, %v819
        %v824 = vsel %vm822, %v819, %v821
        %828 = vrot.lane.b32.xlu0 %v763, 92
        %v829 = vpop.permute.xlu0 %828
        %830 = vrot.lane.b32.xlu0 %v758, 92
        %v831 = vpop.permute.xlu0 %830
        %832 = vrot.lane.b32.xlu0 %v765, 92
        %v833 = vpop.permute.xlu0 %832
        %vm834 = vcmask 752640
        %v835 = vsel %vm834, %v829, %v831
        %v836 = vsel %vm834, %v831, %v833
        %840 = vrot.lane.b32.xlu0 %v763, 91
        %v841 = vpop.permute.xlu0 %840
        %842 = vrot.lane.b32.xlu0 %v758, 91
        %v843 = vpop.permute.xlu0 %842
        %844 = vrot.lane.b32.xlu0 %v765, 91
        %v845 = vpop.permute.xlu0 %844
        %vm846 = vcmask 744448
        %v847 = vsel %vm846, %v841, %v843
        %v848 = vsel %vm846, %v843, %v845
        %852 = vrot.lane.b32.xlu0 %v763, 90
        %v853 = vpop.permute.xlu0 %852
        %854 = vrot.lane.b32.xlu0 %v758, 90
        %v855 = vpop.permute.xlu0 %854
        %856 = vrot.lane.b32.xlu0 %v765, 90
        %v857 = vpop.permute.xlu0 %856
        %vm858 = vcmask 736256
        %v859 = vsel %vm858, %v853, %v855
        %v860 = vsel %vm858, %v855, %v857
        %v864 = vpack.c.bf16 %v775, %v763
        %v865 = vpack.c.bf16 %v776, %v758
        %v866 = vpack.c.bf16 %v773, %v765
        %v867 = vpack.c.bf16 %v799, %v787
        %v868 = vpack.c.bf16 %v800, %v788
        %v869 = vpack.c.bf16 %v797, %v785
        %v870 = vpack.c.bf16 %v823, %v811
        %v871 = vpack.c.bf16 %v824, %v812
        %v872 = vpack.c.bf16 %v821, %v809
        %v873 = vpack.c.bf16 %v847, %v835
        %v874 = vpack.c.bf16 %v848, %v836
        %v875 = vpack.c.bf16 %v845, %v833
        %v876 = vpack.c.bf16 %v859, %v859
        %v877 = vpack.c.bf16 %v860, %v860
        %v878 = vpack.c.bf16 %v857, %v857
        %880 = vset.pattern.permute.xlu0 0
        %881 = vperm.xlu0 %880, %v594
        %v882 = vpop.permute.xlu0 %881
        %885 = vset.pattern.permute.xlu0 0
        %886 = vperm.xlu0 %885, %v595
        %v887 = vpop.permute.xlu0 %886
        %v891 = vunpack.c.l.b16 %v592
        %v892 = vunpack.c.l.b16 %v593
        %v893 = vpack.c.b16 %v892, %v891
        %vm894 = vcmask 588800
        %v896 = vsel %vm894, %v893, 0
        %vm898 = vcmask 1043456
        %v900 = vsel %vm898, %v876, 0
        %v903 = vsel %vm898, %v877, 0
        %v906 = vsel %vm898, %v878, 0
        %908 = vmatpush.bf16.msra.mxu0 0
        %909 = vmatpush.bf16.msra.mxu0 0
        %910 = vmatpush.bf16.msra.mxu0 0
        %911 = vmatpush.bf16.msra.mxu0 %v900
        %912 = vmatpush.bf16.msra.mxu0 %v873
        %913 = vmatpush.bf16.msra.mxu0 %v870
        %914 = vmatpush.bf16.msra.mxu0 %v867
        %915 = vmatpush.bf16.msra.mxu0 %v864
        %916 = vmatmul.bf16.gmra.mxu0 %v896
        %v917 = vpop.f32.mrf.mxu0
        %v918 = vadd.f32 %v882, %v917
        %v919 = vpop.f32.mrf.mxu0
        %v920 = vadd.f32 %v887, %v919
        %921 = vdwg.mxu0
        %922 = vmatpush.bf16.msra.mxu0 0
        %923 = vmatpush.bf16.msra.mxu0 0
        %924 = vmatpush.bf16.msra.mxu0 0
        %925 = vmatpush.bf16.msra.mxu0 %v903
        %926 = vmatpush.bf16.msra.mxu0 %v874
        %927 = vmatpush.bf16.msra.mxu0 %v871
        %928 = vmatpush.bf16.msra.mxu0 %v868
        %929 = vmatpush.bf16.msra.mxu0 %v865
        %930 = vmatmul.bf16.gmra.mxu0 %v896
        %v931 = vpop.f32.mrf.mxu0
        %v932 = vadd.f32 %v882, %v931
        %v933 = vpop.f32.mrf.mxu0
        %v934 = vadd.f32 %v887, %v933
        %935 = vdwg.mxu0
        %936 = vmatpush.bf16.msra.mxu0 0
        %937 = vmatpush.bf16.msra.mxu0 0
        %938 = vmatpush.bf16.msra.mxu0 0
        %939 = vmatpush.bf16.msra.mxu0 %v906
        %940 = vmatpush.bf16.msra.mxu0 %v875
        %941 = vmatpush.bf16.msra.mxu0 %v872
        %942 = vmatpush.bf16.msra.mxu0 %v869
        %943 = vmatpush.bf16.msra.mxu0 %v866
        %944 = vmatmul.bf16.gmra.mxu0 %v896
        %v945 = vpop.f32.mrf.mxu0
        %v946 = vadd.f32 %v882, %v945
        %v947 = vpop.f32.mrf.mxu0
        %v948 = vadd.f32 %v887, %v947
        %949 = vdwg.mxu0
        %v950 = vadd.f32 %v918, %v920
        %v951 = vrot.slane %v950, 4
        %v952 = vadd.f32 %v950, %v951
        %v953 = vrot.slane %v952, 2
        %v954 = vadd.f32 %v952, %v953
        %v955 = vrot.slane %v954, 1
        %v956 = vadd.f32 %v954, %v955
        %v957 = vadd.f32 %v932, %v934
        %v958 = vrot.slane %v957, 4
        %v959 = vadd.f32 %v957, %v958
        %v960 = vrot.slane %v959, 2
        %v961 = vadd.f32 %v959, %v960
        %v962 = vrot.slane %v961, 1
        %v963 = vadd.f32 %v961, %v962
        %v964 = vsel %vm620, %v946, 0.0
        %v965 = vsel %vm620, %v948, 0.0
        %v966 = vadd.f32 %v964, %v965
        %v967 = vrot.slane %v966, 4
        %v968 = vadd.f32 %v966, %v967
        %v969 = vrot.slane %v968, 2
        %v970 = vadd.f32 %v968, %v969
        %v971 = vrot.slane %v970, 1
        %v972 = vadd.f32 %v970, %v971
        %v973 = vmul.f32 %v956, 0.083333336
        %v974 = vmul.f32 %v963, 0.083333336
        %v975 = vmul.f32 %v972, 0.083333336
        %v976 = vmul.f32 %v918, %v918
        %v977 = vmul.f32 %v932, %v932
        %v978 = vmul.f32 %v946, %v946
        %v979 = vmul.f32 %v920, %v920
        %v980 = vmul.f32 %v934, %v934
        %v981 = vmul.f32 %v948, %v948
        %v982 = vadd.f32 %v976, %v979
        %v983 = vrot.slane %v982, 4
        %v984 = vadd.f32 %v982, %v983
        %v985 = vrot.slane %v984, 2
        %v986 = vadd.f32 %v984, %v985
        %v987 = vrot.slane %v986, 1
        %v988 = vadd.f32 %v986, %v987
        %v989 = vadd.f32 %v977, %v980
        %v990 = vrot.slane %v989, 4
        %v991 = vadd.f32 %v989, %v990
        %v992 = vrot.slane %v991, 2
        %v993 = vadd.f32 %v991, %v992
        %v994 = vrot.slane %v993, 1
        %v995 = vadd.f32 %v993, %v994
        %v996 = vsel %vm620, %v978, 0.0
        %v997 = vsel %vm620, %v981, 0.0
        %v998 = vadd.f32 %v996, %v997
        %v999 = vrot.slane %v998, 4
        %v1000 = vadd.f32 %v998, %v999
        %v1001 = vrot.slane %v1000, 2
        %v1002 = vadd.f32 %v1000, %v1001
        %v1003 = vrot.slane %v1002, 1
        %v1004 = vadd.f32 %v1002, %v1003
        %v1005 = vmul.f32 %v988, 0.083333336
        %v1006 = vmul.f32 %v995, 0.083333336
        %v1007 = vmul.f32 %v1004, 0.083333336
        %v1008 = vmul.f32 %v973, %v973
        %v1009 = vmul.f32 %v974, %v974
        %v1010 = vmul.f32 %v975, %v975
        %v1011 = vsub.f32 %v1005, %v1008
        %v1012 = vsub.f32 %v1006, %v1009
        %v1013 = vsub.f32 %v1007, %v1010
        %v1014 = vmax.f32 %v1011, 0.0
        %v1015 = vmax.f32 %v1012, 0.0
        %v1016 = vmax.f32 %v1013, 0.0
        %v1017 = vsub.f32 %v918, %v973
        %v1018 = vsub.f32 %v932, %v974
        %v1019 = vsub.f32 %v946, %v975
        %v1020 = vsub.f32 %v920, %v973
        %v1021 = vsub.f32 %v934, %v974
        %v1022 = vsub.f32 %v948, %v975
        %v1023 = vadd.f32 %v1014, 1e-06
        %v1024 = vadd.f32 %v1015, 1e-06
        %v1025 = vadd.f32 %v1016, 1e-06
        %v1026 = vrsqrt.pop %v1023
        %v1027 = vmul.f32 %v1026, %v1023
        %v1028 = vmul.f32 %v1027, %v1026
        %v1029 = vmul.f32 0.5, %v1028
        %v1030 = vsub.f32 1.5, %v1029
        %v1031 = vmul.f32 %v1026, %v1030
        %vm1032 = vweird.f32 %v1023
        %vm1033 = vweird.f32 %v1026
        %vm1034 = vmor %vm1032, %vm1033
        %v1035 = vsel %vm1034, %v1026, %v1031
        %v1036 = vrsqrt.pop %v1024
        %v1037 = vmul.f32 %v1036, %v1024
        %v1038 = vmul.f32 %v1037, %v1036
        %v1039 = vmul.f32 0.5, %v1038
        %v1040 = vsub.f32 1.5, %v1039
        %v1041 = vmul.f32 %v1036, %v1040
        %vm1042 = vweird.f32 %v1024
        %vm1043 = vweird.f32 %v1036
        %vm1044 = vmor %vm1042, %vm1043
        %v1045 = vsel %vm1044, %v1036, %v1041
        %v1046 = vrsqrt.pop %v1025
        %v1047 = vmul.f32 %v1046, %v1025
        %v1048 = vmul.f32 %v1047, %v1046
        %v1049 = vmul.f32 0.5, %v1048
        %v1050 = vsub.f32 1.5, %v1049
        %v1051 = vmul.f32 %v1046, %v1050
        %vm1052 = vweird.f32 %v1025
        %vm1053 = vweird.f32 %v1046
        %vm1054 = vmor %vm1052, %vm1053
        %v1055 = vsel %vm1054, %v1046, %v1051
        %v1056 = vmul.f32 %v1017, %v1035
        %v1057 = vmul.f32 %v1018, %v1045
        %v1058 = vmul.f32 %v1019, %v1055
        %v1059 = vmul.f32 %v1020, %v1035
        %v1060 = vmul.f32 %v1021, %v1045
        %v1061 = vmul.f32 %v1022, %v1055
        %1063 = vset.pattern.permute.xlu0 0
        %1064 = vperm.xlu0 %1063, %v596
        %v1065 = vpop.permute.xlu0 %1064
        %1068 = vset.pattern.permute.xlu0 0
        %1069 = vperm.xlu0 %1068, %v597
        %v1070 = vpop.permute.xlu0 %1069
        %v1072 = vmul.f32 %v1056, %v1065
        %v1073 = vmul.f32 %v1057, %v1065
        %v1074 = vmul.f32 %v1058, %v1065
        %v1075 = vmul.f32 %v1059, %v1070
        %v1076 = vmul.f32 %v1060, %v1070
        %v1077 = vmul.f32 %v1061, %v1070
        %1079 = vset.pattern.permute.xlu0 0
        %1080 = vperm.xlu0 %1079, %v598
        %v1081 = vpop.permute.xlu0 %1080
        %1084 = vset.pattern.permute.xlu0 0
        %1085 = vperm.xlu0 %1084, %v599
        %v1086 = vpop.permute.xlu0 %1085
        %v1088 = vadd.f32 %v1072, %v1081
        %v1089 = vadd.f32 %v1073, %v1081
        %v1090 = vadd.f32 %v1074, %v1081
        %v1091 = vadd.f32 %v1075, %v1086
        %v1092 = vadd.f32 %v1076, %v1086
        %v1093 = vadd.f32 %v1077, %v1086
        %v1094 = vsub.f32 0.0, %v1088
        %v1095 = vsub.f32 0.0, %v1089
        %v1096 = vsub.f32 0.0, %v1090
        %v1097 = vsub.f32 0.0, %v1091
        %v1098 = vsub.f32 0.0, %v1092
        %v1099 = vsub.f32 0.0, %v1093
        %v1100 = vmul.f32 %v1094, 1.442695
        %v1101 = vpow.pop %v1100
        %v1102 = vmul.f32 %v1095, 1.442695
        %v1103 = vpow.pop %v1102
        %v1104 = vmul.f32 %v1096, 1.442695
        %v1105 = vpow.pop %v1104
        %v1106 = vmul.f32 %v1097, 1.442695
        %v1107 = vpow.pop %v1106
        %v1108 = vmul.f32 %v1098, 1.442695
        %v1109 = vpow.pop %v1108
        %v1110 = vmul.f32 %v1099, 1.442695
        %v1111 = vpow.pop %v1110
        %v1112 = vadd.f32 %v1101, 1.0
        %v1113 = vadd.f32 %v1103, 1.0
        %v1114 = vadd.f32 %v1105, 1.0
        %v1115 = vadd.f32 %v1107, 1.0
        %v1116 = vadd.f32 %v1109, 1.0
        %v1117 = vadd.f32 %v1111, 1.0
        %v1118 = vrcp.pop %v1112
        %v1119 = vrcp.pop %v1113
        %v1120 = vrcp.pop %v1114
        %v1121 = vrcp.pop %v1115
        %v1122 = vrcp.pop %v1116
        %v1123 = vrcp.pop %v1117
        %v1124 = vmul.f32 %v1088, %v1118
        %v1125 = vmul.f32 %v1089, %v1119
        %v1126 = vmul.f32 %v1090, %v1120
        %v1127 = vmul.f32 %v1091, %v1121
        %v1128 = vmul.f32 %v1092, %v1122
        %v1129 = vmul.f32 %v1093, %v1123
        %v1130 = vmul.f32 %v1124, %v739
        %v1131 = vmul.f32 %v1125, %v740
        %v1132 = vmul.f32 %v1126, %v741
        %v1133 = vmul.f32 %v1127, %v739
        %v1134 = vmul.f32 %v1128, %v740
        %v1135 = vmul.f32 %v1129, %v741
        %1142 = vrot.lane.b32.xlu0 %v1130, 19
        %v1143 = vpop.permute.xlu0 %1142
        %1144 = vrot.lane.b32.xlu0 %v1131, 19
        %v1145 = vpop.permute.xlu0 %1144
        %1146 = vrot.lane.b32.xlu0 %v1132, 19
        %v1147 = vpop.permute.xlu0 %1146
        %1148 = vrot.lane.b32.xlu0 %v1133, 19
        %v1149 = vpop.permute.xlu0 %1148
        %1150 = vrot.lane.b32.xlu0 %v1134, 19
        %v1151 = vpop.permute.xlu0 %1150
        %1152 = vrot.lane.b32.xlu0 %v1135, 19
        %v1153 = vpop.permute.xlu0 %1152
        %v1154 = vsel %vm757, %v1143, %v1145
        %v1155 = vsel %vm757, %v1145, %v1147
        %v1156 = vsel %vm757, %v1149, %v1151
        %v1157 = vsel %vm757, %v1151, %v1153
        %v1164 = vsel %vm757, 0.0, %v1143
        %v1165 = vsel %vm757, 0.0, %v1149
        %v1166 = vsel %vm764, %v1155, 0.0
        %v1167 = vsel %vm764, %v1157, 0.0
        %1172 = vrot.lane.b32.xlu0 %v1164, 127
        %v1173 = vpop.permute.xlu0 %1172
        %1174 = vrot.lane.b32.xlu0 %v1154, 127
        %v1175 = vpop.permute.xlu0 %1174
        %1176 = vrot.lane.b32.xlu0 %v1166, 127
        %v1177 = vpop.permute.xlu0 %1176
        %1178 = vrot.lane.b32.xlu0 %v1165, 127
        %v1179 = vpop.permute.xlu0 %1178
        %1180 = vrot.lane.b32.xlu0 %v1156, 127
        %v1181 = vpop.permute.xlu0 %1180
        %1182 = vrot.lane.b32.xlu0 %v1167, 127
        %v1183 = vpop.permute.xlu0 %1182
        %v1184 = vsel %vm774, %v1173, %v1175
        %v1185 = vsel %vm774, %v1175, %v1177
        %v1186 = vsel %vm774, %v1179, %v1181
        %v1187 = vsel %vm774, %v1181, %v1183
        %1194 = vrot.lane.b32.xlu0 %v1164, 126
        %v1195 = vpop.permute.xlu0 %1194
        %1196 = vrot.lane.b32.xlu0 %v1154, 126
        %v1197 = vpop.permute.xlu0 %1196
        %1198 = vrot.lane.b32.xlu0 %v1166, 126
        %v1199 = vpop.permute.xlu0 %1198
        %1200 = vrot.lane.b32.xlu0 %v1165, 126
        %v1201 = vpop.permute.xlu0 %1200
        %1202 = vrot.lane.b32.xlu0 %v1156, 126
        %v1203 = vpop.permute.xlu0 %1202
        %1204 = vrot.lane.b32.xlu0 %v1167, 126
        %v1205 = vpop.permute.xlu0 %1204
        %v1206 = vsel %vm786, %v1195, %v1197
        %v1207 = vsel %vm786, %v1197, %v1199
        %v1208 = vsel %vm786, %v1201, %v1203
        %v1209 = vsel %vm786, %v1203, %v1205
        %1216 = vrot.lane.b32.xlu0 %v1164, 110
        %v1217 = vpop.permute.xlu0 %1216
        %1218 = vrot.lane.b32.xlu0 %v1154, 110
        %v1219 = vpop.permute.xlu0 %1218
        %1220 = vrot.lane.b32.xlu0 %v1166, 110
        %v1221 = vpop.permute.xlu0 %1220
        %1222 = vrot.lane.b32.xlu0 %v1165, 110
        %v1223 = vpop.permute.xlu0 %1222
        %1224 = vrot.lane.b32.xlu0 %v1156, 110
        %v1225 = vpop.permute.xlu0 %1224
        %1226 = vrot.lane.b32.xlu0 %v1167, 110
        %v1227 = vpop.permute.xlu0 %1226
        %v1228 = vsel %vm798, %v1217, %v1219
        %v1229 = vsel %vm798, %v1219, %v1221
        %v1230 = vsel %vm798, %v1223, %v1225
        %v1231 = vsel %vm798, %v1225, %v1227
        %1238 = vrot.lane.b32.xlu0 %v1164, 109
        %v1239 = vpop.permute.xlu0 %1238
        %1240 = vrot.lane.b32.xlu0 %v1154, 109
        %v1241 = vpop.permute.xlu0 %1240
        %1242 = vrot.lane.b32.xlu0 %v1166, 109
        %v1243 = vpop.permute.xlu0 %1242
        %1244 = vrot.lane.b32.xlu0 %v1165, 109
        %v1245 = vpop.permute.xlu0 %1244
        %1246 = vrot.lane.b32.xlu0 %v1156, 109
        %v1247 = vpop.permute.xlu0 %1246
        %1248 = vrot.lane.b32.xlu0 %v1167, 109
        %v1249 = vpop.permute.xlu0 %1248
        %v1250 = vsel %vm810, %v1239, %v1241
        %v1251 = vsel %vm810, %v1241, %v1243
        %v1252 = vsel %vm810, %v1245, %v1247
        %v1253 = vsel %vm810, %v1247, %v1249
        %1260 = vrot.lane.b32.xlu0 %v1164, 108
        %v1261 = vpop.permute.xlu0 %1260
        %1262 = vrot.lane.b32.xlu0 %v1154, 108
        %v1263 = vpop.permute.xlu0 %1262
        %1264 = vrot.lane.b32.xlu0 %v1166, 108
        %v1265 = vpop.permute.xlu0 %1264
        %1266 = vrot.lane.b32.xlu0 %v1165, 108
        %v1267 = vpop.permute.xlu0 %1266
        %1268 = vrot.lane.b32.xlu0 %v1156, 108
        %v1269 = vpop.permute.xlu0 %1268
        %1270 = vrot.lane.b32.xlu0 %v1167, 108
        %v1271 = vpop.permute.xlu0 %1270
        %v1272 = vsel %vm822, %v1261, %v1263
        %v1273 = vsel %vm822, %v1263, %v1265
        %v1274 = vsel %vm822, %v1267, %v1269
        %v1275 = vsel %vm822, %v1269, %v1271
        %1282 = vrot.lane.b32.xlu0 %v1164, 92
        %v1283 = vpop.permute.xlu0 %1282
        %1284 = vrot.lane.b32.xlu0 %v1154, 92
        %v1285 = vpop.permute.xlu0 %1284
        %1286 = vrot.lane.b32.xlu0 %v1166, 92
        %v1287 = vpop.permute.xlu0 %1286
        %1288 = vrot.lane.b32.xlu0 %v1165, 92
        %v1289 = vpop.permute.xlu0 %1288
        %1290 = vrot.lane.b32.xlu0 %v1156, 92
        %v1291 = vpop.permute.xlu0 %1290
        %1292 = vrot.lane.b32.xlu0 %v1167, 92
        %v1293 = vpop.permute.xlu0 %1292
        %v1294 = vsel %vm834, %v1283, %v1285
        %v1295 = vsel %vm834, %v1285, %v1287
        %v1296 = vsel %vm834, %v1289, %v1291
        %v1297 = vsel %vm834, %v1291, %v1293
        %1304 = vrot.lane.b32.xlu0 %v1164, 91
        %v1305 = vpop.permute.xlu0 %1304
        %1306 = vrot.lane.b32.xlu0 %v1154, 91
        %v1307 = vpop.permute.xlu0 %1306
        %1308 = vrot.lane.b32.xlu0 %v1166, 91
        %v1309 = vpop.permute.xlu0 %1308
        %1310 = vrot.lane.b32.xlu0 %v1165, 91
        %v1311 = vpop.permute.xlu0 %1310
        %1312 = vrot.lane.b32.xlu0 %v1156, 91
        %v1313 = vpop.permute.xlu0 %1312
        %1314 = vrot.lane.b32.xlu0 %v1167, 91
        %v1315 = vpop.permute.xlu0 %1314
        %v1316 = vsel %vm846, %v1305, %v1307
        %v1317 = vsel %vm846, %v1307, %v1309
        %v1318 = vsel %vm846, %v1311, %v1313
        %v1319 = vsel %vm846, %v1313, %v1315
        %1326 = vrot.lane.b32.xlu0 %v1164, 90
        %v1327 = vpop.permute.xlu0 %1326
        %1328 = vrot.lane.b32.xlu0 %v1154, 90
        %v1329 = vpop.permute.xlu0 %1328
        %1330 = vrot.lane.b32.xlu0 %v1166, 90
        %v1331 = vpop.permute.xlu0 %1330
        %1332 = vrot.lane.b32.xlu0 %v1165, 90
        %v1333 = vpop.permute.xlu0 %1332
        %1334 = vrot.lane.b32.xlu0 %v1156, 90
        %v1335 = vpop.permute.xlu0 %1334
        %1336 = vrot.lane.b32.xlu0 %v1167, 90
        %v1337 = vpop.permute.xlu0 %1336
        %v1338 = vsel %vm858, %v1327, %v1329
        %v1339 = vsel %vm858, %v1329, %v1331
        %v1340 = vsel %vm858, %v1333, %v1335
        %v1341 = vsel %vm858, %v1335, %v1337
        %v1348 = vpack.c.bf16 %v1165, %v1164
        %v1349 = vpack.c.bf16 %v1156, %v1154
        %v1350 = vpack.c.bf16 %v1167, %v1166
        %v1351 = vpack.c.bf16 %v1186, %v1184
        %v1352 = vpack.c.bf16 %v1187, %v1185
        %v1353 = vpack.c.bf16 %v1183, %v1177
        %v1354 = vpack.c.bf16 %v1208, %v1206
        %v1355 = vpack.c.bf16 %v1209, %v1207
        %v1356 = vpack.c.bf16 %v1205, %v1199
        %v1357 = vpack.c.bf16 %v1230, %v1228
        %v1358 = vpack.c.bf16 %v1231, %v1229
        %v1359 = vpack.c.bf16 %v1227, %v1221
        %v1360 = vpack.c.bf16 %v1252, %v1250
        %v1361 = vpack.c.bf16 %v1253, %v1251
        %v1362 = vpack.c.bf16 %v1249, %v1243
        %v1363 = vpack.c.bf16 %v1274, %v1272
        %v1364 = vpack.c.bf16 %v1275, %v1273
        %v1365 = vpack.c.bf16 %v1271, %v1265
        %v1366 = vpack.c.bf16 %v1296, %v1294
        %v1367 = vpack.c.bf16 %v1297, %v1295
        %v1368 = vpack.c.bf16 %v1293, %v1287
        %v1369 = vpack.c.bf16 %v1318, %v1316
        %v1370 = vpack.c.bf16 %v1319, %v1317
        %v1371 = vpack.c.bf16 %v1315, %v1309
        %v1372 = vpack.c.bf16 %v1340, %v1338
        %v1373 = vpack.c.bf16 %v1341, %v1339
        %v1374 = vpack.c.bf16 %v1337, %v1331
        %1376 = vset.pattern.permute.xlu0 0
        %1377 = vperm.xlu0 %1376, %v602
        %v1378 = vpop.permute.xlu0 %1377
        %1381 = vset.pattern.permute.xlu0 0
        %1382 = vperm.xlu0 %1381, %v603
        %v1383 = vpop.permute.xlu0 %1382
        %v1387 = vunpack.c.l.b16 %v600
        %v1388 = vunpack.c.h.b16 %v600
        %v1389 = vunpack.c.l.b16 %v601
        %v1390 = vunpack.c.h.b16 %v601
        %v1391 = vpack.c.b16 %v1389, %v1387
        %v1392 = vpack.c.b16 %v1390, %v1388
        %vm1394 = vcmask 130048
        %v1396 = vsel %vm1394, %v1392, 0
        %1398 = vmatpush.bf16.msra.mxu0 %v1369
        %1399 = vmatpush.bf16.msra.mxu0 %v1366
        %1400 = vmatpush.bf16.msra.mxu0 %v1363
        %1401 = vmatpush.bf16.msra.mxu0 %v1360
        %1402 = vmatpush.bf16.msra.mxu0 %v1357
        %1403 = vmatpush.bf16.msra.mxu0 %v1354
        %1404 = vmatpush.bf16.msra.mxu0 %v1351
        %1405 = vmatpush.bf16.msra.mxu0 %v1348
        %1406 = vmatmul.bf16.gmra.mxu0 %v1391
        %v1407 = vpop.f32.mrf.mxu0
        %v1408 = vadd.f32 %v1378, %v1407
        %v1409 = vpop.f32.mrf.mxu0
        %v1410 = vadd.f32 %v1383, %v1409
        %1411 = vdwg.mxu0
        %1412 = vmatpush.bf16.msra.mxu0 0
        %1413 = vmatpush.bf16.msra.mxu0 0
        %1414 = vmatpush.bf16.msra.mxu0 0
        %1415 = vmatpush.bf16.msra.mxu0 0
        %1416 = vmatpush.bf16.msra.mxu0 0
        %1417 = vmatpush.bf16.msra.mxu0 0
        %1418 = vmatpush.bf16.msra.mxu0 0
        %1419 = vmatpush.bf16.msra.mxu0 %v1372
        %1420 = vmatmul.bf16.gmra.mxu0 %v1396
        %v1421 = vpop.f32.mrf.mxu0
        %v1422 = vadd.f32 %v1408, %v1421
        %v1423 = vpop.f32.mrf.mxu0
        %v1424 = vadd.f32 %v1410, %v1423
        %1425 = vdwg.mxu0
        %1426 = vmatpush.bf16.msra.mxu0 %v1370
        %1427 = vmatpush.bf16.msra.mxu0 %v1367
        %1428 = vmatpush.bf16.msra.mxu0 %v1364
        %1429 = vmatpush.bf16.msra.mxu0 %v1361
        %1430 = vmatpush.bf16.msra.mxu0 %v1358
        %1431 = vmatpush.bf16.msra.mxu0 %v1355
        %1432 = vmatpush.bf16.msra.mxu0 %v1352
        %1433 = vmatpush.bf16.msra.mxu0 %v1349
        %1434 = vmatmul.bf16.gmra.mxu0 %v1391
        %v1435 = vpop.f32.mrf.mxu0
        %v1436 = vadd.f32 %v1378, %v1435
        %v1437 = vpop.f32.mrf.mxu0
        %v1438 = vadd.f32 %v1383, %v1437
        %1439 = vdwg.mxu0
        %1440 = vmatpush.bf16.msra.mxu0 0
        %1441 = vmatpush.bf16.msra.mxu0 0
        %1442 = vmatpush.bf16.msra.mxu0 0
        %1443 = vmatpush.bf16.msra.mxu0 0
        %1444 = vmatpush.bf16.msra.mxu0 0
        %1445 = vmatpush.bf16.msra.mxu0 0
        %1446 = vmatpush.bf16.msra.mxu0 0
        %1447 = vmatpush.bf16.msra.mxu0 %v1373
        %1448 = vmatmul.bf16.gmra.mxu0 %v1396
        %v1449 = vpop.f32.mrf.mxu0
        %v1450 = vadd.f32 %v1436, %v1449
        %v1451 = vpop.f32.mrf.mxu0
        %v1452 = vadd.f32 %v1438, %v1451
        %1453 = vdwg.mxu0
        %1454 = vmatpush.bf16.msra.mxu0 %v1371
        %1455 = vmatpush.bf16.msra.mxu0 %v1368
        %1456 = vmatpush.bf16.msra.mxu0 %v1365
        %1457 = vmatpush.bf16.msra.mxu0 %v1362
        %1458 = vmatpush.bf16.msra.mxu0 %v1359
        %1459 = vmatpush.bf16.msra.mxu0 %v1356
        %1460 = vmatpush.bf16.msra.mxu0 %v1353
        %1461 = vmatpush.bf16.msra.mxu0 %v1350
        %1462 = vmatmul.bf16.gmra.mxu0 %v1391
        %v1463 = vpop.f32.mrf.mxu0
        %v1464 = vadd.f32 %v1378, %v1463
        %v1465 = vpop.f32.mrf.mxu0
        %v1466 = vadd.f32 %v1383, %v1465
        %1467 = vdwg.mxu0
        %1468 = vmatpush.bf16.msra.mxu0 0
        %1469 = vmatpush.bf16.msra.mxu0 0
        %1470 = vmatpush.bf16.msra.mxu0 0
        %1471 = vmatpush.bf16.msra.mxu0 0
        %1472 = vmatpush.bf16.msra.mxu0 0
        %1473 = vmatpush.bf16.msra.mxu0 0
        %1474 = vmatpush.bf16.msra.mxu0 0
        %1475 = vmatpush.bf16.msra.mxu0 %v1374
        %1476 = vmatmul.bf16.gmra.mxu0 %v1396
        %v1477 = vpop.f32.mrf.mxu0
        %v1478 = vadd.f32 %v1464, %v1477
        %v1479 = vpop.f32.mrf.mxu0
        %v1480 = vadd.f32 %v1466, %v1479
        %1481 = vdwg.mxu0
        %v1482 = vpack.c.bf16 %v586, %v586
        %v1483 = vpack.c.bf16 %v587, %v587
        %v1484 = vpack.c.bf16 %v588, %v588
        %1486 = vset.pattern.permute.xlu0 0
        %1487 = vperm.xlu0 %1486, %v606
        %v1488 = vpop.permute.xlu0 %1487
        %1491 = vset.pattern.permute.xlu0 0
        %1492 = vperm.xlu0 %1491, %v607
        %v1493 = vpop.permute.xlu0 %1492
        %v1497 = vunpack.c.l.b16 %v604
        %v1498 = vunpack.c.l.b16 %v605
        %v1499 = vpack.c.b16 %v1498, %v1497
        %vm1500 = vcmask 64512
        %v1502 = vsel %vm1500, %v1499, 0
        %v1505 = vsel %vm898, %v1482, 0
        %v1508 = vsel %vm898, %v1483, 0
        %v1511 = vsel %vm898, %v1484, 0
        %1513 = vmatpush.bf16.msra.mxu0 0
        %1514 = vmatpush.bf16.msra.mxu0 0
        %1515 = vmatpush.bf16.msra.mxu0 0
        %1516 = vmatpush.bf16.msra.mxu0 0
        %1517 = vmatpush.bf16.msra.mxu0 0
        %1518 = vmatpush.bf16.msra.mxu0 0
        %1519 = vmatpush.bf16.msra.mxu0 0
        %1520 = vmatpush.bf16.msra.mxu0 %v1505
        %1521 = vmatmul.bf16.gmra.mxu0 %v1502
        %v1522 = vpop.f32.mrf.mxu0
        %v1523 = vadd.f32 %v1488, %v1522
        %v1524 = vpop.f32.mrf.mxu0
        %v1525 = vadd.f32 %v1493, %v1524
        %1526 = vdwg.mxu0
        %1527 = vmatpush.bf16.msra.mxu0 0
        %1528 = vmatpush.bf16.msra.mxu0 0
        %1529 = vmatpush.bf16.msra.mxu0 0
        %1530 = vmatpush.bf16.msra.mxu0 0
        %1531 = vmatpush.bf16.msra.mxu0 0
        %1532 = vmatpush.bf16.msra.mxu0 0
        %1533 = vmatpush.bf16.msra.mxu0 0
        %1534 = vmatpush.bf16.msra.mxu0 %v1508
        %1535 = vmatmul.bf16.gmra.mxu0 %v1502
        %v1536 = vpop.f32.mrf.mxu0
        %v1537 = vadd.f32 %v1488, %v1536
        %v1538 = vpop.f32.mrf.mxu0
        %v1539 = vadd.f32 %v1493, %v1538
        %1540 = vdwg.mxu0
        %1541 = vmatpush.bf16.msra.mxu0 0
        %1542 = vmatpush.bf16.msra.mxu0 0
        %1543 = vmatpush.bf16.msra.mxu0 0
        %1544 = vmatpush.bf16.msra.mxu0 0
        %1545 = vmatpush.bf16.msra.mxu0 0
        %1546 = vmatpush.bf16.msra.mxu0 0
        %1547 = vmatpush.bf16.msra.mxu0 0
        %1548 = vmatpush.bf16.msra.mxu0 %v1511
        %1549 = vmatmul.bf16.gmra.mxu0 %v1502
        %v1550 = vpop.f32.mrf.mxu0
        %v1551 = vadd.f32 %v1488, %v1550
        %v1552 = vpop.f32.mrf.mxu0
        %v1553 = vadd.f32 %v1493, %v1552
        %1554 = vdwg.mxu0
        %v1555 = vadd.f32 %v1422, %v1523
        %v1556 = vadd.f32 %v1450, %v1537
        %v1557 = vadd.f32 %v1478, %v1551
        %v1558 = vadd.f32 %v1424, %v1525
        %v1559 = vadd.f32 %v1452, %v1539
        %v1560 = vadd.f32 %v1480, %v1553
        %v1561 = vmul.f32 %v1555, %v739
        %v1562 = vmul.f32 %v1556, %v740
        %v1563 = vmul.f32 %v1557, %v741
        %v1564 = vmul.f32 %v1558, %v739
        %v1565 = vmul.f32 %v1559, %v740
        %v1566 = vmul.f32 %v1560, %v741
        %v1567 = vpack.c.bf16 %v1562, %v1561
        %v1568 = vpack.c.bf16 %v1563, %v1563
        %1569 = vst [vmem:[%s579] sm:$0xff] %v1567
        %vm1570 = vcmask 551936
        %1571 = vst.msk [vmem:[%s579 + $0x8] sm:$0xf] %vm1570, %v1568
        %v1572 = vpack.c.bf16 %v1565, %v1564
        %v1573 = vpack.c.bf16 %v1566, %v1566
        %1574 = vst [vmem:[%s584] sm:$0xff] %v1572
        %1575 = vst.msk [vmem:[%s584 + $0x8] sm:$0xf] %vm1570, %v1573
        %p1576 = scmp.lt.s32.totalorder %s30, 1
        %s1577 = scalar_select %p1576, %s30, 1
        %s1578 = smul.addr %s1577, 3
        %s1579 = smul.addr %s1578, 4
        %s1580 = scalar_lea.vmem %s12, %s1579
        %p1581 = scmp.lt.s32.totalorder %s30, 1
        %s1582 = scalar_select %p1581, %s30, 1
        %s1583 = smul.addr %s1582, 3
        %s1584 = smul.addr %s1583, 4
        %s1585 = scalar_lea.vmem %s13, %s1584
        // Predicated region
        $region101: #{wf_up_block_forward.3} parent=67 // pred_check
          %p1586 = pneg %p305
        $region102: #{wf_up_block_forward.3} parent=67 // pred_check_branch
          %1588 = sbr.rel (%p1586) target = $region104
        $region103: #{wf_up_block_forward.3} parent=67 // pred_region
          _
        $region104: #{wf_up_block_forward.3} parent=67 // pred_fallthru
          _
        // Predicated region
        $region105: #{wf_up_block_forward.3} parent=67 // pred_check
          %p1589 = pneg %p331
        $region106: #{wf_up_block_forward.3} parent=67 // pred_check_branch
          %1591 = sbr.rel (%p1589) target = $region108
        $region107: #{wf_up_block_forward.3} parent=67 // pred_region
          _
        $region108: #{wf_up_block_forward.3} parent=67 // pred_fallthru
          _
      $region68: #{wf_up_block_forward.3} parent=5 // pred_fallthru
        _
      %p1592 = scmp.le.s32.totalorder 2, %s25
      // Predicated region
      $region109: #{wf_up_block_forward.3} parent=5 // pred_check
        %p1593 = pneg %p1592
      $region110: #{wf_up_block_forward.3} parent=5 // pred_check_branch
        %1595 = sbr.rel (%p1593) target = $region112
      $region111: #{wf_up_block_forward.3} parent=5 // pred_region
        %s1596 = ssub.s32 %s25, 2
        // Predicated region
        $region113: #{wf_up_block_forward.3} parent=111 // pred_check
          %p1597 = pneg %p311
        $region114: #{wf_up_block_forward.3} parent=111 // pred_check_branch
          %1599 = sbr.rel (%p1597) target = $region116
        $region115: #{wf_up_block_forward.3} parent=111 // pred_region
          %p1600 = scmp.lt.s32.totalorder %s31, 1
          %s1601 = scalar_select %p1600, %s31, 1
          %s1602 = smul.addr %s1601, 3
          %s1603 = smul.addr %s1602, 4
          %s1604 = scalar_lea.vmem %s12, %s1603
        $region116: #{wf_up_block_forward.3} parent=111 // pred_fallthru
          _
        // Predicated region
        $region117: #{wf_up_block_forward.3} parent=111 // pred_check
          %p1605 = pneg %p337
        $region118: #{wf_up_block_forward.3} parent=111 // pred_check_branch
          %1607 = sbr.rel (%p1605) target = $region120
        $region119: #{wf_up_block_forward.3} parent=111 // pred_region
          %p1608 = scmp.lt.s32.totalorder %s31, 1
          %s1609 = scalar_select %p1608, %s31, 1
          %s1610 = smul.addr %s1609, 3
          %s1611 = smul.addr %s1610, 4
          %s1612 = scalar_lea.vmem %s13, %s1611
        $region120: #{wf_up_block_forward.3} parent=111 // pred_fallthru
          _
      $region112: #{wf_up_block_forward.3} parent=5 // pred_fallthru
        _
    $region6: #{wf_up_block_forward.3} parent=1 // loop_footer
      %s29 = sadd.s32 1, %s25
    $region7: #{wf_up_block_forward.3} parent=1 // loop_footer_branch
      %24 = sbr.rel target = $region3
    $region8: #{wf_up_block_forward.3} parent=1 // loop_exit
      _
    %1613 = vsyncpa [#allocation3], 1
    %s1614 = scalar_lea.sflag [#allocation3], 1
    %1615 = vsyncpa %s1614, 1
    %1616 = vsyncpa [#allocation5], 1
    %1617 = vsyncpa [#allocation8], 1
    %1618 = vsyncpa [#allocation11], 1
    %1619 = vsyncpa [#allocation14], 1

// kernel: wf_up_block_forward.4
$region0: #{wf_up_block_forward.4}
  #allocation0 [shape = 'u32[]', space=smem, size = 0x4, offset = 0x4, fixed_abs, tag = 'smem constant byte address 0x4 - core index']
  #allocation1 [shape = 'u32[72,128]{1,0:T(1,128)}', space=vmem, size = 0x9000, scoped, tag = 'internal scratch']
  %s0 = inlined_call_operand.vmem [shape: bf16[2,8,324], index: 0, kind: input, shape index: {}]
  %s1 = inlined_call_operand.vmem [shape: f32[1,324], index: 1, kind: input, shape index: {}]
  %s2 = inlined_call_operand.vmem [shape: f32[2,8,324], index: 2, kind: input, shape index: {}]
  %s3 = inlined_call_operand.vmem [shape: f32[8,1], index: 3, kind: input, shape index: {}, may-alias: {3,7}]
  %s4 = inlined_call_operand.vmem [shape: f32[8,1], index: 4, kind: input, shape index: {}, may-alias: {4,8}]
  %s5 = inlined_call_operand.hbm [shape: bf16[8,72], index: 5, kind: input, shape index: {}]
  %s6 = inlined_call_operand.hbm [shape: f32[8,1], index: 6, kind: input, shape index: {}]
  %s7 = inlined_call_operand.vmem [shape: f32[8,1], index: 7, kind: input, shape index: {}, may-alias: {3,7}]
  %s8 = inlined_call_operand.vmem [shape: f32[8,1], index: 8, kind: input, shape index: {}, may-alias: {4,8}]
  %s9 = inlined_call_operand.hbm [shape: bf16[8,72], index: 9, kind: input, shape index: {}]
  %s10 = inlined_call_operand.hbm [shape: f32[8,1], index: 10, kind: input, shape index: {}]
  %s11 = inlined_call_operand.hbm [shape: bf16[16,72], index: 11, kind: input, shape index: {}]
  %s12 = inlined_call_operand.hbm [shape: f32[16,1], index: 12, kind: input, shape index: {}]
  %s13 = inlined_call_operand.hbm [shape: bf16[16,16], index: 13, kind: input, shape index: {}]
  %s14 = inlined_call_operand.vmem [shape: f32[2,16,324], index: 14, kind: output, shape index: {0}]
  %s15 = inlined_call_operand.vmem [shape: f32[2,16,324], index: 15, kind: output, shape index: {1}]
  %16 = xla_tuple %s14, %s15
  %s17 = sld [smem:[#allocation0]]
  $region125: #{wf_up_block_forward.4} parent=0
    _
  %s19 = ssub.s32 1, %s17
  %s20 = scalar_select 0, %s19, %s17
  $region1: #{wf_up_block_forward.4} parent=0
    #allocation2 [shape = 'u8[2048]{0}', space=vmem, size = 0x800, scoped, tag = 'input window, operand 5, single buffered']
    #allocation3 [shape = 's32[2]{0}', space=sflag, size = 0x8, scoped, tag = 'scoped memory for wf_up_block_forward.4']
    #allocation4 [shape = 'u8[4096]{0}', space=vmem, size = 0x1000, scoped, tag = 'input window, operand 6, single buffered']
    #allocation5 [shape = 's32[1]{0}', space=sflag, size = 0x4, scoped, tag = 'scoped memory for wf_up_block_forward.4']
    #allocation6 [shape = 'u8[2048]{0}', space=vmem, size = 0x800, scoped, tag = 'input window, operand 9, single buffered']
    #allocation7 [shape = 'u8[4096]{0}', space=vmem, size = 0x1000, scoped, tag = 'input window, operand 10, single buffered']
    #allocation8 [shape = 's32[1]{0}', space=sflag, size = 0x4, scoped, tag = 'scoped memory for wf_up_block_forward.4']
    #allocation9 [shape = 'u8[4096]{0}', space=vmem, size = 0x1000, scoped, tag = 'input window, operand 11, single buffered']
    #allocation10 [shape = 'u8[8192]{0}', space=vmem, size = 0x2000, scoped, tag = 'input window, operand 12, single buffered']
    #allocation11 [shape = 's32[1]{0}', space=sflag, size = 0x4, scoped, tag = 'scoped memory for wf_up_block_forward.4']
    #allocation12 [shape = 'u8[4096]{0}', space=vmem, size = 0x1000, scoped, tag = 'input window, operand 13, single buffered']
    %21 = vsyncpa [#allocation3], 0
    %22 = vsyncpa [#allocation5], 0
    %23 = vsyncpa [#allocation8], 0
    %24 = vsyncpa [#allocation11], 0
    loop: start=0, step=1, limit=4
    $region2: #{wf_up_block_forward.4} parent=1 // loop_pre_header
      _
    $region3: #{wf_up_block_forward.4} parent=1 // loop_header
      %s26 = sphi 0, %s30
      %p27 = scmp.ge.s32.totalorder %s26, 4
      %s36 = sphi 0, %s38
      %s39 = sphi 0, %s36
      %s40 = sphi 0, %s39
      %s56 = sphi 0, %s40
      %s60 = sphi 0, %s60
      %s62 = sphi 0, %s60
      %s63 = sphi 0, %s62
      %s77 = sphi 0, %s63
      %s83 = sphi 0, %s85
      %s86 = sphi 0, %s83
      %s87 = sphi 0, %s86
      %s103 = sphi 0, %s87
      %s107 = sphi 0, %s107
      %s109 = sphi 0, %s107
      %s110 = sphi 0, %s109
      %s124 = sphi 0, %s110
      %s128 = sphi 0, %s128
      %s130 = sphi 0, %s128
      %s131 = sphi 0, %s130
      %s145 = sphi 0, %s131
      %s149 = sphi 0, %s149
      %s151 = sphi 0, %s149
      %s152 = sphi 0, %s151
      %s166 = sphi 0, %s152
      %s170 = sphi 0, %s170
      %s172 = sphi 0, %s170
      %s173 = sphi 0, %s172
      %s187 = sphi 0, %s173
      %s191 = sphi 0, %s191
      %s193 = sphi 0, %s191
      %s194 = sphi 0, %s193
      %s208 = sphi 0, %s194
      %s212 = sphi 0, %s212
      %s214 = sphi 0, %s212
      %s215 = sphi 0, %s214
      %s229 = sphi 0, %s215
      %s233 = sphi 0, %s233
      %s235 = sphi 0, %s233
      %s236 = sphi 0, %s235
      %s250 = sphi 0, %s236
      %s254 = sphi 0, %s254
      %s256 = sphi 0, %s254
      %s257 = sphi 0, %s256
      %s271 = sphi 0, %s257
      %s275 = sphi 0, %s275
      %s277 = sphi 0, %s275
      %s278 = sphi 0, %s277
      %s292 = sphi 0, %s278
      %s296 = sphi 0, %s296
      %s298 = sphi 0, %s296
      %s299 = sphi 0, %s298
      %s313 = sphi 0, %s299
      %s317 = sphi 0, %s317
      %s319 = sphi 0, %s317
      %s320 = sphi 0, %s319
      %s334 = sphi 0, %s320
      %s340 = sphi 0, %s342
      %s343 = sphi 0, %s340
      %s344 = sphi 0, %s343
      %s360 = sphi 0, %s344
      %s366 = sphi 0, %s368
      %s369 = sphi 0, %s366
      %s370 = sphi 0, %s369
      %s386 = sphi 0, %s370
    $region4: #{wf_up_block_forward.4} parent=1 // loop_header_branch
      %29 = sbr.rel (%p27) target = $region8
    $region5: #{wf_up_block_forward.4} parent=1 // loop_body
      %s31 = ssub.s32 %s26, 1
      %s32 = ssub.s32 %s26, 2
      %s33 = sadd.s32 %s26, 1
      %s34 = ssub.s32 %s26, %s33
      %p35 = scmp.eq.s32.totalorder %s34, 0
      %s37 = sadd.s32 %s36, 1
      %s38 = scalar_select %p35, %s36, %s37
      %p41 = pneg %p35
      %p42 = scmp.eq.s32.totalorder %s26, 1
      %p43 = por %p41, %p42
      %p44 = scmp.ne.s32.totalorder %s36, %s39
      %p45 = scmp.eq.s32.totalorder %s26, 0
      %p46 = por %p44, %p45
      %p47 = scmp.ne.s32.totalorder %s36, %s39
      %p48 = scmp.eq.s32.totalorder %s31, 1
      %p49 = por %p47, %p48
      %p50 = scmp.ne.s32.totalorder %s39, %s40
      %p51 = scmp.eq.s32.totalorder %s31, 0
      %p52 = por %p50, %p51
      %p53 = scmp.ne.s32.totalorder %s39, %s40
      %p54 = scmp.eq.s32.totalorder %s32, 1
      %p55 = por %p53, %p54
      %p57 = scmp.ne.s32.totalorder %s40, %s56
      %p58 = scmp.eq.s32.totalorder %s32, 0
      %p59 = por %p57, %p58
      %s61 = sadd.s32 %s60, 1
      %p64 = scmp.eq.s32.totalorder %s26, 1
      %p65 = scmp.ne.s32.totalorder %s60, %s62
      %p66 = scmp.eq.s32.totalorder %s26, 0
      %p67 = por %p65, %p66
      %p68 = scmp.ne.s32.totalorder %s60, %s62
      %p69 = scmp.eq.s32.totalorder %s31, 1
      %p70 = por %p68, %p69
      %p71 = scmp.ne.s32.totalorder %s62, %s63
      %p72 = scmp.eq.s32.totalorder %s31, 0
      %p73 = por %p71, %p72
      %p74 = scmp.ne.s32.totalorder %s62, %s63
      %p75 = scmp.eq.s32.totalorder %s32, 1
      %p76 = por %p74, %p75
      %p78 = scmp.ne.s32.totalorder %s63, %s77
      %p79 = scmp.eq.s32.totalorder %s32, 0
      %p80 = por %p78, %p79
      %s81 = ssub.s32 %s26, %s33
      %p82 = scmp.eq.s32.totalorder %s81, 0
      %s84 = sadd.s32 %s83, 1
      %s85 = scalar_select %p82, %s83, %s84
      %p88 = pneg %p82
      %p89 = scmp.eq.s32.totalorder %s26, 1
      %p90 = por %p88, %p89
      %p91 = scmp.ne.s32.totalorder %s83, %s86
      %p92 = scmp.eq.s32.totalorder %s26, 0
      %p93 = por %p91, %p92
      %p94 = scmp.ne.s32.totalorder %s83, %s86
      %p95 = scmp.eq.s32.totalorder %s31, 1
      %p96 = por %p94, %p95
      %p97 = scmp.ne.s32.totalorder %s86, %s87
      %p98 = scmp.eq.s32.totalorder %s31, 0
      %p99 = por %p97, %p98
      %p100 = scmp.ne.s32.totalorder %s86, %s87
      %p101 = scmp.eq.s32.totalorder %s32, 1
      %p102 = por %p100, %p101
      %p104 = scmp.ne.s32.totalorder %s87, %s103
      %p105 = scmp.eq.s32.totalorder %s32, 0
      %p106 = por %p104, %p105
      %s108 = sadd.s32 %s107, 1
      %p111 = scmp.eq.s32.totalorder %s26, 1
      %p112 = scmp.ne.s32.totalorder %s107, %s109
      %p113 = scmp.eq.s32.totalorder %s26, 0
      %p114 = por %p112, %p113
      %p115 = scmp.ne.s32.totalorder %s107, %s109
      %p116 = scmp.eq.s32.totalorder %s31, 1
      %p117 = por %p115, %p116
      %p118 = scmp.ne.s32.totalorder %s109, %s110
      %p119 = scmp.eq.s32.totalorder %s31, 0
      %p120 = por %p118, %p119
      %p121 = scmp.ne.s32.totalorder %s109, %s110
      %p122 = scmp.eq.s32.totalorder %s32, 1
      %p123 = por %p121, %p122
      %p125 = scmp.ne.s32.totalorder %s110, %s124
      %p126 = scmp.eq.s32.totalorder %s32, 0
      %p127 = por %p125, %p126
      %s129 = sadd.s32 %s128, 1
      %p132 = scmp.eq.s32.totalorder %s26, 1
      %p133 = scmp.ne.s32.totalorder %s128, %s130
      %p134 = scmp.eq.s32.totalorder %s26, 0
      %p135 = por %p133, %p134
      %p136 = scmp.ne.s32.totalorder %s128, %s130
      %p137 = scmp.eq.s32.totalorder %s31, 1
      %p138 = por %p136, %p137
      %p139 = scmp.ne.s32.totalorder %s130, %s131
      %p140 = scmp.eq.s32.totalorder %s31, 0
      %p141 = por %p139, %p140
      %p142 = scmp.ne.s32.totalorder %s130, %s131
      %p143 = scmp.eq.s32.totalorder %s32, 1
      %p144 = por %p142, %p143
      %p146 = scmp.ne.s32.totalorder %s131, %s145
      %p147 = scmp.eq.s32.totalorder %s32, 0
      %p148 = por %p146, %p147
      %s150 = sadd.s32 %s149, 1
      %p153 = scmp.eq.s32.totalorder %s26, 1
      %p154 = scmp.ne.s32.totalorder %s149, %s151
      %p155 = scmp.eq.s32.totalorder %s26, 0
      %p156 = por %p154, %p155
      %p157 = scmp.ne.s32.totalorder %s149, %s151
      %p158 = scmp.eq.s32.totalorder %s31, 1
      %p159 = por %p157, %p158
      %p160 = scmp.ne.s32.totalorder %s151, %s152
      %p161 = scmp.eq.s32.totalorder %s31, 0
      %p162 = por %p160, %p161
      %p163 = scmp.ne.s32.totalorder %s151, %s152
      %p164 = scmp.eq.s32.totalorder %s32, 1
      %p165 = por %p163, %p164
      %p167 = scmp.ne.s32.totalorder %s152, %s166
      %p168 = scmp.eq.s32.totalorder %s32, 0
      %p169 = por %p167, %p168
      %s171 = sadd.s32 %s170, 1
      %p174 = scmp.eq.s32.totalorder %s26, 1
      %p175 = scmp.ne.s32.totalorder %s170, %s172
      %p176 = scmp.eq.s32.totalorder %s26, 0
      %p177 = por %p175, %p176
      %p178 = scmp.ne.s32.totalorder %s170, %s172
      %p179 = scmp.eq.s32.totalorder %s31, 1
      %p180 = por %p178, %p179
      %p181 = scmp.ne.s32.totalorder %s172, %s173
      %p182 = scmp.eq.s32.totalorder %s31, 0
      %p183 = por %p181, %p182
      %p184 = scmp.ne.s32.totalorder %s172, %s173
      %p185 = scmp.eq.s32.totalorder %s32, 1
      %p186 = por %p184, %p185
      %p188 = scmp.ne.s32.totalorder %s173, %s187
      %p189 = scmp.eq.s32.totalorder %s32, 0
      %p190 = por %p188, %p189
      %s192 = sadd.s32 %s191, 1
      %p195 = scmp.eq.s32.totalorder %s26, 1
      %p196 = scmp.ne.s32.totalorder %s191, %s193
      %p197 = scmp.eq.s32.totalorder %s26, 0
      %p198 = por %p196, %p197
      %p199 = scmp.ne.s32.totalorder %s191, %s193
      %p200 = scmp.eq.s32.totalorder %s31, 1
      %p201 = por %p199, %p200
      %p202 = scmp.ne.s32.totalorder %s193, %s194
      %p203 = scmp.eq.s32.totalorder %s31, 0
      %p204 = por %p202, %p203
      %p205 = scmp.ne.s32.totalorder %s193, %s194
      %p206 = scmp.eq.s32.totalorder %s32, 1
      %p207 = por %p205, %p206
      %p209 = scmp.ne.s32.totalorder %s194, %s208
      %p210 = scmp.eq.s32.totalorder %s32, 0
      %p211 = por %p209, %p210
      %s213 = sadd.s32 %s212, 1
      %p216 = scmp.eq.s32.totalorder %s26, 1
      %p217 = scmp.ne.s32.totalorder %s212, %s214
      %p218 = scmp.eq.s32.totalorder %s26, 0
      %p219 = por %p217, %p218
      %p220 = scmp.ne.s32.totalorder %s212, %s214
      %p221 = scmp.eq.s32.totalorder %s31, 1
      %p222 = por %p220, %p221
      %p223 = scmp.ne.s32.totalorder %s214, %s215
      %p224 = scmp.eq.s32.totalorder %s31, 0
      %p225 = por %p223, %p224
      %p226 = scmp.ne.s32.totalorder %s214, %s215
      %p227 = scmp.eq.s32.totalorder %s32, 1
      %p228 = por %p226, %p227
      %p230 = scmp.ne.s32.totalorder %s215, %s229
      %p231 = scmp.eq.s32.totalorder %s32, 0
      %p232 = por %p230, %p231
      %s234 = sadd.s32 %s233, 1
      %p237 = scmp.eq.s32.totalorder %s26, 1
      %p238 = scmp.ne.s32.totalorder %s233, %s235
      %p239 = scmp.eq.s32.totalorder %s26, 0
      %p240 = por %p238, %p239
      %p241 = scmp.ne.s32.totalorder %s233, %s235
      %p242 = scmp.eq.s32.totalorder %s31, 1
      %p243 = por %p241, %p242
      %p244 = scmp.ne.s32.totalorder %s235, %s236
      %p245 = scmp.eq.s32.totalorder %s31, 0
      %p246 = por %p244, %p245
      %p247 = scmp.ne.s32.totalorder %s235, %s236
      %p248 = scmp.eq.s32.totalorder %s32, 1
      %p249 = por %p247, %p248
      %p251 = scmp.ne.s32.totalorder %s236, %s250
      %p252 = scmp.eq.s32.totalorder %s32, 0
      %p253 = por %p251, %p252
      %s255 = sadd.s32 %s254, 1
      %p258 = scmp.eq.s32.totalorder %s26, 1
      %p259 = scmp.ne.s32.totalorder %s254, %s256
      %p260 = scmp.eq.s32.totalorder %s26, 0
      %p261 = por %p259, %p260
      %p262 = scmp.ne.s32.totalorder %s254, %s256
      %p263 = scmp.eq.s32.totalorder %s31, 1
      %p264 = por %p262, %p263
      %p265 = scmp.ne.s32.totalorder %s256, %s257
      %p266 = scmp.eq.s32.totalorder %s31, 0
      %p267 = por %p265, %p266
      %p268 = scmp.ne.s32.totalorder %s256, %s257
      %p269 = scmp.eq.s32.totalorder %s32, 1
      %p270 = por %p268, %p269
      %p272 = scmp.ne.s32.totalorder %s257, %s271
      %p273 = scmp.eq.s32.totalorder %s32, 0
      %p274 = por %p272, %p273
      %s276 = sadd.s32 %s275, 1
      %p279 = scmp.eq.s32.totalorder %s26, 1
      %p280 = scmp.ne.s32.totalorder %s275, %s277
      %p281 = scmp.eq.s32.totalorder %s26, 0
      %p282 = por %p280, %p281
      %p283 = scmp.ne.s32.totalorder %s275, %s277
      %p284 = scmp.eq.s32.totalorder %s31, 1
      %p285 = por %p283, %p284
      %p286 = scmp.ne.s32.totalorder %s277, %s278
      %p287 = scmp.eq.s32.totalorder %s31, 0
      %p288 = por %p286, %p287
      %p289 = scmp.ne.s32.totalorder %s277, %s278
      %p290 = scmp.eq.s32.totalorder %s32, 1
      %p291 = por %p289, %p290
      %p293 = scmp.ne.s32.totalorder %s278, %s292
      %p294 = scmp.eq.s32.totalorder %s32, 0
      %p295 = por %p293, %p294
      %s297 = sadd.s32 %s296, 1
      %p300 = scmp.eq.s32.totalorder %s26, 1
      %p301 = scmp.ne.s32.totalorder %s296, %s298
      %p302 = scmp.eq.s32.totalorder %s26, 0
      %p303 = por %p301, %p302
      %p304 = scmp.ne.s32.totalorder %s296, %s298
      %p305 = scmp.eq.s32.totalorder %s31, 1
      %p306 = por %p304, %p305
      %p307 = scmp.ne.s32.totalorder %s298, %s299
      %p308 = scmp.eq.s32.totalorder %s31, 0
      %p309 = por %p307, %p308
      %p310 = scmp.ne.s32.totalorder %s298, %s299
      %p311 = scmp.eq.s32.totalorder %s32, 1
      %p312 = por %p310, %p311
      %p314 = scmp.ne.s32.totalorder %s299, %s313
      %p315 = scmp.eq.s32.totalorder %s32, 0
      %p316 = por %p314, %p315
      %s318 = sadd.s32 %s317, 1
      %p321 = scmp.eq.s32.totalorder %s26, 1
      %p322 = scmp.ne.s32.totalorder %s317, %s319
      %p323 = scmp.eq.s32.totalorder %s26, 0
      %p324 = por %p322, %p323
      %p325 = scmp.ne.s32.totalorder %s317, %s319
      %p326 = scmp.eq.s32.totalorder %s31, 1
      %p327 = por %p325, %p326
      %p328 = scmp.ne.s32.totalorder %s319, %s320
      %p329 = scmp.eq.s32.totalorder %s31, 0
      %p330 = por %p328, %p329
      %p331 = scmp.ne.s32.totalorder %s319, %s320
      %p332 = scmp.eq.s32.totalorder %s32, 1
      %p333 = por %p331, %p332
      %p335 = scmp.ne.s32.totalorder %s320, %s334
      %p336 = scmp.eq.s32.totalorder %s32, 0
      %p337 = por %p335, %p336
      %s338 = ssub.s32 %s26, %s33
      %p339 = scmp.eq.s32.totalorder %s338, 0
      %s341 = sadd.s32 %s340, 1
      %s342 = scalar_select %p339, %s340, %s341
      %p345 = pneg %p339
      %p346 = scmp.eq.s32.totalorder %s26, 1
      %p347 = por %p345, %p346
      %p348 = scmp.ne.s32.totalorder %s340, %s343
      %p349 = scmp.eq.s32.totalorder %s26, 0
      %p350 = por %p348, %p349
      %p351 = scmp.ne.s32.totalorder %s340, %s343
      %p352 = scmp.eq.s32.totalorder %s31, 1
      %p353 = por %p351, %p352
      %p354 = scmp.ne.s32.totalorder %s343, %s344
      %p355 = scmp.eq.s32.totalorder %s31, 0
      %p356 = por %p354, %p355
      %p357 = scmp.ne.s32.totalorder %s343, %s344
      %p358 = scmp.eq.s32.totalorder %s32, 1
      %p359 = por %p357, %p358
      %p361 = scmp.ne.s32.totalorder %s344, %s360
      %p362 = scmp.eq.s32.totalorder %s32, 0
      %p363 = por %p361, %p362
      %s364 = ssub.s32 %s26, %s33
      %p365 = scmp.eq.s32.totalorder %s364, 0
      %s367 = sadd.s32 %s366, 1
      %s368 = scalar_select %p365, %s366, %s367
      %p371 = pneg %p365
      %p372 = scmp.eq.s32.totalorder %s26, 1
      %p373 = por %p371, %p372
      %p374 = scmp.ne.s32.totalorder %s366, %s369
      %p375 = scmp.eq.s32.totalorder %s26, 0
      %p376 = por %p374, %p375
      %p377 = scmp.ne.s32.totalorder %s366, %s369
      %p378 = scmp.eq.s32.totalorder %s31, 1
      %p379 = por %p377, %p378
      %p380 = scmp.ne.s32.totalorder %s369, %s370
      %p381 = scmp.eq.s32.totalorder %s31, 0
      %p382 = por %p380, %p381
      %p383 = scmp.ne.s32.totalorder %s369, %s370
      %p384 = scmp.eq.s32.totalorder %s32, 1
      %p385 = por %p383, %p384
      %p387 = scmp.ne.s32.totalorder %s370, %s386
      %p388 = scmp.eq.s32.totalorder %s32, 0
      %p389 = por %p387, %p388
      %p390 = scmp.le.s32.totalorder 1, %s26
      %p391 = scmp.lt.s32.totalorder %s26, 3
      %p392 = pnand %p390, %p391
      %p393 = pneg %p392
      // Predicated region
      $region9: #{wf_up_block_forward.4} parent=5 // pred_check
        _
      $region10: #{wf_up_block_forward.4} parent=5 // pred_check_branch
        %395 = sbr.rel (%p392) target = $region12
      $region11: #{wf_up_block_forward.4} parent=5 // pred_region
        %s396 = ssub.s32 %s26, 1
        // Predicated region
        $region13: #{wf_up_block_forward.4} parent=11 // pred_check
          %p397 = pneg %p73
        $region14: #{wf_up_block_forward.4} parent=11 // pred_check_branch
          %399 = sbr.rel (%p397) target = $region16
        $region15: #{wf_up_block_forward.4} parent=11 // pred_region
          _
        $region16: #{wf_up_block_forward.4} parent=11 // pred_fallthru
          _
        // Predicated region
        $region17: #{wf_up_block_forward.4} parent=11 // pred_check
          %p400 = pneg %p120
        $region18: #{wf_up_block_forward.4} parent=11 // pred_check_branch
          %402 = sbr.rel (%p400) target = $region20
        $region19: #{wf_up_block_forward.4} parent=11 // pred_region
          _
        $region20: #{wf_up_block_forward.4} parent=11 // pred_fallthru
          _
        // Predicated region
        $region21: #{wf_up_block_forward.4} parent=11 // pred_check
          %p403 = pneg %p141
        $region22: #{wf_up_block_forward.4} parent=11 // pred_check_branch
          %405 = sbr.rel (%p403) target = $region24
        $region23: #{wf_up_block_forward.4} parent=11 // pred_region
          _
        $region24: #{wf_up_block_forward.4} parent=11 // pred_fallthru
          _
        // Predicated region
        $region25: #{wf_up_block_forward.4} parent=11 // pred_check
          %p406 = pneg %p162
        $region26: #{wf_up_block_forward.4} parent=11 // pred_check_branch
          %408 = sbr.rel (%p406) target = $region28
        $region27: #{wf_up_block_forward.4} parent=11 // pred_region
          %410 = vsyncadd [#allocation3], 0
          %s412 = sshll.u32 %s5, 4
          %s413 = int_to_ptr.hbm [resolvable:$true] %s412
          %s414 = sshll.u32 [#allocation2], 4
          %s415 = int_to_ptr.vmem [resolvable:$true] %s414
          %417 = dma.hbm_to_vmem [thread:$0]  %s413, 64, %s415, [#allocation3]
        $region28: #{wf_up_block_forward.4} parent=11 // pred_fallthru
          _
        // Predicated region
        $region29: #{wf_up_block_forward.4} parent=11 // pred_check
          %p418 = pneg %p183
        $region30: #{wf_up_block_forward.4} parent=11 // pred_check_branch
          %420 = sbr.rel (%p418) target = $region32
        $region31: #{wf_up_block_forward.4} parent=11 // pred_region
          %422 = vsyncadd [#allocation5], 0
          %s424 = sshll.u32 %s6, 4
          %s425 = int_to_ptr.hbm [resolvable:$true] %s424
          %s426 = sshll.u32 [#allocation4], 4
          %s427 = int_to_ptr.vmem [resolvable:$true] %s426
          %429 = dma.hbm_to_vmem [thread:$0]  %s425, 128, %s427, [#allocation5]
        $region32: #{wf_up_block_forward.4} parent=11 // pred_fallthru
          _
        // Predicated region
        $region33: #{wf_up_block_forward.4} parent=11 // pred_check
          %p430 = pneg %p204
        $region34: #{wf_up_block_forward.4} parent=11 // pred_check_branch
          %432 = sbr.rel (%p430) target = $region36
        $region35: #{wf_up_block_forward.4} parent=11 // pred_region
          _
        $region36: #{wf_up_block_forward.4} parent=11 // pred_fallthru
          _
        // Predicated region
        $region37: #{wf_up_block_forward.4} parent=11 // pred_check
          %p433 = pneg %p225
        $region38: #{wf_up_block_forward.4} parent=11 // pred_check_branch
          %435 = sbr.rel (%p433) target = $region40
        $region39: #{wf_up_block_forward.4} parent=11 // pred_region
          _
        $region40: #{wf_up_block_forward.4} parent=11 // pred_fallthru
          _
        // Predicated region
        $region41: #{wf_up_block_forward.4} parent=11 // pred_check
          %p436 = pneg %p246
        $region42: #{wf_up_block_forward.4} parent=11 // pred_check_branch
          %438 = sbr.rel (%p436) target = $region44
        $region43: #{wf_up_block_forward.4} parent=11 // pred_region
          %440 = vsyncadd [#allocation5], 0
          %s442 = sshll.u32 %s9, 4
          %s443 = int_to_ptr.hbm [resolvable:$true] %s442
          %s444 = sshll.u32 [#allocation6], 4
          %s445 = int_to_ptr.vmem [resolvable:$true] %s444
          %447 = dma.hbm_to_vmem [thread:$0]  %s443, 64, %s445, [#allocation5]
        $region44: #{wf_up_block_forward.4} parent=11 // pred_fallthru
          _
        // Predicated region
        $region45: #{wf_up_block_forward.4} parent=11 // pred_check
          %p448 = pneg %p267
        $region46: #{wf_up_block_forward.4} parent=11 // pred_check_branch
          %450 = sbr.rel (%p448) target = $region48
        $region47: #{wf_up_block_forward.4} parent=11 // pred_region
          %452 = vsyncadd [#allocation8], 0
          %s454 = sshll.u32 %s10, 4
          %s455 = int_to_ptr.hbm [resolvable:$true] %s454
          %s456 = sshll.u32 [#allocation7], 4
          %s457 = int_to_ptr.vmem [resolvable:$true] %s456
          %459 = dma.hbm_to_vmem [thread:$0]  %s455, 128, %s457, [#allocation8]
        $region48: #{wf_up_block_forward.4} parent=11 // pred_fallthru
          _
        // Predicated region
        $region49: #{wf_up_block_forward.4} parent=11 // pred_check
          %p460 = pneg %p288
        $region50: #{wf_up_block_forward.4} parent=11 // pred_check_branch
          %462 = sbr.rel (%p460) target = $region52
        $region51: #{wf_up_block_forward.4} parent=11 // pred_region
          %464 = vsyncadd [#allocation8], 0
          %s465 = sshll.u32 %s11, 4
          %s466 = int_to_ptr.hbm [resolvable:$true] %s465
          %s467 = sshll.u32 [#allocation9], 4
          %s468 = int_to_ptr.vmem [resolvable:$true] %s467
          %473 = dma.hbm_to_vmem [thread:$0]  %s466, 128, %s468, [#allocation8], 64, 64, 4
        $region52: #{wf_up_block_forward.4} parent=11 // pred_fallthru
          _
        // Predicated region
        $region53: #{wf_up_block_forward.4} parent=11 // pred_check
          %p474 = pneg %p309
        $region54: #{wf_up_block_forward.4} parent=11 // pred_check_branch
          %476 = sbr.rel (%p474) target = $region56
        $region55: #{wf_up_block_forward.4} parent=11 // pred_region
          %478 = vsyncadd [#allocation11], 0
          %s479 = sshll.u32 %s12, 4
          %s480 = int_to_ptr.hbm [resolvable:$true] %s479
          %s481 = sshll.u32 [#allocation10], 4
          %s482 = int_to_ptr.vmem [resolvable:$true] %s481
          %487 = dma.hbm_to_vmem [thread:$0]  %s480, 256, %s482, [#allocation11], 128, 128, 8
        $region56: #{wf_up_block_forward.4} parent=11 // pred_fallthru
          _
        // Predicated region
        $region57: #{wf_up_block_forward.4} parent=11 // pred_check
          %p488 = pneg %p330
        $region58: #{wf_up_block_forward.4} parent=11 // pred_check_branch
          %490 = sbr.rel (%p488) target = $region60
        $region59: #{wf_up_block_forward.4} parent=11 // pred_region
          %492 = vsyncadd [#allocation11], 0
          %s493 = sshll.u32 %s13, 4
          %s494 = int_to_ptr.hbm [resolvable:$true] %s493
          %s495 = sshll.u32 [#allocation12], 4
          %s496 = int_to_ptr.vmem [resolvable:$true] %s495
          %501 = dma.hbm_to_vmem [thread:$0]  %s494, 128, %s496, [#allocation11], 64, 64, 4
        $region60: #{wf_up_block_forward.4} parent=11 // pred_fallthru
          _
      $region12: #{wf_up_block_forward.4} parent=5 // pred_fallthru
        _
      %p502 = scmp.lt.s32.totalorder %s26, 2
      // Predicated region
      $region61: #{wf_up_block_forward.4} parent=5 // pred_check
        %p503 = pneg %p502
      $region62: #{wf_up_block_forward.4} parent=5 // pred_check_branch
        %505 = sbr.rel (%p503) target = $region64
      $region63: #{wf_up_block_forward.4} parent=5 // pred_region
        // Predicated region
        $region65: #{wf_up_block_forward.4} parent=63 // pred_check
          %p506 = pneg %p46
        $region66: #{wf_up_block_forward.4} parent=63 // pred_check_branch
          %508 = sbr.rel (%p506) target = $region68
        $region67: #{wf_up_block_forward.4} parent=63 // pred_region
          %p509 = scmp.lt.s32.totalorder %s26, 1
          %s510 = scalar_select %p509, %s26, 1
          %s511 = smul.addr %s510, 3
          %s512 = smul.addr %s511, 4
          %s513 = scalar_lea.vmem %s0, %s512
        $region68: #{wf_up_block_forward.4} parent=63 // pred_fallthru
          _
        // Predicated region
        $region69: #{wf_up_block_forward.4} parent=63 // pred_check
          %p514 = pneg %p93
        $region70: #{wf_up_block_forward.4} parent=63 // pred_check_branch
          %516 = sbr.rel (%p514) target = $region72
        $region71: #{wf_up_block_forward.4} parent=63 // pred_region
          %p517 = scmp.lt.s32.totalorder %s26, 1
          %s518 = scalar_select %p517, %s26, 1
          %s519 = smul.addr %s518, 3
          %s520 = smul.addr %s519, 8
          %s521 = scalar_lea.vmem %s2, %s520
        $region72: #{wf_up_block_forward.4} parent=63 // pred_fallthru
          _
      $region64: #{wf_up_block_forward.4} parent=5 // pred_fallthru
        _
      %p522 = scmp.le.s32.totalorder 1, %s26
      %p523 = scmp.lt.s32.totalorder %s26, 3
      %p524 = pnand %p522, %p523
      %p525 = pneg %p524
      // Predicated region
      $region73: #{wf_up_block_forward.4} parent=5 // pred_check
        _
      $region74: #{wf_up_block_forward.4} parent=5 // pred_check_branch
        %527 = sbr.rel (%p524) target = $region76
      $region75: #{wf_up_block_forward.4} parent=5 // pred_region
        %s528 = ssub.s32 %s26, 1
        // Predicated region
        $region77: #{wf_up_block_forward.4} parent=75 // pred_check
          %p529 = pneg %p162
        $region78: #{wf_up_block_forward.4} parent=75 // pred_check_branch
          %531 = sbr.rel (%p529) target = $region80
        $region79: #{wf_up_block_forward.4} parent=75 // pred_region
          %533 = dma.done [#allocation3], 64
        $region80: #{wf_up_block_forward.4} parent=75 // pred_fallthru
          _
        // Predicated region
        $region81: #{wf_up_block_forward.4} parent=75 // pred_check
          %p534 = pneg %p183
        $region82: #{wf_up_block_forward.4} parent=75 // pred_check_branch
          %536 = sbr.rel (%p534) target = $region84
        $region83: #{wf_up_block_forward.4} parent=75 // pred_region
          %538 = dma.done [#allocation5], 128
        $region84: #{wf_up_block_forward.4} parent=75 // pred_fallthru
          _
        // Predicated region
        $region85: #{wf_up_block_forward.4} parent=75 // pred_check
          %p539 = pneg %p246
        $region86: #{wf_up_block_forward.4} parent=75 // pred_check_branch
          %541 = sbr.rel (%p539) target = $region88
        $region87: #{wf_up_block_forward.4} parent=75 // pred_region
          %543 = dma.done [#allocation5], 64
        $region88: #{wf_up_block_forward.4} parent=75 // pred_fallthru
          _
        // Predicated region
        $region89: #{wf_up_block_forward.4} parent=75 // pred_check
          %p544 = pneg %p267
        $region90: #{wf_up_block_forward.4} parent=75 // pred_check_branch
          %546 = sbr.rel (%p544) target = $region92
        $region91: #{wf_up_block_forward.4} parent=75 // pred_region
          %548 = dma.done [#allocation8], 128
        $region92: #{wf_up_block_forward.4} parent=75 // pred_fallthru
          _
        // Predicated region
        $region93: #{wf_up_block_forward.4} parent=75 // pred_check
          %p549 = pneg %p288
        $region94: #{wf_up_block_forward.4} parent=75 // pred_check_branch
          %551 = sbr.rel (%p549) target = $region96
        $region95: #{wf_up_block_forward.4} parent=75 // pred_region
          %553 = dma.done [#allocation8], 128
        $region96: #{wf_up_block_forward.4} parent=75 // pred_fallthru
          _
        // Predicated region
        $region97: #{wf_up_block_forward.4} parent=75 // pred_check
          %p554 = pneg %p309
        $region98: #{wf_up_block_forward.4} parent=75 // pred_check_branch
          %556 = sbr.rel (%p554) target = $region100
        $region99: #{wf_up_block_forward.4} parent=75 // pred_region
          %558 = dma.done [#allocation11], 256
        $region100: #{wf_up_block_forward.4} parent=75 // pred_fallthru
          _
        // Predicated region
        $region101: #{wf_up_block_forward.4} parent=75 // pred_check
          %p559 = pneg %p330
        $region102: #{wf_up_block_forward.4} parent=75 // pred_check_branch
          %561 = sbr.rel (%p559) target = $region104
        $region103: #{wf_up_block_forward.4} parent=75 // pred_region
          %563 = dma.done [#allocation11], 128
        $region104: #{wf_up_block_forward.4} parent=75 // pred_fallthru
          _
        %p564 = scmp.lt.s32.totalorder %s31, 1
        %s565 = scalar_select %p564, %s31, 1
        %s566 = smul.addr %s565, 3
        %s567 = smul.addr %s566, 4
        %s568 = scalar_lea.vmem %s0, %s567
        %p569 = pneg %p52
        %p570 = pneg %p49
        %p571 = pneg %p73
        %p572 = pneg %p70
        %p573 = scmp.lt.s32.totalorder %s31, 1
        %s574 = scalar_select %p573, %s31, 1
        %s575 = smul.addr %s574, 3
        %s576 = smul.addr %s575, 8
        %s577 = scalar_lea.vmem %s2, %s576
        %p578 = pneg %p99
        %p579 = pneg %p96
        %p580 = pneg %p120
        %p581 = pneg %p117
        %p582 = pneg %p141
        %p583 = pneg %p138
        %p584 = pneg %p162
        %p585 = pneg %p159
        %p586 = pneg %p183
        %p587 = pneg %p180
        %p588 = pneg %p204
        %p589 = pneg %p201
        %p590 = pneg %p225
        %p591 = pneg %p222
        %p592 = pneg %p246
        %p593 = pneg %p243
        %p594 = pneg %p267
        %p595 = pneg %p264
        %p596 = pneg %p288
        %p597 = pneg %p285
        %p598 = pneg %p309
        %p599 = pneg %p306
        %p600 = pneg %p330
        %p601 = pneg %p327
        %p602 = pneg %p356
        %p603 = pneg %p353
        %p604 = scmp.lt.s32.totalorder %s31, 1
        %s605 = scalar_select %p604, %s31, 1
        %s606 = smul.addr %s605, 6
        %s607 = smul.addr %s606, 8
        %s608 = scalar_lea.vmem %s14, %s607
        %p609 = pneg %p382
        %p610 = pneg %p379
        %p611 = scmp.lt.s32.totalorder %s31, 1
        %s612 = scalar_select %p611, %s31, 1
        %s613 = smul.addr %s612, 6
        %s614 = smul.addr %s613, 8
        %s615 = scalar_lea.vmem %s15, %s614
        %p616 = scmp.lt.s32.totalorder %s31, 1
        %s617 = scalar_select %p616, %s31, 1
        %s618 = smul.addr %s617, 3
        %s619 = smul.addr %s618, 4
        %s620 = scalar_lea.vmem %s0, %s619
        %p621 = scmp.lt.s32.totalorder %s31, 1
        %s622 = scalar_select %p621, %s31, 1
        %s623 = smul.addr %s622, 3
        %s624 = smul.addr %s623, 8
        %s625 = scalar_lea.vmem %s2, %s624
        %p626 = scmp.lt.s32.totalorder %s31, 1
        %s627 = scalar_select %p626, %s31, 1
        %s628 = smul.addr %s627, 6
        %s629 = smul.addr %s628, 8
        %s630 = scalar_lea.vmem %s14, %s629
        %p631 = scmp.lt.s32.totalorder %s31, 1
        %s632 = scalar_select %p631, %s31, 1
        %s633 = smul.addr %s632, 6
        %s634 = smul.addr %s633, 8
        %s635 = scalar_lea.vmem %s15, %s634
        %v637 = vld [vmem:[%s620] sm:$0xff]
        %v638 = vld [vmem:[%s620 + $0x8] sm:$0xf]
        %v639 = vunpack.c.l.bf16 %v637
        %v640 = vunpack.c.h.bf16 %v637
        %v641 = vunpack.c.l.bf16 %v638
        %v642 = vld [vmem:[%s1] sm:$0x7]
        %v643 = vld [vmem:[%s3] sm:$0xff]
        %v644 = vld [vmem:[%s4] sm:$0xff]
        %v645 = vld [vmem:[#allocation2] sm:$0xf]
        %v646 = vld [vmem:[#allocation4] sm:$0xff]
        %v647 = vld [vmem:[%s7] sm:$0xff]
        %v648 = vld [vmem:[%s8] sm:$0xff]
        %v649 = vld [vmem:[#allocation6] sm:$0xf]
        %v650 = vld [vmem:[#allocation7] sm:$0xff]
        %v651 = vrot.slane %v639, 4
        %v652 = vadd.f32 %v639, %v651
        %v653 = vrot.slane %v652, 2
        %v654 = vadd.f32 %v652, %v653
        %v655 = vrot.slane %v654, 1
        %v656 = vadd.f32 %v654, %v655
        %v657 = vrot.slane %v640, 4
        %v658 = vadd.f32 %v640, %v657
        %v659 = vrot.slane %v658, 2
        %v660 = vadd.f32 %v658, %v659
        %v661 = vrot.slane %v660, 1
        %v662 = vadd.f32 %v660, %v661
        %vm663 = vcmask 556032
        %v664 = vsel %vm663, %v641, 0.0
        %v665 = vrot.slane %v664, 4
        %v666 = vadd.f32 %v664, %v665
        %v667 = vrot.slane %v666, 2
        %v668 = vadd.f32 %v666, %v667
        %v669 = vrot.slane %v668, 1
        %v670 = vadd.f32 %v668, %v669
        %v671 = vmul.f32 %v656, 0.125
        %v672 = vmul.f32 %v662, 0.125
        %v673 = vmul.f32 %v670, 0.125
        %v674 = vmul.f32 %v639, %v639
        %v675 = vmul.f32 %v640, %v640
        %v676 = vmul.f32 %v641, %v641
        %v677 = vrot.slane %v674, 4
        %v678 = vadd.f32 %v674, %v677
        %v679 = vrot.slane %v678, 2
        %v680 = vadd.f32 %v678, %v679
        %v681 = vrot.slane %v680, 1
        %v682 = vadd.f32 %v680, %v681
        %v683 = vrot.slane %v675, 4
        %v684 = vadd.f32 %v675, %v683
        %v685 = vrot.slane %v684, 2
        %v686 = vadd.f32 %v684, %v685
        %v687 = vrot.slane %v686, 1
        %v688 = vadd.f32 %v686, %v687
        %v689 = vsel %vm663, %v676, 0.0
        %v690 = vrot.slane %v689, 4
        %v691 = vadd.f32 %v689, %v690
        %v692 = vrot.slane %v691, 2
        %v693 = vadd.f32 %v691, %v692
        %v694 = vrot.slane %v693, 1
        %v695 = vadd.f32 %v693, %v694
        %v696 = vmul.f32 %v682, 0.125
        %v697 = vmul.f32 %v688, 0.125
        %v698 = vmul.f32 %v695, 0.125
        %v699 = vmul.f32 %v671, %v671
        %v700 = vmul.f32 %v672, %v672
        %v701 = vmul.f32 %v673, %v673
        %v702 = vsub.f32 %v696, %v699
        %v703 = vsub.f32 %v697, %v700
        %v704 = vsub.f32 %v698, %v701
        %v705 = vmax.f32 %v702, 0.0
        %v706 = vmax.f32 %v703, 0.0
        %v707 = vmax.f32 %v704, 0.0
        %v708 = vsub.f32 %v639, %v671
        %v709 = vsub.f32 %v640, %v672
        %v710 = vsub.f32 %v641, %v673
        %v711 = vadd.f32 %v705, 1e-06
        %v712 = vadd.f32 %v706, 1e-06
        %v713 = vadd.f32 %v707, 1e-06
        %v714 = vrsqrt.pop %v711
        %v715 = vmul.f32 %v714, %v711
        %v716 = vmul.f32 %v715, %v714
        %v717 = vmul.f32 0.5, %v716
        %v718 = vsub.f32 1.5, %v717
        %v719 = vmul.f32 %v714, %v718
        %vm720 = vweird.f32 %v711
        %vm721 = vweird.f32 %v714
        %vm722 = vmor %vm720, %vm721
        %v723 = vsel %vm722, %v714, %v719
        %v724 = vrsqrt.pop %v712
        %v725 = vmul.f32 %v724, %v712
        %v726 = vmul.f32 %v725, %v724
        %v727 = vmul.f32 0.5, %v726
        %v728 = vsub.f32 1.5, %v727
        %v729 = vmul.f32 %v724, %v728
        %vm730 = vweird.f32 %v712
        %vm731 = vweird.f32 %v724
        %vm732 = vmor %vm730, %vm731
        %v733 = vsel %vm732, %v724, %v729
        %v734 = vrsqrt.pop %v713
        %v735 = vmul.f32 %v734, %v713
        %v736 = vmul.f32 %v735, %v734
        %v737 = vmul.f32 0.5, %v736
        %v738 = vsub.f32 1.5, %v737
        %v739 = vmul.f32 %v734, %v738
        %vm740 = vweird.f32 %v713
        %vm741 = vweird.f32 %v734
        %vm742 = vmor %vm740, %vm741
        %v743 = vsel %vm742, %v734, %v739
        %v744 = vmul.f32 %v708, %v723
        %v745 = vmul.f32 %v709, %v733
        %v746 = vmul.f32 %v710, %v743
        %748 = vset.pattern.permute.xlu0 0
        %749 = vperm.xlu0 %748, %v643
        %v750 = vpop.permute.xlu0 %749
        %v752 = vmul.f32 %v744, %v750
        %v753 = vmul.f32 %v745, %v750
        %v754 = vmul.f32 %v746, %v750
        %756 = vset.pattern.permute.xlu0 0
        %757 = vperm.xlu0 %756, %v644
        %v758 = vpop.permute.xlu0 %757
        %v760 = vadd.f32 %v752, %v758
        %v761 = vadd.f32 %v753, %v758
        %v762 = vadd.f32 %v754, %v758
        %v763 = vsub.f32 0.0, %v760
        %v764 = vsub.f32 0.0, %v761
        %v765 = vsub.f32 0.0, %v762
        %v766 = vmul.f32 %v763, 1.442695
        %v767 = vpow.pop %v766
        %v768 = vmul.f32 %v764, 1.442695
        %v769 = vpow.pop %v768
        %v770 = vmul.f32 %v765, 1.442695
        %v771 = vpow.pop %v770
        %v772 = vadd.f32 %v767, 1.0
        %v773 = vadd.f32 %v769, 1.0
        %v774 = vadd.f32 %v771, 1.0
        %v775 = vrcp.pop %v772
        %v776 = vrcp.pop %v773
        %v777 = vrcp.pop %v774
        %v778 = vmul.f32 %v760, %v775
        %v779 = vmul.f32 %v761, %v776
        %v780 = vmul.f32 %v762, %v777
        %v782 = vperm.slane %v642, 0
        %v783 = vperm.slane %v642, 1
        %v784 = vperm.slane %v642, 2
        %v788 = vmul.f32 %v778, %v782
        %v789 = vmul.f32 %v779, %v783
        %v790 = vmul.f32 %v780, %v784
        %794 = vrot.lane.b32.xlu0 %v788, 19
        %v795 = vpop.permute.xlu0 %794
        %796 = vrot.lane.b32.xlu0 %v789, 19
        %v797 = vpop.permute.xlu0 %796
        %798 = vrot.lane.b32.xlu0 %v790, 19
        %v799 = vpop.permute.xlu0 %798
        %vm800 = vcmask 154624
        %v801 = vsel %vm800, %v795, %v797
        %v802 = vsel %vm800, %v797, %v799
        %v806 = vsel %vm800, 0.0, %v795
        %vm807 = vcmask 711680
        %v808 = vsel %vm807, %v802, 0.0
        %811 = vrot.lane.b32.xlu0 %v806, 127
        %v812 = vpop.permute.xlu0 %811
        %813 = vrot.lane.b32.xlu0 %v801, 127
        %v814 = vpop.permute.xlu0 %813
        %815 = vrot.lane.b32.xlu0 %v808, 127
        %v816 = vpop.permute.xlu0 %815
        %vm817 = vcmask 1039360
        %v818 = vsel %vm817, %v812, %v814
        %v819 = vsel %vm817, %v814, %v816
        %823 = vrot.lane.b32.xlu0 %v806, 126
        %v824 = vpop.permute.xlu0 %823
        %825 = vrot.lane.b32.xlu0 %v801, 126
        %v826 = vpop.permute.xlu0 %825
        %827 = vrot.lane.b32.xlu0 %v808, 126
        %v828 = vpop.permute.xlu0 %827
        %vm829 = vcmask 1031168
        %v830 = vsel %vm829, %v824, %v826
        %v831 = vsel %vm829, %v826, %v828
        %835 = vrot.lane.b32.xlu0 %v806, 110
        %v836 = vpop.permute.xlu0 %835
        %837 = vrot.lane.b32.xlu0 %v801, 110
        %v838 = vpop.permute.xlu0 %837
        %839 = vrot.lane.b32.xlu0 %v808, 110
        %v840 = vpop.permute.xlu0 %839
        %vm841 = vcmask 900096
        %v842 = vsel %vm841, %v836, %v838
        %v843 = vsel %vm841, %v838, %v840
        %847 = vrot.lane.b32.xlu0 %v806, 109
        %v848 = vpop.permute.xlu0 %847
        %849 = vrot.lane.b32.xlu0 %v801, 109
        %v850 = vpop.permute.xlu0 %849
        %851 = vrot.lane.b32.xlu0 %v808, 109
        %v852 = vpop.permute.xlu0 %851
        %vm853 = vcmask 891904
        %v854 = vsel %vm853, %v848, %v850
        %v855 = vsel %vm853, %v850, %v852
        %859 = vrot.lane.b32.xlu0 %v806, 108
        %v860 = vpop.permute.xlu0 %859
        %861 = vrot.lane.b32.xlu0 %v801, 108
        %v862 = vpop.permute.xlu0 %861
        %863 = vrot.lane.b32.xlu0 %v808, 108
        %v864 = vpop.permute.xlu0 %863
        %vm865 = vcmask 883712
        %v866 = vsel %vm865, %v860, %v862
        %v867 = vsel %vm865, %v862, %v864
        %871 = vrot.lane.b32.xlu0 %v806, 92
        %v872 = vpop.permute.xlu0 %871
        %873 = vrot.lane.b32.xlu0 %v801, 92
        %v874 = vpop.permute.xlu0 %873
        %875 = vrot.lane.b32.xlu0 %v808, 92
        %v876 = vpop.permute.xlu0 %875
        %vm877 = vcmask 752640
        %v878 = vsel %vm877, %v872, %v874
        %v879 = vsel %vm877, %v874, %v876
        %883 = vrot.lane.b32.xlu0 %v806, 91
        %v884 = vpop.permute.xlu0 %883
        %885 = vrot.lane.b32.xlu0 %v801, 91
        %v886 = vpop.permute.xlu0 %885
        %887 = vrot.lane.b32.xlu0 %v808, 91
        %v888 = vpop.permute.xlu0 %887
        %vm889 = vcmask 744448
        %v890 = vsel %vm889, %v884, %v886
        %v891 = vsel %vm889, %v886, %v888
        %895 = vrot.lane.b32.xlu0 %v806, 90
        %v896 = vpop.permute.xlu0 %895
        %897 = vrot.lane.b32.xlu0 %v801, 90
        %v898 = vpop.permute.xlu0 %897
        %899 = vrot.lane.b32.xlu0 %v808, 90
        %v900 = vpop.permute.xlu0 %899
        %vm901 = vcmask 736256
        %v902 = vsel %vm901, %v896, %v898
        %v903 = vsel %vm901, %v898, %v900
        %v907 = vpack.c.bf16 %v818, %v806
        %v908 = vpack.c.bf16 %v819, %v801
        %v909 = vpack.c.bf16 %v816, %v808
        %v910 = vpack.c.bf16 %v842, %v830
        %v911 = vpack.c.bf16 %v843, %v831
        %v912 = vpack.c.bf16 %v840, %v828
        %v913 = vpack.c.bf16 %v866, %v854
        %v914 = vpack.c.bf16 %v867, %v855
        %v915 = vpack.c.bf16 %v864, %v852
        %v916 = vpack.c.bf16 %v890, %v878
        %v917 = vpack.c.bf16 %v891, %v879
        %v918 = vpack.c.bf16 %v888, %v876
        %v919 = vpack.c.bf16 %v902, %v902
        %v920 = vpack.c.bf16 %v903, %v903
        %v921 = vpack.c.bf16 %v900, %v900
        %923 = vset.pattern.permute.xlu0 0
        %924 = vperm.xlu0 %923, %v646
        %v925 = vpop.permute.xlu0 %924
        %vm927 = vcmask 588800
        %v929 = vsel %vm927, %v645, 0
        %vm931 = vcmask 1043456
        %v933 = vsel %vm931, %v919, 0
        %v936 = vsel %vm931, %v920, 0
        %v939 = vsel %vm931, %v921, 0
        %941 = vmatpush.bf16.msra.mxu0 0
        %942 = vmatpush.bf16.msra.mxu0 0
        %943 = vmatpush.bf16.msra.mxu0 0
        %944 = vmatpush.bf16.msra.mxu0 %v933
        %945 = vmatpush.bf16.msra.mxu0 %v916
        %946 = vmatpush.bf16.msra.mxu0 %v913
        %947 = vmatpush.bf16.msra.mxu0 %v910
        %948 = vmatpush.bf16.msra.mxu0 %v907
        %949 = vmatmul.bf16.gmra.mxu0 %v929
        %v950 = vpop.f32.mrf.mxu0
        %v951 = vadd.f32 %v925, %v950
        %v952 = vpop.f32.mrf.mxu0
        %953 = vdwg.mxu0
        %954 = vmatpush.bf16.msra.mxu0 0
        %955 = vmatpush.bf16.msra.mxu0 0
        %956 = vmatpush.bf16.msra.mxu0 0
        %957 = vmatpush.bf16.msra.mxu0 %v936
        %958 = vmatpush.bf16.msra.mxu0 %v917
        %959 = vmatpush.bf16.msra.mxu0 %v914
        %960 = vmatpush.bf16.msra.mxu0 %v911
        %961 = vmatpush.bf16.msra.mxu0 %v908
        %962 = vmatmul.bf16.gmra.mxu0 %v929
        %v963 = vpop.f32.mrf.mxu0
        %v964 = vadd.f32 %v925, %v963
        %v965 = vpop.f32.mrf.mxu0
        %966 = vdwg.mxu0
        %967 = vmatpush.bf16.msra.mxu0 0
        %968 = vmatpush.bf16.msra.mxu0 0
        %969 = vmatpush.bf16.msra.mxu0 0
        %970 = vmatpush.bf16.msra.mxu0 %v939
        %971 = vmatpush.bf16.msra.mxu0 %v918
        %972 = vmatpush.bf16.msra.mxu0 %v915
        %973 = vmatpush.bf16.msra.mxu0 %v912
        %974 = vmatpush.bf16.msra.mxu0 %v909
        %975 = vmatmul.bf16.gmra.mxu0 %v929
        %v976 = vpop.f32.mrf.mxu0
        %v977 = vadd.f32 %v925, %v976
        %v978 = vpop.f32.mrf.mxu0
        %979 = vdwg.mxu0
        %v980 = vrot.slane %v951, 4
        %v981 = vadd.f32 %v951, %v980
        %v982 = vrot.slane %v981, 2
        %v983 = vadd.f32 %v981, %v982
        %v984 = vrot.slane %v983, 1
        %v985 = vadd.f32 %v983, %v984
        %v986 = vrot.slane %v964, 4
        %v987 = vadd.f32 %v964, %v986
        %v988 = vrot.slane %v987, 2
        %v989 = vadd.f32 %v987, %v988
        %v990 = vrot.slane %v989, 1
        %v991 = vadd.f32 %v989, %v990
        %v992 = vsel %vm663, %v977, 0.0
        %v993 = vrot.slane %v992, 4
        %v994 = vadd.f32 %v992, %v993
        %v995 = vrot.slane %v994, 2
        %v996 = vadd.f32 %v994, %v995
        %v997 = vrot.slane %v996, 1
        %v998 = vadd.f32 %v996, %v997
        %v999 = vmul.f32 %v985, 0.125
        %v1000 = vmul.f32 %v991, 0.125
        %v1001 = vmul.f32 %v998, 0.125
        %v1002 = vmul.f32 %v951, %v951
        %v1003 = vmul.f32 %v964, %v964
        %v1004 = vmul.f32 %v977, %v977
        %v1005 = vrot.slane %v1002, 4
        %v1006 = vadd.f32 %v1002, %v1005
        %v1007 = vrot.slane %v1006, 2
        %v1008 = vadd.f32 %v1006, %v1007
        %v1009 = vrot.slane %v1008, 1
        %v1010 = vadd.f32 %v1008, %v1009
        %v1011 = vrot.slane %v1003, 4
        %v1012 = vadd.f32 %v1003, %v1011
        %v1013 = vrot.slane %v1012, 2
        %v1014 = vadd.f32 %v1012, %v1013
        %v1015 = vrot.slane %v1014, 1
        %v1016 = vadd.f32 %v1014, %v1015
        %v1017 = vsel %vm663, %v1004, 0.0
        %v1018 = vrot.slane %v1017, 4
        %v1019 = vadd.f32 %v1017, %v1018
        %v1020 = vrot.slane %v1019, 2
        %v1021 = vadd.f32 %v1019, %v1020
        %v1022 = vrot.slane %v1021, 1
        %v1023 = vadd.f32 %v1021, %v1022
        %v1024 = vmul.f32 %v1010, 0.125
        %v1025 = vmul.f32 %v1016, 0.125
        %v1026 = vmul.f32 %v1023, 0.125
        %v1027 = vmul.f32 %v999, %v999
        %v1028 = vmul.f32 %v1000, %v1000
        %v1029 = vmul.f32 %v1001, %v1001
        %v1030 = vsub.f32 %v1024, %v1027
        %v1031 = vsub.f32 %v1025, %v1028
        %v1032 = vsub.f32 %v1026, %v1029
        %v1033 = vmax.f32 %v1030, 0.0
        %v1034 = vmax.f32 %v1031, 0.0
        %v1035 = vmax.f32 %v1032, 0.0
        %v1036 = vsub.f32 %v951, %v999
        %v1037 = vsub.f32 %v964, %v1000
        %v1038 = vsub.f32 %v977, %v1001
        %v1039 = vadd.f32 %v1033, 1e-06
        %v1040 = vadd.f32 %v1034, 1e-06
        %v1041 = vadd.f32 %v1035, 1e-06
        %v1042 = vrsqrt.pop %v1039
        %v1043 = vmul.f32 %v1042, %v1039
        %v1044 = vmul.f32 %v1043, %v1042
        %v1045 = vmul.f32 0.5, %v1044
        %v1046 = vsub.f32 1.5, %v1045
        %v1047 = vmul.f32 %v1042, %v1046
        %vm1048 = vweird.f32 %v1039
        %vm1049 = vweird.f32 %v1042
        %vm1050 = vmor %vm1048, %vm1049
        %v1051 = vsel %vm1050, %v1042, %v1047
        %v1052 = vrsqrt.pop %v1040
        %v1053 = vmul.f32 %v1052, %v1040
        %v1054 = vmul.f32 %v1053, %v1052
        %v1055 = vmul.f32 0.5, %v1054
        %v1056 = vsub.f32 1.5, %v1055
        %v1057 = vmul.f32 %v1052, %v1056
        %vm1058 = vweird.f32 %v1040
        %vm1059 = vweird.f32 %v1052
        %vm1060 = vmor %vm1058, %vm1059
        %v1061 = vsel %vm1060, %v1052, %v1057
        %v1062 = vrsqrt.pop %v1041
        %v1063 = vmul.f32 %v1062, %v1041
        %v1064 = vmul.f32 %v1063, %v1062
        %v1065 = vmul.f32 0.5, %v1064
        %v1066 = vsub.f32 1.5, %v1065
        %v1067 = vmul.f32 %v1062, %v1066
        %vm1068 = vweird.f32 %v1041
        %vm1069 = vweird.f32 %v1062
        %vm1070 = vmor %vm1068, %vm1069
        %v1071 = vsel %vm1070, %v1062, %v1067
        %v1072 = vmul.f32 %v1036, %v1051
        %v1073 = vmul.f32 %v1037, %v1061
        %v1074 = vmul.f32 %v1038, %v1071
        %1076 = vset.pattern.permute.xlu0 0
        %1077 = vperm.xlu0 %1076, %v647
        %v1078 = vpop.permute.xlu0 %1077
        %v1080 = vmul.f32 %v1072, %v1078
        %v1081 = vmul.f32 %v1073, %v1078
        %v1082 = vmul.f32 %v1074, %v1078
        %1084 = vset.pattern.permute.xlu0 0
        %1085 = vperm.xlu0 %1084, %v648
        %v1086 = vpop.permute.xlu0 %1085
        %v1088 = vadd.f32 %v1080, %v1086
        %v1089 = vadd.f32 %v1081, %v1086
        %v1090 = vadd.f32 %v1082, %v1086
        %v1091 = vsub.f32 0.0, %v1088
        %v1092 = vsub.f32 0.0, %v1089
        %v1093 = vsub.f32 0.0, %v1090
        %v1094 = vmul.f32 %v1091, 1.442695
        %v1095 = vpow.pop %v1094
        %v1096 = vmul.f32 %v1092, 1.442695
        %v1097 = vpow.pop %v1096
        %v1098 = vmul.f32 %v1093, 1.442695
        %v1099 = vpow.pop %v1098
        %v1100 = vadd.f32 %v1095, 1.0
        %v1101 = vadd.f32 %v1097, 1.0
        %v1102 = vadd.f32 %v1099, 1.0
        %v1103 = vrcp.pop %v1100
        %v1104 = vrcp.pop %v1101
        %v1105 = vrcp.pop %v1102
        %v1106 = vmul.f32 %v1088, %v1103
        %v1107 = vmul.f32 %v1089, %v1104
        %v1108 = vmul.f32 %v1090, %v1105
        %v1109 = vmul.f32 %v1106, %v782
        %v1110 = vmul.f32 %v1107, %v783
        %v1111 = vmul.f32 %v1108, %v784
        %1115 = vrot.lane.b32.xlu0 %v1109, 19
        %v1116 = vpop.permute.xlu0 %1115
        %1117 = vrot.lane.b32.xlu0 %v1110, 19
        %v1118 = vpop.permute.xlu0 %1117
        %1119 = vrot.lane.b32.xlu0 %v1111, 19
        %v1120 = vpop.permute.xlu0 %1119
        %v1121 = vsel %vm800, %v1116, %v1118
        %v1122 = vsel %vm800, %v1118, %v1120
        %v1126 = vsel %vm800, 0.0, %v1116
        %v1127 = vsel %vm807, %v1122, 0.0
        %1130 = vrot.lane.b32.xlu0 %v1126, 127
        %v1131 = vpop.permute.xlu0 %1130
        %1132 = vrot.lane.b32.xlu0 %v1121, 127
        %v1133 = vpop.permute.xlu0 %1132
        %1134 = vrot.lane.b32.xlu0 %v1127, 127
        %v1135 = vpop.permute.xlu0 %1134
        %v1136 = vsel %vm817, %v1131, %v1133
        %v1137 = vsel %vm817, %v1133, %v1135
        %1141 = vrot.lane.b32.xlu0 %v1126, 126
        %v1142 = vpop.permute.xlu0 %1141
        %1143 = vrot.lane.b32.xlu0 %v1121, 126
        %v1144 = vpop.permute.xlu0 %1143
        %1145 = vrot.lane.b32.xlu0 %v1127, 126
        %v1146 = vpop.permute.xlu0 %1145
        %v1147 = vsel %vm829, %v1142, %v1144
        %v1148 = vsel %vm829, %v1144, %v1146
        %1152 = vrot.lane.b32.xlu0 %v1126, 110
        %v1153 = vpop.permute.xlu0 %1152
        %1154 = vrot.lane.b32.xlu0 %v1121, 110
        %v1155 = vpop.permute.xlu0 %1154
        %1156 = vrot.lane.b32.xlu0 %v1127, 110
        %v1157 = vpop.permute.xlu0 %1156
        %v1158 = vsel %vm841, %v1153, %v1155
        %v1159 = vsel %vm841, %v1155, %v1157
        %1163 = vrot.lane.b32.xlu0 %v1126, 109
        %v1164 = vpop.permute.xlu0 %1163
        %1165 = vrot.lane.b32.xlu0 %v1121, 109
        %v1166 = vpop.permute.xlu0 %1165
        %1167 = vrot.lane.b32.xlu0 %v1127, 109
        %v1168 = vpop.permute.xlu0 %1167
        %v1169 = vsel %vm853, %v1164, %v1166
        %v1170 = vsel %vm853, %v1166, %v1168
        %1174 = vrot.lane.b32.xlu0 %v1126, 108
        %v1175 = vpop.permute.xlu0 %1174
        %1176 = vrot.lane.b32.xlu0 %v1121, 108
        %v1177 = vpop.permute.xlu0 %1176
        %1178 = vrot.lane.b32.xlu0 %v1127, 108
        %v1179 = vpop.permute.xlu0 %1178
        %v1180 = vsel %vm865, %v1175, %v1177
        %v1181 = vsel %vm865, %v1177, %v1179
        %1185 = vrot.lane.b32.xlu0 %v1126, 92
        %v1186 = vpop.permute.xlu0 %1185
        %1187 = vrot.lane.b32.xlu0 %v1121, 92
        %v1188 = vpop.permute.xlu0 %1187
        %1189 = vrot.lane.b32.xlu0 %v1127, 92
        %v1190 = vpop.permute.xlu0 %1189
        %v1191 = vsel %vm877, %v1186, %v1188
        %v1192 = vsel %vm877, %v1188, %v1190
        %1196 = vrot.lane.b32.xlu0 %v1126, 91
        %v1197 = vpop.permute.xlu0 %1196
        %1198 = vrot.lane.b32.xlu0 %v1121, 91
        %v1199 = vpop.permute.xlu0 %1198
        %1200 = vrot.lane.b32.xlu0 %v1127, 91
        %v1201 = vpop.permute.xlu0 %1200
        %v1202 = vsel %vm889, %v1197, %v1199
        %v1203 = vsel %vm889, %v1199, %v1201
        %1207 = vrot.lane.b32.xlu0 %v1126, 90
        %v1208 = vpop.permute.xlu0 %1207
        %1209 = vrot.lane.b32.xlu0 %v1121, 90
        %v1210 = vpop.permute.xlu0 %1209
        %1211 = vrot.lane.b32.xlu0 %v1127, 90
        %v1212 = vpop.permute.xlu0 %1211
        %v1213 = vsel %vm901, %v1208, %v1210
        %v1214 = vsel %vm901, %v1210, %v1212
        %v1218 = vpack.c.bf16 %v1136, %v1126
        %v1219 = vpack.c.bf16 %v1137, %v1121
        %v1220 = vpack.c.bf16 %v1135, %v1127
        %v1221 = vpack.c.bf16 %v1158, %v1147
        %v1222 = vpack.c.bf16 %v1159, %v1148
        %v1223 = vpack.c.bf16 %v1157, %v1146
        %v1224 = vpack.c.bf16 %v1180, %v1169
        %v1225 = vpack.c.bf16 %v1181, %v1170
        %v1226 = vpack.c.bf16 %v1179, %v1168
        %v1227 = vpack.c.bf16 %v1202, %v1191
        %v1228 = vpack.c.bf16 %v1203, %v1192
        %v1229 = vpack.c.bf16 %v1201, %v1190
        %v1230 = vpack.c.bf16 %v1213, %v1213
        %v1231 = vpack.c.bf16 %v1214, %v1214
        %v1232 = vpack.c.bf16 %v1212, %v1212
        %1234 = vset.pattern.permute.xlu0 0
        %1235 = vperm.xlu0 %1234, %v650
        %v1236 = vpop.permute.xlu0 %1235
        %v1239 = vsel %vm927, %v649, 0
        %v1242 = vsel %vm931, %v1230, 0
        %v1245 = vsel %vm931, %v1231, 0
        %v1248 = vsel %vm931, %v1232, 0
        %1250 = vmatpush.bf16.msra.mxu0 0
        %1251 = vmatpush.bf16.msra.mxu0 0
        %1252 = vmatpush.bf16.msra.mxu0 0
        %1253 = vmatpush.bf16.msra.mxu0 %v1242
        %1254 = vmatpush.bf16.msra.mxu0 %v1227
        %1255 = vmatpush.bf16.msra.mxu0 %v1224
        %1256 = vmatpush.bf16.msra.mxu0 %v1221
        %1257 = vmatpush.bf16.msra.mxu0 %v1218
        %1258 = vmatmul.bf16.gmra.mxu0 %v1239
        %v1259 = vpop.f32.mrf.mxu0
        %v1260 = vadd.f32 %v1236, %v1259
        %v1261 = vpop.f32.mrf.mxu0
        %1262 = vdwg.mxu0
        %1263 = vmatpush.bf16.msra.mxu0 0
        %1264 = vmatpush.bf16.msra.mxu0 0
        %1265 = vmatpush.bf16.msra.mxu0 0
        %1266 = vmatpush.bf16.msra.mxu0 %v1245
        %1267 = vmatpush.bf16.msra.mxu0 %v1228
        %1268 = vmatpush.bf16.msra.mxu0 %v1225
        %1269 = vmatpush.bf16.msra.mxu0 %v1222
        %1270 = vmatpush.bf16.msra.mxu0 %v1219
        %1271 = vmatmul.bf16.gmra.mxu0 %v1239
        %v1272 = vpop.f32.mrf.mxu0
        %v1273 = vadd.f32 %v1236, %v1272
        %v1274 = vpop.f32.mrf.mxu0
        %1275 = vdwg.mxu0
        %1276 = vmatpush.bf16.msra.mxu0 0
        %1277 = vmatpush.bf16.msra.mxu0 0
        %1278 = vmatpush.bf16.msra.mxu0 0
        %1279 = vmatpush.bf16.msra.mxu0 %v1248
        %1280 = vmatpush.bf16.msra.mxu0 %v1229
        %1281 = vmatpush.bf16.msra.mxu0 %v1226
        %1282 = vmatpush.bf16.msra.mxu0 %v1223
        %1283 = vmatpush.bf16.msra.mxu0 %v1220
        %1284 = vmatmul.bf16.gmra.mxu0 %v1239
        %v1285 = vpop.f32.mrf.mxu0
        %v1286 = vadd.f32 %v1236, %v1285
        %v1287 = vpop.f32.mrf.mxu0
        %1288 = vdwg.mxu0
        %v1289 = vadd.f32 %v1260, %v639
        %v1290 = vadd.f32 %v1273, %v640
        %v1291 = vadd.f32 %v1286, %v641
        %v1292 = vmul.f32 %v1289, %v782
        %v1293 = vmul.f32 %v1290, %v783
        %v1294 = vmul.f32 %v1291, %v784
        %v1295 = vld [vmem:[#allocation9] sm:$0xf]
        %v1296 = vld [vmem:[#allocation9 + $0x4] sm:$0xf]
        %v1297 = vld [vmem:[#allocation10] sm:$0xff]
        %v1298 = vld [vmem:[#allocation10 + $0x8] sm:$0xff]
        %1302 = vrot.lane.b32.xlu0 %v1292, 19
        %v1303 = vpop.permute.xlu0 %1302
        %1304 = vrot.lane.b32.xlu0 %v1293, 19
        %v1305 = vpop.permute.xlu0 %1304
        %1306 = vrot.lane.b32.xlu0 %v1294, 19
        %v1307 = vpop.permute.xlu0 %1306
        %v1308 = vsel %vm800, %v1303, %v1305
        %v1309 = vsel %vm800, %v1305, %v1307
        %v1313 = vsel %vm800, 0.0, %v1303
        %v1314 = vsel %vm807, %v1309, 0.0
        %1317 = vrot.lane.b32.xlu0 %v1313, 127
        %v1318 = vpop.permute.xlu0 %1317
        %1319 = vrot.lane.b32.xlu0 %v1308, 127
        %v1320 = vpop.permute.xlu0 %1319
        %1321 = vrot.lane.b32.xlu0 %v1314, 127
        %v1322 = vpop.permute.xlu0 %1321
        %v1323 = vsel %vm817, %v1318, %v1320
        %v1324 = vsel %vm817, %v1320, %v1322
        %1328 = vrot.lane.b32.xlu0 %v1313, 126
        %v1329 = vpop.permute.xlu0 %1328
        %1330 = vrot.lane.b32.xlu0 %v1308, 126
        %v1331 = vpop.permute.xlu0 %1330
        %1332 = vrot.lane.b32.xlu0 %v1314, 126
        %v1333 = vpop.permute.xlu0 %1332
        %v1334 = vsel %vm829, %v1329, %v1331
        %v1335 = vsel %vm829, %v1331, %v1333
        %1339 = vrot.lane.b32.xlu0 %v1313, 110
        %v1340 = vpop.permute.xlu0 %1339
        %1341 = vrot.lane.b32.xlu0 %v1308, 110
        %v1342 = vpop.permute.xlu0 %1341
        %1343 = vrot.lane.b32.xlu0 %v1314, 110
        %v1344 = vpop.permute.xlu0 %1343
        %v1345 = vsel %vm841, %v1340, %v1342
        %v1346 = vsel %vm841, %v1342, %v1344
        %1350 = vrot.lane.b32.xlu0 %v1313, 109
        %v1351 = vpop.permute.xlu0 %1350
        %1352 = vrot.lane.b32.xlu0 %v1308, 109
        %v1353 = vpop.permute.xlu0 %1352
        %1354 = vrot.lane.b32.xlu0 %v1314, 109
        %v1355 = vpop.permute.xlu0 %1354
        %v1356 = vsel %vm853, %v1351, %v1353
        %v1357 = vsel %vm853, %v1353, %v1355
        %1361 = vrot.lane.b32.xlu0 %v1313, 108
        %v1362 = vpop.permute.xlu0 %1361
        %1363 = vrot.lane.b32.xlu0 %v1308, 108
        %v1364 = vpop.permute.xlu0 %1363
        %1365 = vrot.lane.b32.xlu0 %v1314, 108
        %v1366 = vpop.permute.xlu0 %1365
        %v1367 = vsel %vm865, %v1362, %v1364
        %v1368 = vsel %vm865, %v1364, %v1366
        %1372 = vrot.lane.b32.xlu0 %v1313, 92
        %v1373 = vpop.permute.xlu0 %1372
        %1374 = vrot.lane.b32.xlu0 %v1308, 92
        %v1375 = vpop.permute.xlu0 %1374
        %1376 = vrot.lane.b32.xlu0 %v1314, 92
        %v1377 = vpop.permute.xlu0 %1376
        %v1378 = vsel %vm877, %v1373, %v1375
        %v1379 = vsel %vm877, %v1375, %v1377
        %1383 = vrot.lane.b32.xlu0 %v1313, 91
        %v1384 = vpop.permute.xlu0 %1383
        %1385 = vrot.lane.b32.xlu0 %v1308, 91
        %v1386 = vpop.permute.xlu0 %1385
        %1387 = vrot.lane.b32.xlu0 %v1314, 91
        %v1388 = vpop.permute.xlu0 %1387
        %v1389 = vsel %vm889, %v1384, %v1386
        %v1390 = vsel %vm889, %v1386, %v1388
        %1394 = vrot.lane.b32.xlu0 %v1313, 90
        %v1395 = vpop.permute.xlu0 %1394
        %1396 = vrot.lane.b32.xlu0 %v1308, 90
        %v1397 = vpop.permute.xlu0 %1396
        %1398 = vrot.lane.b32.xlu0 %v1314, 90
        %v1399 = vpop.permute.xlu0 %1398
        %v1400 = vsel %vm901, %v1395, %v1397
        %v1401 = vsel %vm901, %v1397, %v1399
        %v1405 = vpack.c.bf16 %v1323, %v1313
        %v1406 = vpack.c.bf16 %v1324, %v1308
        %v1407 = vpack.c.bf16 %v1322, %v1314
        %v1408 = vpack.c.bf16 %v1345, %v1334
        %v1409 = vpack.c.bf16 %v1346, %v1335
        %v1410 = vpack.c.bf16 %v1344, %v1333
        %v1411 = vpack.c.bf16 %v1367, %v1356
        %v1412 = vpack.c.bf16 %v1368, %v1357
        %v1413 = vpack.c.bf16 %v1366, %v1355
        %v1414 = vpack.c.bf16 %v1389, %v1378
        %v1415 = vpack.c.bf16 %v1390, %v1379
        %v1416 = vpack.c.bf16 %v1388, %v1377
        %v1417 = vpack.c.bf16 %v1400, %v1400
        %v1418 = vpack.c.bf16 %v1401, %v1401
        %v1419 = vpack.c.bf16 %v1399, %v1399
        %1421 = vset.pattern.permute.xlu0 0
        %1422 = vperm.xlu0 %1421, %v1297
        %v1423 = vpop.permute.xlu0 %1422
        %1426 = vset.pattern.permute.xlu0 0
        %1427 = vperm.xlu0 %1426, %v1298
        %v1428 = vpop.permute.xlu0 %1427
        %v1432 = vunpack.c.l.b16 %v1295
        %v1433 = vunpack.c.l.b16 %v1296
        %v1434 = vpack.c.b16 %v1433, %v1432
        %v1436 = vsel %vm927, %v1434, 0
        %v1439 = vsel %vm931, %v1417, 0
        %v1442 = vsel %vm931, %v1418, 0
        %v1445 = vsel %vm931, %v1419, 0
        %1447 = vmatpush.bf16.msra.mxu0 0
        %1448 = vmatpush.bf16.msra.mxu0 0
        %1449 = vmatpush.bf16.msra.mxu0 0
        %1450 = vmatpush.bf16.msra.mxu0 %v1439
        %1451 = vmatpush.bf16.msra.mxu0 %v1414
        %1452 = vmatpush.bf16.msra.mxu0 %v1411
        %1453 = vmatpush.bf16.msra.mxu0 %v1408
        %1454 = vmatpush.bf16.msra.mxu0 %v1405
        %1455 = vmatmul.bf16.gmra.mxu0 %v1436
        %v1456 = vpop.f32.mrf.mxu0
        %v1457 = vadd.f32 %v1423, %v1456
        %v1458 = vpop.f32.mrf.mxu0
        %v1459 = vadd.f32 %v1428, %v1458
        %1460 = vdwg.mxu0
        %1461 = vmatpush.bf16.msra.mxu0 0
        %1462 = vmatpush.bf16.msra.mxu0 0
        %1463 = vmatpush.bf16.msra.mxu0 0
        %1464 = vmatpush.bf16.msra.mxu0 %v1442
        %1465 = vmatpush.bf16.msra.mxu0 %v1415
        %1466 = vmatpush.bf16.msra.mxu0 %v1412
        %1467 = vmatpush.bf16.msra.mxu0 %v1409
        %1468 = vmatpush.bf16.msra.mxu0 %v1406
        %1469 = vmatmul.bf16.gmra.mxu0 %v1436
        %v1470 = vpop.f32.mrf.mxu0
        %v1471 = vadd.f32 %v1423, %v1470
        %v1472 = vpop.f32.mrf.mxu0
        %v1473 = vadd.f32 %v1428, %v1472
        %1474 = vdwg.mxu0
        %1475 = vmatpush.bf16.msra.mxu0 0
        %1476 = vmatpush.bf16.msra.mxu0 0
        %1477 = vmatpush.bf16.msra.mxu0 0
        %1478 = vmatpush.bf16.msra.mxu0 %v1445
        %1479 = vmatpush.bf16.msra.mxu0 %v1416
        %1480 = vmatpush.bf16.msra.mxu0 %v1413
        %1481 = vmatpush.bf16.msra.mxu0 %v1410
        %1482 = vmatpush.bf16.msra.mxu0 %v1407
        %1483 = vmatmul.bf16.gmra.mxu0 %v1436
        %v1484 = vpop.f32.mrf.mxu0
        %v1485 = vadd.f32 %v1423, %v1484
        %v1486 = vpop.f32.mrf.mxu0
        %v1487 = vadd.f32 %v1428, %v1486
        %1488 = vdwg.mxu0
        %v1489 = vld [vmem:[%s625] sm:$0xff]
        %v1490 = vld [vmem:[%s625 + $0x8] sm:$0xff]
        %v1491 = vld [vmem:[%s625 + $0x10] sm:$0xff]
        %v1492 = vadd.f32 %v1457, %v1489
        %v1493 = vadd.f32 %v1471, %v1490
        %v1494 = vadd.f32 %v1485, %v1491
        %1495 = vst [vmem:[%s630] sm:$0xff] %v1492
        %1496 = vst [vmem:[%s630 + $0x8] sm:$0xff] %v1493
        %1497 = vst.msk [vmem:[%s630 + $0x10] sm:$0xff] %vm663, %v1494
        %1498 = vst [vmem:[%s630 + $0x18] sm:$0xff] %v1459
        %1499 = vst [vmem:[%s630 + $0x20] sm:$0xff] %v1473
        %1500 = vst.msk [vmem:[%s630 + $0x28] sm:$0xff] %vm663, %v1487
        %v1501 = vld [vmem:[#allocation12] sm:$0xf]
        %v1502 = vld [vmem:[#allocation12 + $0x4] sm:$0xf]
        %v1503 = vpack.c.bf16 %v1459, %v1492
        %v1504 = vpack.c.bf16 %v1473, %v1493
        %v1505 = vpack.c.bf16 %v1487, %v1494
        %v1508 = vunpack.c.l.b16 %v1501
        %v1509 = vunpack.c.l.b16 %v1502
        %v1510 = vpack.c.b16 %v1509, %v1508
        %vm1511 = vcmask 130048
        %v1513 = vsel %vm1511, %v1510, 0
        %1515 = vmatpush.bf16.msra.mxu0 0
        %1516 = vmatpush.bf16.msra.mxu0 0
        %1517 = vmatpush.bf16.msra.mxu0 0
        %1518 = vmatpush.bf16.msra.mxu0 0
        %1519 = vmatpush.bf16.msra.mxu0 0
        %1520 = vmatpush.bf16.msra.mxu0 0
        %1521 = vmatpush.bf16.msra.mxu0 0
        %1522 = vmatpush.bf16.msra.mxu0 %v1503
        %1523 = vmatmul.bf16.gmra.mxu0 %v1513
        %v1524 = vpop.f32.mrf.mxu0
        %v1525 = vadd.f32 0.0, %v1524
        %v1526 = vpop.f32.mrf.mxu0
        %v1527 = vadd.f32 0.0, %v1526
        %1528 = vdwg.mxu0
        %1529 = vmatpush.bf16.msra.mxu0 0
        %1530 = vmatpush.bf16.msra.mxu0 0
        %1531 = vmatpush.bf16.msra.mxu0 0
        %1532 = vmatpush.bf16.msra.mxu0 0
        %1533 = vmatpush.bf16.msra.mxu0 0
        %1534 = vmatpush.bf16.msra.mxu0 0
        %1535 = vmatpush.bf16.msra.mxu0 0
        %1536 = vmatpush.bf16.msra.mxu0 %v1504
        %1537 = vmatmul.bf16.gmra.mxu0 %v1513
        %v1538 = vpop.f32.mrf.mxu0
        %v1539 = vadd.f32 0.0, %v1538
        %v1540 = vpop.f32.mrf.mxu0
        %v1541 = vadd.f32 0.0, %v1540
        %1542 = vdwg.mxu0
        %1543 = vmatpush.bf16.msra.mxu0 0
        %1544 = vmatpush.bf16.msra.mxu0 0
        %1545 = vmatpush.bf16.msra.mxu0 0
        %1546 = vmatpush.bf16.msra.mxu0 0
        %1547 = vmatpush.bf16.msra.mxu0 0
        %1548 = vmatpush.bf16.msra.mxu0 0
        %1549 = vmatpush.bf16.msra.mxu0 0
        %1550 = vmatpush.bf16.msra.mxu0 %v1505
        %1551 = vmatmul.bf16.gmra.mxu0 %v1513
        %v1552 = vpop.f32.mrf.mxu0
        %v1553 = vadd.f32 0.0, %v1552
        %v1554 = vpop.f32.mrf.mxu0
        %v1555 = vadd.f32 0.0, %v1554
        %1556 = vdwg.mxu0
        %1557 = vst [vmem:[%s635] sm:$0xff] %v1525
        %1558 = vst [vmem:[%s635 + $0x8] sm:$0xff] %v1539
        %1559 = vst.msk [vmem:[%s635 + $0x10] sm:$0xff] %vm663, %v1553
        %1560 = vst [vmem:[%s635 + $0x18] sm:$0xff] %v1527
        %1561 = vst [vmem:[%s635 + $0x20] sm:$0xff] %v1541
        %1562 = vst.msk [vmem:[%s635 + $0x28] sm:$0xff] %vm663, %v1555
        %p1563 = scmp.lt.s32.totalorder %s31, 1
        %s1564 = scalar_select %p1563, %s31, 1
        %s1565 = smul.addr %s1564, 6
        %s1566 = smul.addr %s1565, 8
        %s1567 = scalar_lea.vmem %s14, %s1566
        %p1568 = scmp.lt.s32.totalorder %s31, 1
        %s1569 = scalar_select %p1568, %s31, 1
        %s1570 = smul.addr %s1569, 6
        %s1571 = smul.addr %s1570, 8
        %s1572 = scalar_lea.vmem %s15, %s1571
        // Predicated region
        $region105: #{wf_up_block_forward.4} parent=75 // pred_check
          %p1573 = pneg %p353
        $region106: #{wf_up_block_forward.4} parent=75 // pred_check_branch
          %1575 = sbr.rel (%p1573) target = $region108
        $region107: #{wf_up_block_forward.4} parent=75 // pred_region
          _
        $region108: #{wf_up_block_forward.4} parent=75 // pred_fallthru
          _
        // Predicated region
        $region109: #{wf_up_block_forward.4} parent=75 // pred_check
          %p1576 = pneg %p379
        $region110: #{wf_up_block_forward.4} parent=75 // pred_check_branch
          %1578 = sbr.rel (%p1576) target = $region112
        $region111: #{wf_up_block_forward.4} parent=75 // pred_region
          _
        $region112: #{wf_up_block_forward.4} parent=75 // pred_fallthru
          _
      $region76: #{wf_up_block_forward.4} parent=5 // pred_fallthru
        _
      %p1579 = scmp.le.s32.totalorder 2, %s26
      // Predicated region
      $region113: #{wf_up_block_forward.4} parent=5 // pred_check
        %p1580 = pneg %p1579
      $region114: #{wf_up_block_forward.4} parent=5 // pred_check_branch
        %1582 = sbr.rel (%p1580) target = $region116
      $region115: #{wf_up_block_forward.4} parent=5 // pred_region
        %s1583 = ssub.s32 %s26, 2
        // Predicated region
        $region117: #{wf_up_block_forward.4} parent=115 // pred_check
          %p1584 = pneg %p359
        $region118: #{wf_up_block_forward.4} parent=115 // pred_check_branch
          %1586 = sbr.rel (%p1584) target = $region120
        $region119: #{wf_up_block_forward.4} parent=115 // pred_region
          %p1587 = scmp.lt.s32.totalorder %s32, 1
          %s1588 = scalar_select %p1587, %s32, 1
          %s1589 = smul.addr %s1588, 6
          %s1590 = smul.addr %s1589, 8
          %s1591 = scalar_lea.vmem %s14, %s1590
        $region120: #{wf_up_block_forward.4} parent=115 // pred_fallthru
          _
        // Predicated region
        $region121: #{wf_up_block_forward.4} parent=115 // pred_check
          %p1592 = pneg %p385
        $region122: #{wf_up_block_forward.4} parent=115 // pred_check_branch
          %1594 = sbr.rel (%p1592) target = $region124
        $region123: #{wf_up_block_forward.4} parent=115 // pred_region
          %p1595 = scmp.lt.s32.totalorder %s32, 1
          %s1596 = scalar_select %p1595, %s32, 1
          %s1597 = smul.addr %s1596, 6
          %s1598 = smul.addr %s1597, 8
          %s1599 = scalar_lea.vmem %s15, %s1598
        $region124: #{wf_up_block_forward.4} parent=115 // pred_fallthru
          _
      $region116: #{wf_up_block_forward.4} parent=5 // pred_fallthru
        _
    $region6: #{wf_up_block_forward.4} parent=1 // loop_footer
      %s30 = sadd.s32 1, %s26
    $region7: #{wf_up_block_forward.4} parent=1 // loop_footer_branch
      %25 = sbr.rel target = $region3
    $region8: #{wf_up_block_forward.4} parent=1 // loop_exit
      _
    %1600 = vsyncpa [#allocation3], 1
    %s1601 = scalar_lea.sflag [#allocation3], 1
    %1602 = vsyncpa %s1601, 1
    %1603 = vsyncpa [#allocation5], 1
    %1604 = vsyncpa [#allocation8], 1
    %1605 = vsyncpa [#allocation11], 1

// kernel: wf_up_block_forward.5
$region0: #{wf_up_block_forward.5}
  #allocation0 [shape = 'u32[]', space=smem, size = 0x4, offset = 0x4, fixed_abs, tag = 'smem constant byte address 0x4 - core index']
  #allocation1 [shape = 'u32[72,128]{1,0:T(1,128)}', space=vmem, size = 0x9000, scoped, tag = 'internal scratch']
  %s0 = inlined_call_operand.vmem [shape: bf16[2,8,1156], index: 0, kind: input, shape index: {}]
  %s1 = inlined_call_operand.vmem [shape: f32[1,1156], index: 1, kind: input, shape index: {}]
  %s2 = inlined_call_operand.vmem [shape: bf16[8,72], index: 2, kind: input, shape index: {}]
  %s3 = inlined_call_operand.vmem [shape: f32[8,1], index: 3, kind: input, shape index: {}, may-alias: {3,5,9}]
  %s4 = inlined_call_operand.vmem [shape: f32[8,1], index: 4, kind: input, shape index: {}, may-alias: {4,8}]
  %s5 = inlined_call_operand.vmem [shape: f32[8,1], index: 5, kind: input, shape index: {}, may-alias: {3,5,9}]
  %s6 = inlined_call_operand.vmem [shape: bf16[8,72], index: 6, kind: input, shape index: {}]
  %s7 = inlined_call_operand.vmem [shape: f32[8,1], index: 7, kind: input, shape index: {}]
  %s8 = inlined_call_operand.vmem [shape: f32[8,1], index: 8, kind: input, shape index: {}, may-alias: {4,8}]
  %s9 = inlined_call_operand.vmem [shape: f32[8,1], index: 9, kind: input, shape index: {}, may-alias: {3,5,9}]
  %s10 = inlined_call_operand.vmem [shape: bf16[8,72], index: 10, kind: input, shape index: {}]
  %s11 = inlined_call_operand.vmem [shape: f32[8,1], index: 11, kind: input, shape index: {}]
  %s12 = inlined_call_operand.vmem [shape: f32[2,8,1156], index: 12, kind: output, shape index: {}]
  %s13 = sld [smem:[#allocation0]]
  $region81: #{wf_up_block_forward.5} parent=0
    _
  %s15 = ssub.s32 1, %s13
  %s16 = scalar_select 0, %s15, %s13
  loop: start=0, step=1, limit=4
  $region2: #{wf_up_block_forward.5} parent=0 // loop_pre_header
    _
  $region3: #{wf_up_block_forward.5} parent=0 // loop_header
    %s18 = sphi 0, %s22
    %p19 = scmp.ge.s32.totalorder %s18, 4
    %s28 = sphi 0, %s30
    %s31 = sphi 0, %s28
    %s32 = sphi 0, %s31
    %s48 = sphi 0, %s32
    %s52 = sphi 0, %s52
    %s54 = sphi 0, %s52
    %s55 = sphi 0, %s54
    %s69 = sphi 0, %s55
    %s73 = sphi 0, %s73
    %s75 = sphi 0, %s73
    %s76 = sphi 0, %s75
    %s90 = sphi 0, %s76
    %s94 = sphi 0, %s94
    %s96 = sphi 0, %s94
    %s97 = sphi 0, %s96
    %s111 = sphi 0, %s97
    %s115 = sphi 0, %s115
    %s117 = sphi 0, %s115
    %s118 = sphi 0, %s117
    %s132 = sphi 0, %s118
    %s136 = sphi 0, %s136
    %s138 = sphi 0, %s136
    %s139 = sphi 0, %s138
    %s153 = sphi 0, %s139
    %s157 = sphi 0, %s157
    %s159 = sphi 0, %s157
    %s160 = sphi 0, %s159
    %s174 = sphi 0, %s160
    %s178 = sphi 0, %s178
    %s180 = sphi 0, %s178
    %s181 = sphi 0, %s180
    %s195 = sphi 0, %s181
    %s199 = sphi 0, %s199
    %s201 = sphi 0, %s199
    %s202 = sphi 0, %s201
    %s216 = sphi 0, %s202
    %s220 = sphi 0, %s220
    %s222 = sphi 0, %s220
    %s223 = sphi 0, %s222
    %s237 = sphi 0, %s223
    %s241 = sphi 0, %s241
    %s243 = sphi 0, %s241
    %s244 = sphi 0, %s243
    %s258 = sphi 0, %s244
    %s262 = sphi 0, %s262
    %s264 = sphi 0, %s262
    %s265 = sphi 0, %s264
    %s279 = sphi 0, %s265
    %s285 = sphi 0, %s287
    %s288 = sphi 0, %s285
    %s289 = sphi 0, %s288
    %s305 = sphi 0, %s289
  $region4: #{wf_up_block_forward.5} parent=0 // loop_header_branch
    %21 = sbr.rel (%p19) target = $region8
  $region5: #{wf_up_block_forward.5} parent=0 // loop_body
    %s23 = ssub.s32 %s18, 1
    %s24 = ssub.s32 %s18, 2
    %s25 = sadd.s32 %s18, 1
    %s26 = ssub.s32 %s18, %s25
    %p27 = scmp.eq.s32.totalorder %s26, 0
    %s29 = sadd.s32 %s28, 1
    %s30 = scalar_select %p27, %s28, %s29
    %p33 = pneg %p27
    %p34 = scmp.eq.s32.totalorder %s18, 1
    %p35 = por %p33, %p34
    %p36 = scmp.ne.s32.totalorder %s28, %s31
    %p37 = scmp.eq.s32.totalorder %s18, 0
    %p38 = por %p36, %p37
    %p39 = scmp.ne.s32.totalorder %s28, %s31
    %p40 = scmp.eq.s32.totalorder %s23, 1
    %p41 = por %p39, %p40
    %p42 = scmp.ne.s32.totalorder %s31, %s32
    %p43 = scmp.eq.s32.totalorder %s23, 0
    %p44 = por %p42, %p43
    %p45 = scmp.ne.s32.totalorder %s31, %s32
    %p46 = scmp.eq.s32.totalorder %s24, 1
    %p47 = por %p45, %p46
    %p49 = scmp.ne.s32.totalorder %s32, %s48
    %p50 = scmp.eq.s32.totalorder %s24, 0
    %p51 = por %p49, %p50
    %s53 = sadd.s32 %s52, 1
    %p56 = scmp.eq.s32.totalorder %s18, 1
    %p57 = scmp.ne.s32.totalorder %s52, %s54
    %p58 = scmp.eq.s32.totalorder %s18, 0
    %p59 = por %p57, %p58
    %p60 = scmp.ne.s32.totalorder %s52, %s54
    %p61 = scmp.eq.s32.totalorder %s23, 1
    %p62 = por %p60, %p61
    %p63 = scmp.ne.s32.totalorder %s54, %s55
    %p64 = scmp.eq.s32.totalorder %s23, 0
    %p65 = por %p63, %p64
    %p66 = scmp.ne.s32.totalorder %s54, %s55
    %p67 = scmp.eq.s32.totalorder %s24, 1
    %p68 = por %p66, %p67
    %p70 = scmp.ne.s32.totalorder %s55, %s69
    %p71 = scmp.eq.s32.totalorder %s24, 0
    %p72 = por %p70, %p71
    %s74 = sadd.s32 %s73, 1
    %p77 = scmp.eq.s32.totalorder %s18, 1
    %p78 = scmp.ne.s32.totalorder %s73, %s75
    %p79 = scmp.eq.s32.totalorder %s18, 0
    %p80 = por %p78, %p79
    %p81 = scmp.ne.s32.totalorder %s73, %s75
    %p82 = scmp.eq.s32.totalorder %s23, 1
    %p83 = por %p81, %p82
    %p84 = scmp.ne.s32.totalorder %s75, %s76
    %p85 = scmp.eq.s32.totalorder %s23, 0
    %p86 = por %p84, %p85
    %p87 = scmp.ne.s32.totalorder %s75, %s76
    %p88 = scmp.eq.s32.totalorder %s24, 1
    %p89 = por %p87, %p88
    %p91 = scmp.ne.s32.totalorder %s76, %s90
    %p92 = scmp.eq.s32.totalorder %s24, 0
    %p93 = por %p91, %p92
    %s95 = sadd.s32 %s94, 1
    %p98 = scmp.eq.s32.totalorder %s18, 1
    %p99 = scmp.ne.s32.totalorder %s94, %s96
    %p100 = scmp.eq.s32.totalorder %s18, 0
    %p101 = por %p99, %p100
    %p102 = scmp.ne.s32.totalorder %s94, %s96
    %p103 = scmp.eq.s32.totalorder %s23, 1
    %p104 = por %p102, %p103
    %p105 = scmp.ne.s32.totalorder %s96, %s97
    %p106 = scmp.eq.s32.totalorder %s23, 0
    %p107 = por %p105, %p106
    %p108 = scmp.ne.s32.totalorder %s96, %s97
    %p109 = scmp.eq.s32.totalorder %s24, 1
    %p110 = por %p108, %p109
    %p112 = scmp.ne.s32.totalorder %s97, %s111
    %p113 = scmp.eq.s32.totalorder %s24, 0
    %p114 = por %p112, %p113
    %s116 = sadd.s32 %s115, 1
    %p119 = scmp.eq.s32.totalorder %s18, 1
    %p120 = scmp.ne.s32.totalorder %s115, %s117
    %p121 = scmp.eq.s32.totalorder %s18, 0
    %p122 = por %p120, %p121
    %p123 = scmp.ne.s32.totalorder %s115, %s117
    %p124 = scmp.eq.s32.totalorder %s23, 1
    %p125 = por %p123, %p124
    %p126 = scmp.ne.s32.totalorder %s117, %s118
    %p127 = scmp.eq.s32.totalorder %s23, 0
    %p128 = por %p126, %p127
    %p129 = scmp.ne.s32.totalorder %s117, %s118
    %p130 = scmp.eq.s32.totalorder %s24, 1
    %p131 = por %p129, %p130
    %p133 = scmp.ne.s32.totalorder %s118, %s132
    %p134 = scmp.eq.s32.totalorder %s24, 0
    %p135 = por %p133, %p134
    %s137 = sadd.s32 %s136, 1
    %p140 = scmp.eq.s32.totalorder %s18, 1
    %p141 = scmp.ne.s32.totalorder %s136, %s138
    %p142 = scmp.eq.s32.totalorder %s18, 0
    %p143 = por %p141, %p142
    %p144 = scmp.ne.s32.totalorder %s136, %s138
    %p145 = scmp.eq.s32.totalorder %s23, 1
    %p146 = por %p144, %p145
    %p147 = scmp.ne.s32.totalorder %s138, %s139
    %p148 = scmp.eq.s32.totalorder %s23, 0
    %p149 = por %p147, %p148
    %p150 = scmp.ne.s32.totalorder %s138, %s139
    %p151 = scmp.eq.s32.totalorder %s24, 1
    %p152 = por %p150, %p151
    %p154 = scmp.ne.s32.totalorder %s139, %s153
    %p155 = scmp.eq.s32.totalorder %s24, 0
    %p156 = por %p154, %p155
    %s158 = sadd.s32 %s157, 1
    %p161 = scmp.eq.s32.totalorder %s18, 1
    %p162 = scmp.ne.s32.totalorder %s157, %s159
    %p163 = scmp.eq.s32.totalorder %s18, 0
    %p164 = por %p162, %p163
    %p165 = scmp.ne.s32.totalorder %s157, %s159
    %p166 = scmp.eq.s32.totalorder %s23, 1
    %p167 = por %p165, %p166
    %p168 = scmp.ne.s32.totalorder %s159, %s160
    %p169 = scmp.eq.s32.totalorder %s23, 0
    %p170 = por %p168, %p169
    %p171 = scmp.ne.s32.totalorder %s159, %s160
    %p172 = scmp.eq.s32.totalorder %s24, 1
    %p173 = por %p171, %p172
    %p175 = scmp.ne.s32.totalorder %s160, %s174
    %p176 = scmp.eq.s32.totalorder %s24, 0
    %p177 = por %p175, %p176
    %s179 = sadd.s32 %s178, 1
    %p182 = scmp.eq.s32.totalorder %s18, 1
    %p183 = scmp.ne.s32.totalorder %s178, %s180
    %p184 = scmp.eq.s32.totalorder %s18, 0
    %p185 = por %p183, %p184
    %p186 = scmp.ne.s32.totalorder %s178, %s180
    %p187 = scmp.eq.s32.totalorder %s23, 1
    %p188 = por %p186, %p187
    %p189 = scmp.ne.s32.totalorder %s180, %s181
    %p190 = scmp.eq.s32.totalorder %s23, 0
    %p191 = por %p189, %p190
    %p192 = scmp.ne.s32.totalorder %s180, %s181
    %p193 = scmp.eq.s32.totalorder %s24, 1
    %p194 = por %p192, %p193
    %p196 = scmp.ne.s32.totalorder %s181, %s195
    %p197 = scmp.eq.s32.totalorder %s24, 0
    %p198 = por %p196, %p197
    %s200 = sadd.s32 %s199, 1
    %p203 = scmp.eq.s32.totalorder %s18, 1
    %p204 = scmp.ne.s32.totalorder %s199, %s201
    %p205 = scmp.eq.s32.totalorder %s18, 0
    %p206 = por %p204, %p205
    %p207 = scmp.ne.s32.totalorder %s199, %s201
    %p208 = scmp.eq.s32.totalorder %s23, 1
    %p209 = por %p207, %p208
    %p210 = scmp.ne.s32.totalorder %s201, %s202
    %p211 = scmp.eq.s32.totalorder %s23, 0
    %p212 = por %p210, %p211
    %p213 = scmp.ne.s32.totalorder %s201, %s202
    %p214 = scmp.eq.s32.totalorder %s24, 1
    %p215 = por %p213, %p214
    %p217 = scmp.ne.s32.totalorder %s202, %s216
    %p218 = scmp.eq.s32.totalorder %s24, 0
    %p219 = por %p217, %p218
    %s221 = sadd.s32 %s220, 1
    %p224 = scmp.eq.s32.totalorder %s18, 1
    %p225 = scmp.ne.s32.totalorder %s220, %s222
    %p226 = scmp.eq.s32.totalorder %s18, 0
    %p227 = por %p225, %p226
    %p228 = scmp.ne.s32.totalorder %s220, %s222
    %p229 = scmp.eq.s32.totalorder %s23, 1
    %p230 = por %p228, %p229
    %p231 = scmp.ne.s32.totalorder %s222, %s223
    %p232 = scmp.eq.s32.totalorder %s23, 0
    %p233 = por %p231, %p232
    %p234 = scmp.ne.s32.totalorder %s222, %s223
    %p235 = scmp.eq.s32.totalorder %s24, 1
    %p236 = por %p234, %p235
    %p238 = scmp.ne.s32.totalorder %s223, %s237
    %p239 = scmp.eq.s32.totalorder %s24, 0
    %p240 = por %p238, %p239
    %s242 = sadd.s32 %s241, 1
    %p245 = scmp.eq.s32.totalorder %s18, 1
    %p246 = scmp.ne.s32.totalorder %s241, %s243
    %p247 = scmp.eq.s32.totalorder %s18, 0
    %p248 = por %p246, %p247
    %p249 = scmp.ne.s32.totalorder %s241, %s243
    %p250 = scmp.eq.s32.totalorder %s23, 1
    %p251 = por %p249, %p250
    %p252 = scmp.ne.s32.totalorder %s243, %s244
    %p253 = scmp.eq.s32.totalorder %s23, 0
    %p254 = por %p252, %p253
    %p255 = scmp.ne.s32.totalorder %s243, %s244
    %p256 = scmp.eq.s32.totalorder %s24, 1
    %p257 = por %p255, %p256
    %p259 = scmp.ne.s32.totalorder %s244, %s258
    %p260 = scmp.eq.s32.totalorder %s24, 0
    %p261 = por %p259, %p260
    %s263 = sadd.s32 %s262, 1
    %p266 = scmp.eq.s32.totalorder %s18, 1
    %p267 = scmp.ne.s32.totalorder %s262, %s264
    %p268 = scmp.eq.s32.totalorder %s18, 0
    %p269 = por %p267, %p268
    %p270 = scmp.ne.s32.totalorder %s262, %s264
    %p271 = scmp.eq.s32.totalorder %s23, 1
    %p272 = por %p270, %p271
    %p273 = scmp.ne.s32.totalorder %s264, %s265
    %p274 = scmp.eq.s32.totalorder %s23, 0
    %p275 = por %p273, %p274
    %p276 = scmp.ne.s32.totalorder %s264, %s265
    %p277 = scmp.eq.s32.totalorder %s24, 1
    %p278 = por %p276, %p277
    %p280 = scmp.ne.s32.totalorder %s265, %s279
    %p281 = scmp.eq.s32.totalorder %s24, 0
    %p282 = por %p280, %p281
    %s283 = ssub.s32 %s18, %s25
    %p284 = scmp.eq.s32.totalorder %s283, 0
    %s286 = sadd.s32 %s285, 1
    %s287 = scalar_select %p284, %s285, %s286
    %p290 = pneg %p284
    %p291 = scmp.eq.s32.totalorder %s18, 1
    %p292 = por %p290, %p291
    %p293 = scmp.ne.s32.totalorder %s285, %s288
    %p294 = scmp.eq.s32.totalorder %s18, 0
    %p295 = por %p293, %p294
    %p296 = scmp.ne.s32.totalorder %s285, %s288
    %p297 = scmp.eq.s32.totalorder %s23, 1
    %p298 = por %p296, %p297
    %p299 = scmp.ne.s32.totalorder %s288, %s289
    %p300 = scmp.eq.s32.totalorder %s23, 0
    %p301 = por %p299, %p300
    %p302 = scmp.ne.s32.totalorder %s288, %s289
    %p303 = scmp.eq.s32.totalorder %s24, 1
    %p304 = por %p302, %p303
    %p306 = scmp.ne.s32.totalorder %s289, %s305
    %p307 = scmp.eq.s32.totalorder %s24, 0
    %p308 = por %p306, %p307
    %p309 = scmp.le.s32.totalorder 1, %s18
    %p310 = scmp.lt.s32.totalorder %s18, 3
    %p311 = pnand %p309, %p310
    %p312 = pneg %p311
    // Predicated region
    $region9: #{wf_up_block_forward.5} parent=5 // pred_check
      _
    $region10: #{wf_up_block_forward.5} parent=5 // pred_check_branch
      %314 = sbr.rel (%p311) target = $region12
    $region11: #{wf_up_block_forward.5} parent=5 // pred_region
      %s315 = ssub.s32 %s18, 1
      // Predicated region
      $region13: #{wf_up_block_forward.5} parent=11 // pred_check
        %p316 = pneg %p65
      $region14: #{wf_up_block_forward.5} parent=11 // pred_check_branch
        %318 = sbr.rel (%p316) target = $region16
      $region15: #{wf_up_block_forward.5} parent=11 // pred_region
        _
      $region16: #{wf_up_block_forward.5} parent=11 // pred_fallthru
        _
      // Predicated region
      $region17: #{wf_up_block_forward.5} parent=11 // pred_check
        %p319 = pneg %p86
      $region18: #{wf_up_block_forward.5} parent=11 // pred_check_branch
        %321 = sbr.rel (%p319) target = $region20
      $region19: #{wf_up_block_forward.5} parent=11 // pred_region
        _
      $region20: #{wf_up_block_forward.5} parent=11 // pred_fallthru
        _
      // Predicated region
      $region21: #{wf_up_block_forward.5} parent=11 // pred_check
        %p322 = pneg %p107
      $region22: #{wf_up_block_forward.5} parent=11 // pred_check_branch
        %324 = sbr.rel (%p322) target = $region24
      $region23: #{wf_up_block_forward.5} parent=11 // pred_region
        _
      $region24: #{wf_up_block_forward.5} parent=11 // pred_fallthru
        _
      // Predicated region
      $region25: #{wf_up_block_forward.5} parent=11 // pred_check
        %p325 = pneg %p128
      $region26: #{wf_up_block_forward.5} parent=11 // pred_check_branch
        %327 = sbr.rel (%p325) target = $region28
      $region27: #{wf_up_block_forward.5} parent=11 // pred_region
        _
      $region28: #{wf_up_block_forward.5} parent=11 // pred_fallthru
        _
      // Predicated region
      $region29: #{wf_up_block_forward.5} parent=11 // pred_check
        %p328 = pneg %p149
      $region30: #{wf_up_block_forward.5} parent=11 // pred_check_branch
        %330 = sbr.rel (%p328) target = $region32
      $region31: #{wf_up_block_forward.5} parent=11 // pred_region
        _
      $region32: #{wf_up_block_forward.5} parent=11 // pred_fallthru
        _
      // Predicated region
      $region33: #{wf_up_block_forward.5} parent=11 // pred_check
        %p331 = pneg %p170
      $region34: #{wf_up_block_forward.5} parent=11 // pred_check_branch
        %333 = sbr.rel (%p331) target = $region36
      $region35: #{wf_up_block_forward.5} parent=11 // pred_region
        _
      $region36: #{wf_up_block_forward.5} parent=11 // pred_fallthru
        _
      // Predicated region
      $region37: #{wf_up_block_forward.5} parent=11 // pred_check
        %p334 = pneg %p191
      $region38: #{wf_up_block_forward.5} parent=11 // pred_check_branch
        %336 = sbr.rel (%p334) target = $region40
      $region39: #{wf_up_block_forward.5} parent=11 // pred_region
        _
      $region40: #{wf_up_block_forward.5} parent=11 // pred_fallthru
        _
      // Predicated region
      $region41: #{wf_up_block_forward.5} parent=11 // pred_check
        %p337 = pneg %p212
      $region42: #{wf_up_block_forward.5} parent=11 // pred_check_branch
        %339 = sbr.rel (%p337) target = $region44
      $region43: #{wf_up_block_forward.5} parent=11 // pred_region
        _
      $region44: #{wf_up_block_forward.5} parent=11 // pred_fallthru
        _
      // Predicated region
      $region45: #{wf_up_block_forward.5} parent=11 // pred_check
        %p340 = pneg %p233
      $region46: #{wf_up_block_forward.5} parent=11 // pred_check_branch
        %342 = sbr.rel (%p340) target = $region48
      $region47: #{wf_up_block_forward.5} parent=11 // pred_region
        _
      $region48: #{wf_up_block_forward.5} parent=11 // pred_fallthru
        _
      // Predicated region
      $region49: #{wf_up_block_forward.5} parent=11 // pred_check
        %p343 = pneg %p254
      $region50: #{wf_up_block_forward.5} parent=11 // pred_check_branch
        %345 = sbr.rel (%p343) target = $region52
      $region51: #{wf_up_block_forward.5} parent=11 // pred_region
        _
      $region52: #{wf_up_block_forward.5} parent=11 // pred_fallthru
        _
      // Predicated region
      $region53: #{wf_up_block_forward.5} parent=11 // pred_check
        %p346 = pneg %p275
      $region54: #{wf_up_block_forward.5} parent=11 // pred_check_branch
        %348 = sbr.rel (%p346) target = $region56
      $region55: #{wf_up_block_forward.5} parent=11 // pred_region
        _
      $region56: #{wf_up_block_forward.5} parent=11 // pred_fallthru
        _
    $region12: #{wf_up_block_forward.5} parent=5 // pred_fallthru
      _
    %p349 = scmp.lt.s32.totalorder %s18, 2
    // Predicated region
    $region57: #{wf_up_block_forward.5} parent=5 // pred_check
      %p350 = pneg %p349
    $region58: #{wf_up_block_forward.5} parent=5 // pred_check_branch
      %352 = sbr.rel (%p350) target = $region60
    $region59: #{wf_up_block_forward.5} parent=5 // pred_region
      // Predicated region
      $region61: #{wf_up_block_forward.5} parent=59 // pred_check
        %p353 = pneg %p38
      $region62: #{wf_up_block_forward.5} parent=59 // pred_check_branch
        %355 = sbr.rel (%p353) target = $region64
      $region63: #{wf_up_block_forward.5} parent=59 // pred_region
        %p356 = scmp.lt.s32.totalorder %s18, 1
        %s357 = scalar_select %p356, %s18, 1
        %s358 = smul.addr %s357, 10
        %s359 = smul.addr %s358, 4
        %s360 = scalar_lea.vmem %s0, %s359
      $region64: #{wf_up_block_forward.5} parent=59 // pred_fallthru
        _
    $region60: #{wf_up_block_forward.5} parent=5 // pred_fallthru
      _
    %p361 = scmp.le.s32.totalorder 1, %s18
    %p362 = scmp.lt.s32.totalorder %s18, 3
    %p363 = pnand %p361, %p362
    %p364 = pneg %p363
    // Predicated region
    $region65: #{wf_up_block_forward.5} parent=5 // pred_check
      _
    $region66: #{wf_up_block_forward.5} parent=5 // pred_check_branch
      %366 = sbr.rel (%p363) target = $region68
    $region67: #{wf_up_block_forward.5} parent=5 // pred_region
      %s367 = ssub.s32 %s18, 1
      %p368 = scmp.lt.s32.totalorder %s23, 1
      %s369 = scalar_select %p368, %s23, 1
      %s370 = smul.addr %s369, 10
      %s371 = smul.addr %s370, 4
      %s372 = scalar_lea.vmem %s0, %s371
      %p373 = pneg %p44
      %p374 = pneg %p41
      %p375 = pneg %p65
      %p376 = pneg %p62
      %p377 = pneg %p86
      %p378 = pneg %p83
      %p379 = pneg %p107
      %p380 = pneg %p104
      %p381 = pneg %p128
      %p382 = pneg %p125
      %p383 = pneg %p149
      %p384 = pneg %p146
      %p385 = pneg %p170
      %p386 = pneg %p167
      %p387 = pneg %p191
      %p388 = pneg %p188
      %p389 = pneg %p212
      %p390 = pneg %p209
      %p391 = pneg %p233
      %p392 = pneg %p230
      %p393 = pneg %p254
      %p394 = pneg %p251
      %p395 = pneg %p275
      %p396 = pneg %p272
      %p397 = pneg %p301
      %p398 = pneg %p298
      %p399 = scmp.lt.s32.totalorder %s23, 1
      %s400 = scalar_select %p399, %s23, 1
      %s401 = smul.addr %s400, 10
      %s402 = smul.addr %s401, 8
      %s403 = scalar_lea.vmem %s12, %s402
      %p404 = scmp.lt.s32.totalorder %s23, 1
      %s405 = scalar_select %p404, %s23, 1
      %s406 = smul.addr %s405, 10
      %s407 = smul.addr %s406, 4
      %s408 = scalar_lea.vmem %s0, %s407
      %p409 = scmp.lt.s32.totalorder %s23, 1
      %s410 = scalar_select %p409, %s23, 1
      %s411 = smul.addr %s410, 10
      %s412 = smul.addr %s411, 8
      %s413 = scalar_lea.vmem %s12, %s412
      %v415 = vld [vmem:[%s408] sm:$0xff]
      %v416 = vld [vmem:[%s408 + $0x8] sm:$0xff]
      %v417 = vld [vmem:[%s408 + $0x10] sm:$0xff]
      %v418 = vld [vmem:[%s408 + $0x18] sm:$0xff]
      %v419 = vld [vmem:[%s408 + $0x20] sm:$0xff]
      %v420 = vunpack.c.l.bf16 %v415
      %v421 = vunpack.c.h.bf16 %v415
      %v422 = vunpack.c.l.bf16 %v416
      %v423 = vunpack.c.h.bf16 %v416
      %v424 = vunpack.c.l.bf16 %v417
      %v425 = vunpack.c.h.bf16 %v417
      %v426 = vunpack.c.l.bf16 %v418
      %v427 = vunpack.c.h.bf16 %v418
      %v428 = vunpack.c.l.bf16 %v419
      %v429 = vunpack.c.h.bf16 %v419
      %v430 = vld [vmem:[%s1] sm:$0xff]
      %v431 = vld [vmem:[%s1 + $0x8] sm:$0x3]
      %v432 = vld [vmem:[%s2] sm:$0xf]
      %v433 = vld [vmem:[%s3] sm:$0xff]
      %444 = vrot.lane.b32.xlu0 %v420, 35
      %v445 = vpop.permute.xlu0 %444
      %446 = vrot.lane.b32.xlu0 %v421, 35
      %v447 = vpop.permute.xlu0 %446
      %448 = vrot.lane.b32.xlu0 %v422, 35
      %v449 = vpop.permute.xlu0 %448
      %450 = vrot.lane.b32.xlu0 %v423, 35
      %v451 = vpop.permute.xlu0 %450
      %452 = vrot.lane.b32.xlu0 %v424, 35
      %v453 = vpop.permute.xlu0 %452
      %454 = vrot.lane.b32.xlu0 %v425, 35
      %v455 = vpop.permute.xlu0 %454
      %456 = vrot.lane.b32.xlu0 %v426, 35
      %v457 = vpop.permute.xlu0 %456
      %458 = vrot.lane.b32.xlu0 %v427, 35
      %v459 = vpop.permute.xlu0 %458
      %460 = vrot.lane.b32.xlu0 %v428, 35
      %v461 = vpop.permute.xlu0 %460
      %462 = vrot.lane.b32.xlu0 %v429, 35
      %v463 = vpop.permute.xlu0 %462
      %vm464 = vcmask 285696
      %v465 = vsel %vm464, %v445, %v447
      %v466 = vsel %vm464, %v447, %v449
      %v467 = vsel %vm464, %v449, %v451
      %v468 = vsel %vm464, %v451, %v453
      %v469 = vsel %vm464, %v453, %v455
      %v470 = vsel %vm464, %v455, %v457
      %v471 = vsel %vm464, %v457, %v459
      %v472 = vsel %vm464, %v459, %v461
      %v473 = vsel %vm464, %v461, %v463
      %v484 = vsel %vm464, 0.0, %v445
      %vm485 = vcmask 318464
      %v486 = vsel %vm485, %v473, 0.0
      %489 = vrot.lane.b32.xlu0 %v484, 127
      %v490 = vpop.permute.xlu0 %489
      %491 = vrot.lane.b32.xlu0 %v465, 127
      %v492 = vpop.permute.xlu0 %491
      %493 = vrot.lane.b32.xlu0 %v466, 127
      %v494 = vpop.permute.xlu0 %493
      %495 = vrot.lane.b32.xlu0 %v467, 127
      %v496 = vpop.permute.xlu0 %495
      %497 = vrot.lane.b32.xlu0 %v468, 127
      %v498 = vpop.permute.xlu0 %497
      %499 = vrot.lane.b32.xlu0 %v469, 127
      %v500 = vpop.permute.xlu0 %499
      %501 = vrot.lane.b32.xlu0 %v470, 127
      %v502 = vpop.permute.xlu0 %501
      %503 = vrot.lane.b32.xlu0 %v471, 127
      %v504 = vpop.permute.xlu0 %503
      %505 = vrot.lane.b32.xlu0 %v472, 127
      %v506 = vpop.permute.xlu0 %505
      %507 = vrot.lane.b32.xlu0 %v486, 127
      %v508 = vpop.permute.xlu0 %507
      %vm509 = vcmask 1039360
      %v510 = vsel %vm509, %v490, %v492
      %v511 = vsel %vm509, %v492, %v494
      %v512 = vsel %vm509, %v494, %v496
      %v513 = vsel %vm509, %v496, %v498
      %v514 = vsel %vm509, %v498, %v500
      %v515 = vsel %vm509, %v500, %v502
      %v516 = vsel %vm509, %v502, %v504
      %v517 = vsel %vm509, %v504, %v506
      %v518 = vsel %vm509, %v506, %v508
      %529 = vrot.lane.b32.xlu0 %v484, 126
      %v530 = vpop.permute.xlu0 %529
      %531 = vrot.lane.b32.xlu0 %v465, 126
      %v532 = vpop.permute.xlu0 %531
      %533 = vrot.lane.b32.xlu0 %v466, 126
      %v534 = vpop.permute.xlu0 %533
      %535 = vrot.lane.b32.xlu0 %v467, 126
      %v536 = vpop.permute.xlu0 %535
      %537 = vrot.lane.b32.xlu0 %v468, 126
      %v538 = vpop.permute.xlu0 %537
      %539 = vrot.lane.b32.xlu0 %v469, 126
      %v540 = vpop.permute.xlu0 %539
      %541 = vrot.lane.b32.xlu0 %v470, 126
      %v542 = vpop.permute.xlu0 %541
      %543 = vrot.lane.b32.xlu0 %v471, 126
      %v544 = vpop.permute.xlu0 %543
      %545 = vrot.lane.b32.xlu0 %v472, 126
      %v546 = vpop.permute.xlu0 %545
      %547 = vrot.lane.b32.xlu0 %v486, 126
      %v548 = vpop.permute.xlu0 %547
      %vm549 = vcmask 1031168
      %v550 = vsel %vm549, %v530, %v532
      %v551 = vsel %vm549, %v532, %v534
      %v552 = vsel %vm549, %v534, %v536
      %v553 = vsel %vm549, %v536, %v538
      %v554 = vsel %vm549, %v538, %v540
      %v555 = vsel %vm549, %v540, %v542
      %v556 = vsel %vm549, %v542, %v544
      %v557 = vsel %vm549, %v544, %v546
      %v558 = vsel %vm549, %v546, %v548
      %569 = vrot.lane.b32.xlu0 %v484, 94
      %v570 = vpop.permute.xlu0 %569
      %571 = vrot.lane.b32.xlu0 %v465, 94
      %v572 = vpop.permute.xlu0 %571
      %573 = vrot.lane.b32.xlu0 %v466, 94
      %v574 = vpop.permute.xlu0 %573
      %575 = vrot.lane.b32.xlu0 %v467, 94
      %v576 = vpop.permute.xlu0 %575
      %577 = vrot.lane.b32.xlu0 %v468, 94
      %v578 = vpop.permute.xlu0 %577
      %579 = vrot.lane.b32.xlu0 %v469, 94
      %v580 = vpop.permute.xlu0 %579
      %581 = vrot.lane.b32.xlu0 %v470, 94
      %v582 = vpop.permute.xlu0 %581
      %583 = vrot.lane.b32.xlu0 %v471, 94
      %v584 = vpop.permute.xlu0 %583
      %585 = vrot.lane.b32.xlu0 %v472, 94
      %v586 = vpop.permute.xlu0 %585
      %587 = vrot.lane.b32.xlu0 %v486, 94
      %v588 = vpop.permute.xlu0 %587
      %vm589 = vcmask 769024
      %v590 = vsel %vm589, %v570, %v572
      %v591 = vsel %vm589, %v572, %v574
      %v592 = vsel %vm589, %v574, %v576
      %v593 = vsel %vm589, %v576, %v578
      %v594 = vsel %vm589, %v578, %v580
      %v595 = vsel %vm589, %v580, %v582
      %v596 = vsel %vm589, %v582, %v584
      %v597 = vsel %vm589, %v584, %v586
      %v598 = vsel %vm589, %v586, %v588
      %609 = vrot.lane.b32.xlu0 %v484, 93
      %v610 = vpop.permute.xlu0 %609
      %611 = vrot.lane.b32.xlu0 %v465, 93
      %v612 = vpop.permute.xlu0 %611
      %613 = vrot.lane.b32.xlu0 %v466, 93
      %v614 = vpop.permute.xlu0 %613
      %615 = vrot.lane.b32.xlu0 %v467, 93
      %v616 = vpop.permute.xlu0 %615
      %617 = vrot.lane.b32.xlu0 %v468, 93
      %v618 = vpop.permute.xlu0 %617
      %619 = vrot.lane.b32.xlu0 %v469, 93
      %v620 = vpop.permute.xlu0 %619
      %621 = vrot.lane.b32.xlu0 %v470, 93
      %v622 = vpop.permute.xlu0 %621
      %623 = vrot.lane.b32.xlu0 %v471, 93
      %v624 = vpop.permute.xlu0 %623
      %625 = vrot.lane.b32.xlu0 %v472, 93
      %v626 = vpop.permute.xlu0 %625
      %627 = vrot.lane.b32.xlu0 %v486, 93
      %v628 = vpop.permute.xlu0 %627
      %vm629 = vcmask 760832
      %v630 = vsel %vm629, %v610, %v612
      %v631 = vsel %vm629, %v612, %v614
      %v632 = vsel %vm629, %v614, %v616
      %v633 = vsel %vm629, %v616, %v618
      %v634 = vsel %vm629, %v618, %v620
      %v635 = vsel %vm629, %v620, %v622
      %v636 = vsel %vm629, %v622, %v624
      %v637 = vsel %vm629, %v624, %v626
      %v638 = vsel %vm629, %v626, %v628
      %649 = vrot.lane.b32.xlu0 %v484, 92
      %v650 = vpop.permute.xlu0 %649
      %651 = vrot.lane.b32.xlu0 %v465, 92
      %v652 = vpop.permute.xlu0 %651
      %653 = vrot.lane.b32.xlu0 %v466, 92
      %v654 = vpop.permute.xlu0 %653
      %655 = vrot.lane.b32.xlu0 %v467, 92
      %v656 = vpop.permute.xlu0 %655
      %657 = vrot.lane.b32.xlu0 %v468, 92
      %v658 = vpop.permute.xlu0 %657
      %659 = vrot.lane.b32.xlu0 %v469, 92
      %v660 = vpop.permute.xlu0 %659
      %661 = vrot.lane.b32.xlu0 %v470, 92
      %v662 = vpop.permute.xlu0 %661
      %663 = vrot.lane.b32.xlu0 %v471, 92
      %v664 = vpop.permute.xlu0 %663
      %665 = vrot.lane.b32.xlu0 %v472, 92
      %v666 = vpop.permute.xlu0 %665
      %667 = vrot.lane.b32.xlu0 %v486, 92
      %v668 = vpop.permute.xlu0 %667
      %vm669 = vcmask 752640
      %v670 = vsel %vm669, %v650, %v652
      %v671 = vsel %vm669, %v652, %v654
      %v672 = vsel %vm669, %v654, %v656
      %v673 = vsel %vm669, %v656, %v658
      %v674 = vsel %vm669, %v658, %v660
      %v675 = vsel %vm669, %v660, %v662
      %v676 = vsel %vm669, %v662, %v664
      %v677 = vsel %vm669, %v664, %v666
      %v678 = vsel %vm669, %v666, %v668
      %689 = vrot.lane.b32.xlu0 %v484, 60
      %v690 = vpop.permute.xlu0 %689
      %691 = vrot.lane.b32.xlu0 %v465, 60
      %v692 = vpop.permute.xlu0 %691
      %693 = vrot.lane.b32.xlu0 %v466, 60
      %v694 = vpop.permute.xlu0 %693
      %695 = vrot.lane.b32.xlu0 %v467, 60
      %v696 = vpop.permute.xlu0 %695
      %697 = vrot.lane.b32.xlu0 %v468, 60
      %v698 = vpop.permute.xlu0 %697
      %699 = vrot.lane.b32.xlu0 %v469, 60
      %v700 = vpop.permute.xlu0 %699
      %701 = vrot.lane.b32.xlu0 %v470, 60
      %v702 = vpop.permute.xlu0 %701
      %703 = vrot.lane.b32.xlu0 %v471, 60
      %v704 = vpop.permute.xlu0 %703
      %705 = vrot.lane.b32.xlu0 %v472, 60
      %v706 = vpop.permute.xlu0 %705
      %707 = vrot.lane.b32.xlu0 %v486, 60
      %v708 = vpop.permute.xlu0 %707
      %vm709 = vcmask 490496
      %v710 = vsel %vm709, %v690, %v692
      %v711 = vsel %vm709, %v692, %v694
      %v712 = vsel %vm709, %v694, %v696
      %v713 = vsel %vm709, %v696, %v698
      %v714 = vsel %vm709, %v698, %v700
      %v715 = vsel %vm709, %v700, %v702
      %v716 = vsel %vm709, %v702, %v704
      %v717 = vsel %vm709, %v704, %v706
      %v718 = vsel %vm709, %v706, %v708
      %729 = vrot.lane.b32.xlu0 %v484, 59
      %v730 = vpop.permute.xlu0 %729
      %731 = vrot.lane.b32.xlu0 %v465, 59
      %v732 = vpop.permute.xlu0 %731
      %733 = vrot.lane.b32.xlu0 %v466, 59
      %v734 = vpop.permute.xlu0 %733
      %735 = vrot.lane.b32.xlu0 %v467, 59
      %v736 = vpop.permute.xlu0 %735
      %737 = vrot.lane.b32.xlu0 %v468, 59
      %v738 = vpop.permute.xlu0 %737
      %739 = vrot.lane.b32.xlu0 %v469, 59
      %v740 = vpop.permute.xlu0 %739
      %741 = vrot.lane.b32.xlu0 %v470, 59
      %v742 = vpop.permute.xlu0 %741
      %743 = vrot.lane.b32.xlu0 %v471, 59
      %v744 = vpop.permute.xlu0 %743
      %745 = vrot.lane.b32.xlu0 %v472, 59
      %v746 = vpop.permute.xlu0 %745
      %747 = vrot.lane.b32.xlu0 %v486, 59
      %v748 = vpop.permute.xlu0 %747
      %vm749 = vcmask 482304
      %v750 = vsel %vm749, %v730, %v732
      %v751 = vsel %vm749, %v732, %v734
      %v752 = vsel %vm749, %v734, %v736
      %v753 = vsel %vm749, %v736, %v738
      %v754 = vsel %vm749, %v738, %v740
      %v755 = vsel %vm749, %v740, %v742
      %v756 = vsel %vm749, %v742, %v744
      %v757 = vsel %vm749, %v744, %v746
      %v758 = vsel %vm749, %v746, %v748
      %769 = vrot.lane.b32.xlu0 %v484, 58
      %v770 = vpop.permute.xlu0 %769
      %771 = vrot.lane.b32.xlu0 %v465, 58
      %v772 = vpop.permute.xlu0 %771
      %773 = vrot.lane.b32.xlu0 %v466, 58
      %v774 = vpop.permute.xlu0 %773
      %775 = vrot.lane.b32.xlu0 %v467, 58
      %v776 = vpop.permute.xlu0 %775
      %777 = vrot.lane.b32.xlu0 %v468, 58
      %v778 = vpop.permute.xlu0 %777
      %779 = vrot.lane.b32.xlu0 %v469, 58
      %v780 = vpop.permute.xlu0 %779
      %781 = vrot.lane.b32.xlu0 %v470, 58
      %v782 = vpop.permute.xlu0 %781
      %783 = vrot.lane.b32.xlu0 %v471, 58
      %v784 = vpop.permute.xlu0 %783
      %785 = vrot.lane.b32.xlu0 %v472, 58
      %v786 = vpop.permute.xlu0 %785
      %787 = vrot.lane.b32.xlu0 %v486, 58
      %v788 = vpop.permute.xlu0 %787
      %vm789 = vcmask 474112
      %v790 = vsel %vm789, %v770, %v772
      %v791 = vsel %vm789, %v772, %v774
      %v792 = vsel %vm789, %v774, %v776
      %v793 = vsel %vm789, %v776, %v778
      %v794 = vsel %vm789, %v778, %v780
      %v795 = vsel %vm789, %v780, %v782
      %v796 = vsel %vm789, %v782, %v784
      %v797 = vsel %vm789, %v784, %v786
      %v798 = vsel %vm789, %v786, %v788
      %v809 = vpack.c.bf16 %v510, %v484
      %v810 = vpack.c.bf16 %v511, %v465
      %v811 = vpack.c.bf16 %v512, %v466
      %v812 = vpack.c.bf16 %v513, %v467
      %v813 = vpack.c.bf16 %v514, %v468
      %v814 = vpack.c.bf16 %v515, %v469
      %v815 = vpack.c.bf16 %v516, %v470
      %v816 = vpack.c.bf16 %v517, %v471
      %v817 = vpack.c.bf16 %v518, %v472
      %v818 = vpack.c.bf16 %v508, %v486
      %v819 = vpack.c.bf16 %v590, %v550
      %v820 = vpack.c.bf16 %v591, %v551
      %v821 = vpack.c.bf16 %v592, %v552
      %v822 = vpack.c.bf16 %v593, %v553
      %v823 = vpack.c.bf16 %v594, %v554
      %v824 = vpack.c.bf16 %v595, %v555
      %v825 = vpack.c.bf16 %v596, %v556
      %v826 = vpack.c.bf16 %v597, %v557
      %v827 = vpack.c.bf16 %v598, %v558
      %v828 = vpack.c.bf16 %v588, %v548
      %v829 = vpack.c.bf16 %v670, %v630
      %v830 = vpack.c.bf16 %v671, %v631
      %v831 = vpack.c.bf16 %v672, %v632
      %v832 = vpack.c.bf16 %v673, %v633
      %v833 = vpack.c.bf16 %v674, %v634
      %v834 = vpack.c.bf16 %v675, %v635
      %v835 = vpack.c.bf16 %v676, %v636
      %v836 = vpack.c.bf16 %v677, %v637
      %v837 = vpack.c.bf16 %v678, %v638
      %v838 = vpack.c.bf16 %v668, %v628
      %v839 = vpack.c.bf16 %v750, %v710
      %v840 = vpack.c.bf16 %v751, %v711
      %v841 = vpack.c.bf16 %v752, %v712
      %v842 = vpack.c.bf16 %v753, %v713
      %v843 = vpack.c.bf16 %v754, %v714
      %v844 = vpack.c.bf16 %v755, %v715
      %v845 = vpack.c.bf16 %v756, %v716
      %v846 = vpack.c.bf16 %v757, %v717
      %v847 = vpack.c.bf16 %v758, %v718
      %v848 = vpack.c.bf16 %v748, %v708
      %v849 = vpack.c.bf16 %v790, %v790
      %v850 = vpack.c.bf16 %v791, %v791
      %v851 = vpack.c.bf16 %v792, %v792
      %v852 = vpack.c.bf16 %v793, %v793
      %v853 = vpack.c.bf16 %v794, %v794
      %v854 = vpack.c.bf16 %v795, %v795
      %v855 = vpack.c.bf16 %v796, %v796
      %v856 = vpack.c.bf16 %v797, %v797
      %v857 = vpack.c.bf16 %v798, %v798
      %v858 = vpack.c.bf16 %v788, %v788
      %860 = vset.pattern.permute.xlu0 0
      %861 = vperm.xlu0 %860, %v433
      %v862 = vpop.permute.xlu0 %861
      %vm864 = vcmask 588800
      %v866 = vsel %vm864, %v432, 0
      %vm868 = vcmask 1043456
      %v870 = vsel %vm868, %v849, 0
      %v873 = vsel %vm868, %v850, 0
      %v876 = vsel %vm868, %v851, 0
      %v879 = vsel %vm868, %v852, 0
      %v882 = vsel %vm868, %v853, 0
      %v885 = vsel %vm868, %v854, 0
      %v888 = vsel %vm868, %v855, 0
      %v891 = vsel %vm868, %v856, 0
      %v894 = vsel %vm868, %v857, 0
      %v897 = vsel %vm868, %v858, 0
      %899 = vmatpush.bf16.msra.mxu0 0
      %900 = vmatpush.bf16.msra.mxu0 0
      %901 = vmatpush.bf16.msra.mxu0 0
      %902 = vmatpush.bf16.msra.mxu0 %v870
      %903 = vmatpush.bf16.msra.mxu0 %v839
      %904 = vmatpush.bf16.msra.mxu0 %v829
      %905 = vmatpush.bf16.msra.mxu0 %v819
      %906 = vmatpush.bf16.msra.mxu0 %v809
      %907 = vmatmul.bf16.gmra.mxu0 %v866
      %v908 = vpop.f32.mrf.mxu0
      %v909 = vadd.f32 %v862, %v908
      %v910 = vpop.f32.mrf.mxu0
      %911 = vdwg.mxu0
      %912 = vmatpush.bf16.msra.mxu0 0
      %913 = vmatpush.bf16.msra.mxu0 0
      %914 = vmatpush.bf16.msra.mxu0 0
      %915 = vmatpush.bf16.msra.mxu0 %v873
      %916 = vmatpush.bf16.msra.mxu0 %v840
      %917 = vmatpush.bf16.msra.mxu0 %v830
      %918 = vmatpush.bf16.msra.mxu0 %v820
      %919 = vmatpush.bf16.msra.mxu0 %v810
      %920 = vmatmul.bf16.gmra.mxu0 %v866
      %v921 = vpop.f32.mrf.mxu0
      %v922 = vadd.f32 %v862, %v921
      %v923 = vpop.f32.mrf.mxu0
      %924 = vdwg.mxu0
      %925 = vmatpush.bf16.msra.mxu0 0
      %926 = vmatpush.bf16.msra.mxu0 0
      %927 = vmatpush.bf16.msra.mxu0 0
      %928 = vmatpush.bf16.msra.mxu0 %v876
      %929 = vmatpush.bf16.msra.mxu0 %v841
      %930 = vmatpush.bf16.msra.mxu0 %v831
      %931 = vmatpush.bf16.msra.mxu0 %v821
      %932 = vmatpush.bf16.msra.mxu0 %v811
      %933 = vmatmul.bf16.gmra.mxu0 %v866
      %v934 = vpop.f32.mrf.mxu0
      %v935 = vadd.f32 %v862, %v934
      %v936 = vpop.f32.mrf.mxu0
      %937 = vdwg.mxu0
      %938 = vmatpush.bf16.msra.mxu0 0
      %939 = vmatpush.bf16.msra.mxu0 0
      %940 = vmatpush.bf16.msra.mxu0 0
      %941 = vmatpush.bf16.msra.mxu0 %v879
      %942 = vmatpush.bf16.msra.mxu0 %v842
      %943 = vmatpush.bf16.msra.mxu0 %v832
      %944 = vmatpush.bf16.msra.mxu0 %v822
      %945 = vmatpush.bf16.msra.mxu0 %v812
      %946 = vmatmul.bf16.gmra.mxu0 %v866
      %v947 = vpop.f32.mrf.mxu0
      %v948 = vadd.f32 %v862, %v947
      %v949 = vpop.f32.mrf.mxu0
      %950 = vdwg.mxu0
      %951 = vmatpush.bf16.msra.mxu0 0
      %952 = vmatpush.bf16.msra.mxu0 0
      %953 = vmatpush.bf16.msra.mxu0 0
      %954 = vmatpush.bf16.msra.mxu0 %v882
      %955 = vmatpush.bf16.msra.mxu0 %v843
      %956 = vmatpush.bf16.msra.mxu0 %v833
      %957 = vmatpush.bf16.msra.mxu0 %v823
      %958 = vmatpush.bf16.msra.mxu0 %v813
      %959 = vmatmul.bf16.gmra.mxu0 %v866
      %v960 = vpop.f32.mrf.mxu0
      %v961 = vadd.f32 %v862, %v960
      %v962 = vpop.f32.mrf.mxu0
      %963 = vdwg.mxu0
      %964 = vmatpush.bf16.msra.mxu0 0
      %965 = vmatpush.bf16.msra.mxu0 0
      %966 = vmatpush.bf16.msra.mxu0 0
      %967 = vmatpush.bf16.msra.mxu0 %v885
      %968 = vmatpush.bf16.msra.mxu0 %v844
      %969 = vmatpush.bf16.msra.mxu0 %v834
      %970 = vmatpush.bf16.msra.mxu0 %v824
      %971 = vmatpush.bf16.msra.mxu0 %v814
      %972 = vmatmul.bf16.gmra.mxu0 %v866
      %v973 = vpop.f32.mrf.mxu0
      %v974 = vadd.f32 %v862, %v973
      %v975 = vpop.f32.mrf.mxu0
      %976 = vdwg.mxu0
      %977 = vmatpush.bf16.msra.mxu0 0
      %978 = vmatpush.bf16.msra.mxu0 0
      %979 = vmatpush.bf16.msra.mxu0 0
      %980 = vmatpush.bf16.msra.mxu0 %v888
      %981 = vmatpush.bf16.msra.mxu0 %v845
      %982 = vmatpush.bf16.msra.mxu0 %v835
      %983 = vmatpush.bf16.msra.mxu0 %v825
      %984 = vmatpush.bf16.msra.mxu0 %v815
      %985 = vmatmul.bf16.gmra.mxu0 %v866
      %v986 = vpop.f32.mrf.mxu0
      %v987 = vadd.f32 %v862, %v986
      %v988 = vpop.f32.mrf.mxu0
      %989 = vdwg.mxu0
      %990 = vmatpush.bf16.msra.mxu0 0
      %991 = vmatpush.bf16.msra.mxu0 0
      %992 = vmatpush.bf16.msra.mxu0 0
      %993 = vmatpush.bf16.msra.mxu0 %v891
      %994 = vmatpush.bf16.msra.mxu0 %v846
      %995 = vmatpush.bf16.msra.mxu0 %v836
      %996 = vmatpush.bf16.msra.mxu0 %v826
      %997 = vmatpush.bf16.msra.mxu0 %v816
      %998 = vmatmul.bf16.gmra.mxu0 %v866
      %v999 = vpop.f32.mrf.mxu0
      %v1000 = vadd.f32 %v862, %v999
      %v1001 = vpop.f32.mrf.mxu0
      %1002 = vdwg.mxu0
      %1003 = vmatpush.bf16.msra.mxu0 0
      %1004 = vmatpush.bf16.msra.mxu0 0
      %1005 = vmatpush.bf16.msra.mxu0 0
      %1006 = vmatpush.bf16.msra.mxu0 %v894
      %1007 = vmatpush.bf16.msra.mxu0 %v847
      %1008 = vmatpush.bf16.msra.mxu0 %v837
      %1009 = vmatpush.bf16.msra.mxu0 %v827
      %1010 = vmatpush.bf16.msra.mxu0 %v817
      %1011 = vmatmul.bf16.gmra.mxu0 %v866
      %v1012 = vpop.f32.mrf.mxu0
      %v1013 = vadd.f32 %v862, %v1012
      %v1014 = vpop.f32.mrf.mxu0
      %1015 = vdwg.mxu0
      %1016 = vmatpush.bf16.msra.mxu0 0
      %1017 = vmatpush.bf16.msra.mxu0 0
      %1018 = vmatpush.bf16.msra.mxu0 0
      %1019 = vmatpush.bf16.msra.mxu0 %v897
      %1020 = vmatpush.bf16.msra.mxu0 %v848
      %1021 = vmatpush.bf16.msra.mxu0 %v838
      %1022 = vmatpush.bf16.msra.mxu0 %v828
      %1023 = vmatpush.bf16.msra.mxu0 %v818
      %1024 = vmatmul.bf16.gmra.mxu0 %v866
      %v1025 = vpop.f32.mrf.mxu0
      %v1026 = vadd.f32 %v862, %v1025
      %v1027 = vpop.f32.mrf.mxu0
      %1028 = vdwg.mxu0
      %v1029 = vld [vmem:[%s4] sm:$0xff]
      %v1030 = vld [vmem:[%s5] sm:$0xff]
      %v1031 = vld [vmem:[%s6] sm:$0xf]
      %v1032 = vld [vmem:[%s7] sm:$0xff]
      %v1033 = vld [vmem:[%s8] sm:$0xff]
      %v1034 = vld [vmem:[%s9] sm:$0xff]
      %v1035 = vld [vmem:[%s10] sm:$0xf]
      %v1036 = vld [vmem:[%s11] sm:$0xff]
      %v1037 = vrot.slane %v909, 4
      %v1038 = vadd.f32 %v909, %v1037
      %v1039 = vrot.slane %v1038, 2
      %v1040 = vadd.f32 %v1038, %v1039
      %v1041 = vrot.slane %v1040, 1
      %v1042 = vadd.f32 %v1040, %v1041
      %v1043 = vrot.slane %v922, 4
      %v1044 = vadd.f32 %v922, %v1043
      %v1045 = vrot.slane %v1044, 2
      %v1046 = vadd.f32 %v1044, %v1045
      %v1047 = vrot.slane %v1046, 1
      %v1048 = vadd.f32 %v1046, %v1047
      %v1049 = vrot.slane %v935, 4
      %v1050 = vadd.f32 %v935, %v1049
      %v1051 = vrot.slane %v1050, 2
      %v1052 = vadd.f32 %v1050, %v1051
      %v1053 = vrot.slane %v1052, 1
      %v1054 = vadd.f32 %v1052, %v1053
      %v1055 = vrot.slane %v948, 4
      %v1056 = vadd.f32 %v948, %v1055
      %v1057 = vrot.slane %v1056, 2
      %v1058 = vadd.f32 %v1056, %v1057
      %v1059 = vrot.slane %v1058, 1
      %v1060 = vadd.f32 %v1058, %v1059
      %v1061 = vrot.slane %v961, 4
      %v1062 = vadd.f32 %v961, %v1061
      %v1063 = vrot.slane %v1062, 2
      %v1064 = vadd.f32 %v1062, %v1063
      %v1065 = vrot.slane %v1064, 1
      %v1066 = vadd.f32 %v1064, %v1065
      %v1067 = vrot.slane %v974, 4
      %v1068 = vadd.f32 %v974, %v1067
      %v1069 = vrot.slane %v1068, 2
      %v1070 = vadd.f32 %v1068, %v1069
      %v1071 = vrot.slane %v1070, 1
      %v1072 = vadd.f32 %v1070, %v1071
      %v1073 = vrot.slane %v987, 4
      %v1074 = vadd.f32 %v987, %v1073
      %v1075 = vrot.slane %v1074, 2
      %v1076 = vadd.f32 %v1074, %v1075
      %v1077 = vrot.slane %v1076, 1
      %v1078 = vadd.f32 %v1076, %v1077
      %v1079 = vrot.slane %v1000, 4
      %v1080 = vadd.f32 %v1000, %v1079
      %v1081 = vrot.slane %v1080, 2
      %v1082 = vadd.f32 %v1080, %v1081
      %v1083 = vrot.slane %v1082, 1
      %v1084 = vadd.f32 %v1082, %v1083
      %v1085 = vrot.slane %v1013, 4
      %v1086 = vadd.f32 %v1013, %v1085
      %v1087 = vrot.slane %v1086, 2
      %v1088 = vadd.f32 %v1086, %v1087
      %v1089 = vrot.slane %v1088, 1
      %v1090 = vadd.f32 %v1088, %v1089
      %vm1091 = vcmask 31744
      %v1092 = vsel %vm1091, %v1026, 0.0
      %v1093 = vrot.slane %v1092, 4
      %v1094 = vadd.f32 %v1092, %v1093
      %v1095 = vrot.slane %v1094, 2
      %v1096 = vadd.f32 %v1094, %v1095
      %v1097 = vrot.slane %v1096, 1
      %v1098 = vadd.f32 %v1096, %v1097
      %v1099 = vmul.f32 %v1042, 0.25
      %v1100 = vmul.f32 %v1048, 0.25
      %v1101 = vmul.f32 %v1054, 0.25
      %v1102 = vmul.f32 %v1060, 0.25
      %v1103 = vmul.f32 %v1066, 0.25
      %v1104 = vmul.f32 %v1072, 0.25
      %v1105 = vmul.f32 %v1078, 0.25
      %v1106 = vmul.f32 %v1084, 0.25
      %v1107 = vmul.f32 %v1090, 0.25
      %v1108 = vmul.f32 %v1098, 0.25
      %v1109 = vmul.f32 %v909, %v909
      %v1110 = vmul.f32 %v922, %v922
      %v1111 = vmul.f32 %v935, %v935
      %v1112 = vmul.f32 %v948, %v948
      %v1113 = vmul.f32 %v961, %v961
      %v1114 = vmul.f32 %v974, %v974
      %v1115 = vmul.f32 %v987, %v987
      %v1116 = vmul.f32 %v1000, %v1000
      %v1117 = vmul.f32 %v1013, %v1013
      %v1118 = vmul.f32 %v1026, %v1026
      %v1119 = vrot.slane %v1109, 4
      %v1120 = vadd.f32 %v1109, %v1119
      %v1121 = vrot.slane %v1120, 2
      %v1122 = vadd.f32 %v1120, %v1121
      %v1123 = vrot.slane %v1122, 1
      %v1124 = vadd.f32 %v1122, %v1123
      %v1125 = vrot.slane %v1110, 4
      %v1126 = vadd.f32 %v1110, %v1125
      %v1127 = vrot.slane %v1126, 2
      %v1128 = vadd.f32 %v1126, %v1127
      %v1129 = vrot.slane %v1128, 1
      %v1130 = vadd.f32 %v1128, %v1129
      %v1131 = vrot.slane %v1111, 4
      %v1132 = vadd.f32 %v1111, %v1131
      %v1133 = vrot.slane %v1132, 2
      %v1134 = vadd.f32 %v1132, %v1133
      %v1135 = vrot.slane %v1134, 1
      %v1136 = vadd.f32 %v1134, %v1135
      %v1137 = vrot.slane %v1112, 4
      %v1138 = vadd.f32 %v1112, %v1137
      %v1139 = vrot.slane %v1138, 2
      %v1140 = vadd.f32 %v1138, %v1139
      %v1141 = vrot.slane %v1140, 1
      %v1142 = vadd.f32 %v1140, %v1141
      %v1143 = vrot.slane %v1113, 4
      %v1144 = vadd.f32 %v1113, %v1143
      %v1145 = vrot.slane %v1144, 2
      %v1146 = vadd.f32 %v1144, %v1145
      %v1147 = vrot.slane %v1146, 1
      %v1148 = vadd.f32 %v1146, %v1147
      %v1149 = vrot.slane %v1114, 4
      %v1150 = vadd.f32 %v1114, %v1149
      %v1151 = vrot.slane %v1150, 2
      %v1152 = vadd.f32 %v1150, %v1151
      %v1153 = vrot.slane %v1152, 1
      %v1154 = vadd.f32 %v1152, %v1153
      %v1155 = vrot.slane %v1115, 4
      %v1156 = vadd.f32 %v1115, %v1155
      %v1157 = vrot.slane %v1156, 2
      %v1158 = vadd.f32 %v1156, %v1157
      %v1159 = vrot.slane %v1158, 1
      %v1160 = vadd.f32 %v1158, %v1159
      %v1161 = vrot.slane %v1116, 4
      %v1162 = vadd.f32 %v1116, %v1161
      %v1163 = vrot.slane %v1162, 2
      %v1164 = vadd.f32 %v1162, %v1163
      %v1165 = vrot.slane %v1164, 1
      %v1166 = vadd.f32 %v1164, %v1165
      %v1167 = vrot.slane %v1117, 4
      %v1168 = vadd.f32 %v1117, %v1167
      %v1169 = vrot.slane %v1168, 2
      %v1170 = vadd.f32 %v1168, %v1169
      %v1171 = vrot.slane %v1170, 1
      %v1172 = vadd.f32 %v1170, %v1171
      %v1173 = vsel %vm1091, %v1118, 0.0
      %v1174 = vrot.slane %v1173, 4
      %v1175 = vadd.f32 %v1173, %v1174
      %v1176 = vrot.slane %v1175, 2
      %v1177 = vadd.f32 %v1175, %v1176
      %v1178 = vrot.slane %v1177, 1
      %v1179 = vadd.f32 %v1177, %v1178
      %v1180 = vmul.f32 %v1124, 0.25
      %v1181 = vmul.f32 %v1130, 0.25
      %v1182 = vmul.f32 %v1136, 0.25
      %v1183 = vmul.f32 %v1142, 0.25
      %v1184 = vmul.f32 %v1148, 0.25
      %v1185 = vmul.f32 %v1154, 0.25
      %v1186 = vmul.f32 %v1160, 0.25
      %v1187 = vmul.f32 %v1166, 0.25
      %v1188 = vmul.f32 %v1172, 0.25
      %v1189 = vmul.f32 %v1179, 0.25
      %v1190 = vmul.f32 %v1099, %v1099
      %v1191 = vmul.f32 %v1100, %v1100
      %v1192 = vmul.f32 %v1101, %v1101
      %v1193 = vmul.f32 %v1102, %v1102
      %v1194 = vmul.f32 %v1103, %v1103
      %v1195 = vmul.f32 %v1104, %v1104
      %v1196 = vmul.f32 %v1105, %v1105
      %v1197 = vmul.f32 %v1106, %v1106
      %v1198 = vmul.f32 %v1107, %v1107
      %v1199 = vmul.f32 %v1108, %v1108
      %v1200 = vsub.f32 %v1180, %v1190
      %v1201 = vsub.f32 %v1181, %v1191
      %v1202 = vsub.f32 %v1182, %v1192
      %v1203 = vsub.f32 %v1183, %v1193
      %v1204 = vsub.f32 %v1184, %v1194
      %v1205 = vsub.f32 %v1185, %v1195
      %v1206 = vsub.f32 %v1186, %v1196
      %v1207 = vsub.f32 %v1187, %v1197
      %v1208 = vsub.f32 %v1188, %v1198
      %v1209 = vsub.f32 %v1189, %v1199
      %v1210 = vmax.f32 %v1200, 0.0
      %v1211 = vmax.f32 %v1201, 0.0
      %v1212 = vmax.f32 %v1202, 0.0
      %v1213 = vmax.f32 %v1203, 0.0
      %v1214 = vmax.f32 %v1204, 0.0
      %v1215 = vmax.f32 %v1205, 0.0
      %v1216 = vmax.f32 %v1206, 0.0
      %v1217 = vmax.f32 %v1207, 0.0
      %v1218 = vmax.f32 %v1208, 0.0
      %v1219 = vmax.f32 %v1209, 0.0
      %v1220 = vsub.f32 %v909, %v1099
      %v1221 = vsub.f32 %v922, %v1100
      %v1222 = vsub.f32 %v935, %v1101
      %v1223 = vsub.f32 %v948, %v1102
      %v1224 = vsub.f32 %v961, %v1103
      %v1225 = vsub.f32 %v974, %v1104
      %v1226 = vsub.f32 %v987, %v1105
      %v1227 = vsub.f32 %v1000, %v1106
      %v1228 = vsub.f32 %v1013, %v1107
      %v1229 = vsub.f32 %v1026, %v1108
      %v1230 = vadd.f32 %v1210, 1e-06
      %v1231 = vadd.f32 %v1211, 1e-06
      %v1232 = vadd.f32 %v1212, 1e-06
      %v1233 = vadd.f32 %v1213, 1e-06
      %v1234 = vadd.f32 %v1214, 1e-06
      %v1235 = vadd.f32 %v1215, 1e-06
      %v1236 = vadd.f32 %v1216, 1e-06
      %v1237 = vadd.f32 %v1217, 1e-06
      %v1238 = vadd.f32 %v1218, 1e-06
      %v1239 = vadd.f32 %v1219, 1e-06
      %v1240 = vrsqrt.pop %v1230
      %v1241 = vmul.f32 %v1240, %v1230
      %v1242 = vmul.f32 %v1241, %v1240
      %v1243 = vmul.f32 0.5, %v1242
      %v1244 = vsub.f32 1.5, %v1243
      %v1245 = vmul.f32 %v1240, %v1244
      %vm1246 = vweird.f32 %v1230
      %vm1247 = vweird.f32 %v1240
      %vm1248 = vmor %vm1246, %vm1247
      %v1249 = vsel %vm1248, %v1240, %v1245
      %v1250 = vrsqrt.pop %v1231
      %v1251 = vmul.f32 %v1250, %v1231
      %v1252 = vmul.f32 %v1251, %v1250
      %v1253 = vmul.f32 0.5, %v1252
      %v1254 = vsub.f32 1.5, %v1253
      %v1255 = vmul.f32 %v1250, %v1254
      %vm1256 = vweird.f32 %v1231
      %vm1257 = vweird.f32 %v1250
      %vm1258 = vmor %vm1256, %vm1257
      %v1259 = vsel %vm1258, %v1250, %v1255
      %v1260 = vrsqrt.pop %v1232
      %v1261 = vmul.f32 %v1260, %v1232
      %v1262 = vmul.f32 %v1261, %v1260
      %v1263 = vmul.f32 0.5, %v1262
      %v1264 = vsub.f32 1.5, %v1263
      %v1265 = vmul.f32 %v1260, %v1264
      %vm1266 = vweird.f32 %v1232
      %vm1267 = vweird.f32 %v1260
      %vm1268 = vmor %vm1266, %vm1267
      %v1269 = vsel %vm1268, %v1260, %v1265
      %v1270 = vrsqrt.pop %v1233
      %v1271 = vmul.f32 %v1270, %v1233
      %v1272 = vmul.f32 %v1271, %v1270
      %v1273 = vmul.f32 0.5, %v1272
      %v1274 = vsub.f32 1.5, %v1273
      %v1275 = vmul.f32 %v1270, %v1274
      %vm1276 = vweird.f32 %v1233
      %vm1277 = vweird.f32 %v1270
      %vm1278 = vmor %vm1276, %vm1277
      %v1279 = vsel %vm1278, %v1270, %v1275
      %v1280 = vrsqrt.pop %v1234
      %v1281 = vmul.f32 %v1280, %v1234
      %v1282 = vmul.f32 %v1281, %v1280
      %v1283 = vmul.f32 0.5, %v1282
      %v1284 = vsub.f32 1.5, %v1283
      %v1285 = vmul.f32 %v1280, %v1284
      %vm1286 = vweird.f32 %v1234
      %vm1287 = vweird.f32 %v1280
      %vm1288 = vmor %vm1286, %vm1287
      %v1289 = vsel %vm1288, %v1280, %v1285
      %v1290 = vrsqrt.pop %v1235
      %v1291 = vmul.f32 %v1290, %v1235
      %v1292 = vmul.f32 %v1291, %v1290
      %v1293 = vmul.f32 0.5, %v1292
      %v1294 = vsub.f32 1.5, %v1293
      %v1295 = vmul.f32 %v1290, %v1294
      %vm1296 = vweird.f32 %v1235
      %vm1297 = vweird.f32 %v1290
      %vm1298 = vmor %vm1296, %vm1297
      %v1299 = vsel %vm1298, %v1290, %v1295
      %v1300 = vrsqrt.pop %v1236
      %v1301 = vmul.f32 %v1300, %v1236
      %v1302 = vmul.f32 %v1301, %v1300
      %v1303 = vmul.f32 0.5, %v1302
      %v1304 = vsub.f32 1.5, %v1303
      %v1305 = vmul.f32 %v1300, %v1304
      %vm1306 = vweird.f32 %v1236
      %vm1307 = vweird.f32 %v1300
      %vm1308 = vmor %vm1306, %vm1307
      %v1309 = vsel %vm1308, %v1300, %v1305
      %v1310 = vrsqrt.pop %v1237
      %v1311 = vmul.f32 %v1310, %v1237
      %v1312 = vmul.f32 %v1311, %v1310
      %v1313 = vmul.f32 0.5, %v1312
      %v1314 = vsub.f32 1.5, %v1313
      %v1315 = vmul.f32 %v1310, %v1314
      %vm1316 = vweird.f32 %v1237
      %vm1317 = vweird.f32 %v1310
      %vm1318 = vmor %vm1316, %vm1317
      %v1319 = vsel %vm1318, %v1310, %v1315
      %v1320 = vrsqrt.pop %v1238
      %v1321 = vmul.f32 %v1320, %v1238
      %v1322 = vmul.f32 %v1321, %v1320
      %v1323 = vmul.f32 0.5, %v1322
      %v1324 = vsub.f32 1.5, %v1323
      %v1325 = vmul.f32 %v1320, %v1324
      %vm1326 = vweird.f32 %v1238
      %vm1327 = vweird.f32 %v1320
      %vm1328 = vmor %vm1326, %vm1327
      %v1329 = vsel %vm1328, %v1320, %v1325
      %v1330 = vrsqrt.pop %v1239
      %v1331 = vmul.f32 %v1330, %v1239
      %v1332 = vmul.f32 %v1331, %v1330
      %v1333 = vmul.f32 0.5, %v1332
      %v1334 = vsub.f32 1.5, %v1333
      %v1335 = vmul.f32 %v1330, %v1334
      %vm1336 = vweird.f32 %v1239
      %vm1337 = vweird.f32 %v1330
      %vm1338 = vmor %vm1336, %vm1337
      %v1339 = vsel %vm1338, %v1330, %v1335
      %v1340 = vmul.f32 %v1220, %v1249
      %v1341 = vmul.f32 %v1221, %v1259
      %v1342 = vmul.f32 %v1222, %v1269
      %v1343 = vmul.f32 %v1223, %v1279
      %v1344 = vmul.f32 %v1224, %v1289
      %v1345 = vmul.f32 %v1225, %v1299
      %v1346 = vmul.f32 %v1226, %v1309
      %v1347 = vmul.f32 %v1227, %v1319
      %v1348 = vmul.f32 %v1228, %v1329
      %v1349 = vmul.f32 %v1229, %v1339
      %1351 = vset.pattern.permute.xlu0 0
      %1352 = vperm.xlu0 %1351, %v1029
      %v1353 = vpop.permute.xlu0 %1352
      %v1355 = vmul.f32 %v1340, %v1353
      %v1356 = vmul.f32 %v1341, %v1353
      %v1357 = vmul.f32 %v1342, %v1353
      %v1358 = vmul.f32 %v1343, %v1353
      %v1359 = vmul.f32 %v1344, %v1353
      %v1360 = vmul.f32 %v1345, %v1353
      %v1361 = vmul.f32 %v1346, %v1353
      %v1362 = vmul.f32 %v1347, %v1353
      %v1363 = vmul.f32 %v1348, %v1353
      %v1364 = vmul.f32 %v1349, %v1353
      %1366 = vset.pattern.permute.xlu0 0
      %1367 = vperm.xlu0 %1366, %v1030
      %v1368 = vpop.permute.xlu0 %1367
      %v1370 = vadd.f32 %v1355, %v1368
      %v1371 = vadd.f32 %v1356, %v1368
      %v1372 = vadd.f32 %v1357, %v1368
      %v1373 = vadd.f32 %v1358, %v1368
      %v1374 = vadd.f32 %v1359, %v1368
      %v1375 = vadd.f32 %v1360, %v1368
      %v1376 = vadd.f32 %v1361, %v1368
      %v1377 = vadd.f32 %v1362, %v1368
      %v1378 = vadd.f32 %v1363, %v1368
      %v1379 = vadd.f32 %v1364, %v1368
      %v1380 = vsub.f32 0.0, %v1370
      %v1381 = vsub.f32 0.0, %v1371
      %v1382 = vsub.f32 0.0, %v1372
      %v1383 = vsub.f32 0.0, %v1373
      %v1384 = vsub.f32 0.0, %v1374
      %v1385 = vsub.f32 0.0, %v1375
      %v1386 = vsub.f32 0.0, %v1376
      %v1387 = vsub.f32 0.0, %v1377
      %v1388 = vsub.f32 0.0, %v1378
      %v1389 = vsub.f32 0.0, %v1379
      %v1390 = vmul.f32 %v1380, 1.442695
      %v1391 = vpow.pop %v1390
      %v1392 = vmul.f32 %v1381, 1.442695
      %v1393 = vpow.pop %v1392
      %v1394 = vmul.f32 %v1382, 1.442695
      %v1395 = vpow.pop %v1394
      %v1396 = vmul.f32 %v1383, 1.442695
      %v1397 = vpow.pop %v1396
      %v1398 = vmul.f32 %v1384, 1.442695
      %v1399 = vpow.pop %v1398
      %v1400 = vmul.f32 %v1385, 1.442695
      %v1401 = vpow.pop %v1400
      %v1402 = vmul.f32 %v1386, 1.442695
      %v1403 = vpow.pop %v1402
      %v1404 = vmul.f32 %v1387, 1.442695
      %v1405 = vpow.pop %v1404
      %v1406 = vmul.f32 %v1388, 1.442695
      %v1407 = vpow.pop %v1406
      %v1408 = vmul.f32 %v1389, 1.442695
      %v1409 = vpow.pop %v1408
      %v1410 = vadd.f32 %v1391, 1.0
      %v1411 = vadd.f32 %v1393, 1.0
      %v1412 = vadd.f32 %v1395, 1.0
      %v1413 = vadd.f32 %v1397, 1.0
      %v1414 = vadd.f32 %v1399, 1.0
      %v1415 = vadd.f32 %v1401, 1.0
      %v1416 = vadd.f32 %v1403, 1.0
      %v1417 = vadd.f32 %v1405, 1.0
      %v1418 = vadd.f32 %v1407, 1.0
      %v1419 = vadd.f32 %v1409, 1.0
      %v1420 = vrcp.pop %v1410
      %v1421 = vrcp.pop %v1411
      %v1422 = vrcp.pop %v1412
      %v1423 = vrcp.pop %v1413
      %v1424 = vrcp.pop %v1414
      %v1425 = vrcp.pop %v1415
      %v1426 = vrcp.pop %v1416
      %v1427 = vrcp.pop %v1417
      %v1428 = vrcp.pop %v1418
      %v1429 = vrcp.pop %v1419
      %v1430 = vmul.f32 %v1370, %v1420
      %v1431 = vmul.f32 %v1371, %v1421
      %v1432 = vmul.f32 %v1372, %v1422
      %v1433 = vmul.f32 %v1373, %v1423
      %v1434 = vmul.f32 %v1374, %v1424
      %v1435 = vmul.f32 %v1375, %v1425
      %v1436 = vmul.f32 %v1376, %v1426
      %v1437 = vmul.f32 %v1377, %v1427
      %v1438 = vmul.f32 %v1378, %v1428
      %v1439 = vmul.f32 %v1379, %v1429
      %v1442 = vperm.slane %v430, 0
      %v1443 = vperm.slane %v430, 1
      %v1444 = vperm.slane %v430, 2
      %v1445 = vperm.slane %v430, 3
      %v1446 = vperm.slane %v430, 4
      %v1447 = vperm.slane %v430, 5
      %v1448 = vperm.slane %v430, 6
      %v1449 = vperm.slane %v430, 7
      %v1450 = vperm.slane %v431, 0
      %v1451 = vperm.slane %v431, 1
      %v1462 = vmul.f32 %v1430, %v1442
      %v1463 = vmul.f32 %v1431, %v1443
      %v1464 = vmul.f32 %v1432, %v1444
      %v1465 = vmul.f32 %v1433, %v1445
      %v1466 = vmul.f32 %v1434, %v1446
      %v1467 = vmul.f32 %v1435, %v1447
      %v1468 = vmul.f32 %v1436, %v1448
      %v1469 = vmul.f32 %v1437, %v1449
      %v1470 = vmul.f32 %v1438, %v1450
      %v1471 = vmul.f32 %v1439, %v1451
      %1482 = vrot.lane.b32.xlu0 %v1462, 35
      %v1483 = vpop.permute.xlu0 %1482
      %1484 = vrot.lane.b32.xlu0 %v1463, 35
      %v1485 = vpop.permute.xlu0 %1484
      %1486 = vrot.lane.b32.xlu0 %v1464, 35
      %v1487 = vpop.permute.xlu0 %1486
      %1488 = vrot.lane.b32.xlu0 %v1465, 35
      %v1489 = vpop.permute.xlu0 %1488
      %1490 = vrot.lane.b32.xlu0 %v1466, 35
      %v1491 = vpop.permute.xlu0 %1490
      %1492 = vrot.lane.b32.xlu0 %v1467, 35
      %v1493 = vpop.permute.xlu0 %1492
      %1494 = vrot.lane.b32.xlu0 %v1468, 35
      %v1495 = vpop.permute.xlu0 %1494
      %1496 = vrot.lane.b32.xlu0 %v1469, 35
      %v1497 = vpop.permute.xlu0 %1496
      %1498 = vrot.lane.b32.xlu0 %v1470, 35
      %v1499 = vpop.permute.xlu0 %1498
      %1500 = vrot.lane.b32.xlu0 %v1471, 35
      %v1501 = vpop.permute.xlu0 %1500
      %v1502 = vsel %vm464, %v1483, %v1485
      %v1503 = vsel %vm464, %v1485, %v1487
      %v1504 = vsel %vm464, %v1487, %v1489
      %v1505 = vsel %vm464, %v1489, %v1491
      %v1506 = vsel %vm464, %v1491, %v1493
      %v1507 = vsel %vm464, %v1493, %v1495
      %v1508 = vsel %vm464, %v1495, %v1497
      %v1509 = vsel %vm464, %v1497, %v1499
      %v1510 = vsel %vm464, %v1499, %v1501
      %v1521 = vsel %vm464, 0.0, %v1483
      %v1522 = vsel %vm485, %v1510, 0.0
      %1525 = vrot.lane.b32.xlu0 %v1521, 127
      %v1526 = vpop.permute.xlu0 %1525
      %1527 = vrot.lane.b32.xlu0 %v1502, 127
      %v1528 = vpop.permute.xlu0 %1527
      %1529 = vrot.lane.b32.xlu0 %v1503, 127
      %v1530 = vpop.permute.xlu0 %1529
      %1531 = vrot.lane.b32.xlu0 %v1504, 127
      %v1532 = vpop.permute.xlu0 %1531
      %1533 = vrot.lane.b32.xlu0 %v1505, 127
      %v1534 = vpop.permute.xlu0 %1533
      %1535 = vrot.lane.b32.xlu0 %v1506, 127
      %v1536 = vpop.permute.xlu0 %1535
      %1537 = vrot.lane.b32.xlu0 %v1507, 127
      %v1538 = vpop.permute.xlu0 %1537
      %1539 = vrot.lane.b32.xlu0 %v1508, 127
      %v1540 = vpop.permute.xlu0 %1539
      %1541 = vrot.lane.b32.xlu0 %v1509, 127
      %v1542 = vpop.permute.xlu0 %1541
      %1543 = vrot.lane.b32.xlu0 %v1522, 127
      %v1544 = vpop.permute.xlu0 %1543
      %v1545 = vsel %vm509, %v1526, %v1528
      %v1546 = vsel %vm509, %v1528, %v1530
      %v1547 = vsel %vm509, %v1530, %v1532
      %v1548 = vsel %vm509, %v1532, %v1534
      %v1549 = vsel %vm509, %v1534, %v1536
      %v1550 = vsel %vm509, %v1536, %v1538
      %v1551 = vsel %vm509, %v1538, %v1540
      %v1552 = vsel %vm509, %v1540, %v1542
      %v1553 = vsel %vm509, %v1542, %v1544
      %1564 = vrot.lane.b32.xlu0 %v1521, 126
      %v1565 = vpop.permute.xlu0 %1564
      %1566 = vrot.lane.b32.xlu0 %v1502, 126
      %v1567 = vpop.permute.xlu0 %1566
      %1568 = vrot.lane.b32.xlu0 %v1503, 126
      %v1569 = vpop.permute.xlu0 %1568
      %1570 = vrot.lane.b32.xlu0 %v1504, 126
      %v1571 = vpop.permute.xlu0 %1570
      %1572 = vrot.lane.b32.xlu0 %v1505, 126
      %v1573 = vpop.permute.xlu0 %1572
      %1574 = vrot.lane.b32.xlu0 %v1506, 126
      %v1575 = vpop.permute.xlu0 %1574
      %1576 = vrot.lane.b32.xlu0 %v1507, 126
      %v1577 = vpop.permute.xlu0 %1576
      %1578 = vrot.lane.b32.xlu0 %v1508, 126
      %v1579 = vpop.permute.xlu0 %1578
      %1580 = vrot.lane.b32.xlu0 %v1509, 126
      %v1581 = vpop.permute.xlu0 %1580
      %1582 = vrot.lane.b32.xlu0 %v1522, 126
      %v1583 = vpop.permute.xlu0 %1582
      %v1584 = vsel %vm549, %v1565, %v1567
      %v1585 = vsel %vm549, %v1567, %v1569
      %v1586 = vsel %vm549, %v1569, %v1571
      %v1587 = vsel %vm549, %v1571, %v1573
      %v1588 = vsel %vm549, %v1573, %v1575
      %v1589 = vsel %vm549, %v1575, %v1577
      %v1590 = vsel %vm549, %v1577, %v1579
      %v1591 = vsel %vm549, %v1579, %v1581
      %v1592 = vsel %vm549, %v1581, %v1583
      %1603 = vrot.lane.b32.xlu0 %v1521, 94
      %v1604 = vpop.permute.xlu0 %1603
      %1605 = vrot.lane.b32.xlu0 %v1502, 94
      %v1606 = vpop.permute.xlu0 %1605
      %1607 = vrot.lane.b32.xlu0 %v1503, 94
      %v1608 = vpop.permute.xlu0 %1607
      %1609 = vrot.lane.b32.xlu0 %v1504, 94
      %v1610 = vpop.permute.xlu0 %1609
      %1611 = vrot.lane.b32.xlu0 %v1505, 94
      %v1612 = vpop.permute.xlu0 %1611
      %1613 = vrot.lane.b32.xlu0 %v1506, 94
      %v1614 = vpop.permute.xlu0 %1613
      %1615 = vrot.lane.b32.xlu0 %v1507, 94
      %v1616 = vpop.permute.xlu0 %1615
      %1617 = vrot.lane.b32.xlu0 %v1508, 94
      %v1618 = vpop.permute.xlu0 %1617
      %1619 = vrot.lane.b32.xlu0 %v1509, 94
      %v1620 = vpop.permute.xlu0 %1619
      %1621 = vrot.lane.b32.xlu0 %v1522, 94
      %v1622 = vpop.permute.xlu0 %1621
      %v1623 = vsel %vm589, %v1604, %v1606
      %v1624 = vsel %vm589, %v1606, %v1608
      %v1625 = vsel %vm589, %v1608, %v1610
      %v1626 = vsel %vm589, %v1610, %v1612
      %v1627 = vsel %vm589, %v1612, %v1614
      %v1628 = vsel %vm589, %v1614, %v1616
      %v1629 = vsel %vm589, %v1616, %v1618
      %v1630 = vsel %vm589, %v1618, %v1620
      %v1631 = vsel %vm589, %v1620, %v1622
      %1642 = vrot.lane.b32.xlu0 %v1521, 93
      %v1643 = vpop.permute.xlu0 %1642
      %1644 = vrot.lane.b32.xlu0 %v1502, 93
      %v1645 = vpop.permute.xlu0 %1644
      %1646 = vrot.lane.b32.xlu0 %v1503, 93
      %v1647 = vpop.permute.xlu0 %1646
      %1648 = vrot.lane.b32.xlu0 %v1504, 93
      %v1649 = vpop.permute.xlu0 %1648
      %1650 = vrot.lane.b32.xlu0 %v1505, 93
      %v1651 = vpop.permute.xlu0 %1650
      %1652 = vrot.lane.b32.xlu0 %v1506, 93
      %v1653 = vpop.permute.xlu0 %1652
      %1654 = vrot.lane.b32.xlu0 %v1507, 93
      %v1655 = vpop.permute.xlu0 %1654
      %1656 = vrot.lane.b32.xlu0 %v1508, 93
      %v1657 = vpop.permute.xlu0 %1656
      %1658 = vrot.lane.b32.xlu0 %v1509, 93
      %v1659 = vpop.permute.xlu0 %1658
      %1660 = vrot.lane.b32.xlu0 %v1522, 93
      %v1661 = vpop.permute.xlu0 %1660
      %v1662 = vsel %vm629, %v1643, %v1645
      %v1663 = vsel %vm629, %v1645, %v1647
      %v1664 = vsel %vm629, %v1647, %v1649
      %v1665 = vsel %vm629, %v1649, %v1651
      %v1666 = vsel %vm629, %v1651, %v1653
      %v1667 = vsel %vm629, %v1653, %v1655
      %v1668 = vsel %vm629, %v1655, %v1657
      %v1669 = vsel %vm629, %v1657, %v1659
      %v1670 = vsel %vm629, %v1659, %v1661
      %1681 = vrot.lane.b32.xlu0 %v1521, 92
      %v1682 = vpop.permute.xlu0 %1681
      %1683 = vrot.lane.b32.xlu0 %v1502, 92
      %v1684 = vpop.permute.xlu0 %1683
      %1685 = vrot.lane.b32.xlu0 %v1503, 92
      %v1686 = vpop.permute.xlu0 %1685
      %1687 = vrot.lane.b32.xlu0 %v1504, 92
      %v1688 = vpop.permute.xlu0 %1687
      %1689 = vrot.lane.b32.xlu0 %v1505, 92
      %v1690 = vpop.permute.xlu0 %1689
      %1691 = vrot.lane.b32.xlu0 %v1506, 92
      %v1692 = vpop.permute.xlu0 %1691
      %1693 = vrot.lane.b32.xlu0 %v1507, 92
      %v1694 = vpop.permute.xlu0 %1693
      %1695 = vrot.lane.b32.xlu0 %v1508, 92
      %v1696 = vpop.permute.xlu0 %1695
      %1697 = vrot.lane.b32.xlu0 %v1509, 92
      %v1698 = vpop.permute.xlu0 %1697
      %1699 = vrot.lane.b32.xlu0 %v1522, 92
      %v1700 = vpop.permute.xlu0 %1699
      %v1701 = vsel %vm669, %v1682, %v1684
      %v1702 = vsel %vm669, %v1684, %v1686
      %v1703 = vsel %vm669, %v1686, %v1688
      %v1704 = vsel %vm669, %v1688, %v1690
      %v1705 = vsel %vm669, %v1690, %v1692
      %v1706 = vsel %vm669, %v1692, %v1694
      %v1707 = vsel %vm669, %v1694, %v1696
      %v1708 = vsel %vm669, %v1696, %v1698
      %v1709 = vsel %vm669, %v1698, %v1700
      %1720 = vrot.lane.b32.xlu0 %v1521, 60
      %v1721 = vpop.permute.xlu0 %1720
      %1722 = vrot.lane.b32.xlu0 %v1502, 60
      %v1723 = vpop.permute.xlu0 %1722
      %1724 = vrot.lane.b32.xlu0 %v1503, 60
      %v1725 = vpop.permute.xlu0 %1724
      %1726 = vrot.lane.b32.xlu0 %v1504, 60
      %v1727 = vpop.permute.xlu0 %1726
      %1728 = vrot.lane.b32.xlu0 %v1505, 60
      %v1729 = vpop.permute.xlu0 %1728
      %1730 = vrot.lane.b32.xlu0 %v1506, 60
      %v1731 = vpop.permute.xlu0 %1730
      %1732 = vrot.lane.b32.xlu0 %v1507, 60
      %v1733 = vpop.permute.xlu0 %1732
      %1734 = vrot.lane.b32.xlu0 %v1508, 60
      %v1735 = vpop.permute.xlu0 %1734
      %1736 = vrot.lane.b32.xlu0 %v1509, 60
      %v1737 = vpop.permute.xlu0 %1736
      %1738 = vrot.lane.b32.xlu0 %v1522, 60
      %v1739 = vpop.permute.xlu0 %1738
      %v1740 = vsel %vm709, %v1721, %v1723
      %v1741 = vsel %vm709, %v1723, %v1725
      %v1742 = vsel %vm709, %v1725, %v1727
      %v1743 = vsel %vm709, %v1727, %v1729
      %v1744 = vsel %vm709, %v1729, %v1731
      %v1745 = vsel %vm709, %v1731, %v1733
      %v1746 = vsel %vm709, %v1733, %v1735
      %v1747 = vsel %vm709, %v1735, %v1737
      %v1748 = vsel %vm709, %v1737, %v1739
      %1759 = vrot.lane.b32.xlu0 %v1521, 59
      %v1760 = vpop.permute.xlu0 %1759
      %1761 = vrot.lane.b32.xlu0 %v1502, 59
      %v1762 = vpop.permute.xlu0 %1761
      %1763 = vrot.lane.b32.xlu0 %v1503, 59
      %v1764 = vpop.permute.xlu0 %1763
      %1765 = vrot.lane.b32.xlu0 %v1504, 59
      %v1766 = vpop.permute.xlu0 %1765
      %1767 = vrot.lane.b32.xlu0 %v1505, 59
      %v1768 = vpop.permute.xlu0 %1767
      %1769 = vrot.lane.b32.xlu0 %v1506, 59
      %v1770 = vpop.permute.xlu0 %1769
      %1771 = vrot.lane.b32.xlu0 %v1507, 59
      %v1772 = vpop.permute.xlu0 %1771
      %1773 = vrot.lane.b32.xlu0 %v1508, 59
      %v1774 = vpop.permute.xlu0 %1773
      %1775 = vrot.lane.b32.xlu0 %v1509, 59
      %v1776 = vpop.permute.xlu0 %1775
      %1777 = vrot.lane.b32.xlu0 %v1522, 59
      %v1778 = vpop.permute.xlu0 %1777
      %v1779 = vsel %vm749, %v1760, %v1762
      %v1780 = vsel %vm749, %v1762, %v1764
      %v1781 = vsel %vm749, %v1764, %v1766
      %v1782 = vsel %vm749, %v1766, %v1768
      %v1783 = vsel %vm749, %v1768, %v1770
      %v1784 = vsel %vm749, %v1770, %v1772
      %v1785 = vsel %vm749, %v1772, %v1774
      %v1786 = vsel %vm749, %v1774, %v1776
      %v1787 = vsel %vm749, %v1776, %v1778
      %1798 = vrot.lane.b32.xlu0 %v1521, 58
      %v1799 = vpop.permute.xlu0 %1798
      %1800 = vrot.lane.b32.xlu0 %v1502, 58
      %v1801 = vpop.permute.xlu0 %1800
      %1802 = vrot.lane.b32.xlu0 %v1503, 58
      %v1803 = vpop.permute.xlu0 %1802
      %1804 = vrot.lane.b32.xlu0 %v1504, 58
      %v1805 = vpop.permute.xlu0 %1804
      %1806 = vrot.lane.b32.xlu0 %v1505, 58
      %v1807 = vpop.permute.xlu0 %1806
      %1808 = vrot.lane.b32.xlu0 %v1506, 58
      %v1809 = vpop.permute.xlu0 %1808
      %1810 = vrot.lane.b32.xlu0 %v1507, 58
      %v1811 = vpop.permute.xlu0 %1810
      %1812 = vrot.lane.b32.xlu0 %v1508, 58
      %v1813 = vpop.permute.xlu0 %1812
      %1814 = vrot.lane.b32.xlu0 %v1509, 58
      %v1815 = vpop.permute.xlu0 %1814
      %1816 = vrot.lane.b32.xlu0 %v1522, 58
      %v1817 = vpop.permute.xlu0 %1816
      %v1818 = vsel %vm789, %v1799, %v1801
      %v1819 = vsel %vm789, %v1801, %v1803
      %v1820 = vsel %vm789, %v1803, %v1805
      %v1821 = vsel %vm789, %v1805, %v1807
      %v1822 = vsel %vm789, %v1807, %v1809
      %v1823 = vsel %vm789, %v1809, %v1811
      %v1824 = vsel %vm789, %v1811, %v1813
      %v1825 = vsel %vm789, %v1813, %v1815
      %v1826 = vsel %vm789, %v1815, %v1817
      %v1837 = vpack.c.bf16 %v1545, %v1521
      %v1838 = vpack.c.bf16 %v1546, %v1502
      %v1839 = vpack.c.bf16 %v1547, %v1503
      %v1840 = vpack.c.bf16 %v1548, %v1504
      %v1841 = vpack.c.bf16 %v1549, %v1505
      %v1842 = vpack.c.bf16 %v1550, %v1506
      %v1843 = vpack.c.bf16 %v1551, %v1507
      %v1844 = vpack.c.bf16 %v1552, %v1508
      %v1845 = vpack.c.bf16 %v1553, %v1509
      %v1846 = vpack.c.bf16 %v1544, %v1522
      %v1847 = vpack.c.bf16 %v1623, %v1584
      %v1848 = vpack.c.bf16 %v1624, %v1585
      %v1849 = vpack.c.bf16 %v1625, %v1586
      %v1850 = vpack.c.bf16 %v1626, %v1587
      %v1851 = vpack.c.bf16 %v1627, %v1588
      %v1852 = vpack.c.bf16 %v1628, %v1589
      %v1853 = vpack.c.bf16 %v1629, %v1590
      %v1854 = vpack.c.bf16 %v1630, %v1591
      %v1855 = vpack.c.bf16 %v1631, %v1592
      %v1856 = vpack.c.bf16 %v1622, %v1583
      %v1857 = vpack.c.bf16 %v1701, %v1662
      %v1858 = vpack.c.bf16 %v1702, %v1663
      %v1859 = vpack.c.bf16 %v1703, %v1664
      %v1860 = vpack.c.bf16 %v1704, %v1665
      %v1861 = vpack.c.bf16 %v1705, %v1666
      %v1862 = vpack.c.bf16 %v1706, %v1667
      %v1863 = vpack.c.bf16 %v1707, %v1668
      %v1864 = vpack.c.bf16 %v1708, %v1669
      %v1865 = vpack.c.bf16 %v1709, %v1670
      %v1866 = vpack.c.bf16 %v1700, %v1661
      %v1867 = vpack.c.bf16 %v1779, %v1740
      %v1868 = vpack.c.bf16 %v1780, %v1741
      %v1869 = vpack.c.bf16 %v1781, %v1742
      %v1870 = vpack.c.bf16 %v1782, %v1743
      %v1871 = vpack.c.bf16 %v1783, %v1744
      %v1872 = vpack.c.bf16 %v1784, %v1745
      %v1873 = vpack.c.bf16 %v1785, %v1746
      %v1874 = vpack.c.bf16 %v1786, %v1747
      %v1875 = vpack.c.bf16 %v1787, %v1748
      %v1876 = vpack.c.bf16 %v1778, %v1739
      %v1877 = vpack.c.bf16 %v1818, %v1818
      %v1878 = vpack.c.bf16 %v1819, %v1819
      %v1879 = vpack.c.bf16 %v1820, %v1820
      %v1880 = vpack.c.bf16 %v1821, %v1821
      %v1881 = vpack.c.bf16 %v1822, %v1822
      %v1882 = vpack.c.bf16 %v1823, %v1823
      %v1883 = vpack.c.bf16 %v1824, %v1824
      %v1884 = vpack.c.bf16 %v1825, %v1825
      %v1885 = vpack.c.bf16 %v1826, %v1826
      %v1886 = vpack.c.bf16 %v1817, %v1817
      %1888 = vset.pattern.permute.xlu0 0
      %1889 = vperm.xlu0 %1888, %v1032
      %v1890 = vpop.permute.xlu0 %1889
      %v1893 = vsel %vm864, %v1031, 0
      %v1896 = vsel %vm868, %v1877, 0
      %v1899 = vsel %vm868, %v1878, 0
      %v1902 = vsel %vm868, %v1879, 0
      %v1905 = vsel %vm868, %v1880, 0
      %v1908 = vsel %vm868, %v1881, 0
      %v1911 = vsel %vm868, %v1882, 0
      %v1914 = vsel %vm868, %v1883, 0
      %v1917 = vsel %vm868, %v1884, 0
      %v1920 = vsel %vm868, %v1885, 0
      %v1923 = vsel %vm868, %v1886, 0
      %1925 = vmatpush.bf16.msra.mxu0 0
      %1926 = vmatpush.bf16.msra.mxu0 0
      %1927 = vmatpush.bf16.msra.mxu0 0
      %1928 = vmatpush.bf16.msra.mxu0 %v1896
      %1929 = vmatpush.bf16.msra.mxu0 %v1867
      %1930 = vmatpush.bf16.msra.mxu0 %v1857
      %1931 = vmatpush.bf16.msra.mxu0 %v1847
      %1932 = vmatpush.bf16.msra.mxu0 %v1837
      %1933 = vmatmul.bf16.gmra.mxu0 %v1893
      %v1934 = vpop.f32.mrf.mxu0
      %v1935 = vadd.f32 %v1890, %v1934
      %v1936 = vpop.f32.mrf.mxu0
      %1937 = vdwg.mxu0
      %1938 = vmatpush.bf16.msra.mxu0 0
      %1939 = vmatpush.bf16.msra.mxu0 0
      %1940 = vmatpush.bf16.msra.mxu0 0
      %1941 = vmatpush.bf16.msra.mxu0 %v1899
      %1942 = vmatpush.bf16.msra.mxu0 %v1868
      %1943 = vmatpush.bf16.msra.mxu0 %v1858
      %1944 = vmatpush.bf16.msra.mxu0 %v1848
      %1945 = vmatpush.bf16.msra.mxu0 %v1838
      %1946 = vmatmul.bf16.gmra.mxu0 %v1893
      %v1947 = vpop.f32.mrf.mxu0
      %v1948 = vadd.f32 %v1890, %v1947
      %v1949 = vpop.f32.mrf.mxu0
      %1950 = vdwg.mxu0
      %1951 = vmatpush.bf16.msra.mxu0 0
      %1952 = vmatpush.bf16.msra.mxu0 0
      %1953 = vmatpush.bf16.msra.mxu0 0
      %1954 = vmatpush.bf16.msra.mxu0 %v1902
      %1955 = vmatpush.bf16.msra.mxu0 %v1869
      %1956 = vmatpush.bf16.msra.mxu0 %v1859
      %1957 = vmatpush.bf16.msra.mxu0 %v1849
      %1958 = vmatpush.bf16.msra.mxu0 %v1839
      %1959 = vmatmul.bf16.gmra.mxu0 %v1893
      %v1960 = vpop.f32.mrf.mxu0
      %v1961 = vadd.f32 %v1890, %v1960
      %v1962 = vpop.f32.mrf.mxu0
      %1963 = vdwg.mxu0
      %1964 = vmatpush.bf16.msra.mxu0 0
      %1965 = vmatpush.bf16.msra.mxu0 0
      %1966 = vmatpush.bf16.msra.mxu0 0
      %1967 = vmatpush.bf16.msra.mxu0 %v1905
      %1968 = vmatpush.bf16.msra.mxu0 %v1870
      %1969 = vmatpush.bf16.msra.mxu0 %v1860
      %1970 = vmatpush.bf16.msra.mxu0 %v1850
      %1971 = vmatpush.bf16.msra.mxu0 %v1840
      %1972 = vmatmul.bf16.gmra.mxu0 %v1893
      %v1973 = vpop.f32.mrf.mxu0
      %v1974 = vadd.f32 %v1890, %v1973
      %v1975 = vpop.f32.mrf.mxu0
      %1976 = vdwg.mxu0
      %1977 = vmatpush.bf16.msra.mxu0 0
      %1978 = vmatpush.bf16.msra.mxu0 0
      %1979 = vmatpush.bf16.msra.mxu0 0
      %1980 = vmatpush.bf16.msra.mxu0 %v1908
      %1981 = vmatpush.bf16.msra.mxu0 %v1871
      %1982 = vmatpush.bf16.msra.mxu0 %v1861
      %1983 = vmatpush.bf16.msra.mxu0 %v1851
      %1984 = vmatpush.bf16.msra.mxu0 %v1841
      %1985 = vmatmul.bf16.gmra.mxu0 %v1893
      %v1986 = vpop.f32.mrf.mxu0
      %v1987 = vadd.f32 %v1890, %v1986
      %v1988 = vpop.f32.mrf.mxu0
      %1989 = vdwg.mxu0
      %1990 = vmatpush.bf16.msra.mxu0 0
      %1991 = vmatpush.bf16.msra.mxu0 0
      %1992 = vmatpush.bf16.msra.mxu0 0
      %1993 = vmatpush.bf16.msra.mxu0 %v1911
      %1994 = vmatpush.bf16.msra.mxu0 %v1872
      %1995 = vmatpush.bf16.msra.mxu0 %v1862
      %1996 = vmatpush.bf16.msra.mxu0 %v1852
      %1997 = vmatpush.bf16.msra.mxu0 %v1842
      %1998 = vmatmul.bf16.gmra.mxu0 %v1893
      %v1999 = vpop.f32.mrf.mxu0
      %v2000 = vadd.f32 %v1890, %v1999
      %v2001 = vpop.f32.mrf.mxu0
      %2002 = vdwg.mxu0
      %2003 = vmatpush.bf16.msra.mxu0 0
      %2004 = vmatpush.bf16.msra.mxu0 0
      %2005 = vmatpush.bf16.msra.mxu0 0
      %2006 = vmatpush.bf16.msra.mxu0 %v1914
      %2007 = vmatpush.bf16.msra.mxu0 %v1873
      %2008 = vmatpush.bf16.msra.mxu0 %v1863
      %2009 = vmatpush.bf16.msra.mxu0 %v1853
      %2010 = vmatpush.bf16.msra.mxu0 %v1843
      %2011 = vmatmul.bf16.gmra.mxu0 %v1893
      %v2012 = vpop.f32.mrf.mxu0
      %v2013 = vadd.f32 %v1890, %v2012
      %v2014 = vpop.f32.mrf.mxu0
      %2015 = vdwg.mxu0
      %2016 = vmatpush.bf16.msra.mxu0 0
      %2017 = vmatpush.bf16.msra.mxu0 0
      %2018 = vmatpush.bf16.msra.mxu0 0
      %2019 = vmatpush.bf16.msra.mxu0 %v1917
      %2020 = vmatpush.bf16.msra.mxu0 %v1874
      %2021 = vmatpush.bf16.msra.mxu0 %v1864
      %2022 = vmatpush.bf16.msra.mxu0 %v1854
      %2023 = vmatpush.bf16.msra.mxu0 %v1844
      %2024 = vmatmul.bf16.gmra.mxu0 %v1893
      %v2025 = vpop.f32.mrf.mxu0
      %v2026 = vadd.f32 %v1890, %v2025
      %v2027 = vpop.f32.mrf.mxu0
      %2028 = vdwg.mxu0
      %2029 = vmatpush.bf16.msra.mxu0 0
      %2030 = vmatpush.bf16.msra.mxu0 0
      %2031 = vmatpush.bf16.msra.mxu0 0
      %2032 = vmatpush.bf16.msra.mxu0 %v1920
      %2033 = vmatpush.bf16.msra.mxu0 %v1875
      %2034 = vmatpush.bf16.msra.mxu0 %v1865
      %2035 = vmatpush.bf16.msra.mxu0 %v1855
      %2036 = vmatpush.bf16.msra.mxu0 %v1845
      %2037 = vmatmul.bf16.gmra.mxu0 %v1893
      %v2038 = vpop.f32.mrf.mxu0
      %v2039 = vadd.f32 %v1890, %v2038
      %v2040 = vpop.f32.mrf.mxu0
      %2041 = vdwg.mxu0
      %2042 = vmatpush.bf16.msra.mxu0 0
      %2043 = vmatpush.bf16.msra.mxu0 0
      %2044 = vmatpush.bf16.msra.mxu0 0
      %2045 = vmatpush.bf16.msra.mxu0 %v1923
      %2046 = vmatpush.bf16.msra.mxu0 %v1876
      %2047 = vmatpush.bf16.msra.mxu0 %v1866
      %2048 = vmatpush.bf16.msra.mxu0 %v1856
      %2049 = vmatpush.bf16.msra.mxu0 %v1846
      %2050 = vmatmul.bf16.gmra.mxu0 %v1893
      %v2051 = vpop.f32.mrf.mxu0
      %v2052 = vadd.f32 %v1890, %v2051
      %v2053 = vpop.f32.mrf.mxu0
      %2054 = vdwg.mxu0
      %v2055 = vrot.slane %v1935, 4
      %v2056 = vadd.f32 %v1935, %v2055
      %v2057 = vrot.slane %v2056, 2
      %v2058 = vadd.f32 %v2056, %v2057
      %v2059 = vrot.slane %v2058, 1
      %v2060 = vadd.f32 %v2058, %v2059
      %v2061 = vrot.slane %v1948, 4
      %v2062 = vadd.f32 %v1948, %v2061
      %v2063 = vrot.slane %v2062, 2
      %v2064 = vadd.f32 %v2062, %v2063
      %v2065 = vrot.slane %v2064, 1
      %v2066 = vadd.f32 %v2064, %v2065
      %v2067 = vrot.slane %v1961, 4
      %v2068 = vadd.f32 %v1961, %v2067
      %v2069 = vrot.slane %v2068, 2
      %v2070 = vadd.f32 %v2068, %v2069
      %v2071 = vrot.slane %v2070, 1
      %v2072 = vadd.f32 %v2070, %v2071
      %v2073 = vrot.slane %v1974, 4
      %v2074 = vadd.f32 %v1974, %v2073
      %v2075 = vrot.slane %v2074, 2
      %v2076 = vadd.f32 %v2074, %v2075
      %v2077 = vrot.slane %v2076, 1
      %v2078 = vadd.f32 %v2076, %v2077
      %v2079 = vrot.slane %v1987, 4
      %v2080 = vadd.f32 %v1987, %v2079
      %v2081 = vrot.slane %v2080, 2
      %v2082 = vadd.f32 %v2080, %v2081
      %v2083 = vrot.slane %v2082, 1
      %v2084 = vadd.f32 %v2082, %v2083
      %v2085 = vrot.slane %v2000, 4
      %v2086 = vadd.f32 %v2000, %v2085
      %v2087 = vrot.slane %v2086, 2
      %v2088 = vadd.f32 %v2086, %v2087
      %v2089 = vrot.slane %v2088, 1
      %v2090 = vadd.f32 %v2088, %v2089
      %v2091 = vrot.slane %v2013, 4
      %v2092 = vadd.f32 %v2013, %v2091
      %v2093 = vrot.slane %v2092, 2
      %v2094 = vadd.f32 %v2092, %v2093
      %v2095 = vrot.slane %v2094, 1
      %v2096 = vadd.f32 %v2094, %v2095
      %v2097 = vrot.slane %v2026, 4
      %v2098 = vadd.f32 %v2026, %v2097
      %v2099 = vrot.slane %v2098, 2
      %v2100 = vadd.f32 %v2098, %v2099
      %v2101 = vrot.slane %v2100, 1
      %v2102 = vadd.f32 %v2100, %v2101
      %v2103 = vrot.slane %v2039, 4
      %v2104 = vadd.f32 %v2039, %v2103
      %v2105 = vrot.slane %v2104, 2
      %v2106 = vadd.f32 %v2104, %v2105
      %v2107 = vrot.slane %v2106, 1
      %v2108 = vadd.f32 %v2106, %v2107
      %v2109 = vsel %vm1091, %v2052, 0.0
      %v2110 = vrot.slane %v2109, 4
      %v2111 = vadd.f32 %v2109, %v2110
      %v2112 = vrot.slane %v2111, 2
      %v2113 = vadd.f32 %v2111, %v2112
      %v2114 = vrot.slane %v2113, 1
      %v2115 = vadd.f32 %v2113, %v2114
      %v2116 = vmul.f32 %v2060, 0.25
      %v2117 = vmul.f32 %v2066, 0.25
      %v2118 = vmul.f32 %v2072, 0.25
      %v2119 = vmul.f32 %v2078, 0.25
      %v2120 = vmul.f32 %v2084, 0.25
      %v2121 = vmul.f32 %v2090, 0.25
      %v2122 = vmul.f32 %v2096, 0.25
      %v2123 = vmul.f32 %v2102, 0.25
      %v2124 = vmul.f32 %v2108, 0.25
      %v2125 = vmul.f32 %v2115, 0.25
      %v2126 = vmul.f32 %v1935, %v1935
      %v2127 = vmul.f32 %v1948, %v1948
      %v2128 = vmul.f32 %v1961, %v1961
      %v2129 = vmul.f32 %v1974, %v1974
      %v2130 = vmul.f32 %v1987, %v1987
      %v2131 = vmul.f32 %v2000, %v2000
      %v2132 = vmul.f32 %v2013, %v2013
      %v2133 = vmul.f32 %v2026, %v2026
      %v2134 = vmul.f32 %v2039, %v2039
      %v2135 = vmul.f32 %v2052, %v2052
      %v2136 = vrot.slane %v2126, 4
      %v2137 = vadd.f32 %v2126, %v2136
      %v2138 = vrot.slane %v2137, 2
      %v2139 = vadd.f32 %v2137, %v2138
      %v2140 = vrot.slane %v2139, 1
      %v2141 = vadd.f32 %v2139, %v2140
      %v2142 = vrot.slane %v2127, 4
      %v2143 = vadd.f32 %v2127, %v2142
      %v2144 = vrot.slane %v2143, 2
      %v2145 = vadd.f32 %v2143, %v2144
      %v2146 = vrot.slane %v2145, 1
      %v2147 = vadd.f32 %v2145, %v2146
      %v2148 = vrot.slane %v2128, 4
      %v2149 = vadd.f32 %v2128, %v2148
      %v2150 = vrot.slane %v2149, 2
      %v2151 = vadd.f32 %v2149, %v2150
      %v2152 = vrot.slane %v2151, 1
      %v2153 = vadd.f32 %v2151, %v2152
      %v2154 = vrot.slane %v2129, 4
      %v2155 = vadd.f32 %v2129, %v2154
      %v2156 = vrot.slane %v2155, 2
      %v2157 = vadd.f32 %v2155, %v2156
      %v2158 = vrot.slane %v2157, 1
      %v2159 = vadd.f32 %v2157, %v2158
      %v2160 = vrot.slane %v2130, 4
      %v2161 = vadd.f32 %v2130, %v2160
      %v2162 = vrot.slane %v2161, 2
      %v2163 = vadd.f32 %v2161, %v2162
      %v2164 = vrot.slane %v2163, 1
      %v2165 = vadd.f32 %v2163, %v2164
      %v2166 = vrot.slane %v2131, 4
      %v2167 = vadd.f32 %v2131, %v2166
      %v2168 = vrot.slane %v2167, 2
      %v2169 = vadd.f32 %v2167, %v2168
      %v2170 = vrot.slane %v2169, 1
      %v2171 = vadd.f32 %v2169, %v2170
      %v2172 = vrot.slane %v2132, 4
      %v2173 = vadd.f32 %v2132, %v2172
      %v2174 = vrot.slane %v2173, 2
      %v2175 = vadd.f32 %v2173, %v2174
      %v2176 = vrot.slane %v2175, 1
      %v2177 = vadd.f32 %v2175, %v2176
      %v2178 = vrot.slane %v2133, 4
      %v2179 = vadd.f32 %v2133, %v2178
      %v2180 = vrot.slane %v2179, 2
      %v2181 = vadd.f32 %v2179, %v2180
      %v2182 = vrot.slane %v2181, 1
      %v2183 = vadd.f32 %v2181, %v2182
      %v2184 = vrot.slane %v2134, 4
      %v2185 = vadd.f32 %v2134, %v2184
      %v2186 = vrot.slane %v2185, 2
      %v2187 = vadd.f32 %v2185, %v2186
      %v2188 = vrot.slane %v2187, 1
      %v2189 = vadd.f32 %v2187, %v2188
      %v2190 = vsel %vm1091, %v2135, 0.0
      %v2191 = vrot.slane %v2190, 4
      %v2192 = vadd.f32 %v2190, %v2191
      %v2193 = vrot.slane %v2192, 2
      %v2194 = vadd.f32 %v2192, %v2193
      %v2195 = vrot.slane %v2194, 1
      %v2196 = vadd.f32 %v2194, %v2195
      %v2197 = vmul.f32 %v2141, 0.25
      %v2198 = vmul.f32 %v2147, 0.25
      %v2199 = vmul.f32 %v2153, 0.25
      %v2200 = vmul.f32 %v2159, 0.25
      %v2201 = vmul.f32 %v2165, 0.25
      %v2202 = vmul.f32 %v2171, 0.25
      %v2203 = vmul.f32 %v2177, 0.25
      %v2204 = vmul.f32 %v2183, 0.25
      %v2205 = vmul.f32 %v2189, 0.25
      %v2206 = vmul.f32 %v2196, 0.25
      %v2207 = vmul.f32 %v2116, %v2116
      %v2208 = vmul.f32 %v2117, %v2117
      %v2209 = vmul.f32 %v2118, %v2118
      %v2210 = vmul.f32 %v2119, %v2119
      %v2211 = vmul.f32 %v2120, %v2120
      %v2212 = vmul.f32 %v2121, %v2121
      %v2213 = vmul.f32 %v2122, %v2122
      %v2214 = vmul.f32 %v2123, %v2123
      %v2215 = vmul.f32 %v2124, %v2124
      %v2216 = vmul.f32 %v2125, %v2125
      %v2217 = vsub.f32 %v2197, %v2207
      %v2218 = vsub.f32 %v2198, %v2208
      %v2219 = vsub.f32 %v2199, %v2209
      %v2220 = vsub.f32 %v2200, %v2210
      %v2221 = vsub.f32 %v2201, %v2211
      %v2222 = vsub.f32 %v2202, %v2212
      %v2223 = vsub.f32 %v2203, %v2213
      %v2224 = vsub.f32 %v2204, %v2214
      %v2225 = vsub.f32 %v2205, %v2215
      %v2226 = vsub.f32 %v2206, %v2216
      %v2227 = vmax.f32 %v2217, 0.0
      %v2228 = vmax.f32 %v2218, 0.0
      %v2229 = vmax.f32 %v2219, 0.0
      %v2230 = vmax.f32 %v2220, 0.0
      %v2231 = vmax.f32 %v2221, 0.0
      %v2232 = vmax.f32 %v2222, 0.0
      %v2233 = vmax.f32 %v2223, 0.0
      %v2234 = vmax.f32 %v2224, 0.0
      %v2235 = vmax.f32 %v2225, 0.0
      %v2236 = vmax.f32 %v2226, 0.0
      %v2237 = vsub.f32 %v1935, %v2116
      %v2238 = vsub.f32 %v1948, %v2117
      %v2239 = vsub.f32 %v1961, %v2118
      %v2240 = vsub.f32 %v1974, %v2119
      %v2241 = vsub.f32 %v1987, %v2120
      %v2242 = vsub.f32 %v2000, %v2121
      %v2243 = vsub.f32 %v2013, %v2122
      %v2244 = vsub.f32 %v2026, %v2123
      %v2245 = vsub.f32 %v2039, %v2124
      %v2246 = vsub.f32 %v2052, %v2125
      %v2247 = vadd.f32 %v2227, 1e-06
      %v2248 = vadd.f32 %v2228, 1e-06
      %v2249 = vadd.f32 %v2229, 1e-06
      %v2250 = vadd.f32 %v2230, 1e-06
      %v2251 = vadd.f32 %v2231, 1e-06
      %v2252 = vadd.f32 %v2232, 1e-06
      %v2253 = vadd.f32 %v2233, 1e-06
      %v2254 = vadd.f32 %v2234, 1e-06
      %v2255 = vadd.f32 %v2235, 1e-06
      %v2256 = vadd.f32 %v2236, 1e-06
      %v2257 = vrsqrt.pop %v2247
      %v2258 = vmul.f32 %v2257, %v2247
      %v2259 = vmul.f32 %v2258, %v2257
      %v2260 = vmul.f32 0.5, %v2259
      %v2261 = vsub.f32 1.5, %v2260
      %v2262 = vmul.f32 %v2257, %v2261
      %vm2263 = vweird.f32 %v2247
      %vm2264 = vweird.f32 %v2257
      %vm2265 = vmor %vm2263, %vm2264
      %v2266 = vsel %vm2265, %v2257, %v2262
      %v2267 = vrsqrt.pop %v2248
      %v2268 = vmul.f32 %v2267, %v2248
      %v2269 = vmul.f32 %v2268, %v2267
      %v2270 = vmul.f32 0.5, %v2269
      %v2271 = vsub.f32 1.5, %v2270
      %v2272 = vmul.f32 %v2267, %v2271
      %vm2273 = vweird.f32 %v2248
      %vm2274 = vweird.f32 %v2267
      %vm2275 = vmor %vm2273, %vm2274
      %v2276 = vsel %vm2275, %v2267, %v2272
      %v2277 = vrsqrt.pop %v2249
      %v2278 = vmul.f32 %v2277, %v2249
      %v2279 = vmul.f32 %v2278, %v2277
      %v2280 = vmul.f32 0.5, %v2279
      %v2281 = vsub.f32 1.5, %v2280
      %v2282 = vmul.f32 %v2277, %v2281
      %vm2283 = vweird.f32 %v2249
      %vm2284 = vweird.f32 %v2277
      %vm2285 = vmor %vm2283, %vm2284
      %v2286 = vsel %vm2285, %v2277, %v2282
      %v2287 = vrsqrt.pop %v2250
      %v2288 = vmul.f32 %v2287, %v2250
      %v2289 = vmul.f32 %v2288, %v2287
      %v2290 = vmul.f32 0.5, %v2289
      %v2291 = vsub.f32 1.5, %v2290
      %v2292 = vmul.f32 %v2287, %v2291
      %vm2293 = vweird.f32 %v2250
      %vm2294 = vweird.f32 %v2287
      %vm2295 = vmor %vm2293, %vm2294
      %v2296 = vsel %vm2295, %v2287, %v2292
      %v2297 = vrsqrt.pop %v2251
      %v2298 = vmul.f32 %v2297, %v2251
      %v2299 = vmul.f32 %v2298, %v2297
      %v2300 = vmul.f32 0.5, %v2299
      %v2301 = vsub.f32 1.5, %v2300
      %v2302 = vmul.f32 %v2297, %v2301
      %vm2303 = vweird.f32 %v2251
      %vm2304 = vweird.f32 %v2297
      %vm2305 = vmor %vm2303, %vm2304
      %v2306 = vsel %vm2305, %v2297, %v2302
      %v2307 = vrsqrt.pop %v2252
      %v2308 = vmul.f32 %v2307, %v2252
      %v2309 = vmul.f32 %v2308, %v2307
      %v2310 = vmul.f32 0.5, %v2309
      %v2311 = vsub.f32 1.5, %v2310
      %v2312 = vmul.f32 %v2307, %v2311
      %vm2313 = vweird.f32 %v2252
      %vm2314 = vweird.f32 %v2307
      %vm2315 = vmor %vm2313, %vm2314
      %v2316 = vsel %vm2315, %v2307, %v2312
      %v2317 = vrsqrt.pop %v2253
      %v2318 = vmul.f32 %v2317, %v2253
      %v2319 = vmul.f32 %v2318, %v2317
      %v2320 = vmul.f32 0.5, %v2319
      %v2321 = vsub.f32 1.5, %v2320
      %v2322 = vmul.f32 %v2317, %v2321
      %vm2323 = vweird.f32 %v2253
      %vm2324 = vweird.f32 %v2317
      %vm2325 = vmor %vm2323, %vm2324
      %v2326 = vsel %vm2325, %v2317, %v2322
      %v2327 = vrsqrt.pop %v2254
      %v2328 = vmul.f32 %v2327, %v2254
      %v2329 = vmul.f32 %v2328, %v2327
      %v2330 = vmul.f32 0.5, %v2329
      %v2331 = vsub.f32 1.5, %v2330
      %v2332 = vmul.f32 %v2327, %v2331
      %vm2333 = vweird.f32 %v2254
      %vm2334 = vweird.f32 %v2327
      %vm2335 = vmor %vm2333, %vm2334
      %v2336 = vsel %vm2335, %v2327, %v2332
      %v2337 = vrsqrt.pop %v2255
      %v2338 = vmul.f32 %v2337, %v2255
      %v2339 = vmul.f32 %v2338, %v2337
      %v2340 = vmul.f32 0.5, %v2339
      %v2341 = vsub.f32 1.5, %v2340
      %v2342 = vmul.f32 %v2337, %v2341
      %vm2343 = vweird.f32 %v2255
      %vm2344 = vweird.f32 %v2337
      %vm2345 = vmor %vm2343, %vm2344
      %v2346 = vsel %vm2345, %v2337, %v2342
      %v2347 = vrsqrt.pop %v2256
      %v2348 = vmul.f32 %v2347, %v2256
      %v2349 = vmul.f32 %v2348, %v2347
      %v2350 = vmul.f32 0.5, %v2349
      %v2351 = vsub.f32 1.5, %v2350
      %v2352 = vmul.f32 %v2347, %v2351
      %vm2353 = vweird.f32 %v2256
      %vm2354 = vweird.f32 %v2347
      %vm2355 = vmor %vm2353, %vm2354
      %v2356 = vsel %vm2355, %v2347, %v2352
      %v2357 = vmul.f32 %v2237, %v2266
      %v2358 = vmul.f32 %v2238, %v2276
      %v2359 = vmul.f32 %v2239, %v2286
      %v2360 = vmul.f32 %v2240, %v2296
      %v2361 = vmul.f32 %v2241, %v2306
      %v2362 = vmul.f32 %v2242, %v2316
      %v2363 = vmul.f32 %v2243, %v2326
      %v2364 = vmul.f32 %v2244, %v2336
      %v2365 = vmul.f32 %v2245, %v2346
      %v2366 = vmul.f32 %v2246, %v2356
      %2368 = vset.pattern.permute.xlu0 0
      %2369 = vperm.xlu0 %2368, %v1033
      %v2370 = vpop.permute.xlu0 %2369
      %v2372 = vmul.f32 %v2357, %v2370
      %v2373 = vmul.f32 %v2358, %v2370
      %v2374 = vmul.f32 %v2359, %v2370
      %v2375 = vmul.f32 %v2360, %v2370
      %v2376 = vmul.f32 %v2361, %v2370
      %v2377 = vmul.f32 %v2362, %v2370
      %v2378 = vmul.f32 %v2363, %v2370
      %v2379 = vmul.f32 %v2364, %v2370
      %v2380 = vmul.f32 %v2365, %v2370
      %v2381 = vmul.f32 %v2366, %v2370
      %2383 = vset.pattern.permute.xlu0 0
      %2384 = vperm.xlu0 %2383, %v1034
      %v2385 = vpop.permute.xlu0 %2384
      %v2387 = vadd.f32 %v2372, %v2385
      %v2388 = vadd.f32 %v2373, %v2385
      %v2389 = vadd.f32 %v2374, %v2385
      %v2390 = vadd.f32 %v2375, %v2385
      %v2391 = vadd.f32 %v2376, %v2385
      %v2392 = vadd.f32 %v2377, %v2385
      %v2393 = vadd.f32 %v2378, %v2385
      %v2394 = vadd.f32 %v2379, %v2385
      %v2395 = vadd.f32 %v2380, %v2385
      %v2396 = vadd.f32 %v2381, %v2385
      %v2397 = vsub.f32 0.0, %v2387
      %v2398 = vsub.f32 0.0, %v2388
      %v2399 = vsub.f32 0.0, %v2389
      %v2400 = vsub.f32 0.0, %v2390
      %v2401 = vsub.f32 0.0, %v2391
      %v2402 = vsub.f32 0.0, %v2392
      %v2403 = vsub.f32 0.0, %v2393
      %v2404 = vsub.f32 0.0, %v2394
      %v2405 = vsub.f32 0.0, %v2395
      %v2406 = vsub.f32 0.0, %v2396
      %v2407 = vmul.f32 %v2397, 1.442695
      %v2408 = vpow.pop %v2407
      %v2409 = vmul.f32 %v2398, 1.442695
      %v2410 = vpow.pop %v2409
      %v2411 = vmul.f32 %v2399, 1.442695
      %v2412 = vpow.pop %v2411
      %v2413 = vmul.f32 %v2400, 1.442695
      %v2414 = vpow.pop %v2413
      %v2415 = vmul.f32 %v2401, 1.442695
      %v2416 = vpow.pop %v2415
      %v2417 = vmul.f32 %v2402, 1.442695
      %v2418 = vpow.pop %v2417
      %v2419 = vmul.f32 %v2403, 1.442695
      %v2420 = vpow.pop %v2419
      %v2421 = vmul.f32 %v2404, 1.442695
      %v2422 = vpow.pop %v2421
      %v2423 = vmul.f32 %v2405, 1.442695
      %v2424 = vpow.pop %v2423
      %v2425 = vmul.f32 %v2406, 1.442695
      %v2426 = vpow.pop %v2425
      %v2427 = vadd.f32 %v2408, 1.0
      %v2428 = vadd.f32 %v2410, 1.0
      %v2429 = vadd.f32 %v2412, 1.0
      %v2430 = vadd.f32 %v2414, 1.0
      %v2431 = vadd.f32 %v2416, 1.0
      %v2432 = vadd.f32 %v2418, 1.0
      %v2433 = vadd.f32 %v2420, 1.0
      %v2434 = vadd.f32 %v2422, 1.0
      %v2435 = vadd.f32 %v2424, 1.0
      %v2436 = vadd.f32 %v2426, 1.0
      %v2437 = vrcp.pop %v2427
      %v2438 = vrcp.pop %v2428
      %v2439 = vrcp.pop %v2429
      %v2440 = vrcp.pop %v2430
      %v2441 = vrcp.pop %v2431
      %v2442 = vrcp.pop %v2432
      %v2443 = vrcp.pop %v2433
      %v2444 = vrcp.pop %v2434
      %v2445 = vrcp.pop %v2435
      %v2446 = vrcp.pop %v2436
      %v2447 = vmul.f32 %v2387, %v2437
      %v2448 = vmul.f32 %v2388, %v2438
      %v2449 = vmul.f32 %v2389, %v2439
      %v2450 = vmul.f32 %v2390, %v2440
      %v2451 = vmul.f32 %v2391, %v2441
      %v2452 = vmul.f32 %v2392, %v2442
      %v2453 = vmul.f32 %v2393, %v2443
      %v2454 = vmul.f32 %v2394, %v2444
      %v2455 = vmul.f32 %v2395, %v2445
      %v2456 = vmul.f32 %v2396, %v2446
      %v2457 = vmul.f32 %v2447, %v1442
      %v2458 = vmul.f32 %v2448, %v1443
      %v2459 = vmul.f32 %v2449, %v1444
      %v2460 = vmul.f32 %v2450, %v1445
      %v2461 = vmul.f32 %v2451, %v1446
      %v2462 = vmul.f32 %v2452, %v1447
      %v2463 = vmul.f32 %v2453, %v1448
      %v2464 = vmul.f32 %v2454, %v1449
      %v2465 = vmul.f32 %v2455, %v1450
      %v2466 = vmul.f32 %v2456, %v1451
      %2477 = vrot.lane.b32.xlu0 %v2457, 35
      %v2478 = vpop.permute.xlu0 %2477
      %2479 = vrot.lane.b32.xlu0 %v2458, 35
      %v2480 = vpop.permute.xlu0 %2479
      %2481 = vrot.lane.b32.xlu0 %v2459, 35
      %v2482 = vpop.permute.xlu0 %2481
      %2483 = vrot.lane.b32.xlu0 %v2460, 35
      %v2484 = vpop.permute.xlu0 %2483
      %2485 = vrot.lane.b32.xlu0 %v2461, 35
      %v2486 = vpop.permute.xlu0 %2485
      %2487 = vrot.lane.b32.xlu0 %v2462, 35
      %v2488 = vpop.permute.xlu0 %2487
      %2489 = vrot.lane.b32.xlu0 %v2463, 35
      %v2490 = vpop.permute.xlu0 %2489
      %2491 = vrot.lane.b32.xlu0 %v2464, 35
      %v2492 = vpop.permute.xlu0 %2491
      %2493 = vrot.lane.b32.xlu0 %v2465, 35
      %v2494 = vpop.permute.xlu0 %2493
      %2495 = vrot.lane.b32.xlu0 %v2466, 35
      %v2496 = vpop.permute.xlu0 %2495
      %v2497 = vsel %vm464, %v2478, %v2480
      %v2498 = vsel %vm464, %v2480, %v2482
      %v2499 = vsel %vm464, %v2482, %v2484
      %v2500 = vsel %vm464, %v2484, %v2486
      %v2501 = vsel %vm464, %v2486, %v2488
      %v2502 = vsel %vm464, %v2488, %v2490
      %v2503 = vsel %vm464, %v2490, %v2492
      %v2504 = vsel %vm464, %v2492, %v2494
      %v2505 = vsel %vm464, %v2494, %v2496
      %v2516 = vsel %vm464, 0.0, %v2478
      %v2517 = vsel %vm485, %v2505, 0.0
      %2520 = vrot.lane.b32.xlu0 %v2516, 127
      %v2521 = vpop.permute.xlu0 %2520
      %2522 = vrot.lane.b32.xlu0 %v2497, 127
      %v2523 = vpop.permute.xlu0 %2522
      %2524 = vrot.lane.b32.xlu0 %v2498, 127
      %v2525 = vpop.permute.xlu0 %2524
      %2526 = vrot.lane.b32.xlu0 %v2499, 127
      %v2527 = vpop.permute.xlu0 %2526
      %2528 = vrot.lane.b32.xlu0 %v2500, 127
      %v2529 = vpop.permute.xlu0 %2528
      %2530 = vrot.lane.b32.xlu0 %v2501, 127
      %v2531 = vpop.permute.xlu0 %2530
      %2532 = vrot.lane.b32.xlu0 %v2502, 127
      %v2533 = vpop.permute.xlu0 %2532
      %2534 = vrot.lane.b32.xlu0 %v2503, 127
      %v2535 = vpop.permute.xlu0 %2534
      %2536 = vrot.lane.b32.xlu0 %v2504, 127
      %v2537 = vpop.permute.xlu0 %2536
      %2538 = vrot.lane.b32.xlu0 %v2517, 127
      %v2539 = vpop.permute.xlu0 %2538
      %v2540 = vsel %vm509, %v2521, %v2523
      %v2541 = vsel %vm509, %v2523, %v2525
      %v2542 = vsel %vm509, %v2525, %v2527
      %v2543 = vsel %vm509, %v2527, %v2529
      %v2544 = vsel %vm509, %v2529, %v2531
      %v2545 = vsel %vm509, %v2531, %v2533
      %v2546 = vsel %vm509, %v2533, %v2535
      %v2547 = vsel %vm509, %v2535, %v2537
      %v2548 = vsel %vm509, %v2537, %v2539
      %2559 = vrot.lane.b32.xlu0 %v2516, 126
      %v2560 = vpop.permute.xlu0 %2559
      %2561 = vrot.lane.b32.xlu0 %v2497, 126
      %v2562 = vpop.permute.xlu0 %2561
      %2563 = vrot.lane.b32.xlu0 %v2498, 126
      %v2564 = vpop.permute.xlu0 %2563
      %2565 = vrot.lane.b32.xlu0 %v2499, 126
      %v2566 = vpop.permute.xlu0 %2565
      %2567 = vrot.lane.b32.xlu0 %v2500, 126
      %v2568 = vpop.permute.xlu0 %2567
      %2569 = vrot.lane.b32.xlu0 %v2501, 126
      %v2570 = vpop.permute.xlu0 %2569
      %2571 = vrot.lane.b32.xlu0 %v2502, 126
      %v2572 = vpop.permute.xlu0 %2571
      %2573 = vrot.lane.b32.xlu0 %v2503, 126
      %v2574 = vpop.permute.xlu0 %2573
      %2575 = vrot.lane.b32.xlu0 %v2504, 126
      %v2576 = vpop.permute.xlu0 %2575
      %2577 = vrot.lane.b32.xlu0 %v2517, 126
      %v2578 = vpop.permute.xlu0 %2577
      %v2579 = vsel %vm549, %v2560, %v2562
      %v2580 = vsel %vm549, %v2562, %v2564
      %v2581 = vsel %vm549, %v2564, %v2566
      %v2582 = vsel %vm549, %v2566, %v2568
      %v2583 = vsel %vm549, %v2568, %v2570
      %v2584 = vsel %vm549, %v2570, %v2572
      %v2585 = vsel %vm549, %v2572, %v2574
      %v2586 = vsel %vm549, %v2574, %v2576
      %v2587 = vsel %vm549, %v2576, %v2578
      %2598 = vrot.lane.b32.xlu0 %v2516, 94
      %v2599 = vpop.permute.xlu0 %2598
      %2600 = vrot.lane.b32.xlu0 %v2497, 94
      %v2601 = vpop.permute.xlu0 %2600
      %2602 = vrot.lane.b32.xlu0 %v2498, 94
      %v2603 = vpop.permute.xlu0 %2602
      %2604 = vrot.lane.b32.xlu0 %v2499, 94
      %v2605 = vpop.permute.xlu0 %2604
      %2606 = vrot.lane.b32.xlu0 %v2500, 94
      %v2607 = vpop.permute.xlu0 %2606
      %2608 = vrot.lane.b32.xlu0 %v2501, 94
      %v2609 = vpop.permute.xlu0 %2608
      %2610 = vrot.lane.b32.xlu0 %v2502, 94
      %v2611 = vpop.permute.xlu0 %2610
      %2612 = vrot.lane.b32.xlu0 %v2503, 94
      %v2613 = vpop.permute.xlu0 %2612
      %2614 = vrot.lane.b32.xlu0 %v2504, 94
      %v2615 = vpop.permute.xlu0 %2614
      %2616 = vrot.lane.b32.xlu0 %v2517, 94
      %v2617 = vpop.permute.xlu0 %2616
      %v2618 = vsel %vm589, %v2599, %v2601
      %v2619 = vsel %vm589, %v2601, %v2603
      %v2620 = vsel %vm589, %v2603, %v2605
      %v2621 = vsel %vm589, %v2605, %v2607
      %v2622 = vsel %vm589, %v2607, %v2609
      %v2623 = vsel %vm589, %v2609, %v2611
      %v2624 = vsel %vm589, %v2611, %v2613
      %v2625 = vsel %vm589, %v2613, %v2615
      %v2626 = vsel %vm589, %v2615, %v2617
      %2637 = vrot.lane.b32.xlu0 %v2516, 93
      %v2638 = vpop.permute.xlu0 %2637
      %2639 = vrot.lane.b32.xlu0 %v2497, 93
      %v2640 = vpop.permute.xlu0 %2639
      %2641 = vrot.lane.b32.xlu0 %v2498, 93
      %v2642 = vpop.permute.xlu0 %2641
      %2643 = vrot.lane.b32.xlu0 %v2499, 93
      %v2644 = vpop.permute.xlu0 %2643
      %2645 = vrot.lane.b32.xlu0 %v2500, 93
      %v2646 = vpop.permute.xlu0 %2645
      %2647 = vrot.lane.b32.xlu0 %v2501, 93
      %v2648 = vpop.permute.xlu0 %2647
      %2649 = vrot.lane.b32.xlu0 %v2502, 93
      %v2650 = vpop.permute.xlu0 %2649
      %2651 = vrot.lane.b32.xlu0 %v2503, 93
      %v2652 = vpop.permute.xlu0 %2651
      %2653 = vrot.lane.b32.xlu0 %v2504, 93
      %v2654 = vpop.permute.xlu0 %2653
      %2655 = vrot.lane.b32.xlu0 %v2517, 93
      %v2656 = vpop.permute.xlu0 %2655
      %v2657 = vsel %vm629, %v2638, %v2640
      %v2658 = vsel %vm629, %v2640, %v2642
      %v2659 = vsel %vm629, %v2642, %v2644
      %v2660 = vsel %vm629, %v2644, %v2646
      %v2661 = vsel %vm629, %v2646, %v2648
      %v2662 = vsel %vm629, %v2648, %v2650
      %v2663 = vsel %vm629, %v2650, %v2652
      %v2664 = vsel %vm629, %v2652, %v2654
      %v2665 = vsel %vm629, %v2654, %v2656
      %2676 = vrot.lane.b32.xlu0 %v2516, 92
      %v2677 = vpop.permute.xlu0 %2676
      %2678 = vrot.lane.b32.xlu0 %v2497, 92
      %v2679 = vpop.permute.xlu0 %2678
      %2680 = vrot.lane.b32.xlu0 %v2498, 92
      %v2681 = vpop.permute.xlu0 %2680
      %2682 = vrot.lane.b32.xlu0 %v2499, 92
      %v2683 = vpop.permute.xlu0 %2682
      %2684 = vrot.lane.b32.xlu0 %v2500, 92
      %v2685 = vpop.permute.xlu0 %2684
      %2686 = vrot.lane.b32.xlu0 %v2501, 92
      %v2687 = vpop.permute.xlu0 %2686
      %2688 = vrot.lane.b32.xlu0 %v2502, 92
      %v2689 = vpop.permute.xlu0 %2688
      %2690 = vrot.lane.b32.xlu0 %v2503, 92
      %v2691 = vpop.permute.xlu0 %2690
      %2692 = vrot.lane.b32.xlu0 %v2504, 92
      %v2693 = vpop.permute.xlu0 %2692
      %2694 = vrot.lane.b32.xlu0 %v2517, 92
      %v2695 = vpop.permute.xlu0 %2694
      %v2696 = vsel %vm669, %v2677, %v2679
      %v2697 = vsel %vm669, %v2679, %v2681
      %v2698 = vsel %vm669, %v2681, %v2683
      %v2699 = vsel %vm669, %v2683, %v2685
      %v2700 = vsel %vm669, %v2685, %v2687
      %v2701 = vsel %vm669, %v2687, %v2689
      %v2702 = vsel %vm669, %v2689, %v2691
      %v2703 = vsel %vm669, %v2691, %v2693
      %v2704 = vsel %vm669, %v2693, %v2695
      %2715 = vrot.lane.b32.xlu0 %v2516, 60
      %v2716 = vpop.permute.xlu0 %2715
      %2717 = vrot.lane.b32.xlu0 %v2497, 60
      %v2718 = vpop.permute.xlu0 %2717
      %2719 = vrot.lane.b32.xlu0 %v2498, 60
      %v2720 = vpop.permute.xlu0 %2719
      %2721 = vrot.lane.b32.xlu0 %v2499, 60
      %v2722 = vpop.permute.xlu0 %2721
      %2723 = vrot.lane.b32.xlu0 %v2500, 60
      %v2724 = vpop.permute.xlu0 %2723
      %2725 = vrot.lane.b32.xlu0 %v2501, 60
      %v2726 = vpop.permute.xlu0 %2725
      %2727 = vrot.lane.b32.xlu0 %v2502, 60
      %v2728 = vpop.permute.xlu0 %2727
      %2729 = vrot.lane.b32.xlu0 %v2503, 60
      %v2730 = vpop.permute.xlu0 %2729
      %2731 = vrot.lane.b32.xlu0 %v2504, 60
      %v2732 = vpop.permute.xlu0 %2731
      %2733 = vrot.lane.b32.xlu0 %v2517, 60
      %v2734 = vpop.permute.xlu0 %2733
      %v2735 = vsel %vm709, %v2716, %v2718
      %v2736 = vsel %vm709, %v2718, %v2720
      %v2737 = vsel %vm709, %v2720, %v2722
      %v2738 = vsel %vm709, %v2722, %v2724
      %v2739 = vsel %vm709, %v2724, %v2726
      %v2740 = vsel %vm709, %v2726, %v2728
      %v2741 = vsel %vm709, %v2728, %v2730
      %v2742 = vsel %vm709, %v2730, %v2732
      %v2743 = vsel %vm709, %v2732, %v2734
      %2754 = vrot.lane.b32.xlu0 %v2516, 59
      %v2755 = vpop.permute.xlu0 %2754
      %2756 = vrot.lane.b32.xlu0 %v2497, 59
      %v2757 = vpop.permute.xlu0 %2756
      %2758 = vrot.lane.b32.xlu0 %v2498, 59
      %v2759 = vpop.permute.xlu0 %2758
      %2760 = vrot.lane.b32.xlu0 %v2499, 59
      %v2761 = vpop.permute.xlu0 %2760
      %2762 = vrot.lane.b32.xlu0 %v2500, 59
      %v2763 = vpop.permute.xlu0 %2762
      %2764 = vrot.lane.b32.xlu0 %v2501, 59
      %v2765 = vpop.permute.xlu0 %2764
      %2766 = vrot.lane.b32.xlu0 %v2502, 59
      %v2767 = vpop.permute.xlu0 %2766
      %2768 = vrot.lane.b32.xlu0 %v2503, 59
      %v2769 = vpop.permute.xlu0 %2768
      %2770 = vrot.lane.b32.xlu0 %v2504, 59
      %v2771 = vpop.permute.xlu0 %2770
      %2772 = vrot.lane.b32.xlu0 %v2517, 59
      %v2773 = vpop.permute.xlu0 %2772
      %v2774 = vsel %vm749, %v2755, %v2757
      %v2775 = vsel %vm749, %v2757, %v2759
      %v2776 = vsel %vm749, %v2759, %v2761
      %v2777 = vsel %vm749, %v2761, %v2763
      %v2778 = vsel %vm749, %v2763, %v2765
      %v2779 = vsel %vm749, %v2765, %v2767
      %v2780 = vsel %vm749, %v2767, %v2769
      %v2781 = vsel %vm749, %v2769, %v2771
      %v2782 = vsel %vm749, %v2771, %v2773
      %2793 = vrot.lane.b32.xlu0 %v2516, 58
      %v2794 = vpop.permute.xlu0 %2793
      %2795 = vrot.lane.b32.xlu0 %v2497, 58
      %v2796 = vpop.permute.xlu0 %2795
      %2797 = vrot.lane.b32.xlu0 %v2498, 58
      %v2798 = vpop.permute.xlu0 %2797
      %2799 = vrot.lane.b32.xlu0 %v2499, 58
      %v2800 = vpop.permute.xlu0 %2799
      %2801 = vrot.lane.b32.xlu0 %v2500, 58
      %v2802 = vpop.permute.xlu0 %2801
      %2803 = vrot.lane.b32.xlu0 %v2501, 58
      %v2804 = vpop.permute.xlu0 %2803
      %2805 = vrot.lane.b32.xlu0 %v2502, 58
      %v2806 = vpop.permute.xlu0 %2805
      %2807 = vrot.lane.b32.xlu0 %v2503, 58
      %v2808 = vpop.permute.xlu0 %2807
      %2809 = vrot.lane.b32.xlu0 %v2504, 58
      %v2810 = vpop.permute.xlu0 %2809
      %2811 = vrot.lane.b32.xlu0 %v2517, 58
      %v2812 = vpop.permute.xlu0 %2811
      %v2813 = vsel %vm789, %v2794, %v2796
      %v2814 = vsel %vm789, %v2796, %v2798
      %v2815 = vsel %vm789, %v2798, %v2800
      %v2816 = vsel %vm789, %v2800, %v2802
      %v2817 = vsel %vm789, %v2802, %v2804
      %v2818 = vsel %vm789, %v2804, %v2806
      %v2819 = vsel %vm789, %v2806, %v2808
      %v2820 = vsel %vm789, %v2808, %v2810
      %v2821 = vsel %vm789, %v2810, %v2812
      %v2832 = vpack.c.bf16 %v2540, %v2516
      %v2833 = vpack.c.bf16 %v2541, %v2497
      %v2834 = vpack.c.bf16 %v2542, %v2498
      %v2835 = vpack.c.bf16 %v2543, %v2499
      %v2836 = vpack.c.bf16 %v2544, %v2500
      %v2837 = vpack.c.bf16 %v2545, %v2501
      %v2838 = vpack.c.bf16 %v2546, %v2502
      %v2839 = vpack.c.bf16 %v2547, %v2503
      %v2840 = vpack.c.bf16 %v2548, %v2504
      %v2841 = vpack.c.bf16 %v2539, %v2517
      %v2842 = vpack.c.bf16 %v2618, %v2579
      %v2843 = vpack.c.bf16 %v2619, %v2580
      %v2844 = vpack.c.bf16 %v2620, %v2581
      %v2845 = vpack.c.bf16 %v2621, %v2582
      %v2846 = vpack.c.bf16 %v2622, %v2583
      %v2847 = vpack.c.bf16 %v2623, %v2584
      %v2848 = vpack.c.bf16 %v2624, %v2585
      %v2849 = vpack.c.bf16 %v2625, %v2586
      %v2850 = vpack.c.bf16 %v2626, %v2587
      %v2851 = vpack.c.bf16 %v2617, %v2578
      %v2852 = vpack.c.bf16 %v2696, %v2657
      %v2853 = vpack.c.bf16 %v2697, %v2658
      %v2854 = vpack.c.bf16 %v2698, %v2659
      %v2855 = vpack.c.bf16 %v2699, %v2660
      %v2856 = vpack.c.bf16 %v2700, %v2661
      %v2857 = vpack.c.bf16 %v2701, %v2662
      %v2858 = vpack.c.bf16 %v2702, %v2663
      %v2859 = vpack.c.bf16 %v2703, %v2664
      %v2860 = vpack.c.bf16 %v2704, %v2665
      %v2861 = vpack.c.bf16 %v2695, %v2656
      %v2862 = vpack.c.bf16 %v2774, %v2735
      %v2863 = vpack.c.bf16 %v2775, %v2736
      %v2864 = vpack.c.bf16 %v2776, %v2737
      %v2865 = vpack.c.bf16 %v2777, %v2738
      %v2866 = vpack.c.bf16 %v2778, %v2739
      %v2867 = vpack.c.bf16 %v2779, %v2740
      %v2868 = vpack.c.bf16 %v2780, %v2741
      %v2869 = vpack.c.bf16 %v2781, %v2742
      %v2870 = vpack.c.bf16 %v2782, %v2743
      %v2871 = vpack.c.bf16 %v2773, %v2734
      %v2872 = vpack.c.bf16 %v2813, %v2813
      %v2873 = vpack.c.bf16 %v2814, %v2814
      %v2874 = vpack.c.bf16 %v2815, %v2815
      %v2875 = vpack.c.bf16 %v2816, %v2816
      %v2876 = vpack.c.bf16 %v2817, %v2817
      %v2877 = vpack.c.bf16 %v2818, %v2818
      %v2878 = vpack.c.bf16 %v2819, %v2819
      %v2879 = vpack.c.bf16 %v2820, %v2820
      %v2880 = vpack.c.bf16 %v2821, %v2821
      %v2881 = vpack.c.bf16 %v2812, %v2812
      %2883 = vset.pattern.permute.xlu0 0
      %2884 = vperm.xlu0 %2883, %v1036
      %v2885 = vpop.permute.xlu0 %2884
      %v2888 = vsel %vm864, %v1035, 0
      %v2891 = vsel %vm868, %v2872, 0
      %v2894 = vsel %vm868, %v2873, 0
      %v2897 = vsel %vm868, %v2874, 0
      %v2900 = vsel %vm868, %v2875, 0
      %v2903 = vsel %vm868, %v2876, 0
      %v2906 = vsel %vm868, %v2877, 0
      %v2909 = vsel %vm868, %v2878, 0
      %v2912 = vsel %vm868, %v2879, 0
      %v2915 = vsel %vm868, %v2880, 0
      %v2918 = vsel %vm868, %v2881, 0
      %2920 = vmatpush.bf16.msra.mxu0 0
      %2921 = vmatpush.bf16.msra.mxu0 0
      %2922 = vmatpush.bf16.msra.mxu0 0
      %2923 = vmatpush.bf16.msra.mxu0 %v2891
      %2924 = vmatpush.bf16.msra.mxu0 %v2862
      %2925 = vmatpush.bf16.msra.mxu0 %v2852
      %2926 = vmatpush.bf16.msra.mxu0 %v2842
      %2927 = vmatpush.bf16.msra.mxu0 %v2832
      %2928 = vmatmul.bf16.gmra.mxu0 %v2888
      %v2929 = vpop.f32.mrf.mxu0
      %v2930 = vadd.f32 %v2885, %v2929
      %v2931 = vpop.f32.mrf.mxu0
      %2932 = vdwg.mxu0
      %2933 = vmatpush.bf16.msra.mxu0 0
      %2934 = vmatpush.bf16.msra.mxu0 0
      %2935 = vmatpush.bf16.msra.mxu0 0
      %2936 = vmatpush.bf16.msra.mxu0 %v2894
      %2937 = vmatpush.bf16.msra.mxu0 %v2863
      %2938 = vmatpush.bf16.msra.mxu0 %v2853
      %2939 = vmatpush.bf16.msra.mxu0 %v2843
      %2940 = vmatpush.bf16.msra.mxu0 %v2833
      %2941 = vmatmul.bf16.gmra.mxu0 %v2888
      %v2942 = vpop.f32.mrf.mxu0
      %v2943 = vadd.f32 %v2885, %v2942
      %v2944 = vpop.f32.mrf.mxu0
      %2945 = vdwg.mxu0
      %2946 = vmatpush.bf16.msra.mxu0 0
      %2947 = vmatpush.bf16.msra.mxu0 0
      %2948 = vmatpush.bf16.msra.mxu0 0
      %2949 = vmatpush.bf16.msra.mxu0 %v2897
      %2950 = vmatpush.bf16.msra.mxu0 %v2864
      %2951 = vmatpush.bf16.msra.mxu0 %v2854
      %2952 = vmatpush.bf16.msra.mxu0 %v2844
      %2953 = vmatpush.bf16.msra.mxu0 %v2834
      %2954 = vmatmul.bf16.gmra.mxu0 %v2888
      %v2955 = vpop.f32.mrf.mxu0
      %v2956 = vadd.f32 %v2885, %v2955
      %v2957 = vpop.f32.mrf.mxu0
      %2958 = vdwg.mxu0
      %2959 = vmatpush.bf16.msra.mxu0 0
      %2960 = vmatpush.bf16.msra.mxu0 0
      %2961 = vmatpush.bf16.msra.mxu0 0
      %2962 = vmatpush.bf16.msra.mxu0 %v2900
      %2963 = vmatpush.bf16.msra.mxu0 %v2865
      %2964 = vmatpush.bf16.msra.mxu0 %v2855
      %2965 = vmatpush.bf16.msra.mxu0 %v2845
      %2966 = vmatpush.bf16.msra.mxu0 %v2835
      %2967 = vmatmul.bf16.gmra.mxu0 %v2888
      %v2968 = vpop.f32.mrf.mxu0
      %v2969 = vadd.f32 %v2885, %v2968
      %v2970 = vpop.f32.mrf.mxu0
      %2971 = vdwg.mxu0
      %2972 = vmatpush.bf16.msra.mxu0 0
      %2973 = vmatpush.bf16.msra.mxu0 0
      %2974 = vmatpush.bf16.msra.mxu0 0
      %2975 = vmatpush.bf16.msra.mxu0 %v2903
      %2976 = vmatpush.bf16.msra.mxu0 %v2866
      %2977 = vmatpush.bf16.msra.mxu0 %v2856
      %2978 = vmatpush.bf16.msra.mxu0 %v2846
      %2979 = vmatpush.bf16.msra.mxu0 %v2836
      %2980 = vmatmul.bf16.gmra.mxu0 %v2888
      %v2981 = vpop.f32.mrf.mxu0
      %v2982 = vadd.f32 %v2885, %v2981
      %v2983 = vpop.f32.mrf.mxu0
      %2984 = vdwg.mxu0
      %2985 = vmatpush.bf16.msra.mxu0 0
      %2986 = vmatpush.bf16.msra.mxu0 0
      %2987 = vmatpush.bf16.msra.mxu0 0
      %2988 = vmatpush.bf16.msra.mxu0 %v2906
      %2989 = vmatpush.bf16.msra.mxu0 %v2867
      %2990 = vmatpush.bf16.msra.mxu0 %v2857
      %2991 = vmatpush.bf16.msra.mxu0 %v2847
      %2992 = vmatpush.bf16.msra.mxu0 %v2837
      %2993 = vmatmul.bf16.gmra.mxu0 %v2888
      %v2994 = vpop.f32.mrf.mxu0
      %v2995 = vadd.f32 %v2885, %v2994
      %v2996 = vpop.f32.mrf.mxu0
      %2997 = vdwg.mxu0
      %2998 = vmatpush.bf16.msra.mxu0 0
      %2999 = vmatpush.bf16.msra.mxu0 0
      %3000 = vmatpush.bf16.msra.mxu0 0
      %3001 = vmatpush.bf16.msra.mxu0 %v2909
      %3002 = vmatpush.bf16.msra.mxu0 %v2868
      %3003 = vmatpush.bf16.msra.mxu0 %v2858
      %3004 = vmatpush.bf16.msra.mxu0 %v2848
      %3005 = vmatpush.bf16.msra.mxu0 %v2838
      %3006 = vmatmul.bf16.gmra.mxu0 %v2888
      %v3007 = vpop.f32.mrf.mxu0
      %v3008 = vadd.f32 %v2885, %v3007
      %v3009 = vpop.f32.mrf.mxu0
      %3010 = vdwg.mxu0
      %3011 = vmatpush.bf16.msra.mxu0 0
      %3012 = vmatpush.bf16.msra.mxu0 0
      %3013 = vmatpush.bf16.msra.mxu0 0
      %3014 = vmatpush.bf16.msra.mxu0 %v2912
      %3015 = vmatpush.bf16.msra.mxu0 %v2869
      %3016 = vmatpush.bf16.msra.mxu0 %v2859
      %3017 = vmatpush.bf16.msra.mxu0 %v2849
      %3018 = vmatpush.bf16.msra.mxu0 %v2839
      %3019 = vmatmul.bf16.gmra.mxu0 %v2888
      %v3020 = vpop.f32.mrf.mxu0
      %v3021 = vadd.f32 %v2885, %v3020
      %v3022 = vpop.f32.mrf.mxu0
      %3023 = vdwg.mxu0
      %3024 = vmatpush.bf16.msra.mxu0 0
      %3025 = vmatpush.bf16.msra.mxu0 0
      %3026 = vmatpush.bf16.msra.mxu0 0
      %3027 = vmatpush.bf16.msra.mxu0 %v2915
      %3028 = vmatpush.bf16.msra.mxu0 %v2870
      %3029 = vmatpush.bf16.msra.mxu0 %v2860
      %3030 = vmatpush.bf16.msra.mxu0 %v2850
      %3031 = vmatpush.bf16.msra.mxu0 %v2840
      %3032 = vmatmul.bf16.gmra.mxu0 %v2888
      %v3033 = vpop.f32.mrf.mxu0
      %v3034 = vadd.f32 %v2885, %v3033
      %v3035 = vpop.f32.mrf.mxu0
      %3036 = vdwg.mxu0
      %3037 = vmatpush.bf16.msra.mxu0 0
      %3038 = vmatpush.bf16.msra.mxu0 0
      %3039 = vmatpush.bf16.msra.mxu0 0
      %3040 = vmatpush.bf16.msra.mxu0 %v2918
      %3041 = vmatpush.bf16.msra.mxu0 %v2871
      %3042 = vmatpush.bf16.msra.mxu0 %v2861
      %3043 = vmatpush.bf16.msra.mxu0 %v2851
      %3044 = vmatpush.bf16.msra.mxu0 %v2841
      %3045 = vmatmul.bf16.gmra.mxu0 %v2888
      %v3046 = vpop.f32.mrf.mxu0
      %v3047 = vadd.f32 %v2885, %v3046
      %v3048 = vpop.f32.mrf.mxu0
      %3049 = vdwg.mxu0
      %v3050 = vadd.f32 %v2930, %v909
      %v3051 = vadd.f32 %v2943, %v922
      %v3052 = vadd.f32 %v2956, %v935
      %v3053 = vadd.f32 %v2969, %v948
      %v3054 = vadd.f32 %v2982, %v961
      %v3055 = vadd.f32 %v2995, %v974
      %v3056 = vadd.f32 %v3008, %v987
      %v3057 = vadd.f32 %v3021, %v1000
      %v3058 = vadd.f32 %v3034, %v1013
      %v3059 = vadd.f32 %v3047, %v1026
      %3060 = vst [vmem:[%s413] sm:$0xff] %v3050
      %3061 = vst [vmem:[%s413 + $0x8] sm:$0xff] %v3051
      %3062 = vst [vmem:[%s413 + $0x10] sm:$0xff] %v3052
      %3063 = vst [vmem:[%s413 + $0x18] sm:$0xff] %v3053
      %3064 = vst [vmem:[%s413 + $0x20] sm:$0xff] %v3054
      %3065 = vst [vmem:[%s413 + $0x28] sm:$0xff] %v3055
      %3066 = vst [vmem:[%s413 + $0x30] sm:$0xff] %v3056
      %3067 = vst [vmem:[%s413 + $0x38] sm:$0xff] %v3057
      %3068 = vst [vmem:[%s413 + $0x40] sm:$0xff] %v3058
      %3069 = vst.msk [vmem:[%s413 + $0x48] sm:$0xff] %vm1091, %v3059
      %p3070 = scmp.lt.s32.totalorder %s23, 1
      %s3071 = scalar_select %p3070, %s23, 1
      %s3072 = smul.addr %s3071, 10
      %s3073 = smul.addr %s3072, 8
      %s3074 = scalar_lea.vmem %s12, %s3073
      // Predicated region
      $region69: #{wf_up_block_forward.5} parent=67 // pred_check
        %p3075 = pneg %p298
      $region70: #{wf_up_block_forward.5} parent=67 // pred_check_branch
        %3077 = sbr.rel (%p3075) target = $region72
      $region71: #{wf_up_block_forward.5} parent=67 // pred_region
        _
      $region72: #{wf_up_block_forward.5} parent=67 // pred_fallthru
        _
    $region68: #{wf_up_block_forward.5} parent=5 // pred_fallthru
      _
    %p3078 = scmp.le.s32.totalorder 2, %s18
    // Predicated region
    $region73: #{wf_up_block_forward.5} parent=5 // pred_check
      %p3079 = pneg %p3078
    $region74: #{wf_up_block_forward.5} parent=5 // pred_check_branch
      %3081 = sbr.rel (%p3079) target = $region76
    $region75: #{wf_up_block_forward.5} parent=5 // pred_region
      %s3082 = ssub.s32 %s18, 2
      // Predicated region
      $region77: #{wf_up_block_forward.5} parent=75 // pred_check
        %p3083 = pneg %p304
      $region78: #{wf_up_block_forward.5} parent=75 // pred_check_branch
        %3085 = sbr.rel (%p3083) target = $region80
      $region79: #{wf_up_block_forward.5} parent=75 // pred_region
        %p3086 = scmp.lt.s32.totalorder %s24, 1
        %s3087 = scalar_select %p3086, %s24, 1
        %s3088 = smul.addr %s3087, 10
        %s3089 = smul.addr %s3088, 8
        %s3090 = scalar_lea.vmem %s12, %s3089
      $region80: #{wf_up_block_forward.5} parent=75 // pred_fallthru
        _
    $region76: #{wf_up_block_forward.5} parent=5 // pred_fallthru
      _
  $region6: #{wf_up_block_forward.5} parent=0 // loop_footer
    %s22 = sadd.s32 1, %s18
  $region7: #{wf_up_block_forward.5} parent=0 // loop_footer_branch
    %17 = sbr.rel target = $region3
  $region8: #{wf_up_block_forward.5} parent=0 // loop_exit
    _

</llo_original>
